<compile_context>
chip_gen: v7x
topology: tpu7x:2x2x1
jax: 0.10.0
libtpu: 0.0.40
codegen_flags: <defaults>
</compile_context>

<pallas_src>
import jax
import jax.numpy as jnp
import numpy as np
from jax.experimental import pallas as pl
from jax.experimental.pallas import tpu as pltpu


BATCH_TILE = 8            # images processed per grid step (lane-concat factor)


# ------------------------------ fused kernel ------------------------------- #

def _convnet_kernel(x_ref, g1_ref, b1_ref, g2_ref, b2_ref,
                    m1_ref, s_ref, bf1_ref, w3_ref, bf3_ref,
                    out_ref, rhs1_ref, rhs2_ref):
    """One grid step = B images, everything VMEM-resident.

    x_ref  : (B, 28, 28)      input images for this tile
    g1_ref : (144, 140)       conv1 banded weights, kw-merged along K
    b1_ref : (144, 1)         conv1 bias, repeated per output row
    g2_ref : (128, 715)       conv2 banded weights (act on adjacent-max rows)
    b2_ref : (128, 1)         conv2 bias, repeated per output row
    m1_ref : (4, 147, 127)    fc1 weights with the pool-2 row selection folded in
    s_ref  : (4, 15B-2, B)    0/1 gather matrices: (v @ s[w])[:, n] = v[:, n*15+4w]
    bf1_ref: (147, 1)         fc1 bias
    w3_ref : (10, 147)        fc3 weights
    bf3_ref: (10, 1)          fc3 bias
    out_ref: (1, 10, B)       logits block, one column per image
    rhs1_ref: (140, 24B)      scratch: kw-shifted conv1 RHS
    rhs2_ref: (715, 15B)      scratch: kw-shifted conv2 RHS
    """
    f32 = jnp.float32
    B = x_ref.shape[0]

    # ---- conv1 RHS: rhs1[kw*28 + r, n*24 + j] = x[n, r, j + kw] ----
    for n in range(B):
        xn = x_ref[n]                                              # (28, 28)
        for kw in range(5):
            rhs1_ref[kw * 28:(kw + 1) * 28, n * 24:(n + 1) * 24] = xn[:, kw:kw + 24]

    # ---- conv1 + bias + ReLU: channel-stacked rows, images concatenated on lanes ----
    c1 = jnp.dot(g1_ref[...], rhs1_ref[...], preferred_element_type=f32)
    c1 = jnp.maximum(c1 + b1_ref[...], 0.0)                        # (144, 24B)

    # ---- 2x2 max-pool adjacency maxima (even-row/col selection folded into g2) ----
    tc = jnp.maximum(c1[:, :-1], c1[:, 1:])                        # (144, 24B - 1)
    t = jnp.maximum(tc[:-1, :], tc[1:, :])                         # (143, 24B - 1)
    # pooled1[n][ci, r, c] == t[ci*24 + 2r, n*24 + 2c]

    # ---- conv2 RHS: rhs2[kw*143 + r, n*15 + j] = t[r, n*24 + j + 2*kw] ----
    for n in range(B):
        for kw in range(5):
            rhs2_ref[kw * 143:(kw + 1) * 143, n * 15:(n + 1) * 15] = \
                t[:, n * 24 + 2 * kw:n * 24 + 2 * kw + 15]

    # ---- conv2 + bias + ReLU (valid outputs live on even columns) ----
    c2 = jnp.dot(g2_ref[...], rhs2_ref[...], preferred_element_type=f32)
    c2 = jnp.maximum(c2 + b2_ref[...], 0.0)                        # (128, 15B)
    # conv2_out[n][co, i, j] == c2[co*8 + i, n*15 + 2j]

    # ---- 2x2 max-pool of conv2 ----
    u = jnp.maximum(c2[:-1, :], c2[1:, :])                         # (127, 15B)
    v = jnp.maximum(u[:, :-2], u[:, 2:])                           # (127, 15B - 2)
    # pooled2[n][c, h, w] == v[c*8 + 2h, n*15 + 4w]

    # ---- fc1 batched over the tile (column selection done on the MXU) ----
    acc = None
    for w in range(4):
        vw = jnp.dot(v, s_ref[w], preferred_element_type=f32)      # (127, B)
        term = jnp.dot(m1_ref[w], vw, preferred_element_type=f32)  # (147, B)
        acc = term if acc is None else acc + term
    h1 = jnp.maximum(acc + bf1_ref[...], 0.0)                      # (147, B)

    # ---- fc3: logits as one (10, B) block per grid step ----
    out_ref[0] = jnp.dot(w3_ref[...], h1, preferred_element_type=f32) + bf3_ref[...]


# --------------------------- parameter preparation -------------------------- #

def prepare_params(params, batch_tile=BATCH_TILE):
    """One-time re-layout of the PyTorch-style parameters for the fused kernel."""
    w1 = params["conv1_w"].astype(jnp.float32)     # (6, 1, 5, 5)
    w2 = params["conv2_w"].astype(jnp.float32)     # (16, 6, 5, 5)
    fc1_w = params["fc1_w"].astype(jnp.float32)    # (147, 256)

    # conv1 banded + kw-merged: G1[co*24 + i, kw*28 + i + kh] = w1[co, 0, kh, kw]
    co, i, kh, kw = np.indices((6, 24, 5, 5))
    g1 = jnp.zeros((144, 140), jnp.float32).at[
        co * 24 + i, kw * 28 + i + kh].set(w1[co, 0, kh, kw])

    # conv2 acts on the adjacent-max array t, where pooled1[ci][r,c] == t[ci*24+2r, 2c]:
    #   G2[co*8 + i, kw*143 + ci*24 + 2*(i + kh)] = w2[co, ci, kh, kw]
    co, i, ci, kh, kw = np.indices((16, 8, 6, 5, 5))
    g2 = jnp.zeros((128, 715), jnp.float32).at[
        co * 8 + i, kw * 143 + ci * 24 + 2 * i + 2 * kh].set(w2[co, ci, kh, kw])

    # fc1 consumes v where pooled2[c][h, w] == v[c*8 + 2h, 4w]:
    #   M1[w, f, c*8 + 2h] = fc1_w[f, c*16 + 4h + w], zeros elsewhere.
    w_, f, c, h = np.indices((4, 147, 16, 4))
    m1 = jnp.zeros((4, 147, 127), jnp.float32).at[
        w_, f, c * 8 + 2 * h].set(fc1_w[f, c * 16 + 4 * h + w_])

    # 0/1 gather matrices: (v @ s[w])[:, n] == v[:, n*15 + 4w]
    w_, n_ = np.indices((4, batch_tile))
    s = jnp.zeros((4, 15 * batch_tile - 2, batch_tile), jnp.float32).at[
        w_, n_ * 15 + 4 * w_, n_].set(1.0)

    return {
        "g1": g1,
        "b1": jnp.repeat(params["conv1_b"].astype(jnp.float32), 24).reshape(144, 1),
        "g2": g2,
        "b2": jnp.repeat(params["conv2_b"].astype(jnp.float32), 8).reshape(128, 1),
        "m1": m1,
        "s": s,
        "bf1": params["fc1_b"].astype(jnp.float32).reshape(147, 1),
        "w3": params["fc3_w"].astype(jnp.float32),
        "bf3": params["fc3_b"].astype(jnp.float32).reshape(10, 1),
    }


# --------------------------------- forward ---------------------------------- #

@jax.jit
def convnet_forward(prepared, x):
    """x: (N, 1, 28, 28) float32 -> logits (N, 10)."""
    n = x.shape[0]
    B = BATCH_TILE
    nb = pl.cdiv(n, B)
    n_pad = nb * B

    x2 = x.reshape(n, 28, 28).astype(jnp.float32)
    if n_pad != n:
        x2 = jnp.pad(x2, ((0, n_pad - n), (0, 0), (0, 0)))

    out = pl.pallas_call(
        _convnet_kernel,
        out_shape=jax.ShapeDtypeStruct((nb, 10, B), jnp.float32),
        grid_spec=pltpu.PrefetchScalarGridSpec(
            num_scalar_prefetch=0,
            grid=(nb,),
            in_specs=[
                pl.BlockSpec((B, 28, 28), lambda i: (i, 0, 0)),          # x tile
                pl.BlockSpec((144, 140), lambda i: (0, 0)),              # g1
                pl.BlockSpec((144, 1), lambda i: (0, 0)),                # b1
                pl.BlockSpec((128, 715), lambda i: (0, 0)),              # g2
                pl.BlockSpec((128, 1), lambda i: (0, 0)),                # b2
                pl.BlockSpec((4, 147, 127), lambda i: (0, 0, 0)),        # m1
                pl.BlockSpec((4, 15 * B - 2, B), lambda i: (0, 0, 0)),   # s
                pl.BlockSpec((147, 1), lambda i: (0, 0)),                # bf1
                pl.BlockSpec((10, 147), lambda i: (0, 0)),               # w3
                pl.BlockSpec((10, 1), lambda i: (0, 0)),                 # bf3
            ],
            out_specs=pl.BlockSpec((1, 10, B), lambda i: (i, 0, 0)),
            scratch_shapes=[
                pltpu.VMEM((140, 24 * B), jnp.float32),   # conv1 shifted RHS
                pltpu.VMEM((715, 15 * B), jnp.float32),   # conv2 shifted RHS
            ],
        ),
        compiler_params=pltpu.CompilerParams(
            dimension_semantics=("parallel",),
        ),
    )(x2, prepared["g1"], prepared["b1"], prepared["g2"], prepared["b2"],
      prepared["m1"], prepared["s"], prepared["bf1"], prepared["w3"],
      prepared["bf3"])

    logits = jnp.transpose(out, (0, 2, 1)).reshape(n_pad, 10)
    return logits[:n]


# ------------------------------ init / reference ---------------------------- #

def init_params(key):
    """Deterministic init mimicking PyTorch's uniform(-1/sqrt(fan_in), ...)."""
    def uinit(k, shape, fan_in):
        bound = 1.0 / np.sqrt(fan_in)
        return jax.random.uniform(k, shape, jnp.float32, -bound, bound)

    ks = jax.random.split(key, 8)
    return {
        "conv1_w": uinit(ks[0], (6, 1, 5, 5), 1 * 5 * 5),
        "conv1_b": uinit(ks[1], (6,), 1 * 5 * 5),
        "conv2_w": uinit(ks[2], (16, 6, 5, 5), 6 * 5 * 5),
        "conv2_b": uinit(ks[3], (16,), 6 * 5 * 5),
        "fc1_w": uinit(ks[4], (147, 256), 256),
        "fc1_b": uinit(ks[5], (147,), 256),
        "fc3_w": uinit(ks[6], (10, 147), 147),
        "fc3_b": uinit(ks[7], (10,), 147),
    }


def reference_forward(params, x):
    """Pure-JAX (XLA) reference for the correctness check."""
    def conv(x, w, b):
        y = jax.lax.conv_general_dilated(
            x, w, window_strides=(1, 1), padding="VALID",
            dimension_numbers=("NCHW", "OIHW", "NCHW"))
        return y + b.reshape(1, -1, 1, 1)

    def pool(x):
        return jax.lax.reduce_window(
            x, -jnp.inf, jax.lax.max, (1, 1, 2, 2), (1, 1, 2, 2), "VALID")

    x = pool(jax.nn.relu(conv(x, params["conv1_w"], params["conv1_b"])))
    x = pool(jax.nn.relu(conv(x, params["conv2_w"], params["conv2_b"])))
    x = x.reshape(x.shape[0], -1)
    x = jax.nn.relu(x @ params["fc1_w"].T + params["fc1_b"])
    x = x @ params["fc3_w"].T + params["fc3_b"]
    return x


if __name__ == "__main__":
    key = jax.random.PRNGKey(0)
    k_params, k_input = jax.random.split(key)

    params = init_params(k_params)
    prepared = prepare_params(params)
    x = jax.random.normal(k_input, (2, 1, 28, 28), jnp.float32)

    out = jax.block_until_ready(convnet_forward(prepared, x))
    ref = jax.block_until_ready(reference_forward(params, x))

    assert out.shape == (2, 10), out.shape
    np.testing.assert_allclose(np.asarray(out), np.asarray(ref),
                               rtol=5e-4, atol=5e-4)
    print("KERNEL_OK")
</pallas_src>

<mosaic_0001>
module attributes {stable_mosaic.version = 11 : i64} {
  func.func @_convnet_kernel(%arg0: i32, %arg1: memref<8x28x28xf32, #tpu.memory_space<vmem>>, %arg2: memref<144x140xf32, #tpu.memory_space<vmem>>, %arg3: memref<144x1xf32, #tpu.memory_space<vmem>>, %arg4: memref<128x715xf32, #tpu.memory_space<vmem>>, %arg5: memref<128x1xf32, #tpu.memory_space<vmem>>, %arg6: memref<4x147x127xf32, #tpu.memory_space<vmem>>, %arg7: memref<4x118x8xf32, #tpu.memory_space<vmem>>, %arg8: memref<147x1xf32, #tpu.memory_space<vmem>>, %arg9: memref<10x147xf32, #tpu.memory_space<vmem>>, %arg10: memref<10x1xf32, #tpu.memory_space<vmem>>, %arg11: memref<1x10x8xf32, #tpu.memory_space<vmem>>, %arg12: memref<140x192xf32, #tpu.memory_space<vmem>>, %arg13: memref<715x120xf32, #tpu.memory_space<vmem>>) attributes {dimension_semantics = [#tpu.dimension_semantics<parallel>], iteration_bounds = array<i64: 1>, scalar_prefetch = 0 : i64, scratch_operands = 2 : i64, tpu.core_type = #tpu.core_type<tc>, window_params = [{transform_indices = @transform_0, window_bounds = array<i64: 8, 28, 28>}, {pipeline_mode = #tpu.pipeline_mode<synchronous>, transform_indices = @transform_1, window_bounds = array<i64: 144, 140>}, {pipeline_mode = #tpu.pipeline_mode<synchronous>, transform_indices = @transform_2, window_bounds = array<i64: 144, 1>}, {pipeline_mode = #tpu.pipeline_mode<synchronous>, transform_indices = @transform_3, window_bounds = array<i64: 128, 715>}, {pipeline_mode = #tpu.pipeline_mode<synchronous>, transform_indices = @transform_4, window_bounds = array<i64: 128, 1>}, {pipeline_mode = #tpu.pipeline_mode<synchronous>, transform_indices = @transform_5, window_bounds = array<i64: 4, 147, 127>}, {pipeline_mode = #tpu.pipeline_mode<synchronous>, transform_indices = @transform_6, window_bounds = array<i64: 4, 118, 8>}, {pipeline_mode = #tpu.pipeline_mode<synchronous>, transform_indices = @transform_7, window_bounds = array<i64: 147, 1>}, {pipeline_mode = #tpu.pipeline_mode<synchronous>, transform_indices = @transform_8, window_bounds = array<i64: 10, 147>}, {pipeline_mode = #tpu.pipeline_mode<synchronous>, transform_indices = @transform_9, window_bounds = array<i64: 10, 1>}, {transform_indices = @transform_10, window_bounds = array<i64: 1, 10, 8>}]} {
    %c0 = arith.constant 0 : index
    %c0_0 = arith.constant 0 : index
    %c0_1 = arith.constant 0 : index
    %0 = vector.load %arg1[%c0, %c0_0, %c0_1] : memref<8x28x28xf32, #tpu.memory_space<vmem>>, vector<1x28x28xf32>
    %1 = vector.shape_cast %0 : vector<1x28x28xf32> to vector<28x28xf32>
    %2 = vector.extract_strided_slice %1 {offsets = [0, 0], sizes = [28, 24], strides = [1, 1]} : vector<28x28xf32> to vector<28x24xf32>
    %c0_2 = arith.constant 0 : index
    %c0_3 = arith.constant 0 : index
    %3 = vector.load %arg12[%c0_2, %c0_3] : memref<140x192xf32, #tpu.memory_space<vmem>>, vector<28x24xf32>
    tpu.vector_store %arg12[%c0_2, %c0_3], %2 {strides = array<i32>} : memref<140x192xf32, #tpu.memory_space<vmem>>, vector<28x24xf32>,
    %4 = vector.extract_strided_slice %1 {offsets = [0, 1], sizes = [28, 24], strides = [1, 1]} : vector<28x28xf32> to vector<28x24xf32>
    %c28 = arith.constant 28 : index
    %c0_4 = arith.constant 0 : index
    %5 = vector.load %arg12[%c28, %c0_4] : memref<140x192xf32, #tpu.memory_space<vmem>>, vector<28x24xf32>
    tpu.vector_store %arg12[%c28, %c0_4], %4 {strides = array<i32>} : memref<140x192xf32, #tpu.memory_space<vmem>>, vector<28x24xf32>,
    %6 = vector.extract_strided_slice %1 {offsets = [0, 2], sizes = [28, 24], strides = [1, 1]} : vector<28x28xf32> to vector<28x24xf32>
    %c56 = arith.constant 56 : index
    %c0_5 = arith.constant 0 : index
    %7 = vector.load %arg12[%c56, %c0_5] : memref<140x192xf32, #tpu.memory_space<vmem>>, vector<28x24xf32>
    tpu.vector_store %arg12[%c56, %c0_5], %6 {strides = array<i32>} : memref<140x192xf32, #tpu.memory_space<vmem>>, vector<28x24xf32>,
    %8 = vector.extract_strided_slice %1 {offsets = [0, 3], sizes = [28, 24], strides = [1, 1]} : vector<28x28xf32> to vector<28x24xf32>
    %c84 = arith.constant 84 : index
    %c0_6 = arith.constant 0 : index
    %9 = vector.load %arg12[%c84, %c0_6] : memref<140x192xf32, #tpu.memory_space<vmem>>, vector<28x24xf32>
    tpu.vector_store %arg12[%c84, %c0_6], %8 {strides = array<i32>} : memref<140x192xf32, #tpu.memory_space<vmem>>, vector<28x24xf32>,
    %10 = vector.extract_strided_slice %1 {offsets = [0, 4], sizes = [28, 24], strides = [1, 1]} : vector<28x28xf32> to vector<28x24xf32>
    %c112 = arith.constant 112 : index
    %c0_7 = arith.constant 0 : index
    %11 = vector.load %arg12[%c112, %c0_7] : memref<140x192xf32, #tpu.memory_space<vmem>>, vector<28x24xf32>
    tpu.vector_store %arg12[%c112, %c0_7], %10 {strides = array<i32>} : memref<140x192xf32, #tpu.memory_space<vmem>>, vector<28x24xf32>,
    %c1 = arith.constant 1 : index
    %c0_8 = arith.constant 0 : index
    %c0_9 = arith.constant 0 : index
    %12 = vector.load %arg1[%c1, %c0_8, %c0_9] : memref<8x28x28xf32, #tpu.memory_space<vmem>>, vector<1x28x28xf32>
    %13 = vector.shape_cast %12 : vector<1x28x28xf32> to vector<28x28xf32>
    %14 = vector.extract_strided_slice %13 {offsets = [0, 0], sizes = [28, 24], strides = [1, 1]} : vector<28x28xf32> to vector<28x24xf32>
    %c0_10 = arith.constant 0 : index
    %c24 = arith.constant 24 : index
    %15 = vector.load %arg12[%c0_10, %c24] : memref<140x192xf32, #tpu.memory_space<vmem>>, vector<28x24xf32>
    tpu.vector_store %arg12[%c0_10, %c24], %14 {strides = array<i32>} : memref<140x192xf32, #tpu.memory_space<vmem>>, vector<28x24xf32>,
    %16 = vector.extract_strided_slice %13 {offsets = [0, 1], sizes = [28, 24], strides = [1, 1]} : vector<28x28xf32> to vector<28x24xf32>
    %c28_11 = arith.constant 28 : index
    %c24_12 = arith.constant 24 : index
    %17 = vector.load %arg12[%c28_11, %c24_12] : memref<140x192xf32, #tpu.memory_space<vmem>>, vector<28x24xf32>
    tpu.vector_store %arg12[%c28_11, %c24_12], %16 {strides = array<i32>} : memref<140x192xf32, #tpu.memory_space<vmem>>, vector<28x24xf32>,
    %18 = vector.extract_strided_slice %13 {offsets = [0, 2], sizes = [28, 24], strides = [1, 1]} : vector<28x28xf32> to vector<28x24xf32>
    %c56_13 = arith.constant 56 : index
    %c24_14 = arith.constant 24 : index
    %19 = vector.load %arg12[%c56_13, %c24_14] : memref<140x192xf32, #tpu.memory_space<vmem>>, vector<28x24xf32>
    tpu.vector_store %arg12[%c56_13, %c24_14], %18 {strides = array<i32>} : memref<140x192xf32, #tpu.memory_space<vmem>>, vector<28x24xf32>,
    %20 = vector.extract_strided_slice %13 {offsets = [0, 3], sizes = [28, 24], strides = [1, 1]} : vector<28x28xf32> to vector<28x24xf32>
    %c84_15 = arith.constant 84 : index
    %c24_16 = arith.constant 24 : index
    %21 = vector.load %arg12[%c84_15, %c24_16] : memref<140x192xf32, #tpu.memory_space<vmem>>, vector<28x24xf32>
    tpu.vector_store %arg12[%c84_15, %c24_16], %20 {strides = array<i32>} : memref<140x192xf32, #tpu.memory_space<vmem>>, vector<28x24xf32>,
    %22 = vector.extract_strided_slice %13 {offsets = [0, 4], sizes = [28, 24], strides = [1, 1]} : vector<28x28xf32> to vector<28x24xf32>
    %c112_17 = arith.constant 112 : index
    %c24_18 = arith.constant 24 : index
    %23 = vector.load %arg12[%c112_17, %c24_18] : memref<140x192xf32, #tpu.memory_space<vmem>>, vector<28x24xf32>
    tpu.vector_store %arg12[%c112_17, %c24_18], %22 {strides = array<i32>} : memref<140x192xf32, #tpu.memory_space<vmem>>, vector<28x24xf32>,
    %c2 = arith.constant 2 : index
    %c0_19 = arith.constant 0 : index
    %c0_20 = arith.constant 0 : index
    %24 = vector.load %arg1[%c2, %c0_19, %c0_20] : memref<8x28x28xf32, #tpu.memory_space<vmem>>, vector<1x28x28xf32>
    %25 = vector.shape_cast %24 : vector<1x28x28xf32> to vector<28x28xf32>
    %26 = vector.extract_strided_slice %25 {offsets = [0, 0], sizes = [28, 24], strides = [1, 1]} : vector<28x28xf32> to vector<28x24xf32>
    %c0_21 = arith.constant 0 : index
    %c48 = arith.constant 48 : index
    %27 = vector.load %arg12[%c0_21, %c48] : memref<140x192xf32, #tpu.memory_space<vmem>>, vector<28x24xf32>
    tpu.vector_store %arg12[%c0_21, %c48], %26 {strides = array<i32>} : memref<140x192xf32, #tpu.memory_space<vmem>>, vector<28x24xf32>,
    %28 = vector.extract_strided_slice %25 {offsets = [0, 1], sizes = [28, 24], strides = [1, 1]} : vector<28x28xf32> to vector<28x24xf32>
    %c28_22 = arith.constant 28 : index
    %c48_23 = arith.constant 48 : index
    %29 = vector.load %arg12[%c28_22, %c48_23] : memref<140x192xf32, #tpu.memory_space<vmem>>, vector<28x24xf32>
    tpu.vector_store %arg12[%c28_22, %c48_23], %28 {strides = array<i32>} : memref<140x192xf32, #tpu.memory_space<vmem>>, vector<28x24xf32>,
    %30 = vector.extract_strided_slice %25 {offsets = [0, 2], sizes = [28, 24], strides = [1, 1]} : vector<28x28xf32> to vector<28x24xf32>
    %c56_24 = arith.constant 56 : index
    %c48_25 = arith.constant 48 : index
    %31 = vector.load %arg12[%c56_24, %c48_25] : memref<140x192xf32, #tpu.memory_space<vmem>>, vector<28x24xf32>
    tpu.vector_store %arg12[%c56_24, %c48_25], %30 {strides = array<i32>} : memref<140x192xf32, #tpu.memory_space<vmem>>, vector<28x24xf32>,
    %32 = vector.extract_strided_slice %25 {offsets = [0, 3], sizes = [28, 24], strides = [1, 1]} : vector<28x28xf32> to vector<28x24xf32>
    %c84_26 = arith.constant 84 : index
    %c48_27 = arith.constant 48 : index
    %33 = vector.load %arg12[%c84_26, %c48_27] : memref<140x192xf32, #tpu.memory_space<vmem>>, vector<28x24xf32>
    tpu.vector_store %arg12[%c84_26, %c48_27], %32 {strides = array<i32>} : memref<140x192xf32, #tpu.memory_space<vmem>>, vector<28x24xf32>,
    %34 = vector.extract_strided_slice %25 {offsets = [0, 4], sizes = [28, 24], strides = [1, 1]} : vector<28x28xf32> to vector<28x24xf32>
    %c112_28 = arith.constant 112 : index
    %c48_29 = arith.constant 48 : index
    %35 = vector.load %arg12[%c112_28, %c48_29] : memref<140x192xf32, #tpu.memory_space<vmem>>, vector<28x24xf32>
    tpu.vector_store %arg12[%c112_28, %c48_29], %34 {strides = array<i32>} : memref<140x192xf32, #tpu.memory_space<vmem>>, vector<28x24xf32>,
    %c3 = arith.constant 3 : index
    %c0_30 = arith.constant 0 : index
    %c0_31 = arith.constant 0 : index
    %36 = vector.load %arg1[%c3, %c0_30, %c0_31] : memref<8x28x28xf32, #tpu.memory_space<vmem>>, vector<1x28x28xf32>
    %37 = vector.shape_cast %36 : vector<1x28x28xf32> to vector<28x28xf32>
    %38 = vector.extract_strided_slice %37 {offsets = [0, 0], sizes = [28, 24], strides = [1, 1]} : vector<28x28xf32> to vector<28x24xf32>
    %c0_32 = arith.constant 0 : index
    %c72 = arith.constant 72 : index
    %39 = vector.load %arg12[%c0_32, %c72] : memref<140x192xf32, #tpu.memory_space<vmem>>, vector<28x24xf32>
    tpu.vector_store %arg12[%c0_32, %c72], %38 {strides = array<i32>} : memref<140x192xf32, #tpu.memory_space<vmem>>, vector<28x24xf32>,
    %40 = vector.extract_strided_slice %37 {offsets = [0, 1], sizes = [28, 24], strides = [1, 1]} : vector<28x28xf32> to vector<28x24xf32>
    %c28_33 = arith.constant 28 : index
    %c72_34 = arith.constant 72 : index
    %41 = vector.load %arg12[%c28_33, %c72_34] : memref<140x192xf32, #tpu.memory_space<vmem>>, vector<28x24xf32>
    tpu.vector_store %arg12[%c28_33, %c72_34], %40 {strides = array<i32>} : memref<140x192xf32, #tpu.memory_space<vmem>>, vector<28x24xf32>,
    %42 = vector.extract_strided_slice %37 {offsets = [0, 2], sizes = [28, 24], strides = [1, 1]} : vector<28x28xf32> to vector<28x24xf32>
    %c56_35 = arith.constant 56 : index
    %c72_36 = arith.constant 72 : index
    %43 = vector.load %arg12[%c56_35, %c72_36] : memref<140x192xf32, #tpu.memory_space<vmem>>, vector<28x24xf32>
    tpu.vector_store %arg12[%c56_35, %c72_36], %42 {strides = array<i32>} : memref<140x192xf32, #tpu.memory_space<vmem>>, vector<28x24xf32>,
    %44 = vector.extract_strided_slice %37 {offsets = [0, 3], sizes = [28, 24], strides = [1, 1]} : vector<28x28xf32> to vector<28x24xf32>
    %c84_37 = arith.constant 84 : index
    %c72_38 = arith.constant 72 : index
    %45 = vector.load %arg12[%c84_37, %c72_38] : memref<140x192xf32, #tpu.memory_space<vmem>>, vector<28x24xf32>
    tpu.vector_store %arg12[%c84_37, %c72_38], %44 {strides = array<i32>} : memref<140x192xf32, #tpu.memory_space<vmem>>, vector<28x24xf32>,
    %46 = vector.extract_strided_slice %37 {offsets = [0, 4], sizes = [28, 24], strides = [1, 1]} : vector<28x28xf32> to vector<28x24xf32>
    %c112_39 = arith.constant 112 : index
    %c72_40 = arith.constant 72 : index
    %47 = vector.load %arg12[%c112_39, %c72_40] : memref<140x192xf32, #tpu.memory_space<vmem>>, vector<28x24xf32>
    tpu.vector_store %arg12[%c112_39, %c72_40], %46 {strides = array<i32>} : memref<140x192xf32, #tpu.memory_space<vmem>>, vector<28x24xf32>,
    %c4 = arith.constant 4 : index
    %c0_41 = arith.constant 0 : index
    %c0_42 = arith.constant 0 : index
    %48 = vector.load %arg1[%c4, %c0_41, %c0_42] : memref<8x28x28xf32, #tpu.memory_space<vmem>>, vector<1x28x28xf32>
    %49 = vector.shape_cast %48 : vector<1x28x28xf32> to vector<28x28xf32>
    %50 = vector.extract_strided_slice %49 {offsets = [0, 0], sizes = [28, 24], strides = [1, 1]} : vector<28x28xf32> to vector<28x24xf32>
    %c0_43 = arith.constant 0 : index
    %c96 = arith.constant 96 : index
    %51 = vector.load %arg12[%c0_43, %c96] : memref<140x192xf32, #tpu.memory_space<vmem>>, vector<28x24xf32>
    tpu.vector_store %arg12[%c0_43, %c96], %50 {strides = array<i32>} : memref<140x192xf32, #tpu.memory_space<vmem>>, vector<28x24xf32>,
    %52 = vector.extract_strided_slice %49 {offsets = [0, 1], sizes = [28, 24], strides = [1, 1]} : vector<28x28xf32> to vector<28x24xf32>
    %c28_44 = arith.constant 28 : index
    %c96_45 = arith.constant 96 : index
    %53 = vector.load %arg12[%c28_44, %c96_45] : memref<140x192xf32, #tpu.memory_space<vmem>>, vector<28x24xf32>
    tpu.vector_store %arg12[%c28_44, %c96_45], %52 {strides = array<i32>} : memref<140x192xf32, #tpu.memory_space<vmem>>, vector<28x24xf32>,
    %54 = vector.extract_strided_slice %49 {offsets = [0, 2], sizes = [28, 24], strides = [1, 1]} : vector<28x28xf32> to vector<28x24xf32>
    %c56_46 = arith.constant 56 : index
    %c96_47 = arith.constant 96 : index
    %55 = vector.load %arg12[%c56_46, %c96_47] : memref<140x192xf32, #tpu.memory_space<vmem>>, vector<28x24xf32>
    tpu.vector_store %arg12[%c56_46, %c96_47], %54 {strides = array<i32>} : memref<140x192xf32, #tpu.memory_space<vmem>>, vector<28x24xf32>,
    %56 = vector.extract_strided_slice %49 {offsets = [0, 3], sizes = [28, 24], strides = [1, 1]} : vector<28x28xf32> to vector<28x24xf32>
    %c84_48 = arith.constant 84 : index
    %c96_49 = arith.constant 96 : index
    %57 = vector.load %arg12[%c84_48, %c96_49] : memref<140x192xf32, #tpu.memory_space<vmem>>, vector<28x24xf32>
    tpu.vector_store %arg12[%c84_48, %c96_49], %56 {strides = array<i32>} : memref<140x192xf32, #tpu.memory_space<vmem>>, vector<28x24xf32>,
    %58 = vector.extract_strided_slice %49 {offsets = [0, 4], sizes = [28, 24], strides = [1, 1]} : vector<28x28xf32> to vector<28x24xf32>
    %c112_50 = arith.constant 112 : index
    %c96_51 = arith.constant 96 : index
    %59 = vector.load %arg12[%c112_50, %c96_51] : memref<140x192xf32, #tpu.memory_space<vmem>>, vector<28x24xf32>
    tpu.vector_store %arg12[%c112_50, %c96_51], %58 {strides = array<i32>} : memref<140x192xf32, #tpu.memory_space<vmem>>, vector<28x24xf32>,
    %c5 = arith.constant 5 : index
    %c0_52 = arith.constant 0 : index
    %c0_53 = arith.constant 0 : index
    %60 = vector.load %arg1[%c5, %c0_52, %c0_53] : memref<8x28x28xf32, #tpu.memory_space<vmem>>, vector<1x28x28xf32>
    %61 = vector.shape_cast %60 : vector<1x28x28xf32> to vector<28x28xf32>
    %62 = vector.extract_strided_slice %61 {offsets = [0, 0], sizes = [28, 24], strides = [1, 1]} : vector<28x28xf32> to vector<28x24xf32>
    %c0_54 = arith.constant 0 : index
    %c120 = arith.constant 120 : index
    %63 = vector.load %arg12[%c0_54, %c120] : memref<140x192xf32, #tpu.memory_space<vmem>>, vector<28x24xf32>
    tpu.vector_store %arg12[%c0_54, %c120], %62 {strides = array<i32>} : memref<140x192xf32, #tpu.memory_space<vmem>>, vector<28x24xf32>,
    %64 = vector.extract_strided_slice %61 {offsets = [0, 1], sizes = [28, 24], strides = [1, 1]} : vector<28x28xf32> to vector<28x24xf32>
    %c28_55 = arith.constant 28 : index
    %c120_56 = arith.constant 120 : index
    %65 = vector.load %arg12[%c28_55, %c120_56] : memref<140x192xf32, #tpu.memory_space<vmem>>, vector<28x24xf32>
    tpu.vector_store %arg12[%c28_55, %c120_56], %64 {strides = array<i32>} : memref<140x192xf32, #tpu.memory_space<vmem>>, vector<28x24xf32>,
    %66 = vector.extract_strided_slice %61 {offsets = [0, 2], sizes = [28, 24], strides = [1, 1]} : vector<28x28xf32> to vector<28x24xf32>
    %c56_57 = arith.constant 56 : index
    %c120_58 = arith.constant 120 : index
    %67 = vector.load %arg12[%c56_57, %c120_58] : memref<140x192xf32, #tpu.memory_space<vmem>>, vector<28x24xf32>
    tpu.vector_store %arg12[%c56_57, %c120_58], %66 {strides = array<i32>} : memref<140x192xf32, #tpu.memory_space<vmem>>, vector<28x24xf32>,
    %68 = vector.extract_strided_slice %61 {offsets = [0, 3], sizes = [28, 24], strides = [1, 1]} : vector<28x28xf32> to vector<28x24xf32>
    %c84_59 = arith.constant 84 : index
    %c120_60 = arith.constant 120 : index
    %69 = vector.load %arg12[%c84_59, %c120_60] : memref<140x192xf32, #tpu.memory_space<vmem>>, vector<28x24xf32>
    tpu.vector_store %arg12[%c84_59, %c120_60], %68 {strides = array<i32>} : memref<140x192xf32, #tpu.memory_space<vmem>>, vector<28x24xf32>,
    %70 = vector.extract_strided_slice %61 {offsets = [0, 4], sizes = [28, 24], strides = [1, 1]} : vector<28x28xf32> to vector<28x24xf32>
    %c112_61 = arith.constant 112 : index
    %c120_62 = arith.constant 120 : index
    %71 = vector.load %arg12[%c112_61, %c120_62] : memref<140x192xf32, #tpu.memory_space<vmem>>, vector<28x24xf32>
    tpu.vector_store %arg12[%c112_61, %c120_62], %70 {strides = array<i32>} : memref<140x192xf32, #tpu.memory_space<vmem>>, vector<28x24xf32>,
    %c6 = arith.constant 6 : index
    %c0_63 = arith.constant 0 : index
    %c0_64 = arith.constant 0 : index
    %72 = vector.load %arg1[%c6, %c0_63, %c0_64] : memref<8x28x28xf32, #tpu.memory_space<vmem>>, vector<1x28x28xf32>
    %73 = vector.shape_cast %72 : vector<1x28x28xf32> to vector<28x28xf32>
    %74 = vector.extract_strided_slice %73 {offsets = [0, 0], sizes = [28, 24], strides = [1, 1]} : vector<28x28xf32> to vector<28x24xf32>
    %c0_65 = arith.constant 0 : index
    %c144 = arith.constant 144 : index
    %75 = vector.load %arg12[%c0_65, %c144] : memref<140x192xf32, #tpu.memory_space<vmem>>, vector<28x24xf32>
    tpu.vector_store %arg12[%c0_65, %c144], %74 {strides = array<i32>} : memref<140x192xf32, #tpu.memory_space<vmem>>, vector<28x24xf32>,
    %76 = vector.extract_strided_slice %73 {offsets = [0, 1], sizes = [28, 24], strides = [1, 1]} : vector<28x28xf32> to vector<28x24xf32>
    %c28_66 = arith.constant 28 : index
    %c144_67 = arith.constant 144 : index
    %77 = vector.load %arg12[%c28_66, %c144_67] : memref<140x192xf32, #tpu.memory_space<vmem>>, vector<28x24xf32>
    tpu.vector_store %arg12[%c28_66, %c144_67], %76 {strides = array<i32>} : memref<140x192xf32, #tpu.memory_space<vmem>>, vector<28x24xf32>,
    %78 = vector.extract_strided_slice %73 {offsets = [0, 2], sizes = [28, 24], strides = [1, 1]} : vector<28x28xf32> to vector<28x24xf32>
    %c56_68 = arith.constant 56 : index
    %c144_69 = arith.constant 144 : index
    %79 = vector.load %arg12[%c56_68, %c144_69] : memref<140x192xf32, #tpu.memory_space<vmem>>, vector<28x24xf32>
    tpu.vector_store %arg12[%c56_68, %c144_69], %78 {strides = array<i32>} : memref<140x192xf32, #tpu.memory_space<vmem>>, vector<28x24xf32>,
    %80 = vector.extract_strided_slice %73 {offsets = [0, 3], sizes = [28, 24], strides = [1, 1]} : vector<28x28xf32> to vector<28x24xf32>
    %c84_70 = arith.constant 84 : index
    %c144_71 = arith.constant 144 : index
    %81 = vector.load %arg12[%c84_70, %c144_71] : memref<140x192xf32, #tpu.memory_space<vmem>>, vector<28x24xf32>
    tpu.vector_store %arg12[%c84_70, %c144_71], %80 {strides = array<i32>} : memref<140x192xf32, #tpu.memory_space<vmem>>, vector<28x24xf32>,
    %82 = vector.extract_strided_slice %73 {offsets = [0, 4], sizes = [28, 24], strides = [1, 1]} : vector<28x28xf32> to vector<28x24xf32>
    %c112_72 = arith.constant 112 : index
    %c144_73 = arith.constant 144 : index
    %83 = vector.load %arg12[%c112_72, %c144_73] : memref<140x192xf32, #tpu.memory_space<vmem>>, vector<28x24xf32>
    tpu.vector_store %arg12[%c112_72, %c144_73], %82 {strides = array<i32>} : memref<140x192xf32, #tpu.memory_space<vmem>>, vector<28x24xf32>,
    %c7 = arith.constant 7 : index
    %c0_74 = arith.constant 0 : index
    %c0_75 = arith.constant 0 : index
    %84 = vector.load %arg1[%c7, %c0_74, %c0_75] : memref<8x28x28xf32, #tpu.memory_space<vmem>>, vector<1x28x28xf32>
    %85 = vector.shape_cast %84 : vector<1x28x28xf32> to vector<28x28xf32>
    %86 = vector.extract_strided_slice %85 {offsets = [0, 0], sizes = [28, 24], strides = [1, 1]} : vector<28x28xf32> to vector<28x24xf32>
    %c0_76 = arith.constant 0 : index
    %c168 = arith.constant 168 : index
    %87 = vector.load %arg12[%c0_76, %c168] : memref<140x192xf32, #tpu.memory_space<vmem>>, vector<28x24xf32>
    tpu.vector_store %arg12[%c0_76, %c168], %86 {strides = array<i32>} : memref<140x192xf32, #tpu.memory_space<vmem>>, vector<28x24xf32>,
    %88 = vector.extract_strided_slice %85 {offsets = [0, 1], sizes = [28, 24], strides = [1, 1]} : vector<28x28xf32> to vector<28x24xf32>
    %c28_77 = arith.constant 28 : index
    %c168_78 = arith.constant 168 : index
    %89 = vector.load %arg12[%c28_77, %c168_78] : memref<140x192xf32, #tpu.memory_space<vmem>>, vector<28x24xf32>
    tpu.vector_store %arg12[%c28_77, %c168_78], %88 {strides = array<i32>} : memref<140x192xf32, #tpu.memory_space<vmem>>, vector<28x24xf32>,
    %90 = vector.extract_strided_slice %85 {offsets = [0, 2], sizes = [28, 24], strides = [1, 1]} : vector<28x28xf32> to vector<28x24xf32>
    %c56_79 = arith.constant 56 : index
    %c168_80 = arith.constant 168 : index
    %91 = vector.load %arg12[%c56_79, %c168_80] : memref<140x192xf32, #tpu.memory_space<vmem>>, vector<28x24xf32>
    tpu.vector_store %arg12[%c56_79, %c168_80], %90 {strides = array<i32>} : memref<140x192xf32, #tpu.memory_space<vmem>>, vector<28x24xf32>,
    %92 = vector.extract_strided_slice %85 {offsets = [0, 3], sizes = [28, 24], strides = [1, 1]} : vector<28x28xf32> to vector<28x24xf32>
    %c84_81 = arith.constant 84 : index
    %c168_82 = arith.constant 168 : index
    %93 = vector.load %arg12[%c84_81, %c168_82] : memref<140x192xf32, #tpu.memory_space<vmem>>, vector<28x24xf32>
    tpu.vector_store %arg12[%c84_81, %c168_82], %92 {strides = array<i32>} : memref<140x192xf32, #tpu.memory_space<vmem>>, vector<28x24xf32>,
    %94 = vector.extract_strided_slice %85 {offsets = [0, 4], sizes = [28, 24], strides = [1, 1]} : vector<28x28xf32> to vector<28x24xf32>
    %c112_83 = arith.constant 112 : index
    %c168_84 = arith.constant 168 : index
    %95 = vector.load %arg12[%c112_83, %c168_84] : memref<140x192xf32, #tpu.memory_space<vmem>>, vector<28x24xf32>
    tpu.vector_store %arg12[%c112_83, %c168_84], %94 {strides = array<i32>} : memref<140x192xf32, #tpu.memory_space<vmem>>, vector<28x24xf32>,
    %c0_85 = arith.constant 0 : index
    %c0_86 = arith.constant 0 : index
    %96 = vector.load %arg2[%c0_85, %c0_86] : memref<144x140xf32, #tpu.memory_space<vmem>>, vector<144x140xf32>
    %c0_87 = arith.constant 0 : index
    %c0_88 = arith.constant 0 : index
    %97 = vector.load %arg12[%c0_87, %c0_88] : memref<140x192xf32, #tpu.memory_space<vmem>>, vector<140x192xf32>
    %cst = arith.constant dense<0.000000e+00> : vector<144x192xf32>
    %98 = tpu.matmul %96, %97, %cst {dimension_numbers = #tpu.dot_dimension_numbers<[1], [0], [0], [1], [0, 0, 1, 1], [], []>} : vector<144x140xf32>, vector<140x192xf32>, vector<144x192xf32> -> vector<144x192xf32>
    %c0_89 = arith.constant 0 : index
    %c0_90 = arith.constant 0 : index
    %99 = vector.load %arg3[%c0_89, %c0_90] : memref<144x1xf32, #tpu.memory_space<vmem>>, vector<144x1xf32>
    %100 = vector.broadcast %99 : vector<144x1xf32> to vector<144x192xf32>
    %101 = arith.addf %98, %100 : vector<144x192xf32>
    %cst_91 = arith.constant 0.000000e+00 : f32
    %102 = vector.broadcast %cst_91 : f32 to vector<144x192xf32>
    %103 = arith.maximumf %101, %102 : vector<144x192xf32>
    %104 = vector.extract_strided_slice %103 {offsets = [0, 0], sizes = [144, 191], strides = [1, 1]} : vector<144x192xf32> to vector<144x191xf32>
    %105 = vector.extract_strided_slice %103 {offsets = [0, 1], sizes = [144, 191], strides = [1, 1]} : vector<144x192xf32> to vector<144x191xf32>
    %106 = arith.maximumf %104, %105 : vector<144x191xf32>
    %107 = vector.extract_strided_slice %106 {offsets = [0, 0], sizes = [143, 191], strides = [1, 1]} : vector<144x191xf32> to vector<143x191xf32>
    %108 = vector.extract_strided_slice %106 {offsets = [1, 0], sizes = [143, 191], strides = [1, 1]} : vector<144x191xf32> to vector<143x191xf32>
    %109 = arith.maximumf %107, %108 : vector<143x191xf32>
    %110 = vector.extract_strided_slice %109 {offsets = [0, 0], sizes = [143, 15], strides = [1, 1]} : vector<143x191xf32> to vector<143x15xf32>
    %c0_92 = arith.constant 0 : index
    %c0_93 = arith.constant 0 : index
    %111 = vector.load %arg13[%c0_92, %c0_93] : memref<715x120xf32, #tpu.memory_space<vmem>>, vector<143x15xf32>
    tpu.vector_store %arg13[%c0_92, %c0_93], %110 {strides = array<i32>} : memref<715x120xf32, #tpu.memory_space<vmem>>, vector<143x15xf32>,
    %112 = vector.extract_strided_slice %109 {offsets = [0, 2], sizes = [143, 15], strides = [1, 1]} : vector<143x191xf32> to vector<143x15xf32>
    %c143 = arith.constant 143 : index
    %c0_94 = arith.constant 0 : index
    %113 = vector.load %arg13[%c143, %c0_94] : memref<715x120xf32, #tpu.memory_space<vmem>>, vector<143x15xf32>
    tpu.vector_store %arg13[%c143, %c0_94], %112 {strides = array<i32>} : memref<715x120xf32, #tpu.memory_space<vmem>>, vector<143x15xf32>,
    %114 = vector.extract_strided_slice %109 {offsets = [0, 4], sizes = [143, 15], strides = [1, 1]} : vector<143x191xf32> to vector<143x15xf32>
    %c286 = arith.constant 286 : index
    %c0_95 = arith.constant 0 : index
    %115 = vector.load %arg13[%c286, %c0_95] : memref<715x120xf32, #tpu.memory_space<vmem>>, vector<143x15xf32>
    tpu.vector_store %arg13[%c286, %c0_95], %114 {strides = array<i32>} : memref<715x120xf32, #tpu.memory_space<vmem>>, vector<143x15xf32>,
    %116 = vector.extract_strided_slice %109 {offsets = [0, 6], sizes = [143, 15], strides = [1, 1]} : vector<143x191xf32> to vector<143x15xf32>
    %c429 = arith.constant 429 : index
    %c0_96 = arith.constant 0 : index
    %117 = vector.load %arg13[%c429, %c0_96] : memref<715x120xf32, #tpu.memory_space<vmem>>, vector<143x15xf32>
    tpu.vector_store %arg13[%c429, %c0_96], %116 {strides = array<i32>} : memref<715x120xf32, #tpu.memory_space<vmem>>, vector<143x15xf32>,
    %118 = vector.extract_strided_slice %109 {offsets = [0, 8], sizes = [143, 15], strides = [1, 1]} : vector<143x191xf32> to vector<143x15xf32>
    %c572 = arith.constant 572 : index
    %c0_97 = arith.constant 0 : index
    %119 = vector.load %arg13[%c572, %c0_97] : memref<715x120xf32, #tpu.memory_space<vmem>>, vector<143x15xf32>
    tpu.vector_store %arg13[%c572, %c0_97], %118 {strides = array<i32>} : memref<715x120xf32, #tpu.memory_space<vmem>>, vector<143x15xf32>,
    %120 = vector.extract_strided_slice %109 {offsets = [0, 24], sizes = [143, 15], strides = [1, 1]} : vector<143x191xf32> to vector<143x15xf32>
    %c0_98 = arith.constant 0 : index
    %c15 = arith.constant 15 : index
    %121 = vector.load %arg13[%c0_98, %c15] : memref<715x120xf32, #tpu.memory_space<vmem>>, vector<143x15xf32>
    tpu.vector_store %arg13[%c0_98, %c15], %120 {strides = array<i32>} : memref<715x120xf32, #tpu.memory_space<vmem>>, vector<143x15xf32>,
    %122 = vector.extract_strided_slice %109 {offsets = [0, 26], sizes = [143, 15], strides = [1, 1]} : vector<143x191xf32> to vector<143x15xf32>
    %c143_99 = arith.constant 143 : index
    %c15_100 = arith.constant 15 : index
    %123 = vector.load %arg13[%c143_99, %c15_100] : memref<715x120xf32, #tpu.memory_space<vmem>>, vector<143x15xf32>
    tpu.vector_store %arg13[%c143_99, %c15_100], %122 {strides = array<i32>} : memref<715x120xf32, #tpu.memory_space<vmem>>, vector<143x15xf32>,
    %124 = vector.extract_strided_slice %109 {offsets = [0, 28], sizes = [143, 15], strides = [1, 1]} : vector<143x191xf32> to vector<143x15xf32>
    %c286_101 = arith.constant 286 : index
    %c15_102 = arith.constant 15 : index
    %125 = vector.load %arg13[%c286_101, %c15_102] : memref<715x120xf32, #tpu.memory_space<vmem>>, vector<143x15xf32>
    tpu.vector_store %arg13[%c286_101, %c15_102], %124 {strides = array<i32>} : memref<715x120xf32, #tpu.memory_space<vmem>>, vector<143x15xf32>,
    %126 = vector.extract_strided_slice %109 {offsets = [0, 30], sizes = [143, 15], strides = [1, 1]} : vector<143x191xf32> to vector<143x15xf32>
    %c429_103 = arith.constant 429 : index
    %c15_104 = arith.constant 15 : index
    %127 = vector.load %arg13[%c429_103, %c15_104] : memref<715x120xf32, #tpu.memory_space<vmem>>, vector<143x15xf32>
    tpu.vector_store %arg13[%c429_103, %c15_104], %126 {strides = array<i32>} : memref<715x120xf32, #tpu.memory_space<vmem>>, vector<143x15xf32>,
    %128 = vector.extract_strided_slice %109 {offsets = [0, 32], sizes = [143, 15], strides = [1, 1]} : vector<143x191xf32> to vector<143x15xf32>
    %c572_105 = arith.constant 572 : index
    %c15_106 = arith.constant 15 : index
    %129 = vector.load %arg13[%c572_105, %c15_106] : memref<715x120xf32, #tpu.memory_space<vmem>>, vector<143x15xf32>
    tpu.vector_store %arg13[%c572_105, %c15_106], %128 {strides = array<i32>} : memref<715x120xf32, #tpu.memory_space<vmem>>, vector<143x15xf32>,
    %130 = vector.extract_strided_slice %109 {offsets = [0, 48], sizes = [143, 15], strides = [1, 1]} : vector<143x191xf32> to vector<143x15xf32>
    %c0_107 = arith.constant 0 : index
    %c30 = arith.constant 30 : index
    %131 = vector.load %arg13[%c0_107, %c30] : memref<715x120xf32, #tpu.memory_space<vmem>>, vector<143x15xf32>
    tpu.vector_store %arg13[%c0_107, %c30], %130 {strides = array<i32>} : memref<715x120xf32, #tpu.memory_space<vmem>>, vector<143x15xf32>,
    %132 = vector.extract_strided_slice %109 {offsets = [0, 50], sizes = [143, 15], strides = [1, 1]} : vector<143x191xf32> to vector<143x15xf32>
    %c143_108 = arith.constant 143 : index
    %c30_109 = arith.constant 30 : index
    %133 = vector.load %arg13[%c143_108, %c30_109] : memref<715x120xf32, #tpu.memory_space<vmem>>, vector<143x15xf32>
    tpu.vector_store %arg13[%c143_108, %c30_109], %132 {strides = array<i32>} : memref<715x120xf32, #tpu.memory_space<vmem>>, vector<143x15xf32>,
    %134 = vector.extract_strided_slice %109 {offsets = [0, 52], sizes = [143, 15], strides = [1, 1]} : vector<143x191xf32> to vector<143x15xf32>
    %c286_110 = arith.constant 286 : index
    %c30_111 = arith.constant 30 : index
    %135 = vector.load %arg13[%c286_110, %c30_111] : memref<715x120xf32, #tpu.memory_space<vmem>>, vector<143x15xf32>
    tpu.vector_store %arg13[%c286_110, %c30_111], %134 {strides = array<i32>} : memref<715x120xf32, #tpu.memory_space<vmem>>, vector<143x15xf32>,
    %136 = vector.extract_strided_slice %109 {offsets = [0, 54], sizes = [143, 15], strides = [1, 1]} : vector<143x191xf32> to vector<143x15xf32>
    %c429_112 = arith.constant 429 : index
    %c30_113 = arith.constant 30 : index
    %137 = vector.load %arg13[%c429_112, %c30_113] : memref<715x120xf32, #tpu.memory_space<vmem>>, vector<143x15xf32>
    tpu.vector_store %arg13[%c429_112, %c30_113], %136 {strides = array<i32>} : memref<715x120xf32, #tpu.memory_space<vmem>>, vector<143x15xf32>,
    %138 = vector.extract_strided_slice %109 {offsets = [0, 56], sizes = [143, 15], strides = [1, 1]} : vector<143x191xf32> to vector<143x15xf32>
    %c572_114 = arith.constant 572 : index
    %c30_115 = arith.constant 30 : index
    %139 = vector.load %arg13[%c572_114, %c30_115] : memref<715x120xf32, #tpu.memory_space<vmem>>, vector<143x15xf32>
    tpu.vector_store %arg13[%c572_114, %c30_115], %138 {strides = array<i32>} : memref<715x120xf32, #tpu.memory_space<vmem>>, vector<143x15xf32>,
    %140 = vector.extract_strided_slice %109 {offsets = [0, 72], sizes = [143, 15], strides = [1, 1]} : vector<143x191xf32> to vector<143x15xf32>
    %c0_116 = arith.constant 0 : index
    %c45 = arith.constant 45 : index
    %141 = vector.load %arg13[%c0_116, %c45] : memref<715x120xf32, #tpu.memory_space<vmem>>, vector<143x15xf32>
    tpu.vector_store %arg13[%c0_116, %c45], %140 {strides = array<i32>} : memref<715x120xf32, #tpu.memory_space<vmem>>, vector<143x15xf32>,
    %142 = vector.extract_strided_slice %109 {offsets = [0, 74], sizes = [143, 15], strides = [1, 1]} : vector<143x191xf32> to vector<143x15xf32>
    %c143_117 = arith.constant 143 : index
    %c45_118 = arith.constant 45 : index
    %143 = vector.load %arg13[%c143_117, %c45_118] : memref<715x120xf32, #tpu.memory_space<vmem>>, vector<143x15xf32>
    tpu.vector_store %arg13[%c143_117, %c45_118], %142 {strides = array<i32>} : memref<715x120xf32, #tpu.memory_space<vmem>>, vector<143x15xf32>,
    %144 = vector.extract_strided_slice %109 {offsets = [0, 76], sizes = [143, 15], strides = [1, 1]} : vector<143x191xf32> to vector<143x15xf32>
    %c286_119 = arith.constant 286 : index
    %c45_120 = arith.constant 45 : index
    %145 = vector.load %arg13[%c286_119, %c45_120] : memref<715x120xf32, #tpu.memory_space<vmem>>, vector<143x15xf32>
    tpu.vector_store %arg13[%c286_119, %c45_120], %144 {strides = array<i32>} : memref<715x120xf32, #tpu.memory_space<vmem>>, vector<143x15xf32>,
    %146 = vector.extract_strided_slice %109 {offsets = [0, 78], sizes = [143, 15], strides = [1, 1]} : vector<143x191xf32> to vector<143x15xf32>
    %c429_121 = arith.constant 429 : index
    %c45_122 = arith.constant 45 : index
    %147 = vector.load %arg13[%c429_121, %c45_122] : memref<715x120xf32, #tpu.memory_space<vmem>>, vector<143x15xf32>
    tpu.vector_store %arg13[%c429_121, %c45_122], %146 {strides = array<i32>} : memref<715x120xf32, #tpu.memory_space<vmem>>, vector<143x15xf32>,
    %148 = vector.extract_strided_slice %109 {offsets = [0, 80], sizes = [143, 15], strides = [1, 1]} : vector<143x191xf32> to vector<143x15xf32>
    %c572_123 = arith.constant 572 : index
    %c45_124 = arith.constant 45 : index
    %149 = vector.load %arg13[%c572_123, %c45_124] : memref<715x120xf32, #tpu.memory_space<vmem>>, vector<143x15xf32>
    tpu.vector_store %arg13[%c572_123, %c45_124], %148 {strides = array<i32>} : memref<715x120xf32, #tpu.memory_space<vmem>>, vector<143x15xf32>,
    %150 = vector.extract_strided_slice %109 {offsets = [0, 96], sizes = [143, 15], strides = [1, 1]} : vector<143x191xf32> to vector<143x15xf32>
    %c0_125 = arith.constant 0 : index
    %c60 = arith.constant 60 : index
    %151 = vector.load %arg13[%c0_125, %c60] : memref<715x120xf32, #tpu.memory_space<vmem>>, vector<143x15xf32>
    tpu.vector_store %arg13[%c0_125, %c60], %150 {strides = array<i32>} : memref<715x120xf32, #tpu.memory_space<vmem>>, vector<143x15xf32>,
    %152 = vector.extract_strided_slice %109 {offsets = [0, 98], sizes = [143, 15], strides = [1, 1]} : vector<143x191xf32> to vector<143x15xf32>
    %c143_126 = arith.constant 143 : index
    %c60_127 = arith.constant 60 : index
    %153 = vector.load %arg13[%c143_126, %c60_127] : memref<715x120xf32, #tpu.memory_space<vmem>>, vector<143x15xf32>
    tpu.vector_store %arg13[%c143_126, %c60_127], %152 {strides = array<i32>} : memref<715x120xf32, #tpu.memory_space<vmem>>, vector<143x15xf32>,
    %154 = vector.extract_strided_slice %109 {offsets = [0, 100], sizes = [143, 15], strides = [1, 1]} : vector<143x191xf32> to vector<143x15xf32>
    %c286_128 = arith.constant 286 : index
    %c60_129 = arith.constant 60 : index
    %155 = vector.load %arg13[%c286_128, %c60_129] : memref<715x120xf32, #tpu.memory_space<vmem>>, vector<143x15xf32>
    tpu.vector_store %arg13[%c286_128, %c60_129], %154 {strides = array<i32>} : memref<715x120xf32, #tpu.memory_space<vmem>>, vector<143x15xf32>,
    %156 = vector.extract_strided_slice %109 {offsets = [0, 102], sizes = [143, 15], strides = [1, 1]} : vector<143x191xf32> to vector<143x15xf32>
    %c429_130 = arith.constant 429 : index
    %c60_131 = arith.constant 60 : index
    %157 = vector.load %arg13[%c429_130, %c60_131] : memref<715x120xf32, #tpu.memory_space<vmem>>, vector<143x15xf32>
    tpu.vector_store %arg13[%c429_130, %c60_131], %156 {strides = array<i32>} : memref<715x120xf32, #tpu.memory_space<vmem>>, vector<143x15xf32>,
    %158 = vector.extract_strided_slice %109 {offsets = [0, 104], sizes = [143, 15], strides = [1, 1]} : vector<143x191xf32> to vector<143x15xf32>
    %c572_132 = arith.constant 572 : index
    %c60_133 = arith.constant 60 : index
    %159 = vector.load %arg13[%c572_132, %c60_133] : memref<715x120xf32, #tpu.memory_space<vmem>>, vector<143x15xf32>
    tpu.vector_store %arg13[%c572_132, %c60_133], %158 {strides = array<i32>} : memref<715x120xf32, #tpu.memory_space<vmem>>, vector<143x15xf32>,
    %160 = vector.extract_strided_slice %109 {offsets = [0, 120], sizes = [143, 15], strides = [1, 1]} : vector<143x191xf32> to vector<143x15xf32>
    %c0_134 = arith.constant 0 : index
    %c75 = arith.constant 75 : index
    %161 = vector.load %arg13[%c0_134, %c75] : memref<715x120xf32, #tpu.memory_space<vmem>>, vector<143x15xf32>
    tpu.vector_store %arg13[%c0_134, %c75], %160 {strides = array<i32>} : memref<715x120xf32, #tpu.memory_space<vmem>>, vector<143x15xf32>,
    %162 = vector.extract_strided_slice %109 {offsets = [0, 122], sizes = [143, 15], strides = [1, 1]} : vector<143x191xf32> to vector<143x15xf32>
    %c143_135 = arith.constant 143 : index
    %c75_136 = arith.constant 75 : index
    %163 = vector.load %arg13[%c143_135, %c75_136] : memref<715x120xf32, #tpu.memory_space<vmem>>, vector<143x15xf32>
    tpu.vector_store %arg13[%c143_135, %c75_136], %162 {strides = array<i32>} : memref<715x120xf32, #tpu.memory_space<vmem>>, vector<143x15xf32>,
    %164 = vector.extract_strided_slice %109 {offsets = [0, 124], sizes = [143, 15], strides = [1, 1]} : vector<143x191xf32> to vector<143x15xf32>
    %c286_137 = arith.constant 286 : index
    %c75_138 = arith.constant 75 : index
    %165 = vector.load %arg13[%c286_137, %c75_138] : memref<715x120xf32, #tpu.memory_space<vmem>>, vector<143x15xf32>
    tpu.vector_store %arg13[%c286_137, %c75_138], %164 {strides = array<i32>} : memref<715x120xf32, #tpu.memory_space<vmem>>, vector<143x15xf32>,
    %166 = vector.extract_strided_slice %109 {offsets = [0, 126], sizes = [143, 15], strides = [1, 1]} : vector<143x191xf32> to vector<143x15xf32>
    %c429_139 = arith.constant 429 : index
    %c75_140 = arith.constant 75 : index
    %167 = vector.load %arg13[%c429_139, %c75_140] : memref<715x120xf32, #tpu.memory_space<vmem>>, vector<143x15xf32>
    tpu.vector_store %arg13[%c429_139, %c75_140], %166 {strides = array<i32>} : memref<715x120xf32, #tpu.memory_space<vmem>>, vector<143x15xf32>,
    %168 = vector.extract_strided_slice %109 {offsets = [0, 128], sizes = [143, 15], strides = [1, 1]} : vector<143x191xf32> to vector<143x15xf32>
    %c572_141 = arith.constant 572 : index
    %c75_142 = arith.constant 75 : index
    %169 = vector.load %arg13[%c572_141, %c75_142] : memref<715x120xf32, #tpu.memory_space<vmem>>, vector<143x15xf32>
    tpu.vector_store %arg13[%c572_141, %c75_142], %168 {strides = array<i32>} : memref<715x120xf32, #tpu.memory_space<vmem>>, vector<143x15xf32>,
    %170 = vector.extract_strided_slice %109 {offsets = [0, 144], sizes = [143, 15], strides = [1, 1]} : vector<143x191xf32> to vector<143x15xf32>
    %c0_143 = arith.constant 0 : index
    %c90 = arith.constant 90 : index
    %171 = vector.load %arg13[%c0_143, %c90] : memref<715x120xf32, #tpu.memory_space<vmem>>, vector<143x15xf32>
    tpu.vector_store %arg13[%c0_143, %c90], %170 {strides = array<i32>} : memref<715x120xf32, #tpu.memory_space<vmem>>, vector<143x15xf32>,
    %172 = vector.extract_strided_slice %109 {offsets = [0, 146], sizes = [143, 15], strides = [1, 1]} : vector<143x191xf32> to vector<143x15xf32>
    %c143_144 = arith.constant 143 : index
    %c90_145 = arith.constant 90 : index
    %173 = vector.load %arg13[%c143_144, %c90_145] : memref<715x120xf32, #tpu.memory_space<vmem>>, vector<143x15xf32>
    tpu.vector_store %arg13[%c143_144, %c90_145], %172 {strides = array<i32>} : memref<715x120xf32, #tpu.memory_space<vmem>>, vector<143x15xf32>,
    %174 = vector.extract_strided_slice %109 {offsets = [0, 148], sizes = [143, 15], strides = [1, 1]} : vector<143x191xf32> to vector<143x15xf32>
    %c286_146 = arith.constant 286 : index
    %c90_147 = arith.constant 90 : index
    %175 = vector.load %arg13[%c286_146, %c90_147] : memref<715x120xf32, #tpu.memory_space<vmem>>, vector<143x15xf32>
    tpu.vector_store %arg13[%c286_146, %c90_147], %174 {strides = array<i32>} : memref<715x120xf32, #tpu.memory_space<vmem>>, vector<143x15xf32>,
    %176 = vector.extract_strided_slice %109 {offsets = [0, 150], sizes = [143, 15], strides = [1, 1]} : vector<143x191xf32> to vector<143x15xf32>
    %c429_148 = arith.constant 429 : index
    %c90_149 = arith.constant 90 : index
    %177 = vector.load %arg13[%c429_148, %c90_149] : memref<715x120xf32, #tpu.memory_space<vmem>>, vector<143x15xf32>
    tpu.vector_store %arg13[%c429_148, %c90_149], %176 {strides = array<i32>} : memref<715x120xf32, #tpu.memory_space<vmem>>, vector<143x15xf32>,
    %178 = vector.extract_strided_slice %109 {offsets = [0, 152], sizes = [143, 15], strides = [1, 1]} : vector<143x191xf32> to vector<143x15xf32>
    %c572_150 = arith.constant 572 : index
    %c90_151 = arith.constant 90 : index
    %179 = vector.load %arg13[%c572_150, %c90_151] : memref<715x120xf32, #tpu.memory_space<vmem>>, vector<143x15xf32>
    tpu.vector_store %arg13[%c572_150, %c90_151], %178 {strides = array<i32>} : memref<715x120xf32, #tpu.memory_space<vmem>>, vector<143x15xf32>,
    %180 = vector.extract_strided_slice %109 {offsets = [0, 168], sizes = [143, 15], strides = [1, 1]} : vector<143x191xf32> to vector<143x15xf32>
    %c0_152 = arith.constant 0 : index
    %c105 = arith.constant 105 : index
    %181 = vector.load %arg13[%c0_152, %c105] : memref<715x120xf32, #tpu.memory_space<vmem>>, vector<143x15xf32>
    tpu.vector_store %arg13[%c0_152, %c105], %180 {strides = array<i32>} : memref<715x120xf32, #tpu.memory_space<vmem>>, vector<143x15xf32>,
    %182 = vector.extract_strided_slice %109 {offsets = [0, 170], sizes = [143, 15], strides = [1, 1]} : vector<143x191xf32> to vector<143x15xf32>
    %c143_153 = arith.constant 143 : index
    %c105_154 = arith.constant 105 : index
    %183 = vector.load %arg13[%c143_153, %c105_154] : memref<715x120xf32, #tpu.memory_space<vmem>>, vector<143x15xf32>
    tpu.vector_store %arg13[%c143_153, %c105_154], %182 {strides = array<i32>} : memref<715x120xf32, #tpu.memory_space<vmem>>, vector<143x15xf32>,
    %184 = vector.extract_strided_slice %109 {offsets = [0, 172], sizes = [143, 15], strides = [1, 1]} : vector<143x191xf32> to vector<143x15xf32>
    %c286_155 = arith.constant 286 : index
    %c105_156 = arith.constant 105 : index
    %185 = vector.load %arg13[%c286_155, %c105_156] : memref<715x120xf32, #tpu.memory_space<vmem>>, vector<143x15xf32>
    tpu.vector_store %arg13[%c286_155, %c105_156], %184 {strides = array<i32>} : memref<715x120xf32, #tpu.memory_space<vmem>>, vector<143x15xf32>,
    %186 = vector.extract_strided_slice %109 {offsets = [0, 174], sizes = [143, 15], strides = [1, 1]} : vector<143x191xf32> to vector<143x15xf32>
    %c429_157 = arith.constant 429 : index
    %c105_158 = arith.constant 105 : index
    %187 = vector.load %arg13[%c429_157, %c105_158] : memref<715x120xf32, #tpu.memory_space<vmem>>, vector<143x15xf32>
    tpu.vector_store %arg13[%c429_157, %c105_158], %186 {strides = array<i32>} : memref<715x120xf32, #tpu.memory_space<vmem>>, vector<143x15xf32>,
    %188 = vector.extract_strided_slice %109 {offsets = [0, 176], sizes = [143, 15], strides = [1, 1]} : vector<143x191xf32> to vector<143x15xf32>
    %c572_159 = arith.constant 572 : index
    %c105_160 = arith.constant 105 : index
    %189 = vector.load %arg13[%c572_159, %c105_160] : memref<715x120xf32, #tpu.memory_space<vmem>>, vector<143x15xf32>
    tpu.vector_store %arg13[%c572_159, %c105_160], %188 {strides = array<i32>} : memref<715x120xf32, #tpu.memory_space<vmem>>, vector<143x15xf32>,
    %c0_161 = arith.constant 0 : index
    %c0_162 = arith.constant 0 : index
    %190 = vector.load %arg4[%c0_161, %c0_162] : memref<128x715xf32, #tpu.memory_space<vmem>>, vector<128x715xf32>
    %c0_163 = arith.constant 0 : index
    %c0_164 = arith.constant 0 : index
    %191 = vector.load %arg13[%c0_163, %c0_164] : memref<715x120xf32, #tpu.memory_space<vmem>>, vector<715x120xf32>
    %cst_165 = arith.constant dense<0.000000e+00> : vector<128x120xf32>
    %192 = tpu.matmul %190, %191, %cst_165 {dimension_numbers = #tpu.dot_dimension_numbers<[1], [0], [0], [1], [0, 0, 1, 1], [], []>} : vector<128x715xf32>, vector<715x120xf32>, vector<128x120xf32> -> vector<128x120xf32>
    %c0_166 = arith.constant 0 : index
    %c0_167 = arith.constant 0 : index
    %193 = vector.load %arg5[%c0_166, %c0_167] : memref<128x1xf32, #tpu.memory_space<vmem>>, vector<128x1xf32>
    %194 = vector.broadcast %193 : vector<128x1xf32> to vector<128x120xf32>
    %195 = arith.addf %192, %194 : vector<128x120xf32>
    %cst_168 = arith.constant 0.000000e+00 : f32
    %196 = vector.broadcast %cst_168 : f32 to vector<128x120xf32>
    %197 = arith.maximumf %195, %196 : vector<128x120xf32>
    %198 = vector.extract_strided_slice %197 {offsets = [0, 0], sizes = [127, 120], strides = [1, 1]} : vector<128x120xf32> to vector<127x120xf32>
    %199 = vector.extract_strided_slice %197 {offsets = [1, 0], sizes = [127, 120], strides = [1, 1]} : vector<128x120xf32> to vector<127x120xf32>
    %200 = arith.maximumf %198, %199 : vector<127x120xf32>
    %201 = vector.extract_strided_slice %200 {offsets = [0, 0], sizes = [127, 118], strides = [1, 1]} : vector<127x120xf32> to vector<127x118xf32>
    %202 = vector.extract_strided_slice %200 {offsets = [0, 2], sizes = [127, 118], strides = [1, 1]} : vector<127x120xf32> to vector<127x118xf32>
    %203 = arith.maximumf %201, %202 : vector<127x118xf32>
    %c0_169 = arith.constant 0 : index
    %c0_170 = arith.constant 0 : index
    %c0_171 = arith.constant 0 : index
    %204 = vector.load %arg7[%c0_169, %c0_170, %c0_171] : memref<4x118x8xf32, #tpu.memory_space<vmem>>, vector<1x118x8xf32>
    %205 = vector.shape_cast %204 : vector<1x118x8xf32> to vector<118x8xf32>
    %cst_172 = arith.constant dense<0.000000e+00> : vector<127x8xf32>
    %206 = tpu.matmul %203, %205, %cst_172 {dimension_numbers = #tpu.dot_dimension_numbers<[1], [0], [0], [1], [0, 0, 1, 1], [], []>} : vector<127x118xf32>, vector<118x8xf32>, vector<127x8xf32> -> vector<127x8xf32>
    %c0_173 = arith.constant 0 : index
    %c0_174 = arith.constant 0 : index
    %c0_175 = arith.constant 0 : index
    %207 = vector.load %arg6[%c0_173, %c0_174, %c0_175] : memref<4x147x127xf32, #tpu.memory_space<vmem>>, vector<1x147x127xf32>
    %208 = vector.shape_cast %207 : vector<1x147x127xf32> to vector<147x127xf32>
    %cst_176 = arith.constant dense<0.000000e+00> : vector<147x8xf32>
    %209 = tpu.matmul %208, %206, %cst_176 {dimension_numbers = #tpu.dot_dimension_numbers<[1], [0], [0], [1], [0, 0, 1, 1], [], []>} : vector<147x127xf32>, vector<127x8xf32>, vector<147x8xf32> -> vector<147x8xf32>
    %c1_177 = arith.constant 1 : index
    %c0_178 = arith.constant 0 : index
    %c0_179 = arith.constant 0 : index
    %210 = vector.load %arg7[%c1_177, %c0_178, %c0_179] : memref<4x118x8xf32, #tpu.memory_space<vmem>>, vector<1x118x8xf32>
    %211 = vector.shape_cast %210 : vector<1x118x8xf32> to vector<118x8xf32>
    %cst_180 = arith.constant dense<0.000000e+00> : vector<127x8xf32>
    %212 = tpu.matmul %203, %211, %cst_180 {dimension_numbers = #tpu.dot_dimension_numbers<[1], [0], [0], [1], [0, 0, 1, 1], [], []>} : vector<127x118xf32>, vector<118x8xf32>, vector<127x8xf32> -> vector<127x8xf32>
    %c1_181 = arith.constant 1 : index
    %c0_182 = arith.constant 0 : index
    %c0_183 = arith.constant 0 : index
    %213 = vector.load %arg6[%c1_181, %c0_182, %c0_183] : memref<4x147x127xf32, #tpu.memory_space<vmem>>, vector<1x147x127xf32>
    %214 = vector.shape_cast %213 : vector<1x147x127xf32> to vector<147x127xf32>
    %cst_184 = arith.constant dense<0.000000e+00> : vector<147x8xf32>
    %215 = tpu.matmul %214, %212, %cst_184 {dimension_numbers = #tpu.dot_dimension_numbers<[1], [0], [0], [1], [0, 0, 1, 1], [], []>} : vector<147x127xf32>, vector<127x8xf32>, vector<147x8xf32> -> vector<147x8xf32>
    %216 = arith.addf %209, %215 : vector<147x8xf32>
    %c2_185 = arith.constant 2 : index
    %c0_186 = arith.constant 0 : index
    %c0_187 = arith.constant 0 : index
    %217 = vector.load %arg7[%c2_185, %c0_186, %c0_187] : memref<4x118x8xf32, #tpu.memory_space<vmem>>, vector<1x118x8xf32>
    %218 = vector.shape_cast %217 : vector<1x118x8xf32> to vector<118x8xf32>
    %cst_188 = arith.constant dense<0.000000e+00> : vector<127x8xf32>
    %219 = tpu.matmul %203, %218, %cst_188 {dimension_numbers = #tpu.dot_dimension_numbers<[1], [0], [0], [1], [0, 0, 1, 1], [], []>} : vector<127x118xf32>, vector<118x8xf32>, vector<127x8xf32> -> vector<127x8xf32>
    %c2_189 = arith.constant 2 : index
    %c0_190 = arith.constant 0 : index
    %c0_191 = arith.constant 0 : index
    %220 = vector.load %arg6[%c2_189, %c0_190, %c0_191] : memref<4x147x127xf32, #tpu.memory_space<vmem>>, vector<1x147x127xf32>
    %221 = vector.shape_cast %220 : vector<1x147x127xf32> to vector<147x127xf32>
    %cst_192 = arith.constant dense<0.000000e+00> : vector<147x8xf32>
    %222 = tpu.matmul %221, %219, %cst_192 {dimension_numbers = #tpu.dot_dimension_numbers<[1], [0], [0], [1], [0, 0, 1, 1], [], []>} : vector<147x127xf32>, vector<127x8xf32>, vector<147x8xf32> -> vector<147x8xf32>
    %223 = arith.addf %216, %222 : vector<147x8xf32>
    %c3_193 = arith.constant 3 : index
    %c0_194 = arith.constant 0 : index
    %c0_195 = arith.constant 0 : index
    %224 = vector.load %arg7[%c3_193, %c0_194, %c0_195] : memref<4x118x8xf32, #tpu.memory_space<vmem>>, vector<1x118x8xf32>
    %225 = vector.shape_cast %224 : vector<1x118x8xf32> to vector<118x8xf32>
    %cst_196 = arith.constant dense<0.000000e+00> : vector<127x8xf32>
    %226 = tpu.matmul %203, %225, %cst_196 {dimension_numbers = #tpu.dot_dimension_numbers<[1], [0], [0], [1], [0, 0, 1, 1], [], []>} : vector<127x118xf32>, vector<118x8xf32>, vector<127x8xf32> -> vector<127x8xf32>
    %c3_197 = arith.constant 3 : index
    %c0_198 = arith.constant 0 : index
    %c0_199 = arith.constant 0 : index
    %227 = vector.load %arg6[%c3_197, %c0_198, %c0_199] : memref<4x147x127xf32, #tpu.memory_space<vmem>>, vector<1x147x127xf32>
    %228 = vector.shape_cast %227 : vector<1x147x127xf32> to vector<147x127xf32>
    %cst_200 = arith.constant dense<0.000000e+00> : vector<147x8xf32>
    %229 = tpu.matmul %228, %226, %cst_200 {dimension_numbers = #tpu.dot_dimension_numbers<[1], [0], [0], [1], [0, 0, 1, 1], [], []>} : vector<147x127xf32>, vector<127x8xf32>, vector<147x8xf32> -> vector<147x8xf32>
    %230 = arith.addf %223, %229 : vector<147x8xf32>
    %c0_201 = arith.constant 0 : index
    %c0_202 = arith.constant 0 : index
    %231 = vector.load %arg8[%c0_201, %c0_202] : memref<147x1xf32, #tpu.memory_space<vmem>>, vector<147x1xf32>
    %232 = vector.broadcast %231 : vector<147x1xf32> to vector<147x8xf32>
    %233 = arith.addf %230, %232 : vector<147x8xf32>
    %cst_203 = arith.constant 0.000000e+00 : f32
    %234 = vector.broadcast %cst_203 : f32 to vector<147x8xf32>
    %235 = arith.maximumf %233, %234 : vector<147x8xf32>
    %c0_204 = arith.constant 0 : index
    %c0_205 = arith.constant 0 : index
    %236 = vector.load %arg9[%c0_204, %c0_205] : memref<10x147xf32, #tpu.memory_space<vmem>>, vector<10x147xf32>
    %cst_206 = arith.constant dense<0.000000e+00> : vector<10x8xf32>
    %237 = tpu.matmul %236, %235, %cst_206 {dimension_numbers = #tpu.dot_dimension_numbers<[1], [0], [0], [1], [0, 0, 1, 1], [], []>} : vector<10x147xf32>, vector<147x8xf32>, vector<10x8xf32> -> vector<10x8xf32>
    %c0_207 = arith.constant 0 : index
    %c0_208 = arith.constant 0 : index
    %238 = vector.load %arg10[%c0_207, %c0_208] : memref<10x1xf32, #tpu.memory_space<vmem>>, vector<10x1xf32>
    %239 = vector.broadcast %238 : vector<10x1xf32> to vector<10x8xf32>
    %240 = arith.addf %237, %239 : vector<10x8xf32>
    %c0_209 = arith.constant 0 : index
    %c0_210 = arith.constant 0 : index
    %c0_211 = arith.constant 0 : index
    %241 = vector.load %arg11[%c0_209, %c0_210, %c0_211] : memref<1x10x8xf32, #tpu.memory_space<vmem>>, vector<1x10x8xf32>
    %242 = vector.shape_cast %241 : vector<1x10x8xf32> to vector<10x8xf32>
    %243 = vector.shape_cast %240 : vector<10x8xf32> to vector<1x10x8xf32>
    tpu.vector_store %arg11[%c0_209, %c0_210, %c0_211], %243 {strides = array<i32>} : memref<1x10x8xf32, #tpu.memory_space<vmem>>, vector<1x10x8xf32>,
    return
  }
  func.func @transform_0(%arg0: i32) -> (i32, i32, i32) {
    %c0_i32 = arith.constant 0 : i32
    %c0_i32_0 = arith.constant 0 : i32
    %c0_i32_1 = arith.constant 0 : i32
    return %arg0, %c0_i32, %c0_i32_0 : i32, i32, i32
  }
  func.func @transform_1(%arg0: i32) -> (i32, i32) {
    %c0_i32 = arith.constant 0 : i32
    %c0_i32_0 = arith.constant 0 : i32
    %c0_i32_1 = arith.constant 0 : i32
    return %c0_i32, %c0_i32_0 : i32, i32
  }
  func.func @transform_2(%arg0: i32) -> (i32, i32) {
    %c0_i32 = arith.constant 0 : i32
    %c0_i32_0 = arith.constant 0 : i32
    %c0_i32_1 = arith.constant 0 : i32
    return %c0_i32, %c0_i32_0 : i32, i32
  }
  func.func @transform_3(%arg0: i32) -> (i32, i32) {
    %c0_i32 = arith.constant 0 : i32
    %c0_i32_0 = arith.constant 0 : i32
    %c0_i32_1 = arith.constant 0 : i32
    return %c0_i32, %c0_i32_0 : i32, i32
  }
  func.func @transform_4(%arg0: i32) -> (i32, i32) {
    %c0_i32 = arith.constant 0 : i32
    %c0_i32_0 = arith.constant 0 : i32
    %c0_i32_1 = arith.constant 0 : i32
    return %c0_i32, %c0_i32_0 : i32, i32
  }
  func.func @transform_5(%arg0: i32) -> (i32, i32, i32) {
    %c0_i32 = arith.constant 0 : i32
    %c0_i32_0 = arith.constant 0 : i32
    %c0_i32_1 = arith.constant 0 : i32
    %c0_i32_2 = arith.constant 0 : i32
    return %c0_i32, %c0_i32_0, %c0_i32_1 : i32, i32, i32
  }
  func.func @transform_6(%arg0: i32) -> (i32, i32, i32) {
    %c0_i32 = arith.constant 0 : i32
    %c0_i32_0 = arith.constant 0 : i32
    %c0_i32_1 = arith.constant 0 : i32
    %c0_i32_2 = arith.constant 0 : i32
    return %c0_i32, %c0_i32_0, %c0_i32_1 : i32, i32, i32
  }
  func.func @transform_7(%arg0: i32) -> (i32, i32) {
    %c0_i32 = arith.constant 0 : i32
    %c0_i32_0 = arith.constant 0 : i32
    %c0_i32_1 = arith.constant 0 : i32
    return %c0_i32, %c0_i32_0 : i32, i32
  }
  func.func @transform_8(%arg0: i32) -> (i32, i32) {
    %c0_i32 = arith.constant 0 : i32
    %c0_i32_0 = arith.constant 0 : i32
    %c0_i32_1 = arith.constant 0 : i32
    return %c0_i32, %c0_i32_0 : i32, i32
  }
  func.func @transform_9(%arg0: i32) -> (i32, i32) {
    %c0_i32 = arith.constant 0 : i32
    %c0_i32_0 = arith.constant 0 : i32
    %c0_i32_1 = arith.constant 0 : i32
    return %c0_i32, %c0_i32_0 : i32, i32
  }
  func.func @transform_10(%arg0: i32) -> (i32, i32, i32) {
    %c0_i32 = arith.constant 0 : i32
    %c0_i32_0 = arith.constant 0 : i32
    %c0_i32_1 = arith.constant 0 : i32
    return %arg0, %c0_i32, %c0_i32_0 : i32, i32, i32
  }
}

</mosaic_0001>

<llo_original>
// kernel: convnet_forward.1
$region0: #{convnet_forward.1}
  #allocation0 [shape = 'u32[]', space=smem, size = 0x4, offset = 0x4, fixed_abs, tag = 'smem constant byte address 0x4 - core index']
  #allocation1 [shape = 'u32[144,128]{1,0:T(1,128)}', space=vmem, size = 0x12000, scoped, tag = 'internal scratch']
  #allocation2 [shape = 'f32[140,192]{1,0:T(8,128)}', space=vmem, size = 0x24000, scoped, tag = 'scratch operand']
  #allocation3 [shape = 'f32[715,120]{1,0:T(8,128)}', space=vmem, size = 0x5a000, scoped, tag = 'scratch operand']
  %s0 = inlined_call_operand.vmem [shape: f32[8,28,28], index: 0, kind: input, shape index: {}]
  %s1 = inlined_call_operand.vmem [shape: f32[144,140], index: 1, kind: input, shape index: {}]
  %s2 = inlined_call_operand.vmem [shape: f32[144,1], index: 2, kind: input, shape index: {}]
  %s3 = inlined_call_operand.vmem [shape: f32[128,715], index: 3, kind: input, shape index: {}]
  %s4 = inlined_call_operand.vmem [shape: f32[128,1], index: 4, kind: input, shape index: {}]
  %s5 = inlined_call_operand.vmem [shape: f32[4,147,127], index: 5, kind: input, shape index: {}]
  %s6 = inlined_call_operand.vmem [shape: f32[4,118,8], index: 6, kind: input, shape index: {}]
  %s7 = inlined_call_operand.vmem [shape: f32[147,1], index: 7, kind: input, shape index: {}]
  %s8 = inlined_call_operand.vmem [shape: f32[10,147], index: 8, kind: input, shape index: {}]
  %s9 = inlined_call_operand.vmem [shape: f32[10,1], index: 9, kind: input, shape index: {}]
  %s10 = inlined_call_operand.vmem [shape: f32[1,10,8], index: 10, kind: output, shape index: {}]
  %s11 = sld [smem:[#allocation0]]
  $region50: #{convnet_forward.1} parent=0
    _
  %s13 = ssub.s32 1, %s11
  %s14 = scalar_select 0, %s13, %s11
  // Predicated region
  $region2: #{convnet_forward.1} parent=0 // pred_check
    _
  $region3: #{convnet_forward.1} parent=0 // pred_check_branch
    %16 = sbr.rel (0) target = $region5
  $region4: #{convnet_forward.1} parent=0 // pred_region
    _
  $region5: #{convnet_forward.1} parent=0 // pred_fallthru
    _
  // Predicated region
  $region6: #{convnet_forward.1} parent=0 // pred_check
    _
  $region7: #{convnet_forward.1} parent=0 // pred_check_branch
    %18 = sbr.rel (0) target = $region9
  $region8: #{convnet_forward.1} parent=0 // pred_region
    _
  $region9: #{convnet_forward.1} parent=0 // pred_fallthru
    _
  // Predicated region
  $region10: #{convnet_forward.1} parent=0 // pred_check
    _
  $region11: #{convnet_forward.1} parent=0 // pred_check_branch
    %20 = sbr.rel (0) target = $region13
  $region12: #{convnet_forward.1} parent=0 // pred_region
    _
  $region13: #{convnet_forward.1} parent=0 // pred_fallthru
    _
  // Predicated region
  $region14: #{convnet_forward.1} parent=0 // pred_check
    _
  $region15: #{convnet_forward.1} parent=0 // pred_check_branch
    %22 = sbr.rel (0) target = $region17
  $region16: #{convnet_forward.1} parent=0 // pred_region
    _
  $region17: #{convnet_forward.1} parent=0 // pred_fallthru
    _
  // Predicated region
  $region18: #{convnet_forward.1} parent=0 // pred_check
    _
  $region19: #{convnet_forward.1} parent=0 // pred_check_branch
    %24 = sbr.rel (0) target = $region21
  $region20: #{convnet_forward.1} parent=0 // pred_region
    _
  $region21: #{convnet_forward.1} parent=0 // pred_fallthru
    _
  // Predicated region
  $region22: #{convnet_forward.1} parent=0 // pred_check
    _
  $region23: #{convnet_forward.1} parent=0 // pred_check_branch
    %26 = sbr.rel (0) target = $region25
  $region24: #{convnet_forward.1} parent=0 // pred_region
    _
  $region25: #{convnet_forward.1} parent=0 // pred_fallthru
    _
  // Predicated region
  $region26: #{convnet_forward.1} parent=0 // pred_check
    _
  $region27: #{convnet_forward.1} parent=0 // pred_check_branch
    %28 = sbr.rel (0) target = $region29
  $region28: #{convnet_forward.1} parent=0 // pred_region
    _
  $region29: #{convnet_forward.1} parent=0 // pred_fallthru
    _
  // Predicated region
  $region30: #{convnet_forward.1} parent=0 // pred_check
    _
  $region31: #{convnet_forward.1} parent=0 // pred_check_branch
    %30 = sbr.rel (0) target = $region33
  $region32: #{convnet_forward.1} parent=0 // pred_region
    _
  $region33: #{convnet_forward.1} parent=0 // pred_fallthru
    _
  // Predicated region
  $region34: #{convnet_forward.1} parent=0 // pred_check
    _
  $region35: #{convnet_forward.1} parent=0 // pred_check_branch
    %32 = sbr.rel (0) target = $region37
  $region36: #{convnet_forward.1} parent=0 // pred_region
    _
  $region37: #{convnet_forward.1} parent=0 // pred_fallthru
    _
  // Predicated region
  $region38: #{convnet_forward.1} parent=0 // pred_check
    _
  $region39: #{convnet_forward.1} parent=0 // pred_check_branch
    %34 = sbr.rel (0) target = $region41
  $region40: #{convnet_forward.1} parent=0 // pred_region
    _
  $region41: #{convnet_forward.1} parent=0 // pred_fallthru
    _
  %v35 = vld [vmem:[%s0] sm:$0xff]
  %v36 = vld [vmem:[%s0 + $0x8] sm:$0xff]
  %v37 = vld [vmem:[%s0 + $0x10] sm:$0xff]
  %v38 = vld [vmem:[%s0 + $0x18] sm:$0xf]
  %vm39 = vcmask 195584
  %40 = vst.msk [vmem:[#allocation2] sm:$0xff] %vm39, %v35
  %41 = vst.msk [vmem:[#allocation2 + $0x10] sm:$0xff] %vm39, %v36
  %42 = vst.msk [vmem:[#allocation2 + $0x20] sm:$0xff] %vm39, %v37
  %vm43 = vcmask 191488
  %44 = vst.msk [vmem:[#allocation2 + $0x30] sm:$0xf] %vm43, %v38
  %vm49 = vcmask 1043456
  %v50 = vrot.slane %v35, 4
  %v51 = vrot.slane %v36, 4
  %v52 = vsel %vm49, %v50, %v51
  %v53 = vrot.slane %v37, 4
  %v54 = vsel %vm49, %v51, %v53
  %v55 = vrot.slane %v38, 4
  %v56 = vsel %vm49, %v53, %v55
  %57 = vrot.lane.b32.xlu0 %v50, 127
  %v58 = vpop.permute.xlu0 %57
  %59 = vrot.lane.b32.xlu0 %v52, 127
  %v60 = vpop.permute.xlu0 %59
  %61 = vrot.lane.b32.xlu0 %v54, 127
  %v62 = vpop.permute.xlu0 %61
  %63 = vrot.lane.b32.xlu0 %v56, 127
  %v64 = vpop.permute.xlu0 %63
  %vm69 = vcmask 195588
  %70 = vst.msk [vmem:[#allocation2 + $0x30] sm:$0xf0] %vm69, %v58
  %71 = vst.msk [vmem:[#allocation2 + $0x40] sm:$0xff] %vm39, %v60
  %72 = vst.msk [vmem:[#allocation2 + $0x50] sm:$0xff] %vm39, %v62
  %73 = vst.msk [vmem:[#allocation2 + $0x60] sm:$0xff] %vm39, %v64
  %74 = vrot.lane.b32.xlu0 %v35, 126
  %v75 = vpop.permute.xlu0 %74
  %76 = vrot.lane.b32.xlu0 %v36, 126
  %v77 = vpop.permute.xlu0 %76
  %78 = vrot.lane.b32.xlu0 %v37, 126
  %v79 = vpop.permute.xlu0 %78
  %80 = vrot.lane.b32.xlu0 %v38, 126
  %v81 = vpop.permute.xlu0 %80
  %86 = vst.msk [vmem:[#allocation2 + $0x70] sm:$0xff] %vm39, %v75
  %87 = vst.msk [vmem:[#allocation2 + $0x80] sm:$0xff] %vm39, %v77
  %88 = vst.msk [vmem:[#allocation2 + $0x90] sm:$0xff] %vm39, %v79
  %89 = vst.msk [vmem:[#allocation2 + $0xa0] sm:$0xf] %vm43, %v81
  %90 = vrot.lane.b32.xlu0 %v50, 125
  %v91 = vpop.permute.xlu0 %90
  %92 = vrot.lane.b32.xlu0 %v52, 125
  %v93 = vpop.permute.xlu0 %92
  %94 = vrot.lane.b32.xlu0 %v54, 125
  %v95 = vpop.permute.xlu0 %94
  %96 = vrot.lane.b32.xlu0 %v56, 125
  %v97 = vpop.permute.xlu0 %96
  %102 = vst.msk [vmem:[#allocation2 + $0xa0] sm:$0xf0] %vm69, %v91
  %103 = vst.msk [vmem:[#allocation2 + $0xb0] sm:$0xff] %vm39, %v93
  %104 = vst.msk [vmem:[#allocation2 + $0xc0] sm:$0xff] %vm39, %v95
  %105 = vst.msk [vmem:[#allocation2 + $0xd0] sm:$0xff] %vm39, %v97
  %106 = vrot.lane.b32.xlu0 %v35, 124
  %v107 = vpop.permute.xlu0 %106
  %108 = vrot.lane.b32.xlu0 %v36, 124
  %v109 = vpop.permute.xlu0 %108
  %110 = vrot.lane.b32.xlu0 %v37, 124
  %v111 = vpop.permute.xlu0 %110
  %112 = vrot.lane.b32.xlu0 %v38, 124
  %v113 = vpop.permute.xlu0 %112
  %118 = vst.msk [vmem:[#allocation2 + $0xe0] sm:$0xff] %vm39, %v107
  %119 = vst.msk [vmem:[#allocation2 + $0xf0] sm:$0xff] %vm39, %v109
  %120 = vst.msk [vmem:[#allocation2 + $0x100] sm:$0xff] %vm39, %v111
  %121 = vst.msk [vmem:[#allocation2 + $0x110] sm:$0xf] %vm43, %v113
  %s122 = scalar_lea.vmem %s0, 32
  %v123 = vld [vmem:[%s122] sm:$0xff]
  %v124 = vld [vmem:[%s122 + $0x8] sm:$0xff]
  %v125 = vld [vmem:[%s122 + $0x10] sm:$0xff]
  %v126 = vld [vmem:[%s122 + $0x18] sm:$0xf]
  %131 = vrot.lane.b32.xlu0 %v123, 24
  %v132 = vpop.permute.xlu0 %131
  %133 = vrot.lane.b32.xlu0 %v124, 24
  %v134 = vpop.permute.xlu0 %133
  %135 = vrot.lane.b32.xlu0 %v125, 24
  %v136 = vpop.permute.xlu0 %135
  %137 = vrot.lane.b32.xlu0 %v126, 24
  %v138 = vpop.permute.xlu0 %137
  %vm143 = vcmask 392384
  %144 = vst.msk [vmem:[#allocation2] sm:$0xff] %vm143, %v132
  %145 = vst.msk [vmem:[#allocation2 + $0x10] sm:$0xff] %vm143, %v134
  %146 = vst.msk [vmem:[#allocation2 + $0x20] sm:$0xff] %vm143, %v136
  %vm147 = vcmask 388288
  %148 = vst.msk [vmem:[#allocation2 + $0x30] sm:$0xf] %vm147, %v138
  %v149 = vrot.slane %v123, 4
  %v150 = vrot.slane %v124, 4
  %v151 = vsel %vm49, %v149, %v150
  %v152 = vrot.slane %v125, 4
  %v153 = vsel %vm49, %v150, %v152
  %v154 = vrot.slane %v126, 4
  %v155 = vsel %vm49, %v152, %v154
  %156 = vrot.lane.b32.xlu0 %v149, 23
  %v157 = vpop.permute.xlu0 %156
  %158 = vrot.lane.b32.xlu0 %v151, 23
  %v159 = vpop.permute.xlu0 %158
  %160 = vrot.lane.b32.xlu0 %v153, 23
  %v161 = vpop.permute.xlu0 %160
  %162 = vrot.lane.b32.xlu0 %v155, 23
  %v163 = vpop.permute.xlu0 %162
  %vm168 = vcmask 392388
  %169 = vst.msk [vmem:[#allocation2 + $0x30] sm:$0xf0] %vm168, %v157
  %170 = vst.msk [vmem:[#allocation2 + $0x40] sm:$0xff] %vm143, %v159
  %171 = vst.msk [vmem:[#allocation2 + $0x50] sm:$0xff] %vm143, %v161
  %172 = vst.msk [vmem:[#allocation2 + $0x60] sm:$0xff] %vm143, %v163
  %173 = vrot.lane.b32.xlu0 %v123, 22
  %v174 = vpop.permute.xlu0 %173
  %175 = vrot.lane.b32.xlu0 %v124, 22
  %v176 = vpop.permute.xlu0 %175
  %177 = vrot.lane.b32.xlu0 %v125, 22
  %v178 = vpop.permute.xlu0 %177
  %179 = vrot.lane.b32.xlu0 %v126, 22
  %v180 = vpop.permute.xlu0 %179
  %185 = vst.msk [vmem:[#allocation2 + $0x70] sm:$0xff] %vm143, %v174
  %186 = vst.msk [vmem:[#allocation2 + $0x80] sm:$0xff] %vm143, %v176
  %187 = vst.msk [vmem:[#allocation2 + $0x90] sm:$0xff] %vm143, %v178
  %188 = vst.msk [vmem:[#allocation2 + $0xa0] sm:$0xf] %vm147, %v180
  %189 = vrot.lane.b32.xlu0 %v149, 21
  %v190 = vpop.permute.xlu0 %189
  %191 = vrot.lane.b32.xlu0 %v151, 21
  %v192 = vpop.permute.xlu0 %191
  %193 = vrot.lane.b32.xlu0 %v153, 21
  %v194 = vpop.permute.xlu0 %193
  %195 = vrot.lane.b32.xlu0 %v155, 21
  %v196 = vpop.permute.xlu0 %195
  %201 = vst.msk [vmem:[#allocation2 + $0xa0] sm:$0xf0] %vm168, %v190
  %202 = vst.msk [vmem:[#allocation2 + $0xb0] sm:$0xff] %vm143, %v192
  %203 = vst.msk [vmem:[#allocation2 + $0xc0] sm:$0xff] %vm143, %v194
  %204 = vst.msk [vmem:[#allocation2 + $0xd0] sm:$0xff] %vm143, %v196
  %205 = vrot.lane.b32.xlu0 %v123, 20
  %v206 = vpop.permute.xlu0 %205
  %207 = vrot.lane.b32.xlu0 %v124, 20
  %v208 = vpop.permute.xlu0 %207
  %209 = vrot.lane.b32.xlu0 %v125, 20
  %v210 = vpop.permute.xlu0 %209
  %211 = vrot.lane.b32.xlu0 %v126, 20
  %v212 = vpop.permute.xlu0 %211
  %217 = vst.msk [vmem:[#allocation2 + $0xe0] sm:$0xff] %vm143, %v206
  %218 = vst.msk [vmem:[#allocation2 + $0xf0] sm:$0xff] %vm143, %v208
  %219 = vst.msk [vmem:[#allocation2 + $0x100] sm:$0xff] %vm143, %v210
  %220 = vst.msk [vmem:[#allocation2 + $0x110] sm:$0xf] %vm147, %v212
  %s221 = scalar_lea.vmem %s0, 64
  %v222 = vld [vmem:[%s221] sm:$0xff]
  %v223 = vld [vmem:[%s221 + $0x8] sm:$0xff]
  %v224 = vld [vmem:[%s221 + $0x10] sm:$0xff]
  %v225 = vld [vmem:[%s221 + $0x18] sm:$0xf]
  %230 = vrot.lane.b32.xlu0 %v222, 48
  %v231 = vpop.permute.xlu0 %230
  %232 = vrot.lane.b32.xlu0 %v223, 48
  %v233 = vpop.permute.xlu0 %232
  %234 = vrot.lane.b32.xlu0 %v224, 48
  %v235 = vpop.permute.xlu0 %234
  %236 = vrot.lane.b32.xlu0 %v225, 48
  %v237 = vpop.permute.xlu0 %236
  %vm242 = vcmask 589184
  %243 = vst.msk [vmem:[#allocation2] sm:$0xff] %vm242, %v231
  %244 = vst.msk [vmem:[#allocation2 + $0x10] sm:$0xff] %vm242, %v233
  %245 = vst.msk [vmem:[#allocation2 + $0x20] sm:$0xff] %vm242, %v235
  %vm246 = vcmask 585088
  %247 = vst.msk [vmem:[#allocation2 + $0x30] sm:$0xf] %vm246, %v237
  %v248 = vrot.slane %v222, 4
  %v249 = vrot.slane %v223, 4
  %v250 = vsel %vm49, %v248, %v249
  %v251 = vrot.slane %v224, 4
  %v252 = vsel %vm49, %v249, %v251
  %v253 = vrot.slane %v225, 4
  %v254 = vsel %vm49, %v251, %v253
  %255 = vrot.lane.b32.xlu0 %v248, 47
  %v256 = vpop.permute.xlu0 %255
  %257 = vrot.lane.b32.xlu0 %v250, 47
  %v258 = vpop.permute.xlu0 %257
  %259 = vrot.lane.b32.xlu0 %v252, 47
  %v260 = vpop.permute.xlu0 %259
  %261 = vrot.lane.b32.xlu0 %v254, 47
  %v262 = vpop.permute.xlu0 %261
  %vm267 = vcmask 589188
  %268 = vst.msk [vmem:[#allocation2 + $0x30] sm:$0xf0] %vm267, %v256
  %269 = vst.msk [vmem:[#allocation2 + $0x40] sm:$0xff] %vm242, %v258
  %270 = vst.msk [vmem:[#allocation2 + $0x50] sm:$0xff] %vm242, %v260
  %271 = vst.msk [vmem:[#allocation2 + $0x60] sm:$0xff] %vm242, %v262
  %272 = vrot.lane.b32.xlu0 %v222, 46
  %v273 = vpop.permute.xlu0 %272
  %274 = vrot.lane.b32.xlu0 %v223, 46
  %v275 = vpop.permute.xlu0 %274
  %276 = vrot.lane.b32.xlu0 %v224, 46
  %v277 = vpop.permute.xlu0 %276
  %278 = vrot.lane.b32.xlu0 %v225, 46
  %v279 = vpop.permute.xlu0 %278
  %284 = vst.msk [vmem:[#allocation2 + $0x70] sm:$0xff] %vm242, %v273
  %285 = vst.msk [vmem:[#allocation2 + $0x80] sm:$0xff] %vm242, %v275
  %286 = vst.msk [vmem:[#allocation2 + $0x90] sm:$0xff] %vm242, %v277
  %287 = vst.msk [vmem:[#allocation2 + $0xa0] sm:$0xf] %vm246, %v279
  %288 = vrot.lane.b32.xlu0 %v248, 45
  %v289 = vpop.permute.xlu0 %288
  %290 = vrot.lane.b32.xlu0 %v250, 45
  %v291 = vpop.permute.xlu0 %290
  %292 = vrot.lane.b32.xlu0 %v252, 45
  %v293 = vpop.permute.xlu0 %292
  %294 = vrot.lane.b32.xlu0 %v254, 45
  %v295 = vpop.permute.xlu0 %294
  %300 = vst.msk [vmem:[#allocation2 + $0xa0] sm:$0xf0] %vm267, %v289
  %301 = vst.msk [vmem:[#allocation2 + $0xb0] sm:$0xff] %vm242, %v291
  %302 = vst.msk [vmem:[#allocation2 + $0xc0] sm:$0xff] %vm242, %v293
  %303 = vst.msk [vmem:[#allocation2 + $0xd0] sm:$0xff] %vm242, %v295
  %304 = vrot.lane.b32.xlu0 %v222, 44
  %v305 = vpop.permute.xlu0 %304
  %306 = vrot.lane.b32.xlu0 %v223, 44
  %v307 = vpop.permute.xlu0 %306
  %308 = vrot.lane.b32.xlu0 %v224, 44
  %v309 = vpop.permute.xlu0 %308
  %310 = vrot.lane.b32.xlu0 %v225, 44
  %v311 = vpop.permute.xlu0 %310
  %316 = vst.msk [vmem:[#allocation2 + $0xe0] sm:$0xff] %vm242, %v305
  %317 = vst.msk [vmem:[#allocation2 + $0xf0] sm:$0xff] %vm242, %v307
  %318 = vst.msk [vmem:[#allocation2 + $0x100] sm:$0xff] %vm242, %v309
  %319 = vst.msk [vmem:[#allocation2 + $0x110] sm:$0xf] %vm246, %v311
  %s320 = scalar_lea.vmem %s0, 96
  %v321 = vld [vmem:[%s320] sm:$0xff]
  %v322 = vld [vmem:[%s320 + $0x8] sm:$0xff]
  %v323 = vld [vmem:[%s320 + $0x10] sm:$0xff]
  %v324 = vld [vmem:[%s320 + $0x18] sm:$0xf]
  %329 = vrot.lane.b32.xlu0 %v321, 72
  %v330 = vpop.permute.xlu0 %329
  %331 = vrot.lane.b32.xlu0 %v322, 72
  %v332 = vpop.permute.xlu0 %331
  %333 = vrot.lane.b32.xlu0 %v323, 72
  %v334 = vpop.permute.xlu0 %333
  %335 = vrot.lane.b32.xlu0 %v324, 72
  %v336 = vpop.permute.xlu0 %335
  %vm341 = vcmask 785984
  %342 = vst.msk [vmem:[#allocation2] sm:$0xff] %vm341, %v330
  %343 = vst.msk [vmem:[#allocation2 + $0x10] sm:$0xff] %vm341, %v332
  %344 = vst.msk [vmem:[#allocation2 + $0x20] sm:$0xff] %vm341, %v334
  %vm345 = vcmask 781888
  %346 = vst.msk [vmem:[#allocation2 + $0x30] sm:$0xf] %vm345, %v336
  %v347 = vrot.slane %v321, 4
  %v348 = vrot.slane %v322, 4
  %v349 = vsel %vm49, %v347, %v348
  %v350 = vrot.slane %v323, 4
  %v351 = vsel %vm49, %v348, %v350
  %v352 = vrot.slane %v324, 4
  %v353 = vsel %vm49, %v350, %v352
  %354 = vrot.lane.b32.xlu0 %v347, 71
  %v355 = vpop.permute.xlu0 %354
  %356 = vrot.lane.b32.xlu0 %v349, 71
  %v357 = vpop.permute.xlu0 %356
  %358 = vrot.lane.b32.xlu0 %v351, 71
  %v359 = vpop.permute.xlu0 %358
  %360 = vrot.lane.b32.xlu0 %v353, 71
  %v361 = vpop.permute.xlu0 %360
  %vm366 = vcmask 785988
  %367 = vst.msk [vmem:[#allocation2 + $0x30] sm:$0xf0] %vm366, %v355
  %368 = vst.msk [vmem:[#allocation2 + $0x40] sm:$0xff] %vm341, %v357
  %369 = vst.msk [vmem:[#allocation2 + $0x50] sm:$0xff] %vm341, %v359
  %370 = vst.msk [vmem:[#allocation2 + $0x60] sm:$0xff] %vm341, %v361
  %371 = vrot.lane.b32.xlu0 %v321, 70
  %v372 = vpop.permute.xlu0 %371
  %373 = vrot.lane.b32.xlu0 %v322, 70
  %v374 = vpop.permute.xlu0 %373
  %375 = vrot.lane.b32.xlu0 %v323, 70
  %v376 = vpop.permute.xlu0 %375
  %377 = vrot.lane.b32.xlu0 %v324, 70
  %v378 = vpop.permute.xlu0 %377
  %383 = vst.msk [vmem:[#allocation2 + $0x70] sm:$0xff] %vm341, %v372
  %384 = vst.msk [vmem:[#allocation2 + $0x80] sm:$0xff] %vm341, %v374
  %385 = vst.msk [vmem:[#allocation2 + $0x90] sm:$0xff] %vm341, %v376
  %386 = vst.msk [vmem:[#allocation2 + $0xa0] sm:$0xf] %vm345, %v378
  %387 = vrot.lane.b32.xlu0 %v347, 69
  %v388 = vpop.permute.xlu0 %387
  %389 = vrot.lane.b32.xlu0 %v349, 69
  %v390 = vpop.permute.xlu0 %389
  %391 = vrot.lane.b32.xlu0 %v351, 69
  %v392 = vpop.permute.xlu0 %391
  %393 = vrot.lane.b32.xlu0 %v353, 69
  %v394 = vpop.permute.xlu0 %393
  %399 = vst.msk [vmem:[#allocation2 + $0xa0] sm:$0xf0] %vm366, %v388
  %400 = vst.msk [vmem:[#allocation2 + $0xb0] sm:$0xff] %vm341, %v390
  %401 = vst.msk [vmem:[#allocation2 + $0xc0] sm:$0xff] %vm341, %v392
  %402 = vst.msk [vmem:[#allocation2 + $0xd0] sm:$0xff] %vm341, %v394
  %403 = vrot.lane.b32.xlu0 %v321, 68
  %v404 = vpop.permute.xlu0 %403
  %405 = vrot.lane.b32.xlu0 %v322, 68
  %v406 = vpop.permute.xlu0 %405
  %407 = vrot.lane.b32.xlu0 %v323, 68
  %v408 = vpop.permute.xlu0 %407
  %409 = vrot.lane.b32.xlu0 %v324, 68
  %v410 = vpop.permute.xlu0 %409
  %415 = vst.msk [vmem:[#allocation2 + $0xe0] sm:$0xff] %vm341, %v404
  %416 = vst.msk [vmem:[#allocation2 + $0xf0] sm:$0xff] %vm341, %v406
  %417 = vst.msk [vmem:[#allocation2 + $0x100] sm:$0xff] %vm341, %v408
  %418 = vst.msk [vmem:[#allocation2 + $0x110] sm:$0xf] %vm345, %v410
  %s419 = scalar_lea.vmem %s0, 128
  %v420 = vld [vmem:[%s419] sm:$0xff]
  %v421 = vld [vmem:[%s419 + $0x8] sm:$0xff]
  %v422 = vld [vmem:[%s419 + $0x10] sm:$0xff]
  %v423 = vld [vmem:[%s419 + $0x18] sm:$0xf]
  %428 = vrot.lane.b32.xlu0 %v420, 96
  %v429 = vpop.permute.xlu0 %428
  %430 = vrot.lane.b32.xlu0 %v421, 96
  %v431 = vpop.permute.xlu0 %430
  %432 = vrot.lane.b32.xlu0 %v422, 96
  %v433 = vpop.permute.xlu0 %432
  %434 = vrot.lane.b32.xlu0 %v423, 96
  %v435 = vpop.permute.xlu0 %434
  %vm440 = vcmask 982784
  %441 = vst.msk [vmem:[#allocation2] sm:$0xff] %vm440, %v429
  %442 = vst.msk [vmem:[#allocation2 + $0x10] sm:$0xff] %vm440, %v431
  %443 = vst.msk [vmem:[#allocation2 + $0x20] sm:$0xff] %vm440, %v433
  %vm444 = vcmask 978688
  %445 = vst.msk [vmem:[#allocation2 + $0x30] sm:$0xf] %vm444, %v435
  %v446 = vrot.slane %v420, 4
  %v447 = vrot.slane %v421, 4
  %v448 = vsel %vm49, %v446, %v447
  %v449 = vrot.slane %v422, 4
  %v450 = vsel %vm49, %v447, %v449
  %v451 = vrot.slane %v423, 4
  %v452 = vsel %vm49, %v449, %v451
  %453 = vrot.lane.b32.xlu0 %v446, 95
  %v454 = vpop.permute.xlu0 %453
  %455 = vrot.lane.b32.xlu0 %v448, 95
  %v456 = vpop.permute.xlu0 %455
  %457 = vrot.lane.b32.xlu0 %v450, 95
  %v458 = vpop.permute.xlu0 %457
  %459 = vrot.lane.b32.xlu0 %v452, 95
  %v460 = vpop.permute.xlu0 %459
  %vm465 = vcmask 982788
  %466 = vst.msk [vmem:[#allocation2 + $0x30] sm:$0xf0] %vm465, %v454
  %467 = vst.msk [vmem:[#allocation2 + $0x40] sm:$0xff] %vm440, %v456
  %468 = vst.msk [vmem:[#allocation2 + $0x50] sm:$0xff] %vm440, %v458
  %469 = vst.msk [vmem:[#allocation2 + $0x60] sm:$0xff] %vm440, %v460
  %470 = vrot.lane.b32.xlu0 %v420, 94
  %v471 = vpop.permute.xlu0 %470
  %472 = vrot.lane.b32.xlu0 %v421, 94
  %v473 = vpop.permute.xlu0 %472
  %474 = vrot.lane.b32.xlu0 %v422, 94
  %v475 = vpop.permute.xlu0 %474
  %476 = vrot.lane.b32.xlu0 %v423, 94
  %v477 = vpop.permute.xlu0 %476
  %482 = vst.msk [vmem:[#allocation2 + $0x70] sm:$0xff] %vm440, %v471
  %483 = vst.msk [vmem:[#allocation2 + $0x80] sm:$0xff] %vm440, %v473
  %484 = vst.msk [vmem:[#allocation2 + $0x90] sm:$0xff] %vm440, %v475
  %485 = vst.msk [vmem:[#allocation2 + $0xa0] sm:$0xf] %vm444, %v477
  %486 = vrot.lane.b32.xlu0 %v446, 93
  %v487 = vpop.permute.xlu0 %486
  %488 = vrot.lane.b32.xlu0 %v448, 93
  %v489 = vpop.permute.xlu0 %488
  %490 = vrot.lane.b32.xlu0 %v450, 93
  %v491 = vpop.permute.xlu0 %490
  %492 = vrot.lane.b32.xlu0 %v452, 93
  %v493 = vpop.permute.xlu0 %492
  %498 = vst.msk [vmem:[#allocation2 + $0xa0] sm:$0xf0] %vm465, %v487
  %499 = vst.msk [vmem:[#allocation2 + $0xb0] sm:$0xff] %vm440, %v489
  %500 = vst.msk [vmem:[#allocation2 + $0xc0] sm:$0xff] %vm440, %v491
  %501 = vst.msk [vmem:[#allocation2 + $0xd0] sm:$0xff] %vm440, %v493
  %502 = vrot.lane.b32.xlu0 %v420, 92
  %v503 = vpop.permute.xlu0 %502
  %504 = vrot.lane.b32.xlu0 %v421, 92
  %v505 = vpop.permute.xlu0 %504
  %506 = vrot.lane.b32.xlu0 %v422, 92
  %v507 = vpop.permute.xlu0 %506
  %508 = vrot.lane.b32.xlu0 %v423, 92
  %v509 = vpop.permute.xlu0 %508
  %514 = vst.msk [vmem:[#allocation2 + $0xe0] sm:$0xff] %vm440, %v503
  %515 = vst.msk [vmem:[#allocation2 + $0xf0] sm:$0xff] %vm440, %v505
  %516 = vst.msk [vmem:[#allocation2 + $0x100] sm:$0xff] %vm440, %v507
  %517 = vst.msk [vmem:[#allocation2 + $0x110] sm:$0xf] %vm444, %v509
  %s518 = scalar_lea.vmem %s0, 160
  %v519 = vld [vmem:[%s518] sm:$0xff]
  %v520 = vld [vmem:[%s518 + $0x8] sm:$0xff]
  %v521 = vld [vmem:[%s518 + $0x10] sm:$0xff]
  %v522 = vld [vmem:[%s518 + $0x18] sm:$0xf]
  %527 = vrot.lane.b32.xlu0 %v519, 120
  %v528 = vpop.permute.xlu0 %527
  %529 = vrot.lane.b32.xlu0 %v520, 120
  %v530 = vpop.permute.xlu0 %529
  %531 = vrot.lane.b32.xlu0 %v521, 120
  %v532 = vpop.permute.xlu0 %531
  %533 = vrot.lane.b32.xlu0 %v522, 120
  %v534 = vpop.permute.xlu0 %533
  %vm539 = vcmask 1048512
  %540 = vst.msk [vmem:[#allocation2] sm:$0xff] %vm539, %v528
  %vm541 = vcmask 130048
  %542 = vst.msk [vmem:[#allocation2 + $0x8] sm:$0xff] %vm541, %v528
  %543 = vst.msk [vmem:[#allocation2 + $0x10] sm:$0xff] %vm539, %v530
  %544 = vst.msk [vmem:[#allocation2 + $0x18] sm:$0xff] %vm541, %v530
  %545 = vst.msk [vmem:[#allocation2 + $0x20] sm:$0xff] %vm539, %v532
  %546 = vst.msk [vmem:[#allocation2 + $0x28] sm:$0xff] %vm541, %v532
  %vm547 = vcmask 1044416
  %548 = vst.msk [vmem:[#allocation2 + $0x30] sm:$0xf] %vm547, %v534
  %vm549 = vcmask 125952
  %550 = vst.msk [vmem:[#allocation2 + $0x38] sm:$0xf] %vm549, %v534
  %v551 = vrot.slane %v519, 4
  %v552 = vrot.slane %v520, 4
  %v553 = vsel %vm49, %v551, %v552
  %v554 = vrot.slane %v521, 4
  %v555 = vsel %vm49, %v552, %v554
  %v556 = vrot.slane %v522, 4
  %v557 = vsel %vm49, %v554, %v556
  %558 = vrot.lane.b32.xlu0 %v551, 119
  %v559 = vpop.permute.xlu0 %558
  %560 = vrot.lane.b32.xlu0 %v553, 119
  %v561 = vpop.permute.xlu0 %560
  %562 = vrot.lane.b32.xlu0 %v555, 119
  %v563 = vpop.permute.xlu0 %562
  %564 = vrot.lane.b32.xlu0 %v557, 119
  %v565 = vpop.permute.xlu0 %564
  %vm570 = vcmask 1048516
  %571 = vst.msk [vmem:[#allocation2 + $0x30] sm:$0xf0] %vm570, %v559
  %vm572 = vcmask 130052
  %573 = vst.msk [vmem:[#allocation2 + $0x38] sm:$0xf0] %vm572, %v559
  %574 = vst.msk [vmem:[#allocation2 + $0x40] sm:$0xff] %vm539, %v561
  %575 = vst.msk [vmem:[#allocation2 + $0x48] sm:$0xff] %vm541, %v561
  %576 = vst.msk [vmem:[#allocation2 + $0x50] sm:$0xff] %vm539, %v563
  %577 = vst.msk [vmem:[#allocation2 + $0x58] sm:$0xff] %vm541, %v563
  %578 = vst.msk [vmem:[#allocation2 + $0x60] sm:$0xff] %vm539, %v565
  %579 = vst.msk [vmem:[#allocation2 + $0x68] sm:$0xff] %vm541, %v565
  %580 = vrot.lane.b32.xlu0 %v519, 118
  %v581 = vpop.permute.xlu0 %580
  %582 = vrot.lane.b32.xlu0 %v520, 118
  %v583 = vpop.permute.xlu0 %582
  %584 = vrot.lane.b32.xlu0 %v521, 118
  %v585 = vpop.permute.xlu0 %584
  %586 = vrot.lane.b32.xlu0 %v522, 118
  %v587 = vpop.permute.xlu0 %586
  %592 = vst.msk [vmem:[#allocation2 + $0x70] sm:$0xff] %vm539, %v581
  %593 = vst.msk [vmem:[#allocation2 + $0x78] sm:$0xff] %vm541, %v581
  %594 = vst.msk [vmem:[#allocation2 + $0x80] sm:$0xff] %vm539, %v583
  %595 = vst.msk [vmem:[#allocation2 + $0x88] sm:$0xff] %vm541, %v583
  %596 = vst.msk [vmem:[#allocation2 + $0x90] sm:$0xff] %vm539, %v585
  %597 = vst.msk [vmem:[#allocation2 + $0x98] sm:$0xff] %vm541, %v585
  %598 = vst.msk [vmem:[#allocation2 + $0xa0] sm:$0xf] %vm547, %v587
  %599 = vst.msk [vmem:[#allocation2 + $0xa8] sm:$0xf] %vm549, %v587
  %600 = vrot.lane.b32.xlu0 %v551, 117
  %v601 = vpop.permute.xlu0 %600
  %602 = vrot.lane.b32.xlu0 %v553, 117
  %v603 = vpop.permute.xlu0 %602
  %604 = vrot.lane.b32.xlu0 %v555, 117
  %v605 = vpop.permute.xlu0 %604
  %606 = vrot.lane.b32.xlu0 %v557, 117
  %v607 = vpop.permute.xlu0 %606
  %612 = vst.msk [vmem:[#allocation2 + $0xa0] sm:$0xf0] %vm570, %v601
  %613 = vst.msk [vmem:[#allocation2 + $0xa8] sm:$0xf0] %vm572, %v601
  %614 = vst.msk [vmem:[#allocation2 + $0xb0] sm:$0xff] %vm539, %v603
  %615 = vst.msk [vmem:[#allocation2 + $0xb8] sm:$0xff] %vm541, %v603
  %616 = vst.msk [vmem:[#allocation2 + $0xc0] sm:$0xff] %vm539, %v605
  %617 = vst.msk [vmem:[#allocation2 + $0xc8] sm:$0xff] %vm541, %v605
  %618 = vst.msk [vmem:[#allocation2 + $0xd0] sm:$0xff] %vm539, %v607
  %619 = vst.msk [vmem:[#allocation2 + $0xd8] sm:$0xff] %vm541, %v607
  %620 = vrot.lane.b32.xlu0 %v519, 116
  %v621 = vpop.permute.xlu0 %620
  %622 = vrot.lane.b32.xlu0 %v520, 116
  %v623 = vpop.permute.xlu0 %622
  %624 = vrot.lane.b32.xlu0 %v521, 116
  %v625 = vpop.permute.xlu0 %624
  %626 = vrot.lane.b32.xlu0 %v522, 116
  %v627 = vpop.permute.xlu0 %626
  %632 = vst.msk [vmem:[#allocation2 + $0xe0] sm:$0xff] %vm539, %v621
  %633 = vst.msk [vmem:[#allocation2 + $0xe8] sm:$0xff] %vm541, %v621
  %634 = vst.msk [vmem:[#allocation2 + $0xf0] sm:$0xff] %vm539, %v623
  %635 = vst.msk [vmem:[#allocation2 + $0xf8] sm:$0xff] %vm541, %v623
  %636 = vst.msk [vmem:[#allocation2 + $0x100] sm:$0xff] %vm539, %v625
  %637 = vst.msk [vmem:[#allocation2 + $0x108] sm:$0xff] %vm541, %v625
  %638 = vst.msk [vmem:[#allocation2 + $0x110] sm:$0xf] %vm547, %v627
  %639 = vst.msk [vmem:[#allocation2 + $0x118] sm:$0xf] %vm549, %v627
  %s640 = scalar_lea.vmem %s0, 192
  %v641 = vld [vmem:[%s640] sm:$0xff]
  %v642 = vld [vmem:[%s640 + $0x8] sm:$0xff]
  %v643 = vld [vmem:[%s640 + $0x10] sm:$0xff]
  %v644 = vld [vmem:[%s640 + $0x18] sm:$0xf]
  %649 = vrot.lane.b32.xlu0 %v641, 16
  %v650 = vpop.permute.xlu0 %649
  %651 = vrot.lane.b32.xlu0 %v642, 16
  %v652 = vpop.permute.xlu0 %651
  %653 = vrot.lane.b32.xlu0 %v643, 16
  %v654 = vpop.permute.xlu0 %653
  %655 = vrot.lane.b32.xlu0 %v644, 16
  %v656 = vpop.permute.xlu0 %655
  %vm661 = vcmask 326784
  %662 = vst.msk [vmem:[#allocation2 + $0x8] sm:$0xff] %vm661, %v650
  %663 = vst.msk [vmem:[#allocation2 + $0x18] sm:$0xff] %vm661, %v652
  %664 = vst.msk [vmem:[#allocation2 + $0x28] sm:$0xff] %vm661, %v654
  %vm665 = vcmask 322688
  %666 = vst.msk [vmem:[#allocation2 + $0x38] sm:$0xf] %vm665, %v656
  %v667 = vrot.slane %v641, 4
  %v668 = vrot.slane %v642, 4
  %v669 = vsel %vm49, %v667, %v668
  %v670 = vrot.slane %v643, 4
  %v671 = vsel %vm49, %v668, %v670
  %v672 = vrot.slane %v644, 4
  %v673 = vsel %vm49, %v670, %v672
  %674 = vrot.lane.b32.xlu0 %v667, 15
  %v675 = vpop.permute.xlu0 %674
  %676 = vrot.lane.b32.xlu0 %v669, 15
  %v677 = vpop.permute.xlu0 %676
  %678 = vrot.lane.b32.xlu0 %v671, 15
  %v679 = vpop.permute.xlu0 %678
  %680 = vrot.lane.b32.xlu0 %v673, 15
  %v681 = vpop.permute.xlu0 %680
  %vm686 = vcmask 326788
  %687 = vst.msk [vmem:[#allocation2 + $0x38] sm:$0xf0] %vm686, %v675
  %688 = vst.msk [vmem:[#allocation2 + $0x48] sm:$0xff] %vm661, %v677
  %689 = vst.msk [vmem:[#allocation2 + $0x58] sm:$0xff] %vm661, %v679
  %690 = vst.msk [vmem:[#allocation2 + $0x68] sm:$0xff] %vm661, %v681
  %691 = vrot.lane.b32.xlu0 %v641, 14
  %v692 = vpop.permute.xlu0 %691
  %693 = vrot.lane.b32.xlu0 %v642, 14
  %v694 = vpop.permute.xlu0 %693
  %695 = vrot.lane.b32.xlu0 %v643, 14
  %v696 = vpop.permute.xlu0 %695
  %697 = vrot.lane.b32.xlu0 %v644, 14
  %v698 = vpop.permute.xlu0 %697
  %703 = vst.msk [vmem:[#allocation2 + $0x78] sm:$0xff] %vm661, %v692
  %704 = vst.msk [vmem:[#allocation2 + $0x88] sm:$0xff] %vm661, %v694
  %705 = vst.msk [vmem:[#allocation2 + $0x98] sm:$0xff] %vm661, %v696
  %706 = vst.msk [vmem:[#allocation2 + $0xa8] sm:$0xf] %vm665, %v698
  %707 = vrot.lane.b32.xlu0 %v667, 13
  %v708 = vpop.permute.xlu0 %707
  %709 = vrot.lane.b32.xlu0 %v669, 13
  %v710 = vpop.permute.xlu0 %709
  %711 = vrot.lane.b32.xlu0 %v671, 13
  %v712 = vpop.permute.xlu0 %711
  %713 = vrot.lane.b32.xlu0 %v673, 13
  %v714 = vpop.permute.xlu0 %713
  %719 = vst.msk [vmem:[#allocation2 + $0xa8] sm:$0xf0] %vm686, %v708
  %720 = vst.msk [vmem:[#allocation2 + $0xb8] sm:$0xff] %vm661, %v710
  %721 = vst.msk [vmem:[#allocation2 + $0xc8] sm:$0xff] %vm661, %v712
  %722 = vst.msk [vmem:[#allocation2 + $0xd8] sm:$0xff] %vm661, %v714
  %723 = vrot.lane.b32.xlu0 %v641, 12
  %v724 = vpop.permute.xlu0 %723
  %725 = vrot.lane.b32.xlu0 %v642, 12
  %v726 = vpop.permute.xlu0 %725
  %727 = vrot.lane.b32.xlu0 %v643, 12
  %v728 = vpop.permute.xlu0 %727
  %729 = vrot.lane.b32.xlu0 %v644, 12
  %v730 = vpop.permute.xlu0 %729
  %735 = vst.msk [vmem:[#allocation2 + $0xe8] sm:$0xff] %vm661, %v724
  %736 = vst.msk [vmem:[#allocation2 + $0xf8] sm:$0xff] %vm661, %v726
  %737 = vst.msk [vmem:[#allocation2 + $0x108] sm:$0xff] %vm661, %v728
  %738 = vst.msk [vmem:[#allocation2 + $0x118] sm:$0xf] %vm665, %v730
  %s739 = scalar_lea.vmem %s0, 224
  %v740 = vld [vmem:[%s739] sm:$0xff]
  %v741 = vld [vmem:[%s739 + $0x8] sm:$0xff]
  %v742 = vld [vmem:[%s739 + $0x10] sm:$0xff]
  %v743 = vld [vmem:[%s739 + $0x18] sm:$0xf]
  %748 = vrot.lane.b32.xlu0 %v740, 40
  %v749 = vpop.permute.xlu0 %748
  %750 = vrot.lane.b32.xlu0 %v741, 40
  %v751 = vpop.permute.xlu0 %750
  %752 = vrot.lane.b32.xlu0 %v742, 40
  %v753 = vpop.permute.xlu0 %752
  %754 = vrot.lane.b32.xlu0 %v743, 40
  %v755 = vpop.permute.xlu0 %754
  %vm760 = vcmask 523584
  %761 = vst.msk [vmem:[#allocation2 + $0x8] sm:$0xff] %vm760, %v749
  %762 = vst.msk [vmem:[#allocation2 + $0x18] sm:$0xff] %vm760, %v751
  %763 = vst.msk [vmem:[#allocation2 + $0x28] sm:$0xff] %vm760, %v753
  %vm764 = vcmask 519488
  %765 = vst.msk [vmem:[#allocation2 + $0x38] sm:$0xf] %vm764, %v755
  %v766 = vrot.slane %v740, 4
  %v767 = vrot.slane %v741, 4
  %v768 = vsel %vm49, %v766, %v767
  %v769 = vrot.slane %v742, 4
  %v770 = vsel %vm49, %v767, %v769
  %v771 = vrot.slane %v743, 4
  %v772 = vsel %vm49, %v769, %v771
  %773 = vrot.lane.b32.xlu0 %v766, 39
  %v774 = vpop.permute.xlu0 %773
  %775 = vrot.lane.b32.xlu0 %v768, 39
  %v776 = vpop.permute.xlu0 %775
  %777 = vrot.lane.b32.xlu0 %v770, 39
  %v778 = vpop.permute.xlu0 %777
  %779 = vrot.lane.b32.xlu0 %v772, 39
  %v780 = vpop.permute.xlu0 %779
  %vm785 = vcmask 523588
  %786 = vst.msk [vmem:[#allocation2 + $0x38] sm:$0xf0] %vm785, %v774
  %787 = vst.msk [vmem:[#allocation2 + $0x48] sm:$0xff] %vm760, %v776
  %788 = vst.msk [vmem:[#allocation2 + $0x58] sm:$0xff] %vm760, %v778
  %789 = vst.msk [vmem:[#allocation2 + $0x68] sm:$0xff] %vm760, %v780
  %790 = vrot.lane.b32.xlu0 %v740, 38
  %v791 = vpop.permute.xlu0 %790
  %792 = vrot.lane.b32.xlu0 %v741, 38
  %v793 = vpop.permute.xlu0 %792
  %794 = vrot.lane.b32.xlu0 %v742, 38
  %v795 = vpop.permute.xlu0 %794
  %796 = vrot.lane.b32.xlu0 %v743, 38
  %v797 = vpop.permute.xlu0 %796
  %802 = vst.msk [vmem:[#allocation2 + $0x78] sm:$0xff] %vm760, %v791
  %803 = vst.msk [vmem:[#allocation2 + $0x88] sm:$0xff] %vm760, %v793
  %804 = vst.msk [vmem:[#allocation2 + $0x98] sm:$0xff] %vm760, %v795
  %805 = vst.msk [vmem:[#allocation2 + $0xa8] sm:$0xf] %vm764, %v797
  %806 = vrot.lane.b32.xlu0 %v766, 37
  %v807 = vpop.permute.xlu0 %806
  %808 = vrot.lane.b32.xlu0 %v768, 37
  %v809 = vpop.permute.xlu0 %808
  %810 = vrot.lane.b32.xlu0 %v770, 37
  %v811 = vpop.permute.xlu0 %810
  %812 = vrot.lane.b32.xlu0 %v772, 37
  %v813 = vpop.permute.xlu0 %812
  %818 = vst.msk [vmem:[#allocation2 + $0xa8] sm:$0xf0] %vm785, %v807
  %819 = vst.msk [vmem:[#allocation2 + $0xb8] sm:$0xff] %vm760, %v809
  %820 = vst.msk [vmem:[#allocation2 + $0xc8] sm:$0xff] %vm760, %v811
  %821 = vst.msk [vmem:[#allocation2 + $0xd8] sm:$0xff] %vm760, %v813
  %822 = vrot.lane.b32.xlu0 %v740, 36
  %v823 = vpop.permute.xlu0 %822
  %824 = vrot.lane.b32.xlu0 %v741, 36
  %v825 = vpop.permute.xlu0 %824
  %826 = vrot.lane.b32.xlu0 %v742, 36
  %v827 = vpop.permute.xlu0 %826
  %828 = vrot.lane.b32.xlu0 %v743, 36
  %v829 = vpop.permute.xlu0 %828
  %834 = vst.msk [vmem:[#allocation2 + $0xe8] sm:$0xff] %vm760, %v823
  %835 = vst.msk [vmem:[#allocation2 + $0xf8] sm:$0xff] %vm760, %v825
  %836 = vst.msk [vmem:[#allocation2 + $0x108] sm:$0xff] %vm760, %v827
  %837 = vst.msk [vmem:[#allocation2 + $0x118] sm:$0xf] %vm764, %v829
  %v838 = vld [vmem:[%s1] sm:$0xff]
  %v839 = vld [vmem:[%s1 + $0x8] sm:$0xff]
  %v840 = vld [vmem:[%s1 + $0x10] sm:$0xff]
  %v841 = vld [vmem:[%s1 + $0x18] sm:$0xff]
  %v842 = vld [vmem:[%s1 + $0x20] sm:$0xff]
  %v843 = vld [vmem:[%s1 + $0x28] sm:$0xff]
  %v844 = vld [vmem:[%s1 + $0x30] sm:$0xff]
  %v845 = vld [vmem:[%s1 + $0x38] sm:$0xff]
  %v846 = vld [vmem:[%s1 + $0x40] sm:$0xff]
  %v847 = vld [vmem:[%s1 + $0x48] sm:$0xff]
  %v848 = vld [vmem:[%s1 + $0x50] sm:$0xff]
  %v849 = vld [vmem:[%s1 + $0x58] sm:$0xff]
  %v850 = vld [vmem:[%s1 + $0x60] sm:$0xff]
  %v851 = vld [vmem:[%s1 + $0x68] sm:$0xff]
  %v852 = vld [vmem:[%s1 + $0x70] sm:$0xff]
  %v853 = vld [vmem:[%s1 + $0x78] sm:$0xff]
  %v854 = vld [vmem:[%s1 + $0x80] sm:$0xff]
  %v855 = vld [vmem:[%s1 + $0x88] sm:$0xff]
  %v856 = vld [vmem:[%s1 + $0x90] sm:$0xff]
  %v857 = vld [vmem:[%s1 + $0x98] sm:$0xff]
  %v858 = vld [vmem:[%s1 + $0xa0] sm:$0xff]
  %v859 = vld [vmem:[%s1 + $0xa8] sm:$0xff]
  %v860 = vld [vmem:[%s1 + $0xb0] sm:$0xff]
  %v861 = vld [vmem:[%s1 + $0xb8] sm:$0xff]
  %v862 = vld [vmem:[%s1 + $0xc0] sm:$0xff]
  %v863 = vld [vmem:[%s1 + $0xc8] sm:$0xff]
  %v864 = vld [vmem:[%s1 + $0xd0] sm:$0xff]
  %v865 = vld [vmem:[%s1 + $0xd8] sm:$0xff]
  %v866 = vld [vmem:[%s1 + $0xe0] sm:$0xff]
  %v867 = vld [vmem:[%s1 + $0xe8] sm:$0xff]
  %v868 = vld [vmem:[%s1 + $0xf0] sm:$0xff]
  %v869 = vld [vmem:[%s1 + $0xf8] sm:$0xff]
  %v870 = vld [vmem:[%s1 + $0x100] sm:$0xff]
  %v871 = vld [vmem:[%s1 + $0x108] sm:$0xff]
  %v872 = vld [vmem:[%s1 + $0x110] sm:$0xff]
  %v873 = vld [vmem:[%s1 + $0x118] sm:$0xff]
  %v874 = vld [vmem:[#allocation2] sm:$0xff]
  %v875 = vld [vmem:[#allocation2 + $0x8] sm:$0xff]
  %v876 = vld [vmem:[#allocation2 + $0x10] sm:$0xff]
  %v877 = vld [vmem:[#allocation2 + $0x18] sm:$0xff]
  %v878 = vld [vmem:[#allocation2 + $0x20] sm:$0xff]
  %v879 = vld [vmem:[#allocation2 + $0x28] sm:$0xff]
  %v880 = vld [vmem:[#allocation2 + $0x30] sm:$0xff]
  %v881 = vld [vmem:[#allocation2 + $0x38] sm:$0xff]
  %v882 = vld [vmem:[#allocation2 + $0x40] sm:$0xff]
  %v883 = vld [vmem:[#allocation2 + $0x48] sm:$0xff]
  %v884 = vld [vmem:[#allocation2 + $0x50] sm:$0xff]
  %v885 = vld [vmem:[#allocation2 + $0x58] sm:$0xff]
  %v886 = vld [vmem:[#allocation2 + $0x60] sm:$0xff]
  %v887 = vld [vmem:[#allocation2 + $0x68] sm:$0xff]
  %v888 = vld [vmem:[#allocation2 + $0x70] sm:$0xff]
  %v889 = vld [vmem:[#allocation2 + $0x78] sm:$0xff]
  %v890 = vld [vmem:[#allocation2 + $0x80] sm:$0xff]
  %v891 = vld [vmem:[#allocation2 + $0x88] sm:$0xff]
  %v892 = vld [vmem:[#allocation2 + $0x90] sm:$0xff]
  %v893 = vld [vmem:[#allocation2 + $0x98] sm:$0xff]
  %v894 = vld [vmem:[#allocation2 + $0xa0] sm:$0xff]
  %v895 = vld [vmem:[#allocation2 + $0xa8] sm:$0xff]
  %v896 = vld [vmem:[#allocation2 + $0xb0] sm:$0xff]
  %v897 = vld [vmem:[#allocation2 + $0xb8] sm:$0xff]
  %v898 = vld [vmem:[#allocation2 + $0xc0] sm:$0xff]
  %v899 = vld [vmem:[#allocation2 + $0xc8] sm:$0xff]
  %v900 = vld [vmem:[#allocation2 + $0xd0] sm:$0xff]
  %v901 = vld [vmem:[#allocation2 + $0xd8] sm:$0xff]
  %v902 = vld [vmem:[#allocation2 + $0xe0] sm:$0xff]
  %v903 = vld [vmem:[#allocation2 + $0xe8] sm:$0xff]
  %v904 = vld [vmem:[#allocation2 + $0xf0] sm:$0xff]
  %v905 = vld [vmem:[#allocation2 + $0xf8] sm:$0xff]
  %v906 = vld [vmem:[#allocation2 + $0x100] sm:$0xff]
  %v907 = vld [vmem:[#allocation2 + $0x108] sm:$0xff]
  %v908 = vld [vmem:[#allocation2 + $0x110] sm:$0xf]
  %v909 = vld [vmem:[#allocation2 + $0x118] sm:$0xf]
  %v910 = vld [vmem:[%s2] sm:$0xff]
  %v911 = vld [vmem:[%s2 + $0x8] sm:$0xff]
  %v912 = vld [vmem:[%s2 + $0x10] sm:$0xff]
  %v913 = vld [vmem:[%s2 + $0x18] sm:$0xff]
  %v914 = vld [vmem:[%s2 + $0x20] sm:$0xff]
  %v915 = vld [vmem:[%s2 + $0x28] sm:$0xff]
  %v916 = vld [vmem:[%s2 + $0x30] sm:$0xff]
  %v917 = vld [vmem:[%s2 + $0x38] sm:$0xff]
  %v918 = vld [vmem:[%s2 + $0x40] sm:$0xff]
  %v919 = vld [vmem:[%s2 + $0x48] sm:$0xff]
  %v920 = vld [vmem:[%s2 + $0x50] sm:$0xff]
  %v921 = vld [vmem:[%s2 + $0x58] sm:$0xff]
  %v922 = vld [vmem:[%s2 + $0x60] sm:$0xff]
  %v923 = vld [vmem:[%s2 + $0x68] sm:$0xff]
  %v924 = vld [vmem:[%s2 + $0x70] sm:$0xff]
  %v925 = vld [vmem:[%s2 + $0x78] sm:$0xff]
  %v926 = vld [vmem:[%s2 + $0x80] sm:$0xff]
  %v927 = vld [vmem:[%s2 + $0x88] sm:$0xff]
  %929 = vset.pattern.permute.xlu0 0
  %930 = vperm.xlu0 %929, %v910
  %v931 = vpop.permute.xlu0 %930
  %934 = vset.pattern.permute.xlu0 0
  %935 = vperm.xlu0 %934, %v911
  %v936 = vpop.permute.xlu0 %935
  %939 = vset.pattern.permute.xlu0 0
  %940 = vperm.xlu0 %939, %v912
  %v941 = vpop.permute.xlu0 %940
  %944 = vset.pattern.permute.xlu0 0
  %945 = vperm.xlu0 %944, %v913
  %v946 = vpop.permute.xlu0 %945
  %949 = vset.pattern.permute.xlu0 0
  %950 = vperm.xlu0 %949, %v914
  %v951 = vpop.permute.xlu0 %950
  %954 = vset.pattern.permute.xlu0 0
  %955 = vperm.xlu0 %954, %v915
  %v956 = vpop.permute.xlu0 %955
  %959 = vset.pattern.permute.xlu0 0
  %960 = vperm.xlu0 %959, %v916
  %v961 = vpop.permute.xlu0 %960
  %964 = vset.pattern.permute.xlu0 0
  %965 = vperm.xlu0 %964, %v917
  %v966 = vpop.permute.xlu0 %965
  %969 = vset.pattern.permute.xlu0 0
  %970 = vperm.xlu0 %969, %v918
  %v971 = vpop.permute.xlu0 %970
  %974 = vset.pattern.permute.xlu0 0
  %975 = vperm.xlu0 %974, %v919
  %v976 = vpop.permute.xlu0 %975
  %979 = vset.pattern.permute.xlu0 0
  %980 = vperm.xlu0 %979, %v920
  %v981 = vpop.permute.xlu0 %980
  %984 = vset.pattern.permute.xlu0 0
  %985 = vperm.xlu0 %984, %v921
  %v986 = vpop.permute.xlu0 %985
  %989 = vset.pattern.permute.xlu0 0
  %990 = vperm.xlu0 %989, %v922
  %v991 = vpop.permute.xlu0 %990
  %994 = vset.pattern.permute.xlu0 0
  %995 = vperm.xlu0 %994, %v923
  %v996 = vpop.permute.xlu0 %995
  %999 = vset.pattern.permute.xlu0 0
  %1000 = vperm.xlu0 %999, %v924
  %v1001 = vpop.permute.xlu0 %1000
  %1004 = vset.pattern.permute.xlu0 0
  %1005 = vperm.xlu0 %1004, %v925
  %v1006 = vpop.permute.xlu0 %1005
  %1009 = vset.pattern.permute.xlu0 0
  %1010 = vperm.xlu0 %1009, %v926
  %v1011 = vpop.permute.xlu0 %1010
  %1014 = vset.pattern.permute.xlu0 0
  %1015 = vperm.xlu0 %1014, %v927
  %v1016 = vpop.permute.xlu0 %1015
  %vm1018 = vcmask 97280
  %v1020 = vsel %vm1018, %v839, 0
  %v1023 = vsel %vm1018, %v841, 0
  %v1026 = vsel %vm1018, %v843, 0
  %v1029 = vsel %vm1018, %v845, 0
  %v1032 = vsel %vm1018, %v847, 0
  %v1035 = vsel %vm1018, %v849, 0
  %v1038 = vsel %vm1018, %v851, 0
  %v1041 = vsel %vm1018, %v853, 0
  %v1044 = vsel %vm1018, %v855, 0
  %v1047 = vsel %vm1018, %v857, 0
  %v1050 = vsel %vm1018, %v859, 0
  %v1053 = vsel %vm1018, %v861, 0
  %v1056 = vsel %vm1018, %v863, 0
  %v1059 = vsel %vm1018, %v865, 0
  %v1062 = vsel %vm1018, %v867, 0
  %v1065 = vsel %vm1018, %v869, 0
  %v1068 = vsel %vm1018, %v871, 0
  %v1071 = vsel %vm1018, %v873, 0
  %v1074 = vsel %vm49, %v908, 0
  %v1077 = vsel %vm49, %v909, 0
  %1079 = vmatprep.subr.mxu0 %v875
  %1080 = vmatpush1.msra.mxu0 %v874
  %1081 = vmatprep.subr.mxu0 %v877
  %1082 = vmatpush1.msra.mxu0 %v876
  %1083 = vmatprep.subr.mxu0 %v879
  %1084 = vmatpush1.msra.mxu0 %v878
  %1085 = vmatprep.subr.mxu0 %v881
  %1086 = vmatpush1.msra.mxu0 %v880
  %1087 = vmatprep.subr.mxu0 %v883
  %1088 = vmatpush1.msra.mxu0 %v882
  %1089 = vmatprep.subr.mxu0 %v885
  %1090 = vmatpush1.msra.mxu0 %v884
  %1091 = vmatprep.subr.mxu0 %v887
  %1092 = vmatpush1.msra.mxu0 %v886
  %1093 = vmatprep.subr.mxu0 %v889
  %1094 = vmatpush1.msra.mxu0 %v888
  %1095 = vmatprep.subr.mxu0 %v891
  %1096 = vmatpush1.msra.mxu0 %v890
  %1097 = vmatprep.subr.mxu0 %v893
  %1098 = vmatpush1.msra.mxu0 %v892
  %1099 = vmatprep.subr.mxu0 %v895
  %1100 = vmatpush1.msra.mxu0 %v894
  %1101 = vmatprep.subr.mxu0 %v897
  %1102 = vmatpush1.msra.mxu0 %v896
  %1103 = vmatprep.subr.mxu0 %v899
  %1104 = vmatpush1.msra.mxu0 %v898
  %1105 = vmatprep.subr.mxu0 %v901
  %1106 = vmatpush1.msra.mxu0 %v900
  %1107 = vmatprep.subr.mxu0 %v903
  %1108 = vmatpush1.msra.mxu0 %v902
  %1109 = vmatprep.subr.mxu0 %v905
  %1110 = vmatpush1.msra.mxu0 %v904
  %1111 = vmatprep.subr.mxu0 %v907
  %1112 = vmatpush1.msra.mxu0 %v906
  %1113 = vmatprep.subr.mxu0 %v1077
  %1114 = vmatpush1.msra.mxu0 %v1074
  %1115 = vmatprep.subr.mxu0 0.0
  %1116 = vmatpush1.msra.mxu0 0.0
  %1117 = vmatprep.subr.mxu0 0.0
  %1118 = vmatpush1.msra.mxu0 0.0
  %1119 = vmatprep.subr.mxu0 0.0
  %1120 = vmatpush1.msra.mxu0 0.0
  %1121 = vmatprep.subr.mxu0 0.0
  %1122 = vmatpush1.msra.mxu0 0.0
  %1123 = vmatprep.subr.mxu0 0.0
  %1124 = vmatpush1.msra.mxu0 0.0
  %1125 = vmatprep.subr.mxu0 0.0
  %1126 = vmatpush1.msra.mxu0 0.0
  %1127 = vmatprep.subr.mxu0 0.0
  %1128 = vmatpush1.msra.mxu0 0.0
  %1129 = vmatprep.subr.mxu0 0.0
  %1130 = vmatpush1.msra.mxu0 0.0
  %1131 = vmatprep.subr.mxu0 0.0
  %1132 = vmatpush1.msra.mxu0 0.0
  %1133 = vmatprep.subr.mxu0 0.0
  %1134 = vmatpush1.msra.mxu0 0.0
  %1135 = vmatprep.subr.mxu0 0.0
  %1136 = vmatpush1.msra.mxu0 0.0
  %1137 = vmatprep.subr.mxu0 0.0
  %1138 = vmatpush1.msra.mxu0 0.0
  %1139 = vmatprep.subr.mxu0 0.0
  %1140 = vmatpush1.msra.mxu0 0.0
  %1141 = vmatprep.subr.mxu0 0.0
  %1142 = vmatpush1.msra.mxu0 0.0
  %1143 = vmatprep.mubr.f32.mxu0 %v1020
  %1144 = vmatmul.mubr.f32.gmra.mrb[0].mxu0 %v838
  %v1145 = vpop.f32.mrb[0].mxu0
  %v1146 = vadd.f32 %v931, %v1145
  %v1147 = vpop.f32.mrb[0].mxu0
  %v1148 = vadd.f32 %v931, %v1147
  %1149 = vmatprep.mubr.f32.mxu0 %v1023
  %1150 = vmatmul.mubr.f32.gmra.mrb[0].mxu0 %v840
  %v1151 = vpop.f32.mrb[0].mxu0
  %v1152 = vadd.f32 %v936, %v1151
  %v1153 = vpop.f32.mrb[0].mxu0
  %v1154 = vadd.f32 %v936, %v1153
  %1155 = vmatprep.mubr.f32.mxu0 %v1026
  %1156 = vmatmul.mubr.f32.gmra.mrb[0].mxu0 %v842
  %v1157 = vpop.f32.mrb[0].mxu0
  %v1158 = vadd.f32 %v941, %v1157
  %v1159 = vpop.f32.mrb[0].mxu0
  %v1160 = vadd.f32 %v941, %v1159
  %1161 = vmatprep.mubr.f32.mxu0 %v1029
  %1162 = vmatmul.mubr.f32.gmra.mrb[0].mxu0 %v844
  %v1163 = vpop.f32.mrb[0].mxu0
  %v1164 = vadd.f32 %v946, %v1163
  %v1165 = vpop.f32.mrb[0].mxu0
  %v1166 = vadd.f32 %v946, %v1165
  %1167 = vmatprep.mubr.f32.mxu0 %v1032
  %1168 = vmatmul.mubr.f32.gmra.mrb[0].mxu0 %v846
  %v1169 = vpop.f32.mrb[0].mxu0
  %v1170 = vadd.f32 %v951, %v1169
  %v1171 = vpop.f32.mrb[0].mxu0
  %v1172 = vadd.f32 %v951, %v1171
  %1173 = vmatprep.mubr.f32.mxu0 %v1035
  %1174 = vmatmul.mubr.f32.gmra.mrb[0].mxu0 %v848
  %v1175 = vpop.f32.mrb[0].mxu0
  %v1176 = vadd.f32 %v956, %v1175
  %v1177 = vpop.f32.mrb[0].mxu0
  %v1178 = vadd.f32 %v956, %v1177
  %1179 = vmatprep.mubr.f32.mxu0 %v1038
  %1180 = vmatmul.mubr.f32.gmra.mrb[0].mxu0 %v850
  %v1181 = vpop.f32.mrb[0].mxu0
  %v1182 = vadd.f32 %v961, %v1181
  %v1183 = vpop.f32.mrb[0].mxu0
  %v1184 = vadd.f32 %v961, %v1183
  %1185 = vmatprep.mubr.f32.mxu0 %v1041
  %1186 = vmatmul.mubr.f32.gmra.mrb[0].mxu0 %v852
  %v1187 = vpop.f32.mrb[0].mxu0
  %v1188 = vadd.f32 %v966, %v1187
  %v1189 = vpop.f32.mrb[0].mxu0
  %v1190 = vadd.f32 %v966, %v1189
  %1191 = vmatprep.mubr.f32.mxu0 %v1044
  %1192 = vmatmul.mubr.f32.gmra.mrb[0].mxu0 %v854
  %v1193 = vpop.f32.mrb[0].mxu0
  %v1194 = vadd.f32 %v971, %v1193
  %v1195 = vpop.f32.mrb[0].mxu0
  %v1196 = vadd.f32 %v971, %v1195
  %1197 = vmatprep.mubr.f32.mxu0 %v1047
  %1198 = vmatmul.mubr.f32.gmra.mrb[0].mxu0 %v856
  %v1199 = vpop.f32.mrb[0].mxu0
  %v1200 = vadd.f32 %v976, %v1199
  %v1201 = vpop.f32.mrb[0].mxu0
  %v1202 = vadd.f32 %v976, %v1201
  %1203 = vmatprep.mubr.f32.mxu0 %v1050
  %1204 = vmatmul.mubr.f32.gmra.mrb[0].mxu0 %v858
  %v1205 = vpop.f32.mrb[0].mxu0
  %v1206 = vadd.f32 %v981, %v1205
  %v1207 = vpop.f32.mrb[0].mxu0
  %v1208 = vadd.f32 %v981, %v1207
  %1209 = vmatprep.mubr.f32.mxu0 %v1053
  %1210 = vmatmul.mubr.f32.gmra.mrb[0].mxu0 %v860
  %v1211 = vpop.f32.mrb[0].mxu0
  %v1212 = vadd.f32 %v986, %v1211
  %v1213 = vpop.f32.mrb[0].mxu0
  %v1214 = vadd.f32 %v986, %v1213
  %1215 = vmatprep.mubr.f32.mxu0 %v1056
  %1216 = vmatmul.mubr.f32.gmra.mrb[0].mxu0 %v862
  %v1217 = vpop.f32.mrb[0].mxu0
  %v1218 = vadd.f32 %v991, %v1217
  %v1219 = vpop.f32.mrb[0].mxu0
  %v1220 = vadd.f32 %v991, %v1219
  %1221 = vmatprep.mubr.f32.mxu0 %v1059
  %1222 = vmatmul.mubr.f32.gmra.mrb[0].mxu0 %v864
  %v1223 = vpop.f32.mrb[0].mxu0
  %v1224 = vadd.f32 %v996, %v1223
  %v1225 = vpop.f32.mrb[0].mxu0
  %v1226 = vadd.f32 %v996, %v1225
  %1227 = vmatprep.mubr.f32.mxu0 %v1062
  %1228 = vmatmul.mubr.f32.gmra.mrb[0].mxu0 %v866
  %v1229 = vpop.f32.mrb[0].mxu0
  %v1230 = vadd.f32 %v1001, %v1229
  %v1231 = vpop.f32.mrb[0].mxu0
  %v1232 = vadd.f32 %v1001, %v1231
  %1233 = vmatprep.mubr.f32.mxu0 %v1065
  %1234 = vmatmul.mubr.f32.gmra.mrb[0].mxu0 %v868
  %v1235 = vpop.f32.mrb[0].mxu0
  %v1236 = vadd.f32 %v1006, %v1235
  %v1237 = vpop.f32.mrb[0].mxu0
  %v1238 = vadd.f32 %v1006, %v1237
  %1239 = vmatprep.mubr.f32.mxu0 %v1068
  %1240 = vmatmul.mubr.f32.gmra.mrb[0].mxu0 %v870
  %v1241 = vpop.f32.mrb[0].mxu0
  %v1242 = vadd.f32 %v1011, %v1241
  %v1243 = vpop.f32.mrb[0].mxu0
  %v1244 = vadd.f32 %v1011, %v1243
  %1245 = vmatprep.mubr.f32.mxu0 %v1071
  %1246 = vmatmul.mubr.f32.gmra.mrb[0].mxu0 %v872
  %v1247 = vpop.f32.mrb[0].mxu0
  %v1248 = vadd.f32 %v1016, %v1247
  %v1249 = vpop.f32.mrb[0].mxu0
  %v1250 = vadd.f32 %v1016, %v1249
  %1251 = vdwg.mxu0
  %v1252 = vmax.f32 %v1146, 0.0
  %v1253 = vmax.f32 %v1148, 0.0
  %v1254 = vmax.f32 %v1152, 0.0
  %v1255 = vmax.f32 %v1154, 0.0
  %v1256 = vmax.f32 %v1158, 0.0
  %v1257 = vmax.f32 %v1160, 0.0
  %v1258 = vmax.f32 %v1164, 0.0
  %v1259 = vmax.f32 %v1166, 0.0
  %v1260 = vmax.f32 %v1170, 0.0
  %v1261 = vmax.f32 %v1172, 0.0
  %v1262 = vmax.f32 %v1176, 0.0
  %v1263 = vmax.f32 %v1178, 0.0
  %v1264 = vmax.f32 %v1182, 0.0
  %v1265 = vmax.f32 %v1184, 0.0
  %v1266 = vmax.f32 %v1188, 0.0
  %v1267 = vmax.f32 %v1190, 0.0
  %v1268 = vmax.f32 %v1194, 0.0
  %v1269 = vmax.f32 %v1196, 0.0
  %v1270 = vmax.f32 %v1200, 0.0
  %v1271 = vmax.f32 %v1202, 0.0
  %v1272 = vmax.f32 %v1206, 0.0
  %v1273 = vmax.f32 %v1208, 0.0
  %v1274 = vmax.f32 %v1212, 0.0
  %v1275 = vmax.f32 %v1214, 0.0
  %v1276 = vmax.f32 %v1218, 0.0
  %v1277 = vmax.f32 %v1220, 0.0
  %v1278 = vmax.f32 %v1224, 0.0
  %v1279 = vmax.f32 %v1226, 0.0
  %v1280 = vmax.f32 %v1230, 0.0
  %v1281 = vmax.f32 %v1232, 0.0
  %v1282 = vmax.f32 %v1236, 0.0
  %v1283 = vmax.f32 %v1238, 0.0
  %v1284 = vmax.f32 %v1242, 0.0
  %v1285 = vmax.f32 %v1244, 0.0
  %v1286 = vmax.f32 %v1248, 0.0
  %v1287 = vmax.f32 %v1250, 0.0
  %1324 = vrot.lane.b32.xlu0 %v1252, 127
  %v1325 = vpop.permute.xlu0 %1324
  %1326 = vrot.lane.b32.xlu0 %v1253, 127
  %v1327 = vpop.permute.xlu0 %1326
  %1328 = vrot.lane.b32.xlu0 %v1254, 127
  %v1329 = vpop.permute.xlu0 %1328
  %1330 = vrot.lane.b32.xlu0 %v1255, 127
  %v1331 = vpop.permute.xlu0 %1330
  %1332 = vrot.lane.b32.xlu0 %v1256, 127
  %v1333 = vpop.permute.xlu0 %1332
  %1334 = vrot.lane.b32.xlu0 %v1257, 127
  %v1335 = vpop.permute.xlu0 %1334
  %1336 = vrot.lane.b32.xlu0 %v1258, 127
  %v1337 = vpop.permute.xlu0 %1336
  %1338 = vrot.lane.b32.xlu0 %v1259, 127
  %v1339 = vpop.permute.xlu0 %1338
  %1340 = vrot.lane.b32.xlu0 %v1260, 127
  %v1341 = vpop.permute.xlu0 %1340
  %1342 = vrot.lane.b32.xlu0 %v1261, 127
  %v1343 = vpop.permute.xlu0 %1342
  %1344 = vrot.lane.b32.xlu0 %v1262, 127
  %v1345 = vpop.permute.xlu0 %1344
  %1346 = vrot.lane.b32.xlu0 %v1263, 127
  %v1347 = vpop.permute.xlu0 %1346
  %1348 = vrot.lane.b32.xlu0 %v1264, 127
  %v1349 = vpop.permute.xlu0 %1348
  %1350 = vrot.lane.b32.xlu0 %v1265, 127
  %v1351 = vpop.permute.xlu0 %1350
  %1352 = vrot.lane.b32.xlu0 %v1266, 127
  %v1353 = vpop.permute.xlu0 %1352
  %1354 = vrot.lane.b32.xlu0 %v1267, 127
  %v1355 = vpop.permute.xlu0 %1354
  %1356 = vrot.lane.b32.xlu0 %v1268, 127
  %v1357 = vpop.permute.xlu0 %1356
  %1358 = vrot.lane.b32.xlu0 %v1269, 127
  %v1359 = vpop.permute.xlu0 %1358
  %1360 = vrot.lane.b32.xlu0 %v1270, 127
  %v1361 = vpop.permute.xlu0 %1360
  %1362 = vrot.lane.b32.xlu0 %v1271, 127
  %v1363 = vpop.permute.xlu0 %1362
  %1364 = vrot.lane.b32.xlu0 %v1272, 127
  %v1365 = vpop.permute.xlu0 %1364
  %1366 = vrot.lane.b32.xlu0 %v1273, 127
  %v1367 = vpop.permute.xlu0 %1366
  %1368 = vrot.lane.b32.xlu0 %v1274, 127
  %v1369 = vpop.permute.xlu0 %1368
  %1370 = vrot.lane.b32.xlu0 %v1275, 127
  %v1371 = vpop.permute.xlu0 %1370
  %1372 = vrot.lane.b32.xlu0 %v1276, 127
  %v1373 = vpop.permute.xlu0 %1372
  %1374 = vrot.lane.b32.xlu0 %v1277, 127
  %v1375 = vpop.permute.xlu0 %1374
  %1376 = vrot.lane.b32.xlu0 %v1278, 127
  %v1377 = vpop.permute.xlu0 %1376
  %1378 = vrot.lane.b32.xlu0 %v1279, 127
  %v1379 = vpop.permute.xlu0 %1378
  %1380 = vrot.lane.b32.xlu0 %v1280, 127
  %v1381 = vpop.permute.xlu0 %1380
  %1382 = vrot.lane.b32.xlu0 %v1281, 127
  %v1383 = vpop.permute.xlu0 %1382
  %1384 = vrot.lane.b32.xlu0 %v1282, 127
  %v1385 = vpop.permute.xlu0 %1384
  %1386 = vrot.lane.b32.xlu0 %v1283, 127
  %v1387 = vpop.permute.xlu0 %1386
  %1388 = vrot.lane.b32.xlu0 %v1284, 127
  %v1389 = vpop.permute.xlu0 %1388
  %1390 = vrot.lane.b32.xlu0 %v1285, 127
  %v1391 = vpop.permute.xlu0 %1390
  %1392 = vrot.lane.b32.xlu0 %v1286, 127
  %v1393 = vpop.permute.xlu0 %1392
  %1394 = vrot.lane.b32.xlu0 %v1287, 127
  %v1395 = vpop.permute.xlu0 %1394
  %vm1396 = vcmask 1039360
  %v1397 = vsel %vm1396, %v1325, %v1327
  %v1398 = vsel %vm1396, %v1329, %v1331
  %v1399 = vsel %vm1396, %v1333, %v1335
  %v1400 = vsel %vm1396, %v1337, %v1339
  %v1401 = vsel %vm1396, %v1341, %v1343
  %v1402 = vsel %vm1396, %v1345, %v1347
  %v1403 = vsel %vm1396, %v1349, %v1351
  %v1404 = vsel %vm1396, %v1353, %v1355
  %v1405 = vsel %vm1396, %v1357, %v1359
  %v1406 = vsel %vm1396, %v1361, %v1363
  %v1407 = vsel %vm1396, %v1365, %v1367
  %v1408 = vsel %vm1396, %v1369, %v1371
  %v1409 = vsel %vm1396, %v1373, %v1375
  %v1410 = vsel %vm1396, %v1377, %v1379
  %v1411 = vsel %vm1396, %v1381, %v1383
  %v1412 = vsel %vm1396, %v1385, %v1387
  %v1413 = vsel %vm1396, %v1389, %v1391
  %v1414 = vsel %vm1396, %v1393, %v1395
  %v1451 = vmax.f32 %v1252, %v1397
  %v1452 = vmax.f32 %v1253, %v1327
  %v1453 = vmax.f32 %v1254, %v1398
  %v1454 = vmax.f32 %v1255, %v1331
  %v1455 = vmax.f32 %v1256, %v1399
  %v1456 = vmax.f32 %v1257, %v1335
  %v1457 = vmax.f32 %v1258, %v1400
  %v1458 = vmax.f32 %v1259, %v1339
  %v1459 = vmax.f32 %v1260, %v1401
  %v1460 = vmax.f32 %v1261, %v1343
  %v1461 = vmax.f32 %v1262, %v1402
  %v1462 = vmax.f32 %v1263, %v1347
  %v1463 = vmax.f32 %v1264, %v1403
  %v1464 = vmax.f32 %v1265, %v1351
  %v1465 = vmax.f32 %v1266, %v1404
  %v1466 = vmax.f32 %v1267, %v1355
  %v1467 = vmax.f32 %v1268, %v1405
  %v1468 = vmax.f32 %v1269, %v1359
  %v1469 = vmax.f32 %v1270, %v1406
  %v1470 = vmax.f32 %v1271, %v1363
  %v1471 = vmax.f32 %v1272, %v1407
  %v1472 = vmax.f32 %v1273, %v1367
  %v1473 = vmax.f32 %v1274, %v1408
  %v1474 = vmax.f32 %v1275, %v1371
  %v1475 = vmax.f32 %v1276, %v1409
  %v1476 = vmax.f32 %v1277, %v1375
  %v1477 = vmax.f32 %v1278, %v1410
  %v1478 = vmax.f32 %v1279, %v1379
  %v1479 = vmax.f32 %v1280, %v1411
  %v1480 = vmax.f32 %v1281, %v1383
  %v1481 = vmax.f32 %v1282, %v1412
  %v1482 = vmax.f32 %v1283, %v1387
  %v1483 = vmax.f32 %v1284, %v1413
  %v1484 = vmax.f32 %v1285, %v1391
  %v1485 = vmax.f32 %v1286, %v1414
  %v1486 = vmax.f32 %v1287, %v1395
  %vm1523 = vcmask 1046528
  %v1524 = vrot.slane %v1451, 1
  %v1525 = vrot.slane %v1453, 1
  %v1526 = vsel %vm1523, %v1524, %v1525
  %v1527 = vrot.slane %v1452, 1
  %v1528 = vrot.slane %v1454, 1
  %v1529 = vsel %vm1523, %v1527, %v1528
  %v1530 = vrot.slane %v1455, 1
  %v1531 = vsel %vm1523, %v1525, %v1530
  %v1532 = vrot.slane %v1456, 1
  %v1533 = vsel %vm1523, %v1528, %v1532
  %v1534 = vrot.slane %v1457, 1
  %v1535 = vsel %vm1523, %v1530, %v1534
  %v1536 = vrot.slane %v1458, 1
  %v1537 = vsel %vm1523, %v1532, %v1536
  %v1538 = vrot.slane %v1459, 1
  %v1539 = vsel %vm1523, %v1534, %v1538
  %v1540 = vrot.slane %v1460, 1
  %v1541 = vsel %vm1523, %v1536, %v1540
  %v1542 = vrot.slane %v1461, 1
  %v1543 = vsel %vm1523, %v1538, %v1542
  %v1544 = vrot.slane %v1462, 1
  %v1545 = vsel %vm1523, %v1540, %v1544
  %v1546 = vrot.slane %v1463, 1
  %v1547 = vsel %vm1523, %v1542, %v1546
  %v1548 = vrot.slane %v1464, 1
  %v1549 = vsel %vm1523, %v1544, %v1548
  %v1550 = vrot.slane %v1465, 1
  %v1551 = vsel %vm1523, %v1546, %v1550
  %v1552 = vrot.slane %v1466, 1
  %v1553 = vsel %vm1523, %v1548, %v1552
  %v1554 = vrot.slane %v1467, 1
  %v1555 = vsel %vm1523, %v1550, %v1554
  %v1556 = vrot.slane %v1468, 1
  %v1557 = vsel %vm1523, %v1552, %v1556
  %v1558 = vrot.slane %v1469, 1
  %v1559 = vsel %vm1523, %v1554, %v1558
  %v1560 = vrot.slane %v1470, 1
  %v1561 = vsel %vm1523, %v1556, %v1560
  %v1562 = vrot.slane %v1471, 1
  %v1563 = vsel %vm1523, %v1558, %v1562
  %v1564 = vrot.slane %v1472, 1
  %v1565 = vsel %vm1523, %v1560, %v1564
  %v1566 = vrot.slane %v1473, 1
  %v1567 = vsel %vm1523, %v1562, %v1566
  %v1568 = vrot.slane %v1474, 1
  %v1569 = vsel %vm1523, %v1564, %v1568
  %v1570 = vrot.slane %v1475, 1
  %v1571 = vsel %vm1523, %v1566, %v1570
  %v1572 = vrot.slane %v1476, 1
  %v1573 = vsel %vm1523, %v1568, %v1572
  %v1574 = vrot.slane %v1477, 1
  %v1575 = vsel %vm1523, %v1570, %v1574
  %v1576 = vrot.slane %v1478, 1
  %v1577 = vsel %vm1523, %v1572, %v1576
  %v1578 = vrot.slane %v1479, 1
  %v1579 = vsel %vm1523, %v1574, %v1578
  %v1580 = vrot.slane %v1480, 1
  %v1581 = vsel %vm1523, %v1576, %v1580
  %v1582 = vrot.slane %v1481, 1
  %v1583 = vsel %vm1523, %v1578, %v1582
  %v1584 = vrot.slane %v1482, 1
  %v1585 = vsel %vm1523, %v1580, %v1584
  %v1586 = vrot.slane %v1483, 1
  %v1587 = vsel %vm1523, %v1582, %v1586
  %v1588 = vrot.slane %v1484, 1
  %v1589 = vsel %vm1523, %v1584, %v1588
  %v1590 = vrot.slane %v1485, 1
  %v1591 = vsel %vm1523, %v1586, %v1590
  %v1592 = vrot.slane %v1486, 1
  %v1593 = vsel %vm1523, %v1588, %v1592
  %v1630 = vmax.f32 %v1451, %v1526
  %v1631 = vmax.f32 %v1452, %v1529
  %v1632 = vmax.f32 %v1453, %v1531
  %v1633 = vmax.f32 %v1454, %v1533
  %v1634 = vmax.f32 %v1455, %v1535
  %v1635 = vmax.f32 %v1456, %v1537
  %v1636 = vmax.f32 %v1457, %v1539
  %v1637 = vmax.f32 %v1458, %v1541
  %v1638 = vmax.f32 %v1459, %v1543
  %v1639 = vmax.f32 %v1460, %v1545
  %v1640 = vmax.f32 %v1461, %v1547
  %v1641 = vmax.f32 %v1462, %v1549
  %v1642 = vmax.f32 %v1463, %v1551
  %v1643 = vmax.f32 %v1464, %v1553
  %v1644 = vmax.f32 %v1465, %v1555
  %v1645 = vmax.f32 %v1466, %v1557
  %v1646 = vmax.f32 %v1467, %v1559
  %v1647 = vmax.f32 %v1468, %v1561
  %v1648 = vmax.f32 %v1469, %v1563
  %v1649 = vmax.f32 %v1470, %v1565
  %v1650 = vmax.f32 %v1471, %v1567
  %v1651 = vmax.f32 %v1472, %v1569
  %v1652 = vmax.f32 %v1473, %v1571
  %v1653 = vmax.f32 %v1474, %v1573
  %v1654 = vmax.f32 %v1475, %v1575
  %v1655 = vmax.f32 %v1476, %v1577
  %v1656 = vmax.f32 %v1477, %v1579
  %v1657 = vmax.f32 %v1478, %v1581
  %v1658 = vmax.f32 %v1479, %v1583
  %v1659 = vmax.f32 %v1480, %v1585
  %v1660 = vmax.f32 %v1481, %v1587
  %v1661 = vmax.f32 %v1482, %v1589
  %v1662 = vmax.f32 %v1483, %v1591
  %v1663 = vmax.f32 %v1484, %v1593
  %v1664 = vmax.f32 %v1485, %v1590
  %v1665 = vmax.f32 %v1486, %v1592
  %vm1666 = vcmask 121856
  %1667 = vst.msk [vmem:[#allocation3] sm:$0xff] %vm1666, %v1630
  %1668 = vst.msk [vmem:[#allocation3 + $0x8] sm:$0xff] %vm1666, %v1632
  %1669 = vst.msk [vmem:[#allocation3 + $0x10] sm:$0xff] %vm1666, %v1634
  %1670 = vst.msk [vmem:[#allocation3 + $0x18] sm:$0xff] %vm1666, %v1636
  %1671 = vst.msk [vmem:[#allocation3 + $0x20] sm:$0xff] %vm1666, %v1638
  %1672 = vst.msk [vmem:[#allocation3 + $0x28] sm:$0xff] %vm1666, %v1640
  %1673 = vst.msk [vmem:[#allocation3 + $0x30] sm:$0xff] %vm1666, %v1642
  %1674 = vst.msk [vmem:[#allocation3 + $0x38] sm:$0xff] %vm1666, %v1644
  %1675 = vst.msk [vmem:[#allocation3 + $0x40] sm:$0xff] %vm1666, %v1646
  %1676 = vst.msk [vmem:[#allocation3 + $0x48] sm:$0xff] %vm1666, %v1648
  %1677 = vst.msk [vmem:[#allocation3 + $0x50] sm:$0xff] %vm1666, %v1650
  %1678 = vst.msk [vmem:[#allocation3 + $0x58] sm:$0xff] %vm1666, %v1652
  %1679 = vst.msk [vmem:[#allocation3 + $0x60] sm:$0xff] %vm1666, %v1654
  %1680 = vst.msk [vmem:[#allocation3 + $0x68] sm:$0xff] %vm1666, %v1656
  %1681 = vst.msk [vmem:[#allocation3 + $0x70] sm:$0xff] %vm1666, %v1658
  %1682 = vst.msk [vmem:[#allocation3 + $0x78] sm:$0xff] %vm1666, %v1660
  %1683 = vst.msk [vmem:[#allocation3 + $0x80] sm:$0xff] %vm1666, %v1662
  %vm1684 = vcmask 120832
  %1685 = vst.msk [vmem:[#allocation3 + $0x88] sm:$0x7f] %vm1684, %v1664
  %1704 = vrot.lane.b32.xlu0 %v1630, 126
  %v1705 = vpop.permute.xlu0 %1704
  %1706 = vrot.lane.b32.xlu0 %v1632, 126
  %v1707 = vpop.permute.xlu0 %1706
  %1708 = vrot.lane.b32.xlu0 %v1634, 126
  %v1709 = vpop.permute.xlu0 %1708
  %1710 = vrot.lane.b32.xlu0 %v1636, 126
  %v1711 = vpop.permute.xlu0 %1710
  %1712 = vrot.lane.b32.xlu0 %v1638, 126
  %v1713 = vpop.permute.xlu0 %1712
  %1714 = vrot.lane.b32.xlu0 %v1640, 126
  %v1715 = vpop.permute.xlu0 %1714
  %1716 = vrot.lane.b32.xlu0 %v1642, 126
  %v1717 = vpop.permute.xlu0 %1716
  %1718 = vrot.lane.b32.xlu0 %v1644, 126
  %v1719 = vpop.permute.xlu0 %1718
  %1720 = vrot.lane.b32.xlu0 %v1646, 126
  %v1721 = vpop.permute.xlu0 %1720
  %1722 = vrot.lane.b32.xlu0 %v1648, 126
  %v1723 = vpop.permute.xlu0 %1722
  %1724 = vrot.lane.b32.xlu0 %v1650, 126
  %v1725 = vpop.permute.xlu0 %1724
  %1726 = vrot.lane.b32.xlu0 %v1652, 126
  %v1727 = vpop.permute.xlu0 %1726
  %1728 = vrot.lane.b32.xlu0 %v1654, 126
  %v1729 = vpop.permute.xlu0 %1728
  %1730 = vrot.lane.b32.xlu0 %v1656, 126
  %v1731 = vpop.permute.xlu0 %1730
  %1732 = vrot.lane.b32.xlu0 %v1658, 126
  %v1733 = vpop.permute.xlu0 %1732
  %1734 = vrot.lane.b32.xlu0 %v1660, 126
  %v1735 = vpop.permute.xlu0 %1734
  %1736 = vrot.lane.b32.xlu0 %v1662, 126
  %v1737 = vpop.permute.xlu0 %1736
  %1738 = vrot.lane.b32.xlu0 %v1664, 126
  %v1739 = vpop.permute.xlu0 %1738
  %1758 = vst.msk [vmem:[#allocation3 + $0x8f] sm:$0xff] %vm1666, %v1705
  %1759 = vst.msk [vmem:[#allocation3 + $0x97] sm:$0xff] %vm1666, %v1707
  %1760 = vst.msk [vmem:[#allocation3 + $0x9f] sm:$0xff] %vm1666, %v1709
  %1761 = vst.msk [vmem:[#allocation3 + $0xa7] sm:$0xff] %vm1666, %v1711
  %1762 = vst.msk [vmem:[#allocation3 + $0xaf] sm:$0xff] %vm1666, %v1713
  %1763 = vst.msk [vmem:[#allocation3 + $0xb7] sm:$0xff] %vm1666, %v1715
  %1764 = vst.msk [vmem:[#allocation3 + $0xbf] sm:$0xff] %vm1666, %v1717
  %1765 = vst.msk [vmem:[#allocation3 + $0xc7] sm:$0xff] %vm1666, %v1719
  %1766 = vst.msk [vmem:[#allocation3 + $0xcf] sm:$0xff] %vm1666, %v1721
  %1767 = vst.msk [vmem:[#allocation3 + $0xd7] sm:$0xff] %vm1666, %v1723
  %1768 = vst.msk [vmem:[#allocation3 + $0xdf] sm:$0xff] %vm1666, %v1725
  %1769 = vst.msk [vmem:[#allocation3 + $0xe7] sm:$0xff] %vm1666, %v1727
  %1770 = vst.msk [vmem:[#allocation3 + $0xef] sm:$0xff] %vm1666, %v1729
  %1771 = vst.msk [vmem:[#allocation3 + $0xf7] sm:$0xff] %vm1666, %v1731
  %1772 = vst.msk [vmem:[#allocation3 + $0xff] sm:$0xff] %vm1666, %v1733
  %1773 = vst.msk [vmem:[#allocation3 + $0x107] sm:$0xff] %vm1666, %v1735
  %1774 = vst.msk [vmem:[#allocation3 + $0x10f] sm:$0xff] %vm1666, %v1737
  %1775 = vst.msk [vmem:[#allocation3 + $0x117] sm:$0x7f] %vm1684, %v1739
  %1776 = vrot.lane.b32.xlu0 %v1630, 124
  %v1777 = vpop.permute.xlu0 %1776
  %1778 = vrot.lane.b32.xlu0 %v1632, 124
  %v1779 = vpop.permute.xlu0 %1778
  %1780 = vrot.lane.b32.xlu0 %v1634, 124
  %v1781 = vpop.permute.xlu0 %1780
  %1782 = vrot.lane.b32.xlu0 %v1636, 124
  %v1783 = vpop.permute.xlu0 %1782
  %1784 = vrot.lane.b32.xlu0 %v1638, 124
  %v1785 = vpop.permute.xlu0 %1784
  %1786 = vrot.lane.b32.xlu0 %v1640, 124
  %v1787 = vpop.permute.xlu0 %1786
  %1788 = vrot.lane.b32.xlu0 %v1642, 124
  %v1789 = vpop.permute.xlu0 %1788
  %1790 = vrot.lane.b32.xlu0 %v1644, 124
  %v1791 = vpop.permute.xlu0 %1790
  %1792 = vrot.lane.b32.xlu0 %v1646, 124
  %v1793 = vpop.permute.xlu0 %1792
  %1794 = vrot.lane.b32.xlu0 %v1648, 124
  %v1795 = vpop.permute.xlu0 %1794
  %1796 = vrot.lane.b32.xlu0 %v1650, 124
  %v1797 = vpop.permute.xlu0 %1796
  %1798 = vrot.lane.b32.xlu0 %v1652, 124
  %v1799 = vpop.permute.xlu0 %1798
  %1800 = vrot.lane.b32.xlu0 %v1654, 124
  %v1801 = vpop.permute.xlu0 %1800
  %1802 = vrot.lane.b32.xlu0 %v1656, 124
  %v1803 = vpop.permute.xlu0 %1802
  %1804 = vrot.lane.b32.xlu0 %v1658, 124
  %v1805 = vpop.permute.xlu0 %1804
  %1806 = vrot.lane.b32.xlu0 %v1660, 124
  %v1807 = vpop.permute.xlu0 %1806
  %1808 = vrot.lane.b32.xlu0 %v1662, 124
  %v1809 = vpop.permute.xlu0 %1808
  %1810 = vrot.lane.b32.xlu0 %v1664, 124
  %v1811 = vpop.permute.xlu0 %1810
  %1830 = vst.msk [vmem:[#allocation3 + $0x11e] sm:$0xff] %vm1666, %v1777
  %1831 = vst.msk [vmem:[#allocation3 + $0x126] sm:$0xff] %vm1666, %v1779
  %1832 = vst.msk [vmem:[#allocation3 + $0x12e] sm:$0xff] %vm1666, %v1781
  %1833 = vst.msk [vmem:[#allocation3 + $0x136] sm:$0xff] %vm1666, %v1783
  %1834 = vst.msk [vmem:[#allocation3 + $0x13e] sm:$0xff] %vm1666, %v1785
  %1835 = vst.msk [vmem:[#allocation3 + $0x146] sm:$0xff] %vm1666, %v1787
  %1836 = vst.msk [vmem:[#allocation3 + $0x14e] sm:$0xff] %vm1666, %v1789
  %1837 = vst.msk [vmem:[#allocation3 + $0x156] sm:$0xff] %vm1666, %v1791
  %1838 = vst.msk [vmem:[#allocation3 + $0x15e] sm:$0xff] %vm1666, %v1793
  %1839 = vst.msk [vmem:[#allocation3 + $0x166] sm:$0xff] %vm1666, %v1795
  %1840 = vst.msk [vmem:[#allocation3 + $0x16e] sm:$0xff] %vm1666, %v1797
  %1841 = vst.msk [vmem:[#allocation3 + $0x176] sm:$0xff] %vm1666, %v1799
  %1842 = vst.msk [vmem:[#allocation3 + $0x17e] sm:$0xff] %vm1666, %v1801
  %1843 = vst.msk [vmem:[#allocation3 + $0x186] sm:$0xff] %vm1666, %v1803
  %1844 = vst.msk [vmem:[#allocation3 + $0x18e] sm:$0xff] %vm1666, %v1805
  %1845 = vst.msk [vmem:[#allocation3 + $0x196] sm:$0xff] %vm1666, %v1807
  %1846 = vst.msk [vmem:[#allocation3 + $0x19e] sm:$0xff] %vm1666, %v1809
  %1847 = vst.msk [vmem:[#allocation3 + $0x1a6] sm:$0x7f] %vm1684, %v1811
  %1848 = vrot.lane.b32.xlu0 %v1630, 122
  %v1849 = vpop.permute.xlu0 %1848
  %1850 = vrot.lane.b32.xlu0 %v1632, 122
  %v1851 = vpop.permute.xlu0 %1850
  %1852 = vrot.lane.b32.xlu0 %v1634, 122
  %v1853 = vpop.permute.xlu0 %1852
  %1854 = vrot.lane.b32.xlu0 %v1636, 122
  %v1855 = vpop.permute.xlu0 %1854
  %1856 = vrot.lane.b32.xlu0 %v1638, 122
  %v1857 = vpop.permute.xlu0 %1856
  %1858 = vrot.lane.b32.xlu0 %v1640, 122
  %v1859 = vpop.permute.xlu0 %1858
  %1860 = vrot.lane.b32.xlu0 %v1642, 122
  %v1861 = vpop.permute.xlu0 %1860
  %1862 = vrot.lane.b32.xlu0 %v1644, 122
  %v1863 = vpop.permute.xlu0 %1862
  %1864 = vrot.lane.b32.xlu0 %v1646, 122
  %v1865 = vpop.permute.xlu0 %1864
  %1866 = vrot.lane.b32.xlu0 %v1648, 122
  %v1867 = vpop.permute.xlu0 %1866
  %1868 = vrot.lane.b32.xlu0 %v1650, 122
  %v1869 = vpop.permute.xlu0 %1868
  %1870 = vrot.lane.b32.xlu0 %v1652, 122
  %v1871 = vpop.permute.xlu0 %1870
  %1872 = vrot.lane.b32.xlu0 %v1654, 122
  %v1873 = vpop.permute.xlu0 %1872
  %1874 = vrot.lane.b32.xlu0 %v1656, 122
  %v1875 = vpop.permute.xlu0 %1874
  %1876 = vrot.lane.b32.xlu0 %v1658, 122
  %v1877 = vpop.permute.xlu0 %1876
  %1878 = vrot.lane.b32.xlu0 %v1660, 122
  %v1879 = vpop.permute.xlu0 %1878
  %1880 = vrot.lane.b32.xlu0 %v1662, 122
  %v1881 = vpop.permute.xlu0 %1880
  %1882 = vrot.lane.b32.xlu0 %v1664, 122
  %v1883 = vpop.permute.xlu0 %1882
  %1902 = vst.msk [vmem:[#allocation3 + $0x1ad] sm:$0xff] %vm1666, %v1849
  %1903 = vst.msk [vmem:[#allocation3 + $0x1b5] sm:$0xff] %vm1666, %v1851
  %1904 = vst.msk [vmem:[#allocation3 + $0x1bd] sm:$0xff] %vm1666, %v1853
  %1905 = vst.msk [vmem:[#allocation3 + $0x1c5] sm:$0xff] %vm1666, %v1855
  %1906 = vst.msk [vmem:[#allocation3 + $0x1cd] sm:$0xff] %vm1666, %v1857
  %1907 = vst.msk [vmem:[#allocation3 + $0x1d5] sm:$0xff] %vm1666, %v1859
  %1908 = vst.msk [vmem:[#allocation3 + $0x1dd] sm:$0xff] %vm1666, %v1861
  %1909 = vst.msk [vmem:[#allocation3 + $0x1e5] sm:$0xff] %vm1666, %v1863
  %1910 = vst.msk [vmem:[#allocation3 + $0x1ed] sm:$0xff] %vm1666, %v1865
  %1911 = vst.msk [vmem:[#allocation3 + $0x1f5] sm:$0xff] %vm1666, %v1867
  %1912 = vst.msk [vmem:[#allocation3 + $0x1fd] sm:$0xff] %vm1666, %v1869
  %1913 = vst.msk [vmem:[#allocation3 + $0x205] sm:$0xff] %vm1666, %v1871
  %1914 = vst.msk [vmem:[#allocation3 + $0x20d] sm:$0xff] %vm1666, %v1873
  %1915 = vst.msk [vmem:[#allocation3 + $0x215] sm:$0xff] %vm1666, %v1875
  %1916 = vst.msk [vmem:[#allocation3 + $0x21d] sm:$0xff] %vm1666, %v1877
  %1917 = vst.msk [vmem:[#allocation3 + $0x225] sm:$0xff] %vm1666, %v1879
  %1918 = vst.msk [vmem:[#allocation3 + $0x22d] sm:$0xff] %vm1666, %v1881
  %1919 = vst.msk [vmem:[#allocation3 + $0x235] sm:$0x7f] %vm1684, %v1883
  %1920 = vrot.lane.b32.xlu0 %v1630, 120
  %v1921 = vpop.permute.xlu0 %1920
  %1922 = vrot.lane.b32.xlu0 %v1632, 120
  %v1923 = vpop.permute.xlu0 %1922
  %1924 = vrot.lane.b32.xlu0 %v1634, 120
  %v1925 = vpop.permute.xlu0 %1924
  %1926 = vrot.lane.b32.xlu0 %v1636, 120
  %v1927 = vpop.permute.xlu0 %1926
  %1928 = vrot.lane.b32.xlu0 %v1638, 120
  %v1929 = vpop.permute.xlu0 %1928
  %1930 = vrot.lane.b32.xlu0 %v1640, 120
  %v1931 = vpop.permute.xlu0 %1930
  %1932 = vrot.lane.b32.xlu0 %v1642, 120
  %v1933 = vpop.permute.xlu0 %1932
  %1934 = vrot.lane.b32.xlu0 %v1644, 120
  %v1935 = vpop.permute.xlu0 %1934
  %1936 = vrot.lane.b32.xlu0 %v1646, 120
  %v1937 = vpop.permute.xlu0 %1936
  %1938 = vrot.lane.b32.xlu0 %v1648, 120
  %v1939 = vpop.permute.xlu0 %1938
  %1940 = vrot.lane.b32.xlu0 %v1650, 120
  %v1941 = vpop.permute.xlu0 %1940
  %1942 = vrot.lane.b32.xlu0 %v1652, 120
  %v1943 = vpop.permute.xlu0 %1942
  %1944 = vrot.lane.b32.xlu0 %v1654, 120
  %v1945 = vpop.permute.xlu0 %1944
  %1946 = vrot.lane.b32.xlu0 %v1656, 120
  %v1947 = vpop.permute.xlu0 %1946
  %1948 = vrot.lane.b32.xlu0 %v1658, 120
  %v1949 = vpop.permute.xlu0 %1948
  %1950 = vrot.lane.b32.xlu0 %v1660, 120
  %v1951 = vpop.permute.xlu0 %1950
  %1952 = vrot.lane.b32.xlu0 %v1662, 120
  %v1953 = vpop.permute.xlu0 %1952
  %1954 = vrot.lane.b32.xlu0 %v1664, 120
  %v1955 = vpop.permute.xlu0 %1954
  %1974 = vst.msk [vmem:[#allocation3 + $0x23c] sm:$0xff] %vm1666, %v1921
  %1975 = vst.msk [vmem:[#allocation3 + $0x244] sm:$0xff] %vm1666, %v1923
  %1976 = vst.msk [vmem:[#allocation3 + $0x24c] sm:$0xff] %vm1666, %v1925
  %1977 = vst.msk [vmem:[#allocation3 + $0x254] sm:$0xff] %vm1666, %v1927
  %1978 = vst.msk [vmem:[#allocation3 + $0x25c] sm:$0xff] %vm1666, %v1929
  %1979 = vst.msk [vmem:[#allocation3 + $0x264] sm:$0xff] %vm1666, %v1931
  %1980 = vst.msk [vmem:[#allocation3 + $0x26c] sm:$0xff] %vm1666, %v1933
  %1981 = vst.msk [vmem:[#allocation3 + $0x274] sm:$0xff] %vm1666, %v1935
  %1982 = vst.msk [vmem:[#allocation3 + $0x27c] sm:$0xff] %vm1666, %v1937
  %1983 = vst.msk [vmem:[#allocation3 + $0x284] sm:$0xff] %vm1666, %v1939
  %1984 = vst.msk [vmem:[#allocation3 + $0x28c] sm:$0xff] %vm1666, %v1941
  %1985 = vst.msk [vmem:[#allocation3 + $0x294] sm:$0xff] %vm1666, %v1943
  %1986 = vst.msk [vmem:[#allocation3 + $0x29c] sm:$0xff] %vm1666, %v1945
  %1987 = vst.msk [vmem:[#allocation3 + $0x2a4] sm:$0xff] %vm1666, %v1947
  %1988 = vst.msk [vmem:[#allocation3 + $0x2ac] sm:$0xff] %vm1666, %v1949
  %1989 = vst.msk [vmem:[#allocation3 + $0x2b4] sm:$0xff] %vm1666, %v1951
  %1990 = vst.msk [vmem:[#allocation3 + $0x2bc] sm:$0xff] %vm1666, %v1953
  %1991 = vst.msk [vmem:[#allocation3 + $0x2c4] sm:$0x7f] %vm1684, %v1955
  %1992 = vrot.lane.b32.xlu0 %v1630, 119
  %v1993 = vpop.permute.xlu0 %1992
  %1994 = vrot.lane.b32.xlu0 %v1632, 119
  %v1995 = vpop.permute.xlu0 %1994
  %1996 = vrot.lane.b32.xlu0 %v1634, 119
  %v1997 = vpop.permute.xlu0 %1996
  %1998 = vrot.lane.b32.xlu0 %v1636, 119
  %v1999 = vpop.permute.xlu0 %1998
  %2000 = vrot.lane.b32.xlu0 %v1638, 119
  %v2001 = vpop.permute.xlu0 %2000
  %2002 = vrot.lane.b32.xlu0 %v1640, 119
  %v2003 = vpop.permute.xlu0 %2002
  %2004 = vrot.lane.b32.xlu0 %v1642, 119
  %v2005 = vpop.permute.xlu0 %2004
  %2006 = vrot.lane.b32.xlu0 %v1644, 119
  %v2007 = vpop.permute.xlu0 %2006
  %2008 = vrot.lane.b32.xlu0 %v1646, 119
  %v2009 = vpop.permute.xlu0 %2008
  %2010 = vrot.lane.b32.xlu0 %v1648, 119
  %v2011 = vpop.permute.xlu0 %2010
  %2012 = vrot.lane.b32.xlu0 %v1650, 119
  %v2013 = vpop.permute.xlu0 %2012
  %2014 = vrot.lane.b32.xlu0 %v1652, 119
  %v2015 = vpop.permute.xlu0 %2014
  %2016 = vrot.lane.b32.xlu0 %v1654, 119
  %v2017 = vpop.permute.xlu0 %2016
  %2018 = vrot.lane.b32.xlu0 %v1656, 119
  %v2019 = vpop.permute.xlu0 %2018
  %2020 = vrot.lane.b32.xlu0 %v1658, 119
  %v2021 = vpop.permute.xlu0 %2020
  %2022 = vrot.lane.b32.xlu0 %v1660, 119
  %v2023 = vpop.permute.xlu0 %2022
  %2024 = vrot.lane.b32.xlu0 %v1662, 119
  %v2025 = vpop.permute.xlu0 %2024
  %2026 = vrot.lane.b32.xlu0 %v1664, 119
  %v2027 = vpop.permute.xlu0 %2026
  %vm2046 = vcmask 244856
  %2047 = vst.msk [vmem:[#allocation3] sm:$0xff] %vm2046, %v1993
  %2048 = vst.msk [vmem:[#allocation3 + $0x8] sm:$0xff] %vm2046, %v1995
  %2049 = vst.msk [vmem:[#allocation3 + $0x10] sm:$0xff] %vm2046, %v1997
  %2050 = vst.msk [vmem:[#allocation3 + $0x18] sm:$0xff] %vm2046, %v1999
  %2051 = vst.msk [vmem:[#allocation3 + $0x20] sm:$0xff] %vm2046, %v2001
  %2052 = vst.msk [vmem:[#allocation3 + $0x28] sm:$0xff] %vm2046, %v2003
  %2053 = vst.msk [vmem:[#allocation3 + $0x30] sm:$0xff] %vm2046, %v2005
  %2054 = vst.msk [vmem:[#allocation3 + $0x38] sm:$0xff] %vm2046, %v2007
  %2055 = vst.msk [vmem:[#allocation3 + $0x40] sm:$0xff] %vm2046, %v2009
  %2056 = vst.msk [vmem:[#allocation3 + $0x48] sm:$0xff] %vm2046, %v2011
  %2057 = vst.msk [vmem:[#allocation3 + $0x50] sm:$0xff] %vm2046, %v2013
  %2058 = vst.msk [vmem:[#allocation3 + $0x58] sm:$0xff] %vm2046, %v2015
  %2059 = vst.msk [vmem:[#allocation3 + $0x60] sm:$0xff] %vm2046, %v2017
  %2060 = vst.msk [vmem:[#allocation3 + $0x68] sm:$0xff] %vm2046, %v2019
  %2061 = vst.msk [vmem:[#allocation3 + $0x70] sm:$0xff] %vm2046, %v2021
  %2062 = vst.msk [vmem:[#allocation3 + $0x78] sm:$0xff] %vm2046, %v2023
  %2063 = vst.msk [vmem:[#allocation3 + $0x80] sm:$0xff] %vm2046, %v2025
  %vm2064 = vcmask 243832
  %2065 = vst.msk [vmem:[#allocation3 + $0x88] sm:$0x7f] %vm2064, %v2027
  %2066 = vrot.lane.b32.xlu0 %v1630, 117
  %v2067 = vpop.permute.xlu0 %2066
  %2068 = vrot.lane.b32.xlu0 %v1632, 117
  %v2069 = vpop.permute.xlu0 %2068
  %2070 = vrot.lane.b32.xlu0 %v1634, 117
  %v2071 = vpop.permute.xlu0 %2070
  %2072 = vrot.lane.b32.xlu0 %v1636, 117
  %v2073 = vpop.permute.xlu0 %2072
  %2074 = vrot.lane.b32.xlu0 %v1638, 117
  %v2075 = vpop.permute.xlu0 %2074
  %2076 = vrot.lane.b32.xlu0 %v1640, 117
  %v2077 = vpop.permute.xlu0 %2076
  %2078 = vrot.lane.b32.xlu0 %v1642, 117
  %v2079 = vpop.permute.xlu0 %2078
  %2080 = vrot.lane.b32.xlu0 %v1644, 117
  %v2081 = vpop.permute.xlu0 %2080
  %2082 = vrot.lane.b32.xlu0 %v1646, 117
  %v2083 = vpop.permute.xlu0 %2082
  %2084 = vrot.lane.b32.xlu0 %v1648, 117
  %v2085 = vpop.permute.xlu0 %2084
  %2086 = vrot.lane.b32.xlu0 %v1650, 117
  %v2087 = vpop.permute.xlu0 %2086
  %2088 = vrot.lane.b32.xlu0 %v1652, 117
  %v2089 = vpop.permute.xlu0 %2088
  %2090 = vrot.lane.b32.xlu0 %v1654, 117
  %v2091 = vpop.permute.xlu0 %2090
  %2092 = vrot.lane.b32.xlu0 %v1656, 117
  %v2093 = vpop.permute.xlu0 %2092
  %2094 = vrot.lane.b32.xlu0 %v1658, 117
  %v2095 = vpop.permute.xlu0 %2094
  %2096 = vrot.lane.b32.xlu0 %v1660, 117
  %v2097 = vpop.permute.xlu0 %2096
  %2098 = vrot.lane.b32.xlu0 %v1662, 117
  %v2099 = vpop.permute.xlu0 %2098
  %2100 = vrot.lane.b32.xlu0 %v1664, 117
  %v2101 = vpop.permute.xlu0 %2100
  %2120 = vst.msk [vmem:[#allocation3 + $0x8f] sm:$0xff] %vm2046, %v2067
  %2121 = vst.msk [vmem:[#allocation3 + $0x97] sm:$0xff] %vm2046, %v2069
  %2122 = vst.msk [vmem:[#allocation3 + $0x9f] sm:$0xff] %vm2046, %v2071
  %2123 = vst.msk [vmem:[#allocation3 + $0xa7] sm:$0xff] %vm2046, %v2073
  %2124 = vst.msk [vmem:[#allocation3 + $0xaf] sm:$0xff] %vm2046, %v2075
  %2125 = vst.msk [vmem:[#allocation3 + $0xb7] sm:$0xff] %vm2046, %v2077
  %2126 = vst.msk [vmem:[#allocation3 + $0xbf] sm:$0xff] %vm2046, %v2079
  %2127 = vst.msk [vmem:[#allocation3 + $0xc7] sm:$0xff] %vm2046, %v2081
  %2128 = vst.msk [vmem:[#allocation3 + $0xcf] sm:$0xff] %vm2046, %v2083
  %2129 = vst.msk [vmem:[#allocation3 + $0xd7] sm:$0xff] %vm2046, %v2085
  %2130 = vst.msk [vmem:[#allocation3 + $0xdf] sm:$0xff] %vm2046, %v2087
  %2131 = vst.msk [vmem:[#allocation3 + $0xe7] sm:$0xff] %vm2046, %v2089
  %2132 = vst.msk [vmem:[#allocation3 + $0xef] sm:$0xff] %vm2046, %v2091
  %2133 = vst.msk [vmem:[#allocation3 + $0xf7] sm:$0xff] %vm2046, %v2093
  %2134 = vst.msk [vmem:[#allocation3 + $0xff] sm:$0xff] %vm2046, %v2095
  %2135 = vst.msk [vmem:[#allocation3 + $0x107] sm:$0xff] %vm2046, %v2097
  %2136 = vst.msk [vmem:[#allocation3 + $0x10f] sm:$0xff] %vm2046, %v2099
  %2137 = vst.msk [vmem:[#allocation3 + $0x117] sm:$0x7f] %vm2064, %v2101
  %2138 = vrot.lane.b32.xlu0 %v1630, 115
  %v2139 = vpop.permute.xlu0 %2138
  %2140 = vrot.lane.b32.xlu0 %v1632, 115
  %v2141 = vpop.permute.xlu0 %2140
  %2142 = vrot.lane.b32.xlu0 %v1634, 115
  %v2143 = vpop.permute.xlu0 %2142
  %2144 = vrot.lane.b32.xlu0 %v1636, 115
  %v2145 = vpop.permute.xlu0 %2144
  %2146 = vrot.lane.b32.xlu0 %v1638, 115
  %v2147 = vpop.permute.xlu0 %2146
  %2148 = vrot.lane.b32.xlu0 %v1640, 115
  %v2149 = vpop.permute.xlu0 %2148
  %2150 = vrot.lane.b32.xlu0 %v1642, 115
  %v2151 = vpop.permute.xlu0 %2150
  %2152 = vrot.lane.b32.xlu0 %v1644, 115
  %v2153 = vpop.permute.xlu0 %2152
  %2154 = vrot.lane.b32.xlu0 %v1646, 115
  %v2155 = vpop.permute.xlu0 %2154
  %2156 = vrot.lane.b32.xlu0 %v1648, 115
  %v2157 = vpop.permute.xlu0 %2156
  %2158 = vrot.lane.b32.xlu0 %v1650, 115
  %v2159 = vpop.permute.xlu0 %2158
  %2160 = vrot.lane.b32.xlu0 %v1652, 115
  %v2161 = vpop.permute.xlu0 %2160
  %2162 = vrot.lane.b32.xlu0 %v1654, 115
  %v2163 = vpop.permute.xlu0 %2162
  %2164 = vrot.lane.b32.xlu0 %v1656, 115
  %v2165 = vpop.permute.xlu0 %2164
  %2166 = vrot.lane.b32.xlu0 %v1658, 115
  %v2167 = vpop.permute.xlu0 %2166
  %2168 = vrot.lane.b32.xlu0 %v1660, 115
  %v2169 = vpop.permute.xlu0 %2168
  %2170 = vrot.lane.b32.xlu0 %v1662, 115
  %v2171 = vpop.permute.xlu0 %2170
  %2172 = vrot.lane.b32.xlu0 %v1664, 115
  %v2173 = vpop.permute.xlu0 %2172
  %2192 = vst.msk [vmem:[#allocation3 + $0x11e] sm:$0xff] %vm2046, %v2139
  %2193 = vst.msk [vmem:[#allocation3 + $0x126] sm:$0xff] %vm2046, %v2141
  %2194 = vst.msk [vmem:[#allocation3 + $0x12e] sm:$0xff] %vm2046, %v2143
  %2195 = vst.msk [vmem:[#allocation3 + $0x136] sm:$0xff] %vm2046, %v2145
  %2196 = vst.msk [vmem:[#allocation3 + $0x13e] sm:$0xff] %vm2046, %v2147
  %2197 = vst.msk [vmem:[#allocation3 + $0x146] sm:$0xff] %vm2046, %v2149
  %2198 = vst.msk [vmem:[#allocation3 + $0x14e] sm:$0xff] %vm2046, %v2151
  %2199 = vst.msk [vmem:[#allocation3 + $0x156] sm:$0xff] %vm2046, %v2153
  %2200 = vst.msk [vmem:[#allocation3 + $0x15e] sm:$0xff] %vm2046, %v2155
  %2201 = vst.msk [vmem:[#allocation3 + $0x166] sm:$0xff] %vm2046, %v2157
  %2202 = vst.msk [vmem:[#allocation3 + $0x16e] sm:$0xff] %vm2046, %v2159
  %2203 = vst.msk [vmem:[#allocation3 + $0x176] sm:$0xff] %vm2046, %v2161
  %2204 = vst.msk [vmem:[#allocation3 + $0x17e] sm:$0xff] %vm2046, %v2163
  %2205 = vst.msk [vmem:[#allocation3 + $0x186] sm:$0xff] %vm2046, %v2165
  %2206 = vst.msk [vmem:[#allocation3 + $0x18e] sm:$0xff] %vm2046, %v2167
  %2207 = vst.msk [vmem:[#allocation3 + $0x196] sm:$0xff] %vm2046, %v2169
  %2208 = vst.msk [vmem:[#allocation3 + $0x19e] sm:$0xff] %vm2046, %v2171
  %2209 = vst.msk [vmem:[#allocation3 + $0x1a6] sm:$0x7f] %vm2064, %v2173
  %2210 = vrot.lane.b32.xlu0 %v1630, 113
  %v2211 = vpop.permute.xlu0 %2210
  %2212 = vrot.lane.b32.xlu0 %v1632, 113
  %v2213 = vpop.permute.xlu0 %2212
  %2214 = vrot.lane.b32.xlu0 %v1634, 113
  %v2215 = vpop.permute.xlu0 %2214
  %2216 = vrot.lane.b32.xlu0 %v1636, 113
  %v2217 = vpop.permute.xlu0 %2216
  %2218 = vrot.lane.b32.xlu0 %v1638, 113
  %v2219 = vpop.permute.xlu0 %2218
  %2220 = vrot.lane.b32.xlu0 %v1640, 113
  %v2221 = vpop.permute.xlu0 %2220
  %2222 = vrot.lane.b32.xlu0 %v1642, 113
  %v2223 = vpop.permute.xlu0 %2222
  %2224 = vrot.lane.b32.xlu0 %v1644, 113
  %v2225 = vpop.permute.xlu0 %2224
  %2226 = vrot.lane.b32.xlu0 %v1646, 113
  %v2227 = vpop.permute.xlu0 %2226
  %2228 = vrot.lane.b32.xlu0 %v1648, 113
  %v2229 = vpop.permute.xlu0 %2228
  %2230 = vrot.lane.b32.xlu0 %v1650, 113
  %v2231 = vpop.permute.xlu0 %2230
  %2232 = vrot.lane.b32.xlu0 %v1652, 113
  %v2233 = vpop.permute.xlu0 %2232
  %2234 = vrot.lane.b32.xlu0 %v1654, 113
  %v2235 = vpop.permute.xlu0 %2234
  %2236 = vrot.lane.b32.xlu0 %v1656, 113
  %v2237 = vpop.permute.xlu0 %2236
  %2238 = vrot.lane.b32.xlu0 %v1658, 113
  %v2239 = vpop.permute.xlu0 %2238
  %2240 = vrot.lane.b32.xlu0 %v1660, 113
  %v2241 = vpop.permute.xlu0 %2240
  %2242 = vrot.lane.b32.xlu0 %v1662, 113
  %v2243 = vpop.permute.xlu0 %2242
  %2244 = vrot.lane.b32.xlu0 %v1664, 113
  %v2245 = vpop.permute.xlu0 %2244
  %2264 = vst.msk [vmem:[#allocation3 + $0x1ad] sm:$0xff] %vm2046, %v2211
  %2265 = vst.msk [vmem:[#allocation3 + $0x1b5] sm:$0xff] %vm2046, %v2213
  %2266 = vst.msk [vmem:[#allocation3 + $0x1bd] sm:$0xff] %vm2046, %v2215
  %2267 = vst.msk [vmem:[#allocation3 + $0x1c5] sm:$0xff] %vm2046, %v2217
  %2268 = vst.msk [vmem:[#allocation3 + $0x1cd] sm:$0xff] %vm2046, %v2219
  %2269 = vst.msk [vmem:[#allocation3 + $0x1d5] sm:$0xff] %vm2046, %v2221
  %2270 = vst.msk [vmem:[#allocation3 + $0x1dd] sm:$0xff] %vm2046, %v2223
  %2271 = vst.msk [vmem:[#allocation3 + $0x1e5] sm:$0xff] %vm2046, %v2225
  %2272 = vst.msk [vmem:[#allocation3 + $0x1ed] sm:$0xff] %vm2046, %v2227
  %2273 = vst.msk [vmem:[#allocation3 + $0x1f5] sm:$0xff] %vm2046, %v2229
  %2274 = vst.msk [vmem:[#allocation3 + $0x1fd] sm:$0xff] %vm2046, %v2231
  %2275 = vst.msk [vmem:[#allocation3 + $0x205] sm:$0xff] %vm2046, %v2233
  %2276 = vst.msk [vmem:[#allocation3 + $0x20d] sm:$0xff] %vm2046, %v2235
  %2277 = vst.msk [vmem:[#allocation3 + $0x215] sm:$0xff] %vm2046, %v2237
  %2278 = vst.msk [vmem:[#allocation3 + $0x21d] sm:$0xff] %vm2046, %v2239
  %2279 = vst.msk [vmem:[#allocation3 + $0x225] sm:$0xff] %vm2046, %v2241
  %2280 = vst.msk [vmem:[#allocation3 + $0x22d] sm:$0xff] %vm2046, %v2243
  %2281 = vst.msk [vmem:[#allocation3 + $0x235] sm:$0x7f] %vm2064, %v2245
  %2282 = vrot.lane.b32.xlu0 %v1630, 111
  %v2283 = vpop.permute.xlu0 %2282
  %2284 = vrot.lane.b32.xlu0 %v1632, 111
  %v2285 = vpop.permute.xlu0 %2284
  %2286 = vrot.lane.b32.xlu0 %v1634, 111
  %v2287 = vpop.permute.xlu0 %2286
  %2288 = vrot.lane.b32.xlu0 %v1636, 111
  %v2289 = vpop.permute.xlu0 %2288
  %2290 = vrot.lane.b32.xlu0 %v1638, 111
  %v2291 = vpop.permute.xlu0 %2290
  %2292 = vrot.lane.b32.xlu0 %v1640, 111
  %v2293 = vpop.permute.xlu0 %2292
  %2294 = vrot.lane.b32.xlu0 %v1642, 111
  %v2295 = vpop.permute.xlu0 %2294
  %2296 = vrot.lane.b32.xlu0 %v1644, 111
  %v2297 = vpop.permute.xlu0 %2296
  %2298 = vrot.lane.b32.xlu0 %v1646, 111
  %v2299 = vpop.permute.xlu0 %2298
  %2300 = vrot.lane.b32.xlu0 %v1648, 111
  %v2301 = vpop.permute.xlu0 %2300
  %2302 = vrot.lane.b32.xlu0 %v1650, 111
  %v2303 = vpop.permute.xlu0 %2302
  %2304 = vrot.lane.b32.xlu0 %v1652, 111
  %v2305 = vpop.permute.xlu0 %2304
  %2306 = vrot.lane.b32.xlu0 %v1654, 111
  %v2307 = vpop.permute.xlu0 %2306
  %2308 = vrot.lane.b32.xlu0 %v1656, 111
  %v2309 = vpop.permute.xlu0 %2308
  %2310 = vrot.lane.b32.xlu0 %v1658, 111
  %v2311 = vpop.permute.xlu0 %2310
  %2312 = vrot.lane.b32.xlu0 %v1660, 111
  %v2313 = vpop.permute.xlu0 %2312
  %2314 = vrot.lane.b32.xlu0 %v1662, 111
  %v2315 = vpop.permute.xlu0 %2314
  %2316 = vrot.lane.b32.xlu0 %v1664, 111
  %v2317 = vpop.permute.xlu0 %2316
  %2336 = vst.msk [vmem:[#allocation3 + $0x23c] sm:$0xff] %vm2046, %v2283
  %2337 = vst.msk [vmem:[#allocation3 + $0x244] sm:$0xff] %vm2046, %v2285
  %2338 = vst.msk [vmem:[#allocation3 + $0x24c] sm:$0xff] %vm2046, %v2287
  %2339 = vst.msk [vmem:[#allocation3 + $0x254] sm:$0xff] %vm2046, %v2289
  %2340 = vst.msk [vmem:[#allocation3 + $0x25c] sm:$0xff] %vm2046, %v2291
  %2341 = vst.msk [vmem:[#allocation3 + $0x264] sm:$0xff] %vm2046, %v2293
  %2342 = vst.msk [vmem:[#allocation3 + $0x26c] sm:$0xff] %vm2046, %v2295
  %2343 = vst.msk [vmem:[#allocation3 + $0x274] sm:$0xff] %vm2046, %v2297
  %2344 = vst.msk [vmem:[#allocation3 + $0x27c] sm:$0xff] %vm2046, %v2299
  %2345 = vst.msk [vmem:[#allocation3 + $0x284] sm:$0xff] %vm2046, %v2301
  %2346 = vst.msk [vmem:[#allocation3 + $0x28c] sm:$0xff] %vm2046, %v2303
  %2347 = vst.msk [vmem:[#allocation3 + $0x294] sm:$0xff] %vm2046, %v2305
  %2348 = vst.msk [vmem:[#allocation3 + $0x29c] sm:$0xff] %vm2046, %v2307
  %2349 = vst.msk [vmem:[#allocation3 + $0x2a4] sm:$0xff] %vm2046, %v2309
  %2350 = vst.msk [vmem:[#allocation3 + $0x2ac] sm:$0xff] %vm2046, %v2311
  %2351 = vst.msk [vmem:[#allocation3 + $0x2b4] sm:$0xff] %vm2046, %v2313
  %2352 = vst.msk [vmem:[#allocation3 + $0x2bc] sm:$0xff] %vm2046, %v2315
  %2353 = vst.msk [vmem:[#allocation3 + $0x2c4] sm:$0x7f] %vm2064, %v2317
  %2354 = vrot.lane.b32.xlu0 %v1630, 110
  %v2355 = vpop.permute.xlu0 %2354
  %2356 = vrot.lane.b32.xlu0 %v1632, 110
  %v2357 = vpop.permute.xlu0 %2356
  %2358 = vrot.lane.b32.xlu0 %v1634, 110
  %v2359 = vpop.permute.xlu0 %2358
  %2360 = vrot.lane.b32.xlu0 %v1636, 110
  %v2361 = vpop.permute.xlu0 %2360
  %2362 = vrot.lane.b32.xlu0 %v1638, 110
  %v2363 = vpop.permute.xlu0 %2362
  %2364 = vrot.lane.b32.xlu0 %v1640, 110
  %v2365 = vpop.permute.xlu0 %2364
  %2366 = vrot.lane.b32.xlu0 %v1642, 110
  %v2367 = vpop.permute.xlu0 %2366
  %2368 = vrot.lane.b32.xlu0 %v1644, 110
  %v2369 = vpop.permute.xlu0 %2368
  %2370 = vrot.lane.b32.xlu0 %v1646, 110
  %v2371 = vpop.permute.xlu0 %2370
  %2372 = vrot.lane.b32.xlu0 %v1648, 110
  %v2373 = vpop.permute.xlu0 %2372
  %2374 = vrot.lane.b32.xlu0 %v1650, 110
  %v2375 = vpop.permute.xlu0 %2374
  %2376 = vrot.lane.b32.xlu0 %v1652, 110
  %v2377 = vpop.permute.xlu0 %2376
  %2378 = vrot.lane.b32.xlu0 %v1654, 110
  %v2379 = vpop.permute.xlu0 %2378
  %2380 = vrot.lane.b32.xlu0 %v1656, 110
  %v2381 = vpop.permute.xlu0 %2380
  %2382 = vrot.lane.b32.xlu0 %v1658, 110
  %v2383 = vpop.permute.xlu0 %2382
  %2384 = vrot.lane.b32.xlu0 %v1660, 110
  %v2385 = vpop.permute.xlu0 %2384
  %2386 = vrot.lane.b32.xlu0 %v1662, 110
  %v2387 = vpop.permute.xlu0 %2386
  %2388 = vrot.lane.b32.xlu0 %v1664, 110
  %v2389 = vpop.permute.xlu0 %2388
  %vm2408 = vcmask 367856
  %2409 = vst.msk [vmem:[#allocation3] sm:$0xff] %vm2408, %v2355
  %2410 = vst.msk [vmem:[#allocation3 + $0x8] sm:$0xff] %vm2408, %v2357
  %2411 = vst.msk [vmem:[#allocation3 + $0x10] sm:$0xff] %vm2408, %v2359
  %2412 = vst.msk [vmem:[#allocation3 + $0x18] sm:$0xff] %vm2408, %v2361
  %2413 = vst.msk [vmem:[#allocation3 + $0x20] sm:$0xff] %vm2408, %v2363
  %2414 = vst.msk [vmem:[#allocation3 + $0x28] sm:$0xff] %vm2408, %v2365
  %2415 = vst.msk [vmem:[#allocation3 + $0x30] sm:$0xff] %vm2408, %v2367
  %2416 = vst.msk [vmem:[#allocation3 + $0x38] sm:$0xff] %vm2408, %v2369
  %2417 = vst.msk [vmem:[#allocation3 + $0x40] sm:$0xff] %vm2408, %v2371
  %2418 = vst.msk [vmem:[#allocation3 + $0x48] sm:$0xff] %vm2408, %v2373
  %2419 = vst.msk [vmem:[#allocation3 + $0x50] sm:$0xff] %vm2408, %v2375
  %2420 = vst.msk [vmem:[#allocation3 + $0x58] sm:$0xff] %vm2408, %v2377
  %2421 = vst.msk [vmem:[#allocation3 + $0x60] sm:$0xff] %vm2408, %v2379
  %2422 = vst.msk [vmem:[#allocation3 + $0x68] sm:$0xff] %vm2408, %v2381
  %2423 = vst.msk [vmem:[#allocation3 + $0x70] sm:$0xff] %vm2408, %v2383
  %2424 = vst.msk [vmem:[#allocation3 + $0x78] sm:$0xff] %vm2408, %v2385
  %2425 = vst.msk [vmem:[#allocation3 + $0x80] sm:$0xff] %vm2408, %v2387
  %vm2426 = vcmask 366832
  %2427 = vst.msk [vmem:[#allocation3 + $0x88] sm:$0x7f] %vm2426, %v2389
  %2428 = vrot.lane.b32.xlu0 %v1630, 108
  %v2429 = vpop.permute.xlu0 %2428
  %2430 = vrot.lane.b32.xlu0 %v1632, 108
  %v2431 = vpop.permute.xlu0 %2430
  %2432 = vrot.lane.b32.xlu0 %v1634, 108
  %v2433 = vpop.permute.xlu0 %2432
  %2434 = vrot.lane.b32.xlu0 %v1636, 108
  %v2435 = vpop.permute.xlu0 %2434
  %2436 = vrot.lane.b32.xlu0 %v1638, 108
  %v2437 = vpop.permute.xlu0 %2436
  %2438 = vrot.lane.b32.xlu0 %v1640, 108
  %v2439 = vpop.permute.xlu0 %2438
  %2440 = vrot.lane.b32.xlu0 %v1642, 108
  %v2441 = vpop.permute.xlu0 %2440
  %2442 = vrot.lane.b32.xlu0 %v1644, 108
  %v2443 = vpop.permute.xlu0 %2442
  %2444 = vrot.lane.b32.xlu0 %v1646, 108
  %v2445 = vpop.permute.xlu0 %2444
  %2446 = vrot.lane.b32.xlu0 %v1648, 108
  %v2447 = vpop.permute.xlu0 %2446
  %2448 = vrot.lane.b32.xlu0 %v1650, 108
  %v2449 = vpop.permute.xlu0 %2448
  %2450 = vrot.lane.b32.xlu0 %v1652, 108
  %v2451 = vpop.permute.xlu0 %2450
  %2452 = vrot.lane.b32.xlu0 %v1654, 108
  %v2453 = vpop.permute.xlu0 %2452
  %2454 = vrot.lane.b32.xlu0 %v1656, 108
  %v2455 = vpop.permute.xlu0 %2454
  %2456 = vrot.lane.b32.xlu0 %v1658, 108
  %v2457 = vpop.permute.xlu0 %2456
  %2458 = vrot.lane.b32.xlu0 %v1660, 108
  %v2459 = vpop.permute.xlu0 %2458
  %2460 = vrot.lane.b32.xlu0 %v1662, 108
  %v2461 = vpop.permute.xlu0 %2460
  %2462 = vrot.lane.b32.xlu0 %v1664, 108
  %v2463 = vpop.permute.xlu0 %2462
  %2482 = vst.msk [vmem:[#allocation3 + $0x8f] sm:$0xff] %vm2408, %v2429
  %2483 = vst.msk [vmem:[#allocation3 + $0x97] sm:$0xff] %vm2408, %v2431
  %2484 = vst.msk [vmem:[#allocation3 + $0x9f] sm:$0xff] %vm2408, %v2433
  %2485 = vst.msk [vmem:[#allocation3 + $0xa7] sm:$0xff] %vm2408, %v2435
  %2486 = vst.msk [vmem:[#allocation3 + $0xaf] sm:$0xff] %vm2408, %v2437
  %2487 = vst.msk [vmem:[#allocation3 + $0xb7] sm:$0xff] %vm2408, %v2439
  %2488 = vst.msk [vmem:[#allocation3 + $0xbf] sm:$0xff] %vm2408, %v2441
  %2489 = vst.msk [vmem:[#allocation3 + $0xc7] sm:$0xff] %vm2408, %v2443
  %2490 = vst.msk [vmem:[#allocation3 + $0xcf] sm:$0xff] %vm2408, %v2445
  %2491 = vst.msk [vmem:[#allocation3 + $0xd7] sm:$0xff] %vm2408, %v2447
  %2492 = vst.msk [vmem:[#allocation3 + $0xdf] sm:$0xff] %vm2408, %v2449
  %2493 = vst.msk [vmem:[#allocation3 + $0xe7] sm:$0xff] %vm2408, %v2451
  %2494 = vst.msk [vmem:[#allocation3 + $0xef] sm:$0xff] %vm2408, %v2453
  %2495 = vst.msk [vmem:[#allocation3 + $0xf7] sm:$0xff] %vm2408, %v2455
  %2496 = vst.msk [vmem:[#allocation3 + $0xff] sm:$0xff] %vm2408, %v2457
  %2497 = vst.msk [vmem:[#allocation3 + $0x107] sm:$0xff] %vm2408, %v2459
  %2498 = vst.msk [vmem:[#allocation3 + $0x10f] sm:$0xff] %vm2408, %v2461
  %2499 = vst.msk [vmem:[#allocation3 + $0x117] sm:$0x7f] %vm2426, %v2463
  %2500 = vrot.lane.b32.xlu0 %v1630, 106
  %v2501 = vpop.permute.xlu0 %2500
  %2502 = vrot.lane.b32.xlu0 %v1632, 106
  %v2503 = vpop.permute.xlu0 %2502
  %2504 = vrot.lane.b32.xlu0 %v1634, 106
  %v2505 = vpop.permute.xlu0 %2504
  %2506 = vrot.lane.b32.xlu0 %v1636, 106
  %v2507 = vpop.permute.xlu0 %2506
  %2508 = vrot.lane.b32.xlu0 %v1638, 106
  %v2509 = vpop.permute.xlu0 %2508
  %2510 = vrot.lane.b32.xlu0 %v1640, 106
  %v2511 = vpop.permute.xlu0 %2510
  %2512 = vrot.lane.b32.xlu0 %v1642, 106
  %v2513 = vpop.permute.xlu0 %2512
  %2514 = vrot.lane.b32.xlu0 %v1644, 106
  %v2515 = vpop.permute.xlu0 %2514
  %2516 = vrot.lane.b32.xlu0 %v1646, 106
  %v2517 = vpop.permute.xlu0 %2516
  %2518 = vrot.lane.b32.xlu0 %v1648, 106
  %v2519 = vpop.permute.xlu0 %2518
  %2520 = vrot.lane.b32.xlu0 %v1650, 106
  %v2521 = vpop.permute.xlu0 %2520
  %2522 = vrot.lane.b32.xlu0 %v1652, 106
  %v2523 = vpop.permute.xlu0 %2522
  %2524 = vrot.lane.b32.xlu0 %v1654, 106
  %v2525 = vpop.permute.xlu0 %2524
  %2526 = vrot.lane.b32.xlu0 %v1656, 106
  %v2527 = vpop.permute.xlu0 %2526
  %2528 = vrot.lane.b32.xlu0 %v1658, 106
  %v2529 = vpop.permute.xlu0 %2528
  %2530 = vrot.lane.b32.xlu0 %v1660, 106
  %v2531 = vpop.permute.xlu0 %2530
  %2532 = vrot.lane.b32.xlu0 %v1662, 106
  %v2533 = vpop.permute.xlu0 %2532
  %2534 = vrot.lane.b32.xlu0 %v1664, 106
  %v2535 = vpop.permute.xlu0 %2534
  %2554 = vst.msk [vmem:[#allocation3 + $0x11e] sm:$0xff] %vm2408, %v2501
  %2555 = vst.msk [vmem:[#allocation3 + $0x126] sm:$0xff] %vm2408, %v2503
  %2556 = vst.msk [vmem:[#allocation3 + $0x12e] sm:$0xff] %vm2408, %v2505
  %2557 = vst.msk [vmem:[#allocation3 + $0x136] sm:$0xff] %vm2408, %v2507
  %2558 = vst.msk [vmem:[#allocation3 + $0x13e] sm:$0xff] %vm2408, %v2509
  %2559 = vst.msk [vmem:[#allocation3 + $0x146] sm:$0xff] %vm2408, %v2511
  %2560 = vst.msk [vmem:[#allocation3 + $0x14e] sm:$0xff] %vm2408, %v2513
  %2561 = vst.msk [vmem:[#allocation3 + $0x156] sm:$0xff] %vm2408, %v2515
  %2562 = vst.msk [vmem:[#allocation3 + $0x15e] sm:$0xff] %vm2408, %v2517
  %2563 = vst.msk [vmem:[#allocation3 + $0x166] sm:$0xff] %vm2408, %v2519
  %2564 = vst.msk [vmem:[#allocation3 + $0x16e] sm:$0xff] %vm2408, %v2521
  %2565 = vst.msk [vmem:[#allocation3 + $0x176] sm:$0xff] %vm2408, %v2523
  %2566 = vst.msk [vmem:[#allocation3 + $0x17e] sm:$0xff] %vm2408, %v2525
  %2567 = vst.msk [vmem:[#allocation3 + $0x186] sm:$0xff] %vm2408, %v2527
  %2568 = vst.msk [vmem:[#allocation3 + $0x18e] sm:$0xff] %vm2408, %v2529
  %2569 = vst.msk [vmem:[#allocation3 + $0x196] sm:$0xff] %vm2408, %v2531
  %2570 = vst.msk [vmem:[#allocation3 + $0x19e] sm:$0xff] %vm2408, %v2533
  %2571 = vst.msk [vmem:[#allocation3 + $0x1a6] sm:$0x7f] %vm2426, %v2535
  %2572 = vrot.lane.b32.xlu0 %v1630, 104
  %v2573 = vpop.permute.xlu0 %2572
  %2574 = vrot.lane.b32.xlu0 %v1632, 104
  %v2575 = vpop.permute.xlu0 %2574
  %2576 = vrot.lane.b32.xlu0 %v1634, 104
  %v2577 = vpop.permute.xlu0 %2576
  %2578 = vrot.lane.b32.xlu0 %v1636, 104
  %v2579 = vpop.permute.xlu0 %2578
  %2580 = vrot.lane.b32.xlu0 %v1638, 104
  %v2581 = vpop.permute.xlu0 %2580
  %2582 = vrot.lane.b32.xlu0 %v1640, 104
  %v2583 = vpop.permute.xlu0 %2582
  %2584 = vrot.lane.b32.xlu0 %v1642, 104
  %v2585 = vpop.permute.xlu0 %2584
  %2586 = vrot.lane.b32.xlu0 %v1644, 104
  %v2587 = vpop.permute.xlu0 %2586
  %2588 = vrot.lane.b32.xlu0 %v1646, 104
  %v2589 = vpop.permute.xlu0 %2588
  %2590 = vrot.lane.b32.xlu0 %v1648, 104
  %v2591 = vpop.permute.xlu0 %2590
  %2592 = vrot.lane.b32.xlu0 %v1650, 104
  %v2593 = vpop.permute.xlu0 %2592
  %2594 = vrot.lane.b32.xlu0 %v1652, 104
  %v2595 = vpop.permute.xlu0 %2594
  %2596 = vrot.lane.b32.xlu0 %v1654, 104
  %v2597 = vpop.permute.xlu0 %2596
  %2598 = vrot.lane.b32.xlu0 %v1656, 104
  %v2599 = vpop.permute.xlu0 %2598
  %2600 = vrot.lane.b32.xlu0 %v1658, 104
  %v2601 = vpop.permute.xlu0 %2600
  %2602 = vrot.lane.b32.xlu0 %v1660, 104
  %v2603 = vpop.permute.xlu0 %2602
  %2604 = vrot.lane.b32.xlu0 %v1662, 104
  %v2605 = vpop.permute.xlu0 %2604
  %2606 = vrot.lane.b32.xlu0 %v1664, 104
  %v2607 = vpop.permute.xlu0 %2606
  %2626 = vst.msk [vmem:[#allocation3 + $0x1ad] sm:$0xff] %vm2408, %v2573
  %2627 = vst.msk [vmem:[#allocation3 + $0x1b5] sm:$0xff] %vm2408, %v2575
  %2628 = vst.msk [vmem:[#allocation3 + $0x1bd] sm:$0xff] %vm2408, %v2577
  %2629 = vst.msk [vmem:[#allocation3 + $0x1c5] sm:$0xff] %vm2408, %v2579
  %2630 = vst.msk [vmem:[#allocation3 + $0x1cd] sm:$0xff] %vm2408, %v2581
  %2631 = vst.msk [vmem:[#allocation3 + $0x1d5] sm:$0xff] %vm2408, %v2583
  %2632 = vst.msk [vmem:[#allocation3 + $0x1dd] sm:$0xff] %vm2408, %v2585
  %2633 = vst.msk [vmem:[#allocation3 + $0x1e5] sm:$0xff] %vm2408, %v2587
  %2634 = vst.msk [vmem:[#allocation3 + $0x1ed] sm:$0xff] %vm2408, %v2589
  %2635 = vst.msk [vmem:[#allocation3 + $0x1f5] sm:$0xff] %vm2408, %v2591
  %2636 = vst.msk [vmem:[#allocation3 + $0x1fd] sm:$0xff] %vm2408, %v2593
  %2637 = vst.msk [vmem:[#allocation3 + $0x205] sm:$0xff] %vm2408, %v2595
  %2638 = vst.msk [vmem:[#allocation3 + $0x20d] sm:$0xff] %vm2408, %v2597
  %2639 = vst.msk [vmem:[#allocation3 + $0x215] sm:$0xff] %vm2408, %v2599
  %2640 = vst.msk [vmem:[#allocation3 + $0x21d] sm:$0xff] %vm2408, %v2601
  %2641 = vst.msk [vmem:[#allocation3 + $0x225] sm:$0xff] %vm2408, %v2603
  %2642 = vst.msk [vmem:[#allocation3 + $0x22d] sm:$0xff] %vm2408, %v2605
  %2643 = vst.msk [vmem:[#allocation3 + $0x235] sm:$0x7f] %vm2426, %v2607
  %2644 = vrot.lane.b32.xlu0 %v1630, 102
  %v2645 = vpop.permute.xlu0 %2644
  %2646 = vrot.lane.b32.xlu0 %v1632, 102
  %v2647 = vpop.permute.xlu0 %2646
  %2648 = vrot.lane.b32.xlu0 %v1634, 102
  %v2649 = vpop.permute.xlu0 %2648
  %2650 = vrot.lane.b32.xlu0 %v1636, 102
  %v2651 = vpop.permute.xlu0 %2650
  %2652 = vrot.lane.b32.xlu0 %v1638, 102
  %v2653 = vpop.permute.xlu0 %2652
  %2654 = vrot.lane.b32.xlu0 %v1640, 102
  %v2655 = vpop.permute.xlu0 %2654
  %2656 = vrot.lane.b32.xlu0 %v1642, 102
  %v2657 = vpop.permute.xlu0 %2656
  %2658 = vrot.lane.b32.xlu0 %v1644, 102
  %v2659 = vpop.permute.xlu0 %2658
  %2660 = vrot.lane.b32.xlu0 %v1646, 102
  %v2661 = vpop.permute.xlu0 %2660
  %2662 = vrot.lane.b32.xlu0 %v1648, 102
  %v2663 = vpop.permute.xlu0 %2662
  %2664 = vrot.lane.b32.xlu0 %v1650, 102
  %v2665 = vpop.permute.xlu0 %2664
  %2666 = vrot.lane.b32.xlu0 %v1652, 102
  %v2667 = vpop.permute.xlu0 %2666
  %2668 = vrot.lane.b32.xlu0 %v1654, 102
  %v2669 = vpop.permute.xlu0 %2668
  %2670 = vrot.lane.b32.xlu0 %v1656, 102
  %v2671 = vpop.permute.xlu0 %2670
  %2672 = vrot.lane.b32.xlu0 %v1658, 102
  %v2673 = vpop.permute.xlu0 %2672
  %2674 = vrot.lane.b32.xlu0 %v1660, 102
  %v2675 = vpop.permute.xlu0 %2674
  %2676 = vrot.lane.b32.xlu0 %v1662, 102
  %v2677 = vpop.permute.xlu0 %2676
  %2678 = vrot.lane.b32.xlu0 %v1664, 102
  %v2679 = vpop.permute.xlu0 %2678
  %2698 = vst.msk [vmem:[#allocation3 + $0x23c] sm:$0xff] %vm2408, %v2645
  %2699 = vst.msk [vmem:[#allocation3 + $0x244] sm:$0xff] %vm2408, %v2647
  %2700 = vst.msk [vmem:[#allocation3 + $0x24c] sm:$0xff] %vm2408, %v2649
  %2701 = vst.msk [vmem:[#allocation3 + $0x254] sm:$0xff] %vm2408, %v2651
  %2702 = vst.msk [vmem:[#allocation3 + $0x25c] sm:$0xff] %vm2408, %v2653
  %2703 = vst.msk [vmem:[#allocation3 + $0x264] sm:$0xff] %vm2408, %v2655
  %2704 = vst.msk [vmem:[#allocation3 + $0x26c] sm:$0xff] %vm2408, %v2657
  %2705 = vst.msk [vmem:[#allocation3 + $0x274] sm:$0xff] %vm2408, %v2659
  %2706 = vst.msk [vmem:[#allocation3 + $0x27c] sm:$0xff] %vm2408, %v2661
  %2707 = vst.msk [vmem:[#allocation3 + $0x284] sm:$0xff] %vm2408, %v2663
  %2708 = vst.msk [vmem:[#allocation3 + $0x28c] sm:$0xff] %vm2408, %v2665
  %2709 = vst.msk [vmem:[#allocation3 + $0x294] sm:$0xff] %vm2408, %v2667
  %2710 = vst.msk [vmem:[#allocation3 + $0x29c] sm:$0xff] %vm2408, %v2669
  %2711 = vst.msk [vmem:[#allocation3 + $0x2a4] sm:$0xff] %vm2408, %v2671
  %2712 = vst.msk [vmem:[#allocation3 + $0x2ac] sm:$0xff] %vm2408, %v2673
  %2713 = vst.msk [vmem:[#allocation3 + $0x2b4] sm:$0xff] %vm2408, %v2675
  %2714 = vst.msk [vmem:[#allocation3 + $0x2bc] sm:$0xff] %vm2408, %v2677
  %2715 = vst.msk [vmem:[#allocation3 + $0x2c4] sm:$0x7f] %vm2426, %v2679
  %2716 = vrot.lane.b32.xlu0 %v1630, 101
  %v2717 = vpop.permute.xlu0 %2716
  %2718 = vrot.lane.b32.xlu0 %v1632, 101
  %v2719 = vpop.permute.xlu0 %2718
  %2720 = vrot.lane.b32.xlu0 %v1634, 101
  %v2721 = vpop.permute.xlu0 %2720
  %2722 = vrot.lane.b32.xlu0 %v1636, 101
  %v2723 = vpop.permute.xlu0 %2722
  %2724 = vrot.lane.b32.xlu0 %v1638, 101
  %v2725 = vpop.permute.xlu0 %2724
  %2726 = vrot.lane.b32.xlu0 %v1640, 101
  %v2727 = vpop.permute.xlu0 %2726
  %2728 = vrot.lane.b32.xlu0 %v1642, 101
  %v2729 = vpop.permute.xlu0 %2728
  %2730 = vrot.lane.b32.xlu0 %v1644, 101
  %v2731 = vpop.permute.xlu0 %2730
  %2732 = vrot.lane.b32.xlu0 %v1646, 101
  %v2733 = vpop.permute.xlu0 %2732
  %2734 = vrot.lane.b32.xlu0 %v1648, 101
  %v2735 = vpop.permute.xlu0 %2734
  %2736 = vrot.lane.b32.xlu0 %v1650, 101
  %v2737 = vpop.permute.xlu0 %2736
  %2738 = vrot.lane.b32.xlu0 %v1652, 101
  %v2739 = vpop.permute.xlu0 %2738
  %2740 = vrot.lane.b32.xlu0 %v1654, 101
  %v2741 = vpop.permute.xlu0 %2740
  %2742 = vrot.lane.b32.xlu0 %v1656, 101
  %v2743 = vpop.permute.xlu0 %2742
  %2744 = vrot.lane.b32.xlu0 %v1658, 101
  %v2745 = vpop.permute.xlu0 %2744
  %2746 = vrot.lane.b32.xlu0 %v1660, 101
  %v2747 = vpop.permute.xlu0 %2746
  %2748 = vrot.lane.b32.xlu0 %v1662, 101
  %v2749 = vpop.permute.xlu0 %2748
  %2750 = vrot.lane.b32.xlu0 %v1664, 101
  %v2751 = vpop.permute.xlu0 %2750
  %vm2770 = vcmask 490856
  %2771 = vst.msk [vmem:[#allocation3] sm:$0xff] %vm2770, %v2717
  %2772 = vst.msk [vmem:[#allocation3 + $0x8] sm:$0xff] %vm2770, %v2719
  %2773 = vst.msk [vmem:[#allocation3 + $0x10] sm:$0xff] %vm2770, %v2721
  %2774 = vst.msk [vmem:[#allocation3 + $0x18] sm:$0xff] %vm2770, %v2723
  %2775 = vst.msk [vmem:[#allocation3 + $0x20] sm:$0xff] %vm2770, %v2725
  %2776 = vst.msk [vmem:[#allocation3 + $0x28] sm:$0xff] %vm2770, %v2727
  %2777 = vst.msk [vmem:[#allocation3 + $0x30] sm:$0xff] %vm2770, %v2729
  %2778 = vst.msk [vmem:[#allocation3 + $0x38] sm:$0xff] %vm2770, %v2731
  %2779 = vst.msk [vmem:[#allocation3 + $0x40] sm:$0xff] %vm2770, %v2733
  %2780 = vst.msk [vmem:[#allocation3 + $0x48] sm:$0xff] %vm2770, %v2735
  %2781 = vst.msk [vmem:[#allocation3 + $0x50] sm:$0xff] %vm2770, %v2737
  %2782 = vst.msk [vmem:[#allocation3 + $0x58] sm:$0xff] %vm2770, %v2739
  %2783 = vst.msk [vmem:[#allocation3 + $0x60] sm:$0xff] %vm2770, %v2741
  %2784 = vst.msk [vmem:[#allocation3 + $0x68] sm:$0xff] %vm2770, %v2743
  %2785 = vst.msk [vmem:[#allocation3 + $0x70] sm:$0xff] %vm2770, %v2745
  %2786 = vst.msk [vmem:[#allocation3 + $0x78] sm:$0xff] %vm2770, %v2747
  %2787 = vst.msk [vmem:[#allocation3 + $0x80] sm:$0xff] %vm2770, %v2749
  %vm2788 = vcmask 489832
  %2789 = vst.msk [vmem:[#allocation3 + $0x88] sm:$0x7f] %vm2788, %v2751
  %2790 = vrot.lane.b32.xlu0 %v1630, 99
  %v2791 = vpop.permute.xlu0 %2790
  %2792 = vrot.lane.b32.xlu0 %v1632, 99
  %v2793 = vpop.permute.xlu0 %2792
  %2794 = vrot.lane.b32.xlu0 %v1634, 99
  %v2795 = vpop.permute.xlu0 %2794
  %2796 = vrot.lane.b32.xlu0 %v1636, 99
  %v2797 = vpop.permute.xlu0 %2796
  %2798 = vrot.lane.b32.xlu0 %v1638, 99
  %v2799 = vpop.permute.xlu0 %2798
  %2800 = vrot.lane.b32.xlu0 %v1640, 99
  %v2801 = vpop.permute.xlu0 %2800
  %2802 = vrot.lane.b32.xlu0 %v1642, 99
  %v2803 = vpop.permute.xlu0 %2802
  %2804 = vrot.lane.b32.xlu0 %v1644, 99
  %v2805 = vpop.permute.xlu0 %2804
  %2806 = vrot.lane.b32.xlu0 %v1646, 99
  %v2807 = vpop.permute.xlu0 %2806
  %2808 = vrot.lane.b32.xlu0 %v1648, 99
  %v2809 = vpop.permute.xlu0 %2808
  %2810 = vrot.lane.b32.xlu0 %v1650, 99
  %v2811 = vpop.permute.xlu0 %2810
  %2812 = vrot.lane.b32.xlu0 %v1652, 99
  %v2813 = vpop.permute.xlu0 %2812
  %2814 = vrot.lane.b32.xlu0 %v1654, 99
  %v2815 = vpop.permute.xlu0 %2814
  %2816 = vrot.lane.b32.xlu0 %v1656, 99
  %v2817 = vpop.permute.xlu0 %2816
  %2818 = vrot.lane.b32.xlu0 %v1658, 99
  %v2819 = vpop.permute.xlu0 %2818
  %2820 = vrot.lane.b32.xlu0 %v1660, 99
  %v2821 = vpop.permute.xlu0 %2820
  %2822 = vrot.lane.b32.xlu0 %v1662, 99
  %v2823 = vpop.permute.xlu0 %2822
  %2824 = vrot.lane.b32.xlu0 %v1664, 99
  %v2825 = vpop.permute.xlu0 %2824
  %2844 = vst.msk [vmem:[#allocation3 + $0x8f] sm:$0xff] %vm2770, %v2791
  %2845 = vst.msk [vmem:[#allocation3 + $0x97] sm:$0xff] %vm2770, %v2793
  %2846 = vst.msk [vmem:[#allocation3 + $0x9f] sm:$0xff] %vm2770, %v2795
  %2847 = vst.msk [vmem:[#allocation3 + $0xa7] sm:$0xff] %vm2770, %v2797
  %2848 = vst.msk [vmem:[#allocation3 + $0xaf] sm:$0xff] %vm2770, %v2799
  %2849 = vst.msk [vmem:[#allocation3 + $0xb7] sm:$0xff] %vm2770, %v2801
  %2850 = vst.msk [vmem:[#allocation3 + $0xbf] sm:$0xff] %vm2770, %v2803
  %2851 = vst.msk [vmem:[#allocation3 + $0xc7] sm:$0xff] %vm2770, %v2805
  %2852 = vst.msk [vmem:[#allocation3 + $0xcf] sm:$0xff] %vm2770, %v2807
  %2853 = vst.msk [vmem:[#allocation3 + $0xd7] sm:$0xff] %vm2770, %v2809
  %2854 = vst.msk [vmem:[#allocation3 + $0xdf] sm:$0xff] %vm2770, %v2811
  %2855 = vst.msk [vmem:[#allocation3 + $0xe7] sm:$0xff] %vm2770, %v2813
  %2856 = vst.msk [vmem:[#allocation3 + $0xef] sm:$0xff] %vm2770, %v2815
  %2857 = vst.msk [vmem:[#allocation3 + $0xf7] sm:$0xff] %vm2770, %v2817
  %2858 = vst.msk [vmem:[#allocation3 + $0xff] sm:$0xff] %vm2770, %v2819
  %2859 = vst.msk [vmem:[#allocation3 + $0x107] sm:$0xff] %vm2770, %v2821
  %2860 = vst.msk [vmem:[#allocation3 + $0x10f] sm:$0xff] %vm2770, %v2823
  %2861 = vst.msk [vmem:[#allocation3 + $0x117] sm:$0x7f] %vm2788, %v2825
  %2862 = vrot.lane.b32.xlu0 %v1630, 97
  %v2863 = vpop.permute.xlu0 %2862
  %2864 = vrot.lane.b32.xlu0 %v1632, 97
  %v2865 = vpop.permute.xlu0 %2864
  %2866 = vrot.lane.b32.xlu0 %v1634, 97
  %v2867 = vpop.permute.xlu0 %2866
  %2868 = vrot.lane.b32.xlu0 %v1636, 97
  %v2869 = vpop.permute.xlu0 %2868
  %2870 = vrot.lane.b32.xlu0 %v1638, 97
  %v2871 = vpop.permute.xlu0 %2870
  %2872 = vrot.lane.b32.xlu0 %v1640, 97
  %v2873 = vpop.permute.xlu0 %2872
  %2874 = vrot.lane.b32.xlu0 %v1642, 97
  %v2875 = vpop.permute.xlu0 %2874
  %2876 = vrot.lane.b32.xlu0 %v1644, 97
  %v2877 = vpop.permute.xlu0 %2876
  %2878 = vrot.lane.b32.xlu0 %v1646, 97
  %v2879 = vpop.permute.xlu0 %2878
  %2880 = vrot.lane.b32.xlu0 %v1648, 97
  %v2881 = vpop.permute.xlu0 %2880
  %2882 = vrot.lane.b32.xlu0 %v1650, 97
  %v2883 = vpop.permute.xlu0 %2882
  %2884 = vrot.lane.b32.xlu0 %v1652, 97
  %v2885 = vpop.permute.xlu0 %2884
  %2886 = vrot.lane.b32.xlu0 %v1654, 97
  %v2887 = vpop.permute.xlu0 %2886
  %2888 = vrot.lane.b32.xlu0 %v1656, 97
  %v2889 = vpop.permute.xlu0 %2888
  %2890 = vrot.lane.b32.xlu0 %v1658, 97
  %v2891 = vpop.permute.xlu0 %2890
  %2892 = vrot.lane.b32.xlu0 %v1660, 97
  %v2893 = vpop.permute.xlu0 %2892
  %2894 = vrot.lane.b32.xlu0 %v1662, 97
  %v2895 = vpop.permute.xlu0 %2894
  %2896 = vrot.lane.b32.xlu0 %v1664, 97
  %v2897 = vpop.permute.xlu0 %2896
  %2916 = vst.msk [vmem:[#allocation3 + $0x11e] sm:$0xff] %vm2770, %v2863
  %2917 = vst.msk [vmem:[#allocation3 + $0x126] sm:$0xff] %vm2770, %v2865
  %2918 = vst.msk [vmem:[#allocation3 + $0x12e] sm:$0xff] %vm2770, %v2867
  %2919 = vst.msk [vmem:[#allocation3 + $0x136] sm:$0xff] %vm2770, %v2869
  %2920 = vst.msk [vmem:[#allocation3 + $0x13e] sm:$0xff] %vm2770, %v2871
  %2921 = vst.msk [vmem:[#allocation3 + $0x146] sm:$0xff] %vm2770, %v2873
  %2922 = vst.msk [vmem:[#allocation3 + $0x14e] sm:$0xff] %vm2770, %v2875
  %2923 = vst.msk [vmem:[#allocation3 + $0x156] sm:$0xff] %vm2770, %v2877
  %2924 = vst.msk [vmem:[#allocation3 + $0x15e] sm:$0xff] %vm2770, %v2879
  %2925 = vst.msk [vmem:[#allocation3 + $0x166] sm:$0xff] %vm2770, %v2881
  %2926 = vst.msk [vmem:[#allocation3 + $0x16e] sm:$0xff] %vm2770, %v2883
  %2927 = vst.msk [vmem:[#allocation3 + $0x176] sm:$0xff] %vm2770, %v2885
  %2928 = vst.msk [vmem:[#allocation3 + $0x17e] sm:$0xff] %vm2770, %v2887
  %2929 = vst.msk [vmem:[#allocation3 + $0x186] sm:$0xff] %vm2770, %v2889
  %2930 = vst.msk [vmem:[#allocation3 + $0x18e] sm:$0xff] %vm2770, %v2891
  %2931 = vst.msk [vmem:[#allocation3 + $0x196] sm:$0xff] %vm2770, %v2893
  %2932 = vst.msk [vmem:[#allocation3 + $0x19e] sm:$0xff] %vm2770, %v2895
  %2933 = vst.msk [vmem:[#allocation3 + $0x1a6] sm:$0x7f] %vm2788, %v2897
  %2934 = vrot.lane.b32.xlu0 %v1630, 95
  %v2935 = vpop.permute.xlu0 %2934
  %2936 = vrot.lane.b32.xlu0 %v1632, 95
  %v2937 = vpop.permute.xlu0 %2936
  %2938 = vrot.lane.b32.xlu0 %v1634, 95
  %v2939 = vpop.permute.xlu0 %2938
  %2940 = vrot.lane.b32.xlu0 %v1636, 95
  %v2941 = vpop.permute.xlu0 %2940
  %2942 = vrot.lane.b32.xlu0 %v1638, 95
  %v2943 = vpop.permute.xlu0 %2942
  %2944 = vrot.lane.b32.xlu0 %v1640, 95
  %v2945 = vpop.permute.xlu0 %2944
  %2946 = vrot.lane.b32.xlu0 %v1642, 95
  %v2947 = vpop.permute.xlu0 %2946
  %2948 = vrot.lane.b32.xlu0 %v1644, 95
  %v2949 = vpop.permute.xlu0 %2948
  %2950 = vrot.lane.b32.xlu0 %v1646, 95
  %v2951 = vpop.permute.xlu0 %2950
  %2952 = vrot.lane.b32.xlu0 %v1648, 95
  %v2953 = vpop.permute.xlu0 %2952
  %2954 = vrot.lane.b32.xlu0 %v1650, 95
  %v2955 = vpop.permute.xlu0 %2954
  %2956 = vrot.lane.b32.xlu0 %v1652, 95
  %v2957 = vpop.permute.xlu0 %2956
  %2958 = vrot.lane.b32.xlu0 %v1654, 95
  %v2959 = vpop.permute.xlu0 %2958
  %2960 = vrot.lane.b32.xlu0 %v1656, 95
  %v2961 = vpop.permute.xlu0 %2960
  %2962 = vrot.lane.b32.xlu0 %v1658, 95
  %v2963 = vpop.permute.xlu0 %2962
  %2964 = vrot.lane.b32.xlu0 %v1660, 95
  %v2965 = vpop.permute.xlu0 %2964
  %2966 = vrot.lane.b32.xlu0 %v1662, 95
  %v2967 = vpop.permute.xlu0 %2966
  %2968 = vrot.lane.b32.xlu0 %v1664, 95
  %v2969 = vpop.permute.xlu0 %2968
  %2988 = vst.msk [vmem:[#allocation3 + $0x1ad] sm:$0xff] %vm2770, %v2935
  %2989 = vst.msk [vmem:[#allocation3 + $0x1b5] sm:$0xff] %vm2770, %v2937
  %2990 = vst.msk [vmem:[#allocation3 + $0x1bd] sm:$0xff] %vm2770, %v2939
  %2991 = vst.msk [vmem:[#allocation3 + $0x1c5] sm:$0xff] %vm2770, %v2941
  %2992 = vst.msk [vmem:[#allocation3 + $0x1cd] sm:$0xff] %vm2770, %v2943
  %2993 = vst.msk [vmem:[#allocation3 + $0x1d5] sm:$0xff] %vm2770, %v2945
  %2994 = vst.msk [vmem:[#allocation3 + $0x1dd] sm:$0xff] %vm2770, %v2947
  %2995 = vst.msk [vmem:[#allocation3 + $0x1e5] sm:$0xff] %vm2770, %v2949
  %2996 = vst.msk [vmem:[#allocation3 + $0x1ed] sm:$0xff] %vm2770, %v2951
  %2997 = vst.msk [vmem:[#allocation3 + $0x1f5] sm:$0xff] %vm2770, %v2953
  %2998 = vst.msk [vmem:[#allocation3 + $0x1fd] sm:$0xff] %vm2770, %v2955
  %2999 = vst.msk [vmem:[#allocation3 + $0x205] sm:$0xff] %vm2770, %v2957
  %3000 = vst.msk [vmem:[#allocation3 + $0x20d] sm:$0xff] %vm2770, %v2959
  %3001 = vst.msk [vmem:[#allocation3 + $0x215] sm:$0xff] %vm2770, %v2961
  %3002 = vst.msk [vmem:[#allocation3 + $0x21d] sm:$0xff] %vm2770, %v2963
  %3003 = vst.msk [vmem:[#allocation3 + $0x225] sm:$0xff] %vm2770, %v2965
  %3004 = vst.msk [vmem:[#allocation3 + $0x22d] sm:$0xff] %vm2770, %v2967
  %3005 = vst.msk [vmem:[#allocation3 + $0x235] sm:$0x7f] %vm2788, %v2969
  %3006 = vrot.lane.b32.xlu0 %v1630, 93
  %v3007 = vpop.permute.xlu0 %3006
  %3008 = vrot.lane.b32.xlu0 %v1632, 93
  %v3009 = vpop.permute.xlu0 %3008
  %3010 = vrot.lane.b32.xlu0 %v1634, 93
  %v3011 = vpop.permute.xlu0 %3010
  %3012 = vrot.lane.b32.xlu0 %v1636, 93
  %v3013 = vpop.permute.xlu0 %3012
  %3014 = vrot.lane.b32.xlu0 %v1638, 93
  %v3015 = vpop.permute.xlu0 %3014
  %3016 = vrot.lane.b32.xlu0 %v1640, 93
  %v3017 = vpop.permute.xlu0 %3016
  %3018 = vrot.lane.b32.xlu0 %v1642, 93
  %v3019 = vpop.permute.xlu0 %3018
  %3020 = vrot.lane.b32.xlu0 %v1644, 93
  %v3021 = vpop.permute.xlu0 %3020
  %3022 = vrot.lane.b32.xlu0 %v1646, 93
  %v3023 = vpop.permute.xlu0 %3022
  %3024 = vrot.lane.b32.xlu0 %v1648, 93
  %v3025 = vpop.permute.xlu0 %3024
  %3026 = vrot.lane.b32.xlu0 %v1650, 93
  %v3027 = vpop.permute.xlu0 %3026
  %3028 = vrot.lane.b32.xlu0 %v1652, 93
  %v3029 = vpop.permute.xlu0 %3028
  %3030 = vrot.lane.b32.xlu0 %v1654, 93
  %v3031 = vpop.permute.xlu0 %3030
  %3032 = vrot.lane.b32.xlu0 %v1656, 93
  %v3033 = vpop.permute.xlu0 %3032
  %3034 = vrot.lane.b32.xlu0 %v1658, 93
  %v3035 = vpop.permute.xlu0 %3034
  %3036 = vrot.lane.b32.xlu0 %v1660, 93
  %v3037 = vpop.permute.xlu0 %3036
  %3038 = vrot.lane.b32.xlu0 %v1662, 93
  %v3039 = vpop.permute.xlu0 %3038
  %3040 = vrot.lane.b32.xlu0 %v1664, 93
  %v3041 = vpop.permute.xlu0 %3040
  %3060 = vst.msk [vmem:[#allocation3 + $0x23c] sm:$0xff] %vm2770, %v3007
  %3061 = vst.msk [vmem:[#allocation3 + $0x244] sm:$0xff] %vm2770, %v3009
  %3062 = vst.msk [vmem:[#allocation3 + $0x24c] sm:$0xff] %vm2770, %v3011
  %3063 = vst.msk [vmem:[#allocation3 + $0x254] sm:$0xff] %vm2770, %v3013
  %3064 = vst.msk [vmem:[#allocation3 + $0x25c] sm:$0xff] %vm2770, %v3015
  %3065 = vst.msk [vmem:[#allocation3 + $0x264] sm:$0xff] %vm2770, %v3017
  %3066 = vst.msk [vmem:[#allocation3 + $0x26c] sm:$0xff] %vm2770, %v3019
  %3067 = vst.msk [vmem:[#allocation3 + $0x274] sm:$0xff] %vm2770, %v3021
  %3068 = vst.msk [vmem:[#allocation3 + $0x27c] sm:$0xff] %vm2770, %v3023
  %3069 = vst.msk [vmem:[#allocation3 + $0x284] sm:$0xff] %vm2770, %v3025
  %3070 = vst.msk [vmem:[#allocation3 + $0x28c] sm:$0xff] %vm2770, %v3027
  %3071 = vst.msk [vmem:[#allocation3 + $0x294] sm:$0xff] %vm2770, %v3029
  %3072 = vst.msk [vmem:[#allocation3 + $0x29c] sm:$0xff] %vm2770, %v3031
  %3073 = vst.msk [vmem:[#allocation3 + $0x2a4] sm:$0xff] %vm2770, %v3033
  %3074 = vst.msk [vmem:[#allocation3 + $0x2ac] sm:$0xff] %vm2770, %v3035
  %3075 = vst.msk [vmem:[#allocation3 + $0x2b4] sm:$0xff] %vm2770, %v3037
  %3076 = vst.msk [vmem:[#allocation3 + $0x2bc] sm:$0xff] %vm2770, %v3039
  %3077 = vst.msk [vmem:[#allocation3 + $0x2c4] sm:$0x7f] %vm2788, %v3041
  %3078 = vrot.lane.b32.xlu0 %v1630, 92
  %v3079 = vpop.permute.xlu0 %3078
  %3080 = vrot.lane.b32.xlu0 %v1632, 92
  %v3081 = vpop.permute.xlu0 %3080
  %3082 = vrot.lane.b32.xlu0 %v1634, 92
  %v3083 = vpop.permute.xlu0 %3082
  %3084 = vrot.lane.b32.xlu0 %v1636, 92
  %v3085 = vpop.permute.xlu0 %3084
  %3086 = vrot.lane.b32.xlu0 %v1638, 92
  %v3087 = vpop.permute.xlu0 %3086
  %3088 = vrot.lane.b32.xlu0 %v1640, 92
  %v3089 = vpop.permute.xlu0 %3088
  %3090 = vrot.lane.b32.xlu0 %v1642, 92
  %v3091 = vpop.permute.xlu0 %3090
  %3092 = vrot.lane.b32.xlu0 %v1644, 92
  %v3093 = vpop.permute.xlu0 %3092
  %3094 = vrot.lane.b32.xlu0 %v1646, 92
  %v3095 = vpop.permute.xlu0 %3094
  %3096 = vrot.lane.b32.xlu0 %v1648, 92
  %v3097 = vpop.permute.xlu0 %3096
  %3098 = vrot.lane.b32.xlu0 %v1650, 92
  %v3099 = vpop.permute.xlu0 %3098
  %3100 = vrot.lane.b32.xlu0 %v1652, 92
  %v3101 = vpop.permute.xlu0 %3100
  %3102 = vrot.lane.b32.xlu0 %v1654, 92
  %v3103 = vpop.permute.xlu0 %3102
  %3104 = vrot.lane.b32.xlu0 %v1656, 92
  %v3105 = vpop.permute.xlu0 %3104
  %3106 = vrot.lane.b32.xlu0 %v1658, 92
  %v3107 = vpop.permute.xlu0 %3106
  %3108 = vrot.lane.b32.xlu0 %v1660, 92
  %v3109 = vpop.permute.xlu0 %3108
  %3110 = vrot.lane.b32.xlu0 %v1662, 92
  %v3111 = vpop.permute.xlu0 %3110
  %3112 = vrot.lane.b32.xlu0 %v1664, 92
  %v3113 = vpop.permute.xlu0 %3112
  %vm3132 = vcmask 613856
  %3133 = vst.msk [vmem:[#allocation3] sm:$0xff] %vm3132, %v3079
  %3134 = vst.msk [vmem:[#allocation3 + $0x8] sm:$0xff] %vm3132, %v3081
  %3135 = vst.msk [vmem:[#allocation3 + $0x10] sm:$0xff] %vm3132, %v3083
  %3136 = vst.msk [vmem:[#allocation3 + $0x18] sm:$0xff] %vm3132, %v3085
  %3137 = vst.msk [vmem:[#allocation3 + $0x20] sm:$0xff] %vm3132, %v3087
  %3138 = vst.msk [vmem:[#allocation3 + $0x28] sm:$0xff] %vm3132, %v3089
  %3139 = vst.msk [vmem:[#allocation3 + $0x30] sm:$0xff] %vm3132, %v3091
  %3140 = vst.msk [vmem:[#allocation3 + $0x38] sm:$0xff] %vm3132, %v3093
  %3141 = vst.msk [vmem:[#allocation3 + $0x40] sm:$0xff] %vm3132, %v3095
  %3142 = vst.msk [vmem:[#allocation3 + $0x48] sm:$0xff] %vm3132, %v3097
  %3143 = vst.msk [vmem:[#allocation3 + $0x50] sm:$0xff] %vm3132, %v3099
  %3144 = vst.msk [vmem:[#allocation3 + $0x58] sm:$0xff] %vm3132, %v3101
  %3145 = vst.msk [vmem:[#allocation3 + $0x60] sm:$0xff] %vm3132, %v3103
  %3146 = vst.msk [vmem:[#allocation3 + $0x68] sm:$0xff] %vm3132, %v3105
  %3147 = vst.msk [vmem:[#allocation3 + $0x70] sm:$0xff] %vm3132, %v3107
  %3148 = vst.msk [vmem:[#allocation3 + $0x78] sm:$0xff] %vm3132, %v3109
  %3149 = vst.msk [vmem:[#allocation3 + $0x80] sm:$0xff] %vm3132, %v3111
  %vm3150 = vcmask 612832
  %3151 = vst.msk [vmem:[#allocation3 + $0x88] sm:$0x7f] %vm3150, %v3113
  %3152 = vrot.lane.b32.xlu0 %v1630, 90
  %v3153 = vpop.permute.xlu0 %3152
  %3154 = vrot.lane.b32.xlu0 %v1632, 90
  %v3155 = vpop.permute.xlu0 %3154
  %3156 = vrot.lane.b32.xlu0 %v1634, 90
  %v3157 = vpop.permute.xlu0 %3156
  %3158 = vrot.lane.b32.xlu0 %v1636, 90
  %v3159 = vpop.permute.xlu0 %3158
  %3160 = vrot.lane.b32.xlu0 %v1638, 90
  %v3161 = vpop.permute.xlu0 %3160
  %3162 = vrot.lane.b32.xlu0 %v1640, 90
  %v3163 = vpop.permute.xlu0 %3162
  %3164 = vrot.lane.b32.xlu0 %v1642, 90
  %v3165 = vpop.permute.xlu0 %3164
  %3166 = vrot.lane.b32.xlu0 %v1644, 90
  %v3167 = vpop.permute.xlu0 %3166
  %3168 = vrot.lane.b32.xlu0 %v1646, 90
  %v3169 = vpop.permute.xlu0 %3168
  %3170 = vrot.lane.b32.xlu0 %v1648, 90
  %v3171 = vpop.permute.xlu0 %3170
  %3172 = vrot.lane.b32.xlu0 %v1650, 90
  %v3173 = vpop.permute.xlu0 %3172
  %3174 = vrot.lane.b32.xlu0 %v1652, 90
  %v3175 = vpop.permute.xlu0 %3174
  %3176 = vrot.lane.b32.xlu0 %v1654, 90
  %v3177 = vpop.permute.xlu0 %3176
  %3178 = vrot.lane.b32.xlu0 %v1656, 90
  %v3179 = vpop.permute.xlu0 %3178
  %3180 = vrot.lane.b32.xlu0 %v1658, 90
  %v3181 = vpop.permute.xlu0 %3180
  %3182 = vrot.lane.b32.xlu0 %v1660, 90
  %v3183 = vpop.permute.xlu0 %3182
  %3184 = vrot.lane.b32.xlu0 %v1662, 90
  %v3185 = vpop.permute.xlu0 %3184
  %3186 = vrot.lane.b32.xlu0 %v1664, 90
  %v3187 = vpop.permute.xlu0 %3186
  %3206 = vst.msk [vmem:[#allocation3 + $0x8f] sm:$0xff] %vm3132, %v3153
  %3207 = vst.msk [vmem:[#allocation3 + $0x97] sm:$0xff] %vm3132, %v3155
  %3208 = vst.msk [vmem:[#allocation3 + $0x9f] sm:$0xff] %vm3132, %v3157
  %3209 = vst.msk [vmem:[#allocation3 + $0xa7] sm:$0xff] %vm3132, %v3159
  %3210 = vst.msk [vmem:[#allocation3 + $0xaf] sm:$0xff] %vm3132, %v3161
  %3211 = vst.msk [vmem:[#allocation3 + $0xb7] sm:$0xff] %vm3132, %v3163
  %3212 = vst.msk [vmem:[#allocation3 + $0xbf] sm:$0xff] %vm3132, %v3165
  %3213 = vst.msk [vmem:[#allocation3 + $0xc7] sm:$0xff] %vm3132, %v3167
  %3214 = vst.msk [vmem:[#allocation3 + $0xcf] sm:$0xff] %vm3132, %v3169
  %3215 = vst.msk [vmem:[#allocation3 + $0xd7] sm:$0xff] %vm3132, %v3171
  %3216 = vst.msk [vmem:[#allocation3 + $0xdf] sm:$0xff] %vm3132, %v3173
  %3217 = vst.msk [vmem:[#allocation3 + $0xe7] sm:$0xff] %vm3132, %v3175
  %3218 = vst.msk [vmem:[#allocation3 + $0xef] sm:$0xff] %vm3132, %v3177
  %3219 = vst.msk [vmem:[#allocation3 + $0xf7] sm:$0xff] %vm3132, %v3179
  %3220 = vst.msk [vmem:[#allocation3 + $0xff] sm:$0xff] %vm3132, %v3181
  %3221 = vst.msk [vmem:[#allocation3 + $0x107] sm:$0xff] %vm3132, %v3183
  %3222 = vst.msk [vmem:[#allocation3 + $0x10f] sm:$0xff] %vm3132, %v3185
  %3223 = vst.msk [vmem:[#allocation3 + $0x117] sm:$0x7f] %vm3150, %v3187
  %3224 = vrot.lane.b32.xlu0 %v1630, 88
  %v3225 = vpop.permute.xlu0 %3224
  %3226 = vrot.lane.b32.xlu0 %v1632, 88
  %v3227 = vpop.permute.xlu0 %3226
  %3228 = vrot.lane.b32.xlu0 %v1634, 88
  %v3229 = vpop.permute.xlu0 %3228
  %3230 = vrot.lane.b32.xlu0 %v1636, 88
  %v3231 = vpop.permute.xlu0 %3230
  %3232 = vrot.lane.b32.xlu0 %v1638, 88
  %v3233 = vpop.permute.xlu0 %3232
  %3234 = vrot.lane.b32.xlu0 %v1640, 88
  %v3235 = vpop.permute.xlu0 %3234
  %3236 = vrot.lane.b32.xlu0 %v1642, 88
  %v3237 = vpop.permute.xlu0 %3236
  %3238 = vrot.lane.b32.xlu0 %v1644, 88
  %v3239 = vpop.permute.xlu0 %3238
  %3240 = vrot.lane.b32.xlu0 %v1646, 88
  %v3241 = vpop.permute.xlu0 %3240
  %3242 = vrot.lane.b32.xlu0 %v1648, 88
  %v3243 = vpop.permute.xlu0 %3242
  %3244 = vrot.lane.b32.xlu0 %v1650, 88
  %v3245 = vpop.permute.xlu0 %3244
  %3246 = vrot.lane.b32.xlu0 %v1652, 88
  %v3247 = vpop.permute.xlu0 %3246
  %3248 = vrot.lane.b32.xlu0 %v1654, 88
  %v3249 = vpop.permute.xlu0 %3248
  %3250 = vrot.lane.b32.xlu0 %v1656, 88
  %v3251 = vpop.permute.xlu0 %3250
  %3252 = vrot.lane.b32.xlu0 %v1658, 88
  %v3253 = vpop.permute.xlu0 %3252
  %3254 = vrot.lane.b32.xlu0 %v1660, 88
  %v3255 = vpop.permute.xlu0 %3254
  %3256 = vrot.lane.b32.xlu0 %v1662, 88
  %v3257 = vpop.permute.xlu0 %3256
  %3258 = vrot.lane.b32.xlu0 %v1664, 88
  %v3259 = vpop.permute.xlu0 %3258
  %3278 = vst.msk [vmem:[#allocation3 + $0x11e] sm:$0xff] %vm3132, %v3225
  %3279 = vst.msk [vmem:[#allocation3 + $0x126] sm:$0xff] %vm3132, %v3227
  %3280 = vst.msk [vmem:[#allocation3 + $0x12e] sm:$0xff] %vm3132, %v3229
  %3281 = vst.msk [vmem:[#allocation3 + $0x136] sm:$0xff] %vm3132, %v3231
  %3282 = vst.msk [vmem:[#allocation3 + $0x13e] sm:$0xff] %vm3132, %v3233
  %3283 = vst.msk [vmem:[#allocation3 + $0x146] sm:$0xff] %vm3132, %v3235
  %3284 = vst.msk [vmem:[#allocation3 + $0x14e] sm:$0xff] %vm3132, %v3237
  %3285 = vst.msk [vmem:[#allocation3 + $0x156] sm:$0xff] %vm3132, %v3239
  %3286 = vst.msk [vmem:[#allocation3 + $0x15e] sm:$0xff] %vm3132, %v3241
  %3287 = vst.msk [vmem:[#allocation3 + $0x166] sm:$0xff] %vm3132, %v3243
  %3288 = vst.msk [vmem:[#allocation3 + $0x16e] sm:$0xff] %vm3132, %v3245
  %3289 = vst.msk [vmem:[#allocation3 + $0x176] sm:$0xff] %vm3132, %v3247
  %3290 = vst.msk [vmem:[#allocation3 + $0x17e] sm:$0xff] %vm3132, %v3249
  %3291 = vst.msk [vmem:[#allocation3 + $0x186] sm:$0xff] %vm3132, %v3251
  %3292 = vst.msk [vmem:[#allocation3 + $0x18e] sm:$0xff] %vm3132, %v3253
  %3293 = vst.msk [vmem:[#allocation3 + $0x196] sm:$0xff] %vm3132, %v3255
  %3294 = vst.msk [vmem:[#allocation3 + $0x19e] sm:$0xff] %vm3132, %v3257
  %3295 = vst.msk [vmem:[#allocation3 + $0x1a6] sm:$0x7f] %vm3150, %v3259
  %3296 = vrot.lane.b32.xlu0 %v1630, 86
  %v3297 = vpop.permute.xlu0 %3296
  %3298 = vrot.lane.b32.xlu0 %v1632, 86
  %v3299 = vpop.permute.xlu0 %3298
  %3300 = vrot.lane.b32.xlu0 %v1634, 86
  %v3301 = vpop.permute.xlu0 %3300
  %3302 = vrot.lane.b32.xlu0 %v1636, 86
  %v3303 = vpop.permute.xlu0 %3302
  %3304 = vrot.lane.b32.xlu0 %v1638, 86
  %v3305 = vpop.permute.xlu0 %3304
  %3306 = vrot.lane.b32.xlu0 %v1640, 86
  %v3307 = vpop.permute.xlu0 %3306
  %3308 = vrot.lane.b32.xlu0 %v1642, 86
  %v3309 = vpop.permute.xlu0 %3308
  %3310 = vrot.lane.b32.xlu0 %v1644, 86
  %v3311 = vpop.permute.xlu0 %3310
  %3312 = vrot.lane.b32.xlu0 %v1646, 86
  %v3313 = vpop.permute.xlu0 %3312
  %3314 = vrot.lane.b32.xlu0 %v1648, 86
  %v3315 = vpop.permute.xlu0 %3314
  %3316 = vrot.lane.b32.xlu0 %v1650, 86
  %v3317 = vpop.permute.xlu0 %3316
  %3318 = vrot.lane.b32.xlu0 %v1652, 86
  %v3319 = vpop.permute.xlu0 %3318
  %3320 = vrot.lane.b32.xlu0 %v1654, 86
  %v3321 = vpop.permute.xlu0 %3320
  %3322 = vrot.lane.b32.xlu0 %v1656, 86
  %v3323 = vpop.permute.xlu0 %3322
  %3324 = vrot.lane.b32.xlu0 %v1658, 86
  %v3325 = vpop.permute.xlu0 %3324
  %3326 = vrot.lane.b32.xlu0 %v1660, 86
  %v3327 = vpop.permute.xlu0 %3326
  %3328 = vrot.lane.b32.xlu0 %v1662, 86
  %v3329 = vpop.permute.xlu0 %3328
  %3330 = vrot.lane.b32.xlu0 %v1664, 86
  %v3331 = vpop.permute.xlu0 %3330
  %3350 = vst.msk [vmem:[#allocation3 + $0x1ad] sm:$0xff] %vm3132, %v3297
  %3351 = vst.msk [vmem:[#allocation3 + $0x1b5] sm:$0xff] %vm3132, %v3299
  %3352 = vst.msk [vmem:[#allocation3 + $0x1bd] sm:$0xff] %vm3132, %v3301
  %3353 = vst.msk [vmem:[#allocation3 + $0x1c5] sm:$0xff] %vm3132, %v3303
  %3354 = vst.msk [vmem:[#allocation3 + $0x1cd] sm:$0xff] %vm3132, %v3305
  %3355 = vst.msk [vmem:[#allocation3 + $0x1d5] sm:$0xff] %vm3132, %v3307
  %3356 = vst.msk [vmem:[#allocation3 + $0x1dd] sm:$0xff] %vm3132, %v3309
  %3357 = vst.msk [vmem:[#allocation3 + $0x1e5] sm:$0xff] %vm3132, %v3311
  %3358 = vst.msk [vmem:[#allocation3 + $0x1ed] sm:$0xff] %vm3132, %v3313
  %3359 = vst.msk [vmem:[#allocation3 + $0x1f5] sm:$0xff] %vm3132, %v3315
  %3360 = vst.msk [vmem:[#allocation3 + $0x1fd] sm:$0xff] %vm3132, %v3317
  %3361 = vst.msk [vmem:[#allocation3 + $0x205] sm:$0xff] %vm3132, %v3319
  %3362 = vst.msk [vmem:[#allocation3 + $0x20d] sm:$0xff] %vm3132, %v3321
  %3363 = vst.msk [vmem:[#allocation3 + $0x215] sm:$0xff] %vm3132, %v3323
  %3364 = vst.msk [vmem:[#allocation3 + $0x21d] sm:$0xff] %vm3132, %v3325
  %3365 = vst.msk [vmem:[#allocation3 + $0x225] sm:$0xff] %vm3132, %v3327
  %3366 = vst.msk [vmem:[#allocation3 + $0x22d] sm:$0xff] %vm3132, %v3329
  %3367 = vst.msk [vmem:[#allocation3 + $0x235] sm:$0x7f] %vm3150, %v3331
  %3368 = vrot.lane.b32.xlu0 %v1630, 84
  %v3369 = vpop.permute.xlu0 %3368
  %3370 = vrot.lane.b32.xlu0 %v1632, 84
  %v3371 = vpop.permute.xlu0 %3370
  %3372 = vrot.lane.b32.xlu0 %v1634, 84
  %v3373 = vpop.permute.xlu0 %3372
  %3374 = vrot.lane.b32.xlu0 %v1636, 84
  %v3375 = vpop.permute.xlu0 %3374
  %3376 = vrot.lane.b32.xlu0 %v1638, 84
  %v3377 = vpop.permute.xlu0 %3376
  %3378 = vrot.lane.b32.xlu0 %v1640, 84
  %v3379 = vpop.permute.xlu0 %3378
  %3380 = vrot.lane.b32.xlu0 %v1642, 84
  %v3381 = vpop.permute.xlu0 %3380
  %3382 = vrot.lane.b32.xlu0 %v1644, 84
  %v3383 = vpop.permute.xlu0 %3382
  %3384 = vrot.lane.b32.xlu0 %v1646, 84
  %v3385 = vpop.permute.xlu0 %3384
  %3386 = vrot.lane.b32.xlu0 %v1648, 84
  %v3387 = vpop.permute.xlu0 %3386
  %3388 = vrot.lane.b32.xlu0 %v1650, 84
  %v3389 = vpop.permute.xlu0 %3388
  %3390 = vrot.lane.b32.xlu0 %v1652, 84
  %v3391 = vpop.permute.xlu0 %3390
  %3392 = vrot.lane.b32.xlu0 %v1654, 84
  %v3393 = vpop.permute.xlu0 %3392
  %3394 = vrot.lane.b32.xlu0 %v1656, 84
  %v3395 = vpop.permute.xlu0 %3394
  %3396 = vrot.lane.b32.xlu0 %v1658, 84
  %v3397 = vpop.permute.xlu0 %3396
  %3398 = vrot.lane.b32.xlu0 %v1660, 84
  %v3399 = vpop.permute.xlu0 %3398
  %3400 = vrot.lane.b32.xlu0 %v1662, 84
  %v3401 = vpop.permute.xlu0 %3400
  %3402 = vrot.lane.b32.xlu0 %v1664, 84
  %v3403 = vpop.permute.xlu0 %3402
  %3422 = vst.msk [vmem:[#allocation3 + $0x23c] sm:$0xff] %vm3132, %v3369
  %3423 = vst.msk [vmem:[#allocation3 + $0x244] sm:$0xff] %vm3132, %v3371
  %3424 = vst.msk [vmem:[#allocation3 + $0x24c] sm:$0xff] %vm3132, %v3373
  %3425 = vst.msk [vmem:[#allocation3 + $0x254] sm:$0xff] %vm3132, %v3375
  %3426 = vst.msk [vmem:[#allocation3 + $0x25c] sm:$0xff] %vm3132, %v3377
  %3427 = vst.msk [vmem:[#allocation3 + $0x264] sm:$0xff] %vm3132, %v3379
  %3428 = vst.msk [vmem:[#allocation3 + $0x26c] sm:$0xff] %vm3132, %v3381
  %3429 = vst.msk [vmem:[#allocation3 + $0x274] sm:$0xff] %vm3132, %v3383
  %3430 = vst.msk [vmem:[#allocation3 + $0x27c] sm:$0xff] %vm3132, %v3385
  %3431 = vst.msk [vmem:[#allocation3 + $0x284] sm:$0xff] %vm3132, %v3387
  %3432 = vst.msk [vmem:[#allocation3 + $0x28c] sm:$0xff] %vm3132, %v3389
  %3433 = vst.msk [vmem:[#allocation3 + $0x294] sm:$0xff] %vm3132, %v3391
  %3434 = vst.msk [vmem:[#allocation3 + $0x29c] sm:$0xff] %vm3132, %v3393
  %3435 = vst.msk [vmem:[#allocation3 + $0x2a4] sm:$0xff] %vm3132, %v3395
  %3436 = vst.msk [vmem:[#allocation3 + $0x2ac] sm:$0xff] %vm3132, %v3397
  %3437 = vst.msk [vmem:[#allocation3 + $0x2b4] sm:$0xff] %vm3132, %v3399
  %3438 = vst.msk [vmem:[#allocation3 + $0x2bc] sm:$0xff] %vm3132, %v3401
  %3439 = vst.msk [vmem:[#allocation3 + $0x2c4] sm:$0x7f] %vm3150, %v3403
  %3458 = vrot.lane.b32.xlu0 %v1630, 83
  %v3459 = vpop.permute.xlu0 %3458
  %3460 = vrot.lane.b32.xlu0 %v1631, 83
  %v3461 = vpop.permute.xlu0 %3460
  %3462 = vrot.lane.b32.xlu0 %v1632, 83
  %v3463 = vpop.permute.xlu0 %3462
  %3464 = vrot.lane.b32.xlu0 %v1633, 83
  %v3465 = vpop.permute.xlu0 %3464
  %3466 = vrot.lane.b32.xlu0 %v1634, 83
  %v3467 = vpop.permute.xlu0 %3466
  %3468 = vrot.lane.b32.xlu0 %v1635, 83
  %v3469 = vpop.permute.xlu0 %3468
  %3470 = vrot.lane.b32.xlu0 %v1636, 83
  %v3471 = vpop.permute.xlu0 %3470
  %3472 = vrot.lane.b32.xlu0 %v1637, 83
  %v3473 = vpop.permute.xlu0 %3472
  %3474 = vrot.lane.b32.xlu0 %v1638, 83
  %v3475 = vpop.permute.xlu0 %3474
  %3476 = vrot.lane.b32.xlu0 %v1639, 83
  %v3477 = vpop.permute.xlu0 %3476
  %3478 = vrot.lane.b32.xlu0 %v1640, 83
  %v3479 = vpop.permute.xlu0 %3478
  %3480 = vrot.lane.b32.xlu0 %v1641, 83
  %v3481 = vpop.permute.xlu0 %3480
  %3482 = vrot.lane.b32.xlu0 %v1642, 83
  %v3483 = vpop.permute.xlu0 %3482
  %3484 = vrot.lane.b32.xlu0 %v1643, 83
  %v3485 = vpop.permute.xlu0 %3484
  %3486 = vrot.lane.b32.xlu0 %v1644, 83
  %v3487 = vpop.permute.xlu0 %3486
  %3488 = vrot.lane.b32.xlu0 %v1645, 83
  %v3489 = vpop.permute.xlu0 %3488
  %3490 = vrot.lane.b32.xlu0 %v1646, 83
  %v3491 = vpop.permute.xlu0 %3490
  %3492 = vrot.lane.b32.xlu0 %v1647, 83
  %v3493 = vpop.permute.xlu0 %3492
  %3494 = vrot.lane.b32.xlu0 %v1648, 83
  %v3495 = vpop.permute.xlu0 %3494
  %3496 = vrot.lane.b32.xlu0 %v1649, 83
  %v3497 = vpop.permute.xlu0 %3496
  %3498 = vrot.lane.b32.xlu0 %v1650, 83
  %v3499 = vpop.permute.xlu0 %3498
  %3500 = vrot.lane.b32.xlu0 %v1651, 83
  %v3501 = vpop.permute.xlu0 %3500
  %3502 = vrot.lane.b32.xlu0 %v1652, 83
  %v3503 = vpop.permute.xlu0 %3502
  %3504 = vrot.lane.b32.xlu0 %v1653, 83
  %v3505 = vpop.permute.xlu0 %3504
  %3506 = vrot.lane.b32.xlu0 %v1654, 83
  %v3507 = vpop.permute.xlu0 %3506
  %3508 = vrot.lane.b32.xlu0 %v1655, 83
  %v3509 = vpop.permute.xlu0 %3508
  %3510 = vrot.lane.b32.xlu0 %v1656, 83
  %v3511 = vpop.permute.xlu0 %3510
  %3512 = vrot.lane.b32.xlu0 %v1657, 83
  %v3513 = vpop.permute.xlu0 %3512
  %3514 = vrot.lane.b32.xlu0 %v1658, 83
  %v3515 = vpop.permute.xlu0 %3514
  %3516 = vrot.lane.b32.xlu0 %v1659, 83
  %v3517 = vpop.permute.xlu0 %3516
  %3518 = vrot.lane.b32.xlu0 %v1660, 83
  %v3519 = vpop.permute.xlu0 %3518
  %3520 = vrot.lane.b32.xlu0 %v1661, 83
  %v3521 = vpop.permute.xlu0 %3520
  %3522 = vrot.lane.b32.xlu0 %v1662, 83
  %v3523 = vpop.permute.xlu0 %3522
  %3524 = vrot.lane.b32.xlu0 %v1663, 83
  %v3525 = vpop.permute.xlu0 %3524
  %3526 = vrot.lane.b32.xlu0 %v1664, 83
  %v3527 = vpop.permute.xlu0 %3526
  %3528 = vrot.lane.b32.xlu0 %v1665, 83
  %v3529 = vpop.permute.xlu0 %3528
  %vm3530 = vcmask 678912
  %v3531 = vsel %vm3530, %v3459, %v3461
  %v3532 = vsel %vm3530, %v3463, %v3465
  %v3533 = vsel %vm3530, %v3467, %v3469
  %v3534 = vsel %vm3530, %v3471, %v3473
  %v3535 = vsel %vm3530, %v3475, %v3477
  %v3536 = vsel %vm3530, %v3479, %v3481
  %v3537 = vsel %vm3530, %v3483, %v3485
  %v3538 = vsel %vm3530, %v3487, %v3489
  %v3539 = vsel %vm3530, %v3491, %v3493
  %v3540 = vsel %vm3530, %v3495, %v3497
  %v3541 = vsel %vm3530, %v3499, %v3501
  %v3542 = vsel %vm3530, %v3503, %v3505
  %v3543 = vsel %vm3530, %v3507, %v3509
  %v3544 = vsel %vm3530, %v3511, %v3513
  %v3545 = vsel %vm3530, %v3515, %v3517
  %v3546 = vsel %vm3530, %v3519, %v3521
  %v3547 = vsel %vm3530, %v3523, %v3525
  %v3548 = vsel %vm3530, %v3527, %v3529
  %vm3567 = vcmask 736856
  %3568 = vst.msk [vmem:[#allocation3] sm:$0xff] %vm3567, %v3531
  %3569 = vst.msk [vmem:[#allocation3 + $0x8] sm:$0xff] %vm3567, %v3532
  %3570 = vst.msk [vmem:[#allocation3 + $0x10] sm:$0xff] %vm3567, %v3533
  %3571 = vst.msk [vmem:[#allocation3 + $0x18] sm:$0xff] %vm3567, %v3534
  %3572 = vst.msk [vmem:[#allocation3 + $0x20] sm:$0xff] %vm3567, %v3535
  %3573 = vst.msk [vmem:[#allocation3 + $0x28] sm:$0xff] %vm3567, %v3536
  %3574 = vst.msk [vmem:[#allocation3 + $0x30] sm:$0xff] %vm3567, %v3537
  %3575 = vst.msk [vmem:[#allocation3 + $0x38] sm:$0xff] %vm3567, %v3538
  %3576 = vst.msk [vmem:[#allocation3 + $0x40] sm:$0xff] %vm3567, %v3539
  %3577 = vst.msk [vmem:[#allocation3 + $0x48] sm:$0xff] %vm3567, %v3540
  %3578 = vst.msk [vmem:[#allocation3 + $0x50] sm:$0xff] %vm3567, %v3541
  %3579 = vst.msk [vmem:[#allocation3 + $0x58] sm:$0xff] %vm3567, %v3542
  %3580 = vst.msk [vmem:[#allocation3 + $0x60] sm:$0xff] %vm3567, %v3543
  %3581 = vst.msk [vmem:[#allocation3 + $0x68] sm:$0xff] %vm3567, %v3544
  %3582 = vst.msk [vmem:[#allocation3 + $0x70] sm:$0xff] %vm3567, %v3545
  %3583 = vst.msk [vmem:[#allocation3 + $0x78] sm:$0xff] %vm3567, %v3546
  %3584 = vst.msk [vmem:[#allocation3 + $0x80] sm:$0xff] %vm3567, %v3547
  %vm3585 = vcmask 735832
  %3586 = vst.msk [vmem:[#allocation3 + $0x88] sm:$0x7f] %vm3585, %v3548
  %3587 = vrot.lane.b32.xlu0 %v1630, 81
  %v3588 = vpop.permute.xlu0 %3587
  %3589 = vrot.lane.b32.xlu0 %v1631, 81
  %v3590 = vpop.permute.xlu0 %3589
  %3591 = vrot.lane.b32.xlu0 %v1632, 81
  %v3592 = vpop.permute.xlu0 %3591
  %3593 = vrot.lane.b32.xlu0 %v1633, 81
  %v3594 = vpop.permute.xlu0 %3593
  %3595 = vrot.lane.b32.xlu0 %v1634, 81
  %v3596 = vpop.permute.xlu0 %3595
  %3597 = vrot.lane.b32.xlu0 %v1635, 81
  %v3598 = vpop.permute.xlu0 %3597
  %3599 = vrot.lane.b32.xlu0 %v1636, 81
  %v3600 = vpop.permute.xlu0 %3599
  %3601 = vrot.lane.b32.xlu0 %v1637, 81
  %v3602 = vpop.permute.xlu0 %3601
  %3603 = vrot.lane.b32.xlu0 %v1638, 81
  %v3604 = vpop.permute.xlu0 %3603
  %3605 = vrot.lane.b32.xlu0 %v1639, 81
  %v3606 = vpop.permute.xlu0 %3605
  %3607 = vrot.lane.b32.xlu0 %v1640, 81
  %v3608 = vpop.permute.xlu0 %3607
  %3609 = vrot.lane.b32.xlu0 %v1641, 81
  %v3610 = vpop.permute.xlu0 %3609
  %3611 = vrot.lane.b32.xlu0 %v1642, 81
  %v3612 = vpop.permute.xlu0 %3611
  %3613 = vrot.lane.b32.xlu0 %v1643, 81
  %v3614 = vpop.permute.xlu0 %3613
  %3615 = vrot.lane.b32.xlu0 %v1644, 81
  %v3616 = vpop.permute.xlu0 %3615
  %3617 = vrot.lane.b32.xlu0 %v1645, 81
  %v3618 = vpop.permute.xlu0 %3617
  %3619 = vrot.lane.b32.xlu0 %v1646, 81
  %v3620 = vpop.permute.xlu0 %3619
  %3621 = vrot.lane.b32.xlu0 %v1647, 81
  %v3622 = vpop.permute.xlu0 %3621
  %3623 = vrot.lane.b32.xlu0 %v1648, 81
  %v3624 = vpop.permute.xlu0 %3623
  %3625 = vrot.lane.b32.xlu0 %v1649, 81
  %v3626 = vpop.permute.xlu0 %3625
  %3627 = vrot.lane.b32.xlu0 %v1650, 81
  %v3628 = vpop.permute.xlu0 %3627
  %3629 = vrot.lane.b32.xlu0 %v1651, 81
  %v3630 = vpop.permute.xlu0 %3629
  %3631 = vrot.lane.b32.xlu0 %v1652, 81
  %v3632 = vpop.permute.xlu0 %3631
  %3633 = vrot.lane.b32.xlu0 %v1653, 81
  %v3634 = vpop.permute.xlu0 %3633
  %3635 = vrot.lane.b32.xlu0 %v1654, 81
  %v3636 = vpop.permute.xlu0 %3635
  %3637 = vrot.lane.b32.xlu0 %v1655, 81
  %v3638 = vpop.permute.xlu0 %3637
  %3639 = vrot.lane.b32.xlu0 %v1656, 81
  %v3640 = vpop.permute.xlu0 %3639
  %3641 = vrot.lane.b32.xlu0 %v1657, 81
  %v3642 = vpop.permute.xlu0 %3641
  %3643 = vrot.lane.b32.xlu0 %v1658, 81
  %v3644 = vpop.permute.xlu0 %3643
  %3645 = vrot.lane.b32.xlu0 %v1659, 81
  %v3646 = vpop.permute.xlu0 %3645
  %3647 = vrot.lane.b32.xlu0 %v1660, 81
  %v3648 = vpop.permute.xlu0 %3647
  %3649 = vrot.lane.b32.xlu0 %v1661, 81
  %v3650 = vpop.permute.xlu0 %3649
  %3651 = vrot.lane.b32.xlu0 %v1662, 81
  %v3652 = vpop.permute.xlu0 %3651
  %3653 = vrot.lane.b32.xlu0 %v1663, 81
  %v3654 = vpop.permute.xlu0 %3653
  %3655 = vrot.lane.b32.xlu0 %v1664, 81
  %v3656 = vpop.permute.xlu0 %3655
  %3657 = vrot.lane.b32.xlu0 %v1665, 81
  %v3658 = vpop.permute.xlu0 %3657
  %vm3659 = vcmask 662528
  %v3660 = vsel %vm3659, %v3588, %v3590
  %v3661 = vsel %vm3659, %v3592, %v3594
  %v3662 = vsel %vm3659, %v3596, %v3598
  %v3663 = vsel %vm3659, %v3600, %v3602
  %v3664 = vsel %vm3659, %v3604, %v3606
  %v3665 = vsel %vm3659, %v3608, %v3610
  %v3666 = vsel %vm3659, %v3612, %v3614
  %v3667 = vsel %vm3659, %v3616, %v3618
  %v3668 = vsel %vm3659, %v3620, %v3622
  %v3669 = vsel %vm3659, %v3624, %v3626
  %v3670 = vsel %vm3659, %v3628, %v3630
  %v3671 = vsel %vm3659, %v3632, %v3634
  %v3672 = vsel %vm3659, %v3636, %v3638
  %v3673 = vsel %vm3659, %v3640, %v3642
  %v3674 = vsel %vm3659, %v3644, %v3646
  %v3675 = vsel %vm3659, %v3648, %v3650
  %v3676 = vsel %vm3659, %v3652, %v3654
  %v3677 = vsel %vm3659, %v3656, %v3658
  %3696 = vst.msk [vmem:[#allocation3 + $0x8f] sm:$0xff] %vm3567, %v3660
  %3697 = vst.msk [vmem:[#allocation3 + $0x97] sm:$0xff] %vm3567, %v3661
  %3698 = vst.msk [vmem:[#allocation3 + $0x9f] sm:$0xff] %vm3567, %v3662
  %3699 = vst.msk [vmem:[#allocation3 + $0xa7] sm:$0xff] %vm3567, %v3663
  %3700 = vst.msk [vmem:[#allocation3 + $0xaf] sm:$0xff] %vm3567, %v3664
  %3701 = vst.msk [vmem:[#allocation3 + $0xb7] sm:$0xff] %vm3567, %v3665
  %3702 = vst.msk [vmem:[#allocation3 + $0xbf] sm:$0xff] %vm3567, %v3666
  %3703 = vst.msk [vmem:[#allocation3 + $0xc7] sm:$0xff] %vm3567, %v3667
  %3704 = vst.msk [vmem:[#allocation3 + $0xcf] sm:$0xff] %vm3567, %v3668
  %3705 = vst.msk [vmem:[#allocation3 + $0xd7] sm:$0xff] %vm3567, %v3669
  %3706 = vst.msk [vmem:[#allocation3 + $0xdf] sm:$0xff] %vm3567, %v3670
  %3707 = vst.msk [vmem:[#allocation3 + $0xe7] sm:$0xff] %vm3567, %v3671
  %3708 = vst.msk [vmem:[#allocation3 + $0xef] sm:$0xff] %vm3567, %v3672
  %3709 = vst.msk [vmem:[#allocation3 + $0xf7] sm:$0xff] %vm3567, %v3673
  %3710 = vst.msk [vmem:[#allocation3 + $0xff] sm:$0xff] %vm3567, %v3674
  %3711 = vst.msk [vmem:[#allocation3 + $0x107] sm:$0xff] %vm3567, %v3675
  %3712 = vst.msk [vmem:[#allocation3 + $0x10f] sm:$0xff] %vm3567, %v3676
  %3713 = vst.msk [vmem:[#allocation3 + $0x117] sm:$0x7f] %vm3585, %v3677
  %3714 = vrot.lane.b32.xlu0 %v1630, 79
  %v3715 = vpop.permute.xlu0 %3714
  %3716 = vrot.lane.b32.xlu0 %v1631, 79
  %v3717 = vpop.permute.xlu0 %3716
  %3718 = vrot.lane.b32.xlu0 %v1632, 79
  %v3719 = vpop.permute.xlu0 %3718
  %3720 = vrot.lane.b32.xlu0 %v1633, 79
  %v3721 = vpop.permute.xlu0 %3720
  %3722 = vrot.lane.b32.xlu0 %v1634, 79
  %v3723 = vpop.permute.xlu0 %3722
  %3724 = vrot.lane.b32.xlu0 %v1635, 79
  %v3725 = vpop.permute.xlu0 %3724
  %3726 = vrot.lane.b32.xlu0 %v1636, 79
  %v3727 = vpop.permute.xlu0 %3726
  %3728 = vrot.lane.b32.xlu0 %v1637, 79
  %v3729 = vpop.permute.xlu0 %3728
  %3730 = vrot.lane.b32.xlu0 %v1638, 79
  %v3731 = vpop.permute.xlu0 %3730
  %3732 = vrot.lane.b32.xlu0 %v1639, 79
  %v3733 = vpop.permute.xlu0 %3732
  %3734 = vrot.lane.b32.xlu0 %v1640, 79
  %v3735 = vpop.permute.xlu0 %3734
  %3736 = vrot.lane.b32.xlu0 %v1641, 79
  %v3737 = vpop.permute.xlu0 %3736
  %3738 = vrot.lane.b32.xlu0 %v1642, 79
  %v3739 = vpop.permute.xlu0 %3738
  %3740 = vrot.lane.b32.xlu0 %v1643, 79
  %v3741 = vpop.permute.xlu0 %3740
  %3742 = vrot.lane.b32.xlu0 %v1644, 79
  %v3743 = vpop.permute.xlu0 %3742
  %3744 = vrot.lane.b32.xlu0 %v1645, 79
  %v3745 = vpop.permute.xlu0 %3744
  %3746 = vrot.lane.b32.xlu0 %v1646, 79
  %v3747 = vpop.permute.xlu0 %3746
  %3748 = vrot.lane.b32.xlu0 %v1647, 79
  %v3749 = vpop.permute.xlu0 %3748
  %3750 = vrot.lane.b32.xlu0 %v1648, 79
  %v3751 = vpop.permute.xlu0 %3750
  %3752 = vrot.lane.b32.xlu0 %v1649, 79
  %v3753 = vpop.permute.xlu0 %3752
  %3754 = vrot.lane.b32.xlu0 %v1650, 79
  %v3755 = vpop.permute.xlu0 %3754
  %3756 = vrot.lane.b32.xlu0 %v1651, 79
  %v3757 = vpop.permute.xlu0 %3756
  %3758 = vrot.lane.b32.xlu0 %v1652, 79
  %v3759 = vpop.permute.xlu0 %3758
  %3760 = vrot.lane.b32.xlu0 %v1653, 79
  %v3761 = vpop.permute.xlu0 %3760
  %3762 = vrot.lane.b32.xlu0 %v1654, 79
  %v3763 = vpop.permute.xlu0 %3762
  %3764 = vrot.lane.b32.xlu0 %v1655, 79
  %v3765 = vpop.permute.xlu0 %3764
  %3766 = vrot.lane.b32.xlu0 %v1656, 79
  %v3767 = vpop.permute.xlu0 %3766
  %3768 = vrot.lane.b32.xlu0 %v1657, 79
  %v3769 = vpop.permute.xlu0 %3768
  %3770 = vrot.lane.b32.xlu0 %v1658, 79
  %v3771 = vpop.permute.xlu0 %3770
  %3772 = vrot.lane.b32.xlu0 %v1659, 79
  %v3773 = vpop.permute.xlu0 %3772
  %3774 = vrot.lane.b32.xlu0 %v1660, 79
  %v3775 = vpop.permute.xlu0 %3774
  %3776 = vrot.lane.b32.xlu0 %v1661, 79
  %v3777 = vpop.permute.xlu0 %3776
  %3778 = vrot.lane.b32.xlu0 %v1662, 79
  %v3779 = vpop.permute.xlu0 %3778
  %3780 = vrot.lane.b32.xlu0 %v1663, 79
  %v3781 = vpop.permute.xlu0 %3780
  %3782 = vrot.lane.b32.xlu0 %v1664, 79
  %v3783 = vpop.permute.xlu0 %3782
  %3784 = vrot.lane.b32.xlu0 %v1665, 79
  %v3785 = vpop.permute.xlu0 %3784
  %vm3786 = vcmask 646144
  %v3787 = vsel %vm3786, %v3715, %v3717
  %v3788 = vsel %vm3786, %v3719, %v3721
  %v3789 = vsel %vm3786, %v3723, %v3725
  %v3790 = vsel %vm3786, %v3727, %v3729
  %v3791 = vsel %vm3786, %v3731, %v3733
  %v3792 = vsel %vm3786, %v3735, %v3737
  %v3793 = vsel %vm3786, %v3739, %v3741
  %v3794 = vsel %vm3786, %v3743, %v3745
  %v3795 = vsel %vm3786, %v3747, %v3749
  %v3796 = vsel %vm3786, %v3751, %v3753
  %v3797 = vsel %vm3786, %v3755, %v3757
  %v3798 = vsel %vm3786, %v3759, %v3761
  %v3799 = vsel %vm3786, %v3763, %v3765
  %v3800 = vsel %vm3786, %v3767, %v3769
  %v3801 = vsel %vm3786, %v3771, %v3773
  %v3802 = vsel %vm3786, %v3775, %v3777
  %v3803 = vsel %vm3786, %v3779, %v3781
  %v3804 = vsel %vm3786, %v3783, %v3785
  %3823 = vst.msk [vmem:[#allocation3 + $0x11e] sm:$0xff] %vm3567, %v3787
  %3824 = vst.msk [vmem:[#allocation3 + $0x126] sm:$0xff] %vm3567, %v3788
  %3825 = vst.msk [vmem:[#allocation3 + $0x12e] sm:$0xff] %vm3567, %v3789
  %3826 = vst.msk [vmem:[#allocation3 + $0x136] sm:$0xff] %vm3567, %v3790
  %3827 = vst.msk [vmem:[#allocation3 + $0x13e] sm:$0xff] %vm3567, %v3791
  %3828 = vst.msk [vmem:[#allocation3 + $0x146] sm:$0xff] %vm3567, %v3792
  %3829 = vst.msk [vmem:[#allocation3 + $0x14e] sm:$0xff] %vm3567, %v3793
  %3830 = vst.msk [vmem:[#allocation3 + $0x156] sm:$0xff] %vm3567, %v3794
  %3831 = vst.msk [vmem:[#allocation3 + $0x15e] sm:$0xff] %vm3567, %v3795
  %3832 = vst.msk [vmem:[#allocation3 + $0x166] sm:$0xff] %vm3567, %v3796
  %3833 = vst.msk [vmem:[#allocation3 + $0x16e] sm:$0xff] %vm3567, %v3797
  %3834 = vst.msk [vmem:[#allocation3 + $0x176] sm:$0xff] %vm3567, %v3798
  %3835 = vst.msk [vmem:[#allocation3 + $0x17e] sm:$0xff] %vm3567, %v3799
  %3836 = vst.msk [vmem:[#allocation3 + $0x186] sm:$0xff] %vm3567, %v3800
  %3837 = vst.msk [vmem:[#allocation3 + $0x18e] sm:$0xff] %vm3567, %v3801
  %3838 = vst.msk [vmem:[#allocation3 + $0x196] sm:$0xff] %vm3567, %v3802
  %3839 = vst.msk [vmem:[#allocation3 + $0x19e] sm:$0xff] %vm3567, %v3803
  %3840 = vst.msk [vmem:[#allocation3 + $0x1a6] sm:$0x7f] %vm3585, %v3804
  %3841 = vrot.lane.b32.xlu0 %v1630, 77
  %v3842 = vpop.permute.xlu0 %3841
  %3843 = vrot.lane.b32.xlu0 %v1631, 77
  %v3844 = vpop.permute.xlu0 %3843
  %3845 = vrot.lane.b32.xlu0 %v1632, 77
  %v3846 = vpop.permute.xlu0 %3845
  %3847 = vrot.lane.b32.xlu0 %v1633, 77
  %v3848 = vpop.permute.xlu0 %3847
  %3849 = vrot.lane.b32.xlu0 %v1634, 77
  %v3850 = vpop.permute.xlu0 %3849
  %3851 = vrot.lane.b32.xlu0 %v1635, 77
  %v3852 = vpop.permute.xlu0 %3851
  %3853 = vrot.lane.b32.xlu0 %v1636, 77
  %v3854 = vpop.permute.xlu0 %3853
  %3855 = vrot.lane.b32.xlu0 %v1637, 77
  %v3856 = vpop.permute.xlu0 %3855
  %3857 = vrot.lane.b32.xlu0 %v1638, 77
  %v3858 = vpop.permute.xlu0 %3857
  %3859 = vrot.lane.b32.xlu0 %v1639, 77
  %v3860 = vpop.permute.xlu0 %3859
  %3861 = vrot.lane.b32.xlu0 %v1640, 77
  %v3862 = vpop.permute.xlu0 %3861
  %3863 = vrot.lane.b32.xlu0 %v1641, 77
  %v3864 = vpop.permute.xlu0 %3863
  %3865 = vrot.lane.b32.xlu0 %v1642, 77
  %v3866 = vpop.permute.xlu0 %3865
  %3867 = vrot.lane.b32.xlu0 %v1643, 77
  %v3868 = vpop.permute.xlu0 %3867
  %3869 = vrot.lane.b32.xlu0 %v1644, 77
  %v3870 = vpop.permute.xlu0 %3869
  %3871 = vrot.lane.b32.xlu0 %v1645, 77
  %v3872 = vpop.permute.xlu0 %3871
  %3873 = vrot.lane.b32.xlu0 %v1646, 77
  %v3874 = vpop.permute.xlu0 %3873
  %3875 = vrot.lane.b32.xlu0 %v1647, 77
  %v3876 = vpop.permute.xlu0 %3875
  %3877 = vrot.lane.b32.xlu0 %v1648, 77
  %v3878 = vpop.permute.xlu0 %3877
  %3879 = vrot.lane.b32.xlu0 %v1649, 77
  %v3880 = vpop.permute.xlu0 %3879
  %3881 = vrot.lane.b32.xlu0 %v1650, 77
  %v3882 = vpop.permute.xlu0 %3881
  %3883 = vrot.lane.b32.xlu0 %v1651, 77
  %v3884 = vpop.permute.xlu0 %3883
  %3885 = vrot.lane.b32.xlu0 %v1652, 77
  %v3886 = vpop.permute.xlu0 %3885
  %3887 = vrot.lane.b32.xlu0 %v1653, 77
  %v3888 = vpop.permute.xlu0 %3887
  %3889 = vrot.lane.b32.xlu0 %v1654, 77
  %v3890 = vpop.permute.xlu0 %3889
  %3891 = vrot.lane.b32.xlu0 %v1655, 77
  %v3892 = vpop.permute.xlu0 %3891
  %3893 = vrot.lane.b32.xlu0 %v1656, 77
  %v3894 = vpop.permute.xlu0 %3893
  %3895 = vrot.lane.b32.xlu0 %v1657, 77
  %v3896 = vpop.permute.xlu0 %3895
  %3897 = vrot.lane.b32.xlu0 %v1658, 77
  %v3898 = vpop.permute.xlu0 %3897
  %3899 = vrot.lane.b32.xlu0 %v1659, 77
  %v3900 = vpop.permute.xlu0 %3899
  %3901 = vrot.lane.b32.xlu0 %v1660, 77
  %v3902 = vpop.permute.xlu0 %3901
  %3903 = vrot.lane.b32.xlu0 %v1661, 77
  %v3904 = vpop.permute.xlu0 %3903
  %3905 = vrot.lane.b32.xlu0 %v1662, 77
  %v3906 = vpop.permute.xlu0 %3905
  %3907 = vrot.lane.b32.xlu0 %v1663, 77
  %v3908 = vpop.permute.xlu0 %3907
  %3909 = vrot.lane.b32.xlu0 %v1664, 77
  %v3910 = vpop.permute.xlu0 %3909
  %3911 = vrot.lane.b32.xlu0 %v1665, 77
  %v3912 = vpop.permute.xlu0 %3911
  %vm3913 = vcmask 629760
  %v3914 = vsel %vm3913, %v3842, %v3844
  %v3915 = vsel %vm3913, %v3846, %v3848
  %v3916 = vsel %vm3913, %v3850, %v3852
  %v3917 = vsel %vm3913, %v3854, %v3856
  %v3918 = vsel %vm3913, %v3858, %v3860
  %v3919 = vsel %vm3913, %v3862, %v3864
  %v3920 = vsel %vm3913, %v3866, %v3868
  %v3921 = vsel %vm3913, %v3870, %v3872
  %v3922 = vsel %vm3913, %v3874, %v3876
  %v3923 = vsel %vm3913, %v3878, %v3880
  %v3924 = vsel %vm3913, %v3882, %v3884
  %v3925 = vsel %vm3913, %v3886, %v3888
  %v3926 = vsel %vm3913, %v3890, %v3892
  %v3927 = vsel %vm3913, %v3894, %v3896
  %v3928 = vsel %vm3913, %v3898, %v3900
  %v3929 = vsel %vm3913, %v3902, %v3904
  %v3930 = vsel %vm3913, %v3906, %v3908
  %v3931 = vsel %vm3913, %v3910, %v3912
  %3950 = vst.msk [vmem:[#allocation3 + $0x1ad] sm:$0xff] %vm3567, %v3914
  %3951 = vst.msk [vmem:[#allocation3 + $0x1b5] sm:$0xff] %vm3567, %v3915
  %3952 = vst.msk [vmem:[#allocation3 + $0x1bd] sm:$0xff] %vm3567, %v3916
  %3953 = vst.msk [vmem:[#allocation3 + $0x1c5] sm:$0xff] %vm3567, %v3917
  %3954 = vst.msk [vmem:[#allocation3 + $0x1cd] sm:$0xff] %vm3567, %v3918
  %3955 = vst.msk [vmem:[#allocation3 + $0x1d5] sm:$0xff] %vm3567, %v3919
  %3956 = vst.msk [vmem:[#allocation3 + $0x1dd] sm:$0xff] %vm3567, %v3920
  %3957 = vst.msk [vmem:[#allocation3 + $0x1e5] sm:$0xff] %vm3567, %v3921
  %3958 = vst.msk [vmem:[#allocation3 + $0x1ed] sm:$0xff] %vm3567, %v3922
  %3959 = vst.msk [vmem:[#allocation3 + $0x1f5] sm:$0xff] %vm3567, %v3923
  %3960 = vst.msk [vmem:[#allocation3 + $0x1fd] sm:$0xff] %vm3567, %v3924
  %3961 = vst.msk [vmem:[#allocation3 + $0x205] sm:$0xff] %vm3567, %v3925
  %3962 = vst.msk [vmem:[#allocation3 + $0x20d] sm:$0xff] %vm3567, %v3926
  %3963 = vst.msk [vmem:[#allocation3 + $0x215] sm:$0xff] %vm3567, %v3927
  %3964 = vst.msk [vmem:[#allocation3 + $0x21d] sm:$0xff] %vm3567, %v3928
  %3965 = vst.msk [vmem:[#allocation3 + $0x225] sm:$0xff] %vm3567, %v3929
  %3966 = vst.msk [vmem:[#allocation3 + $0x22d] sm:$0xff] %vm3567, %v3930
  %3967 = vst.msk [vmem:[#allocation3 + $0x235] sm:$0x7f] %vm3585, %v3931
  %3968 = vrot.lane.b32.xlu0 %v1631, 75
  %v3969 = vpop.permute.xlu0 %3968
  %3970 = vrot.lane.b32.xlu0 %v1633, 75
  %v3971 = vpop.permute.xlu0 %3970
  %3972 = vrot.lane.b32.xlu0 %v1635, 75
  %v3973 = vpop.permute.xlu0 %3972
  %3974 = vrot.lane.b32.xlu0 %v1637, 75
  %v3975 = vpop.permute.xlu0 %3974
  %3976 = vrot.lane.b32.xlu0 %v1639, 75
  %v3977 = vpop.permute.xlu0 %3976
  %3978 = vrot.lane.b32.xlu0 %v1641, 75
  %v3979 = vpop.permute.xlu0 %3978
  %3980 = vrot.lane.b32.xlu0 %v1643, 75
  %v3981 = vpop.permute.xlu0 %3980
  %3982 = vrot.lane.b32.xlu0 %v1645, 75
  %v3983 = vpop.permute.xlu0 %3982
  %3984 = vrot.lane.b32.xlu0 %v1647, 75
  %v3985 = vpop.permute.xlu0 %3984
  %3986 = vrot.lane.b32.xlu0 %v1649, 75
  %v3987 = vpop.permute.xlu0 %3986
  %3988 = vrot.lane.b32.xlu0 %v1651, 75
  %v3989 = vpop.permute.xlu0 %3988
  %3990 = vrot.lane.b32.xlu0 %v1653, 75
  %v3991 = vpop.permute.xlu0 %3990
  %3992 = vrot.lane.b32.xlu0 %v1655, 75
  %v3993 = vpop.permute.xlu0 %3992
  %3994 = vrot.lane.b32.xlu0 %v1657, 75
  %v3995 = vpop.permute.xlu0 %3994
  %3996 = vrot.lane.b32.xlu0 %v1659, 75
  %v3997 = vpop.permute.xlu0 %3996
  %3998 = vrot.lane.b32.xlu0 %v1661, 75
  %v3999 = vpop.permute.xlu0 %3998
  %4000 = vrot.lane.b32.xlu0 %v1663, 75
  %v4001 = vpop.permute.xlu0 %4000
  %4002 = vrot.lane.b32.xlu0 %v1665, 75
  %v4003 = vpop.permute.xlu0 %4002
  %4022 = vst.msk [vmem:[#allocation3 + $0x23c] sm:$0xff] %vm3567, %v3969
  %4023 = vst.msk [vmem:[#allocation3 + $0x244] sm:$0xff] %vm3567, %v3971
  %4024 = vst.msk [vmem:[#allocation3 + $0x24c] sm:$0xff] %vm3567, %v3973
  %4025 = vst.msk [vmem:[#allocation3 + $0x254] sm:$0xff] %vm3567, %v3975
  %4026 = vst.msk [vmem:[#allocation3 + $0x25c] sm:$0xff] %vm3567, %v3977
  %4027 = vst.msk [vmem:[#allocation3 + $0x264] sm:$0xff] %vm3567, %v3979
  %4028 = vst.msk [vmem:[#allocation3 + $0x26c] sm:$0xff] %vm3567, %v3981
  %4029 = vst.msk [vmem:[#allocation3 + $0x274] sm:$0xff] %vm3567, %v3983
  %4030 = vst.msk [vmem:[#allocation3 + $0x27c] sm:$0xff] %vm3567, %v3985
  %4031 = vst.msk [vmem:[#allocation3 + $0x284] sm:$0xff] %vm3567, %v3987
  %4032 = vst.msk [vmem:[#allocation3 + $0x28c] sm:$0xff] %vm3567, %v3989
  %4033 = vst.msk [vmem:[#allocation3 + $0x294] sm:$0xff] %vm3567, %v3991
  %4034 = vst.msk [vmem:[#allocation3 + $0x29c] sm:$0xff] %vm3567, %v3993
  %4035 = vst.msk [vmem:[#allocation3 + $0x2a4] sm:$0xff] %vm3567, %v3995
  %4036 = vst.msk [vmem:[#allocation3 + $0x2ac] sm:$0xff] %vm3567, %v3997
  %4037 = vst.msk [vmem:[#allocation3 + $0x2b4] sm:$0xff] %vm3567, %v3999
  %4038 = vst.msk [vmem:[#allocation3 + $0x2bc] sm:$0xff] %vm3567, %v4001
  %4039 = vst.msk [vmem:[#allocation3 + $0x2c4] sm:$0x7f] %vm3585, %v4003
  %4040 = vrot.lane.b32.xlu0 %v1631, 74
  %v4041 = vpop.permute.xlu0 %4040
  %4042 = vrot.lane.b32.xlu0 %v1633, 74
  %v4043 = vpop.permute.xlu0 %4042
  %4044 = vrot.lane.b32.xlu0 %v1635, 74
  %v4045 = vpop.permute.xlu0 %4044
  %4046 = vrot.lane.b32.xlu0 %v1637, 74
  %v4047 = vpop.permute.xlu0 %4046
  %4048 = vrot.lane.b32.xlu0 %v1639, 74
  %v4049 = vpop.permute.xlu0 %4048
  %4050 = vrot.lane.b32.xlu0 %v1641, 74
  %v4051 = vpop.permute.xlu0 %4050
  %4052 = vrot.lane.b32.xlu0 %v1643, 74
  %v4053 = vpop.permute.xlu0 %4052
  %4054 = vrot.lane.b32.xlu0 %v1645, 74
  %v4055 = vpop.permute.xlu0 %4054
  %4056 = vrot.lane.b32.xlu0 %v1647, 74
  %v4057 = vpop.permute.xlu0 %4056
  %4058 = vrot.lane.b32.xlu0 %v1649, 74
  %v4059 = vpop.permute.xlu0 %4058
  %4060 = vrot.lane.b32.xlu0 %v1651, 74
  %v4061 = vpop.permute.xlu0 %4060
  %4062 = vrot.lane.b32.xlu0 %v1653, 74
  %v4063 = vpop.permute.xlu0 %4062
  %4064 = vrot.lane.b32.xlu0 %v1655, 74
  %v4065 = vpop.permute.xlu0 %4064
  %4066 = vrot.lane.b32.xlu0 %v1657, 74
  %v4067 = vpop.permute.xlu0 %4066
  %4068 = vrot.lane.b32.xlu0 %v1659, 74
  %v4069 = vpop.permute.xlu0 %4068
  %4070 = vrot.lane.b32.xlu0 %v1661, 74
  %v4071 = vpop.permute.xlu0 %4070
  %4072 = vrot.lane.b32.xlu0 %v1663, 74
  %v4073 = vpop.permute.xlu0 %4072
  %4074 = vrot.lane.b32.xlu0 %v1665, 74
  %v4075 = vpop.permute.xlu0 %4074
  %vm4094 = vcmask 859856
  %4095 = vst.msk [vmem:[#allocation3] sm:$0xff] %vm4094, %v4041
  %4096 = vst.msk [vmem:[#allocation3 + $0x8] sm:$0xff] %vm4094, %v4043
  %4097 = vst.msk [vmem:[#allocation3 + $0x10] sm:$0xff] %vm4094, %v4045
  %4098 = vst.msk [vmem:[#allocation3 + $0x18] sm:$0xff] %vm4094, %v4047
  %4099 = vst.msk [vmem:[#allocation3 + $0x20] sm:$0xff] %vm4094, %v4049
  %4100 = vst.msk [vmem:[#allocation3 + $0x28] sm:$0xff] %vm4094, %v4051
  %4101 = vst.msk [vmem:[#allocation3 + $0x30] sm:$0xff] %vm4094, %v4053
  %4102 = vst.msk [vmem:[#allocation3 + $0x38] sm:$0xff] %vm4094, %v4055
  %4103 = vst.msk [vmem:[#allocation3 + $0x40] sm:$0xff] %vm4094, %v4057
  %4104 = vst.msk [vmem:[#allocation3 + $0x48] sm:$0xff] %vm4094, %v4059
  %4105 = vst.msk [vmem:[#allocation3 + $0x50] sm:$0xff] %vm4094, %v4061
  %4106 = vst.msk [vmem:[#allocation3 + $0x58] sm:$0xff] %vm4094, %v4063
  %4107 = vst.msk [vmem:[#allocation3 + $0x60] sm:$0xff] %vm4094, %v4065
  %4108 = vst.msk [vmem:[#allocation3 + $0x68] sm:$0xff] %vm4094, %v4067
  %4109 = vst.msk [vmem:[#allocation3 + $0x70] sm:$0xff] %vm4094, %v4069
  %4110 = vst.msk [vmem:[#allocation3 + $0x78] sm:$0xff] %vm4094, %v4071
  %4111 = vst.msk [vmem:[#allocation3 + $0x80] sm:$0xff] %vm4094, %v4073
  %vm4112 = vcmask 858832
  %4113 = vst.msk [vmem:[#allocation3 + $0x88] sm:$0x7f] %vm4112, %v4075
  %4114 = vrot.lane.b32.xlu0 %v1631, 72
  %v4115 = vpop.permute.xlu0 %4114
  %4116 = vrot.lane.b32.xlu0 %v1633, 72
  %v4117 = vpop.permute.xlu0 %4116
  %4118 = vrot.lane.b32.xlu0 %v1635, 72
  %v4119 = vpop.permute.xlu0 %4118
  %4120 = vrot.lane.b32.xlu0 %v1637, 72
  %v4121 = vpop.permute.xlu0 %4120
  %4122 = vrot.lane.b32.xlu0 %v1639, 72
  %v4123 = vpop.permute.xlu0 %4122
  %4124 = vrot.lane.b32.xlu0 %v1641, 72
  %v4125 = vpop.permute.xlu0 %4124
  %4126 = vrot.lane.b32.xlu0 %v1643, 72
  %v4127 = vpop.permute.xlu0 %4126
  %4128 = vrot.lane.b32.xlu0 %v1645, 72
  %v4129 = vpop.permute.xlu0 %4128
  %4130 = vrot.lane.b32.xlu0 %v1647, 72
  %v4131 = vpop.permute.xlu0 %4130
  %4132 = vrot.lane.b32.xlu0 %v1649, 72
  %v4133 = vpop.permute.xlu0 %4132
  %4134 = vrot.lane.b32.xlu0 %v1651, 72
  %v4135 = vpop.permute.xlu0 %4134
  %4136 = vrot.lane.b32.xlu0 %v1653, 72
  %v4137 = vpop.permute.xlu0 %4136
  %4138 = vrot.lane.b32.xlu0 %v1655, 72
  %v4139 = vpop.permute.xlu0 %4138
  %4140 = vrot.lane.b32.xlu0 %v1657, 72
  %v4141 = vpop.permute.xlu0 %4140
  %4142 = vrot.lane.b32.xlu0 %v1659, 72
  %v4143 = vpop.permute.xlu0 %4142
  %4144 = vrot.lane.b32.xlu0 %v1661, 72
  %v4145 = vpop.permute.xlu0 %4144
  %4146 = vrot.lane.b32.xlu0 %v1663, 72
  %v4147 = vpop.permute.xlu0 %4146
  %4148 = vrot.lane.b32.xlu0 %v1665, 72
  %v4149 = vpop.permute.xlu0 %4148
  %4168 = vst.msk [vmem:[#allocation3 + $0x8f] sm:$0xff] %vm4094, %v4115
  %4169 = vst.msk [vmem:[#allocation3 + $0x97] sm:$0xff] %vm4094, %v4117
  %4170 = vst.msk [vmem:[#allocation3 + $0x9f] sm:$0xff] %vm4094, %v4119
  %4171 = vst.msk [vmem:[#allocation3 + $0xa7] sm:$0xff] %vm4094, %v4121
  %4172 = vst.msk [vmem:[#allocation3 + $0xaf] sm:$0xff] %vm4094, %v4123
  %4173 = vst.msk [vmem:[#allocation3 + $0xb7] sm:$0xff] %vm4094, %v4125
  %4174 = vst.msk [vmem:[#allocation3 + $0xbf] sm:$0xff] %vm4094, %v4127
  %4175 = vst.msk [vmem:[#allocation3 + $0xc7] sm:$0xff] %vm4094, %v4129
  %4176 = vst.msk [vmem:[#allocation3 + $0xcf] sm:$0xff] %vm4094, %v4131
  %4177 = vst.msk [vmem:[#allocation3 + $0xd7] sm:$0xff] %vm4094, %v4133
  %4178 = vst.msk [vmem:[#allocation3 + $0xdf] sm:$0xff] %vm4094, %v4135
  %4179 = vst.msk [vmem:[#allocation3 + $0xe7] sm:$0xff] %vm4094, %v4137
  %4180 = vst.msk [vmem:[#allocation3 + $0xef] sm:$0xff] %vm4094, %v4139
  %4181 = vst.msk [vmem:[#allocation3 + $0xf7] sm:$0xff] %vm4094, %v4141
  %4182 = vst.msk [vmem:[#allocation3 + $0xff] sm:$0xff] %vm4094, %v4143
  %4183 = vst.msk [vmem:[#allocation3 + $0x107] sm:$0xff] %vm4094, %v4145
  %4184 = vst.msk [vmem:[#allocation3 + $0x10f] sm:$0xff] %vm4094, %v4147
  %4185 = vst.msk [vmem:[#allocation3 + $0x117] sm:$0x7f] %vm4112, %v4149
  %4186 = vrot.lane.b32.xlu0 %v1631, 70
  %v4187 = vpop.permute.xlu0 %4186
  %4188 = vrot.lane.b32.xlu0 %v1633, 70
  %v4189 = vpop.permute.xlu0 %4188
  %4190 = vrot.lane.b32.xlu0 %v1635, 70
  %v4191 = vpop.permute.xlu0 %4190
  %4192 = vrot.lane.b32.xlu0 %v1637, 70
  %v4193 = vpop.permute.xlu0 %4192
  %4194 = vrot.lane.b32.xlu0 %v1639, 70
  %v4195 = vpop.permute.xlu0 %4194
  %4196 = vrot.lane.b32.xlu0 %v1641, 70
  %v4197 = vpop.permute.xlu0 %4196
  %4198 = vrot.lane.b32.xlu0 %v1643, 70
  %v4199 = vpop.permute.xlu0 %4198
  %4200 = vrot.lane.b32.xlu0 %v1645, 70
  %v4201 = vpop.permute.xlu0 %4200
  %4202 = vrot.lane.b32.xlu0 %v1647, 70
  %v4203 = vpop.permute.xlu0 %4202
  %4204 = vrot.lane.b32.xlu0 %v1649, 70
  %v4205 = vpop.permute.xlu0 %4204
  %4206 = vrot.lane.b32.xlu0 %v1651, 70
  %v4207 = vpop.permute.xlu0 %4206
  %4208 = vrot.lane.b32.xlu0 %v1653, 70
  %v4209 = vpop.permute.xlu0 %4208
  %4210 = vrot.lane.b32.xlu0 %v1655, 70
  %v4211 = vpop.permute.xlu0 %4210
  %4212 = vrot.lane.b32.xlu0 %v1657, 70
  %v4213 = vpop.permute.xlu0 %4212
  %4214 = vrot.lane.b32.xlu0 %v1659, 70
  %v4215 = vpop.permute.xlu0 %4214
  %4216 = vrot.lane.b32.xlu0 %v1661, 70
  %v4217 = vpop.permute.xlu0 %4216
  %4218 = vrot.lane.b32.xlu0 %v1663, 70
  %v4219 = vpop.permute.xlu0 %4218
  %4220 = vrot.lane.b32.xlu0 %v1665, 70
  %v4221 = vpop.permute.xlu0 %4220
  %4240 = vst.msk [vmem:[#allocation3 + $0x11e] sm:$0xff] %vm4094, %v4187
  %4241 = vst.msk [vmem:[#allocation3 + $0x126] sm:$0xff] %vm4094, %v4189
  %4242 = vst.msk [vmem:[#allocation3 + $0x12e] sm:$0xff] %vm4094, %v4191
  %4243 = vst.msk [vmem:[#allocation3 + $0x136] sm:$0xff] %vm4094, %v4193
  %4244 = vst.msk [vmem:[#allocation3 + $0x13e] sm:$0xff] %vm4094, %v4195
  %4245 = vst.msk [vmem:[#allocation3 + $0x146] sm:$0xff] %vm4094, %v4197
  %4246 = vst.msk [vmem:[#allocation3 + $0x14e] sm:$0xff] %vm4094, %v4199
  %4247 = vst.msk [vmem:[#allocation3 + $0x156] sm:$0xff] %vm4094, %v4201
  %4248 = vst.msk [vmem:[#allocation3 + $0x15e] sm:$0xff] %vm4094, %v4203
  %4249 = vst.msk [vmem:[#allocation3 + $0x166] sm:$0xff] %vm4094, %v4205
  %4250 = vst.msk [vmem:[#allocation3 + $0x16e] sm:$0xff] %vm4094, %v4207
  %4251 = vst.msk [vmem:[#allocation3 + $0x176] sm:$0xff] %vm4094, %v4209
  %4252 = vst.msk [vmem:[#allocation3 + $0x17e] sm:$0xff] %vm4094, %v4211
  %4253 = vst.msk [vmem:[#allocation3 + $0x186] sm:$0xff] %vm4094, %v4213
  %4254 = vst.msk [vmem:[#allocation3 + $0x18e] sm:$0xff] %vm4094, %v4215
  %4255 = vst.msk [vmem:[#allocation3 + $0x196] sm:$0xff] %vm4094, %v4217
  %4256 = vst.msk [vmem:[#allocation3 + $0x19e] sm:$0xff] %vm4094, %v4219
  %4257 = vst.msk [vmem:[#allocation3 + $0x1a6] sm:$0x7f] %vm4112, %v4221
  %4258 = vrot.lane.b32.xlu0 %v1631, 68
  %v4259 = vpop.permute.xlu0 %4258
  %4260 = vrot.lane.b32.xlu0 %v1633, 68
  %v4261 = vpop.permute.xlu0 %4260
  %4262 = vrot.lane.b32.xlu0 %v1635, 68
  %v4263 = vpop.permute.xlu0 %4262
  %4264 = vrot.lane.b32.xlu0 %v1637, 68
  %v4265 = vpop.permute.xlu0 %4264
  %4266 = vrot.lane.b32.xlu0 %v1639, 68
  %v4267 = vpop.permute.xlu0 %4266
  %4268 = vrot.lane.b32.xlu0 %v1641, 68
  %v4269 = vpop.permute.xlu0 %4268
  %4270 = vrot.lane.b32.xlu0 %v1643, 68
  %v4271 = vpop.permute.xlu0 %4270
  %4272 = vrot.lane.b32.xlu0 %v1645, 68
  %v4273 = vpop.permute.xlu0 %4272
  %4274 = vrot.lane.b32.xlu0 %v1647, 68
  %v4275 = vpop.permute.xlu0 %4274
  %4276 = vrot.lane.b32.xlu0 %v1649, 68
  %v4277 = vpop.permute.xlu0 %4276
  %4278 = vrot.lane.b32.xlu0 %v1651, 68
  %v4279 = vpop.permute.xlu0 %4278
  %4280 = vrot.lane.b32.xlu0 %v1653, 68
  %v4281 = vpop.permute.xlu0 %4280
  %4282 = vrot.lane.b32.xlu0 %v1655, 68
  %v4283 = vpop.permute.xlu0 %4282
  %4284 = vrot.lane.b32.xlu0 %v1657, 68
  %v4285 = vpop.permute.xlu0 %4284
  %4286 = vrot.lane.b32.xlu0 %v1659, 68
  %v4287 = vpop.permute.xlu0 %4286
  %4288 = vrot.lane.b32.xlu0 %v1661, 68
  %v4289 = vpop.permute.xlu0 %4288
  %4290 = vrot.lane.b32.xlu0 %v1663, 68
  %v4291 = vpop.permute.xlu0 %4290
  %4292 = vrot.lane.b32.xlu0 %v1665, 68
  %v4293 = vpop.permute.xlu0 %4292
  %4312 = vst.msk [vmem:[#allocation3 + $0x1ad] sm:$0xff] %vm4094, %v4259
  %4313 = vst.msk [vmem:[#allocation3 + $0x1b5] sm:$0xff] %vm4094, %v4261
  %4314 = vst.msk [vmem:[#allocation3 + $0x1bd] sm:$0xff] %vm4094, %v4263
  %4315 = vst.msk [vmem:[#allocation3 + $0x1c5] sm:$0xff] %vm4094, %v4265
  %4316 = vst.msk [vmem:[#allocation3 + $0x1cd] sm:$0xff] %vm4094, %v4267
  %4317 = vst.msk [vmem:[#allocation3 + $0x1d5] sm:$0xff] %vm4094, %v4269
  %4318 = vst.msk [vmem:[#allocation3 + $0x1dd] sm:$0xff] %vm4094, %v4271
  %4319 = vst.msk [vmem:[#allocation3 + $0x1e5] sm:$0xff] %vm4094, %v4273
  %4320 = vst.msk [vmem:[#allocation3 + $0x1ed] sm:$0xff] %vm4094, %v4275
  %4321 = vst.msk [vmem:[#allocation3 + $0x1f5] sm:$0xff] %vm4094, %v4277
  %4322 = vst.msk [vmem:[#allocation3 + $0x1fd] sm:$0xff] %vm4094, %v4279
  %4323 = vst.msk [vmem:[#allocation3 + $0x205] sm:$0xff] %vm4094, %v4281
  %4324 = vst.msk [vmem:[#allocation3 + $0x20d] sm:$0xff] %vm4094, %v4283
  %4325 = vst.msk [vmem:[#allocation3 + $0x215] sm:$0xff] %vm4094, %v4285
  %4326 = vst.msk [vmem:[#allocation3 + $0x21d] sm:$0xff] %vm4094, %v4287
  %4327 = vst.msk [vmem:[#allocation3 + $0x225] sm:$0xff] %vm4094, %v4289
  %4328 = vst.msk [vmem:[#allocation3 + $0x22d] sm:$0xff] %vm4094, %v4291
  %4329 = vst.msk [vmem:[#allocation3 + $0x235] sm:$0x7f] %vm4112, %v4293
  %4330 = vrot.lane.b32.xlu0 %v1631, 66
  %v4331 = vpop.permute.xlu0 %4330
  %4332 = vrot.lane.b32.xlu0 %v1633, 66
  %v4333 = vpop.permute.xlu0 %4332
  %4334 = vrot.lane.b32.xlu0 %v1635, 66
  %v4335 = vpop.permute.xlu0 %4334
  %4336 = vrot.lane.b32.xlu0 %v1637, 66
  %v4337 = vpop.permute.xlu0 %4336
  %4338 = vrot.lane.b32.xlu0 %v1639, 66
  %v4339 = vpop.permute.xlu0 %4338
  %4340 = vrot.lane.b32.xlu0 %v1641, 66
  %v4341 = vpop.permute.xlu0 %4340
  %4342 = vrot.lane.b32.xlu0 %v1643, 66
  %v4343 = vpop.permute.xlu0 %4342
  %4344 = vrot.lane.b32.xlu0 %v1645, 66
  %v4345 = vpop.permute.xlu0 %4344
  %4346 = vrot.lane.b32.xlu0 %v1647, 66
  %v4347 = vpop.permute.xlu0 %4346
  %4348 = vrot.lane.b32.xlu0 %v1649, 66
  %v4349 = vpop.permute.xlu0 %4348
  %4350 = vrot.lane.b32.xlu0 %v1651, 66
  %v4351 = vpop.permute.xlu0 %4350
  %4352 = vrot.lane.b32.xlu0 %v1653, 66
  %v4353 = vpop.permute.xlu0 %4352
  %4354 = vrot.lane.b32.xlu0 %v1655, 66
  %v4355 = vpop.permute.xlu0 %4354
  %4356 = vrot.lane.b32.xlu0 %v1657, 66
  %v4357 = vpop.permute.xlu0 %4356
  %4358 = vrot.lane.b32.xlu0 %v1659, 66
  %v4359 = vpop.permute.xlu0 %4358
  %4360 = vrot.lane.b32.xlu0 %v1661, 66
  %v4361 = vpop.permute.xlu0 %4360
  %4362 = vrot.lane.b32.xlu0 %v1663, 66
  %v4363 = vpop.permute.xlu0 %4362
  %4364 = vrot.lane.b32.xlu0 %v1665, 66
  %v4365 = vpop.permute.xlu0 %4364
  %4384 = vst.msk [vmem:[#allocation3 + $0x23c] sm:$0xff] %vm4094, %v4331
  %4385 = vst.msk [vmem:[#allocation3 + $0x244] sm:$0xff] %vm4094, %v4333
  %4386 = vst.msk [vmem:[#allocation3 + $0x24c] sm:$0xff] %vm4094, %v4335
  %4387 = vst.msk [vmem:[#allocation3 + $0x254] sm:$0xff] %vm4094, %v4337
  %4388 = vst.msk [vmem:[#allocation3 + $0x25c] sm:$0xff] %vm4094, %v4339
  %4389 = vst.msk [vmem:[#allocation3 + $0x264] sm:$0xff] %vm4094, %v4341
  %4390 = vst.msk [vmem:[#allocation3 + $0x26c] sm:$0xff] %vm4094, %v4343
  %4391 = vst.msk [vmem:[#allocation3 + $0x274] sm:$0xff] %vm4094, %v4345
  %4392 = vst.msk [vmem:[#allocation3 + $0x27c] sm:$0xff] %vm4094, %v4347
  %4393 = vst.msk [vmem:[#allocation3 + $0x284] sm:$0xff] %vm4094, %v4349
  %4394 = vst.msk [vmem:[#allocation3 + $0x28c] sm:$0xff] %vm4094, %v4351
  %4395 = vst.msk [vmem:[#allocation3 + $0x294] sm:$0xff] %vm4094, %v4353
  %4396 = vst.msk [vmem:[#allocation3 + $0x29c] sm:$0xff] %vm4094, %v4355
  %4397 = vst.msk [vmem:[#allocation3 + $0x2a4] sm:$0xff] %vm4094, %v4357
  %4398 = vst.msk [vmem:[#allocation3 + $0x2ac] sm:$0xff] %vm4094, %v4359
  %4399 = vst.msk [vmem:[#allocation3 + $0x2b4] sm:$0xff] %vm4094, %v4361
  %4400 = vst.msk [vmem:[#allocation3 + $0x2bc] sm:$0xff] %vm4094, %v4363
  %4401 = vst.msk [vmem:[#allocation3 + $0x2c4] sm:$0x7f] %vm4112, %v4365
  %4402 = vrot.lane.b32.xlu0 %v1631, 65
  %v4403 = vpop.permute.xlu0 %4402
  %4404 = vrot.lane.b32.xlu0 %v1633, 65
  %v4405 = vpop.permute.xlu0 %4404
  %4406 = vrot.lane.b32.xlu0 %v1635, 65
  %v4407 = vpop.permute.xlu0 %4406
  %4408 = vrot.lane.b32.xlu0 %v1637, 65
  %v4409 = vpop.permute.xlu0 %4408
  %4410 = vrot.lane.b32.xlu0 %v1639, 65
  %v4411 = vpop.permute.xlu0 %4410
  %4412 = vrot.lane.b32.xlu0 %v1641, 65
  %v4413 = vpop.permute.xlu0 %4412
  %4414 = vrot.lane.b32.xlu0 %v1643, 65
  %v4415 = vpop.permute.xlu0 %4414
  %4416 = vrot.lane.b32.xlu0 %v1645, 65
  %v4417 = vpop.permute.xlu0 %4416
  %4418 = vrot.lane.b32.xlu0 %v1647, 65
  %v4419 = vpop.permute.xlu0 %4418
  %4420 = vrot.lane.b32.xlu0 %v1649, 65
  %v4421 = vpop.permute.xlu0 %4420
  %4422 = vrot.lane.b32.xlu0 %v1651, 65
  %v4423 = vpop.permute.xlu0 %4422
  %4424 = vrot.lane.b32.xlu0 %v1653, 65
  %v4425 = vpop.permute.xlu0 %4424
  %4426 = vrot.lane.b32.xlu0 %v1655, 65
  %v4427 = vpop.permute.xlu0 %4426
  %4428 = vrot.lane.b32.xlu0 %v1657, 65
  %v4429 = vpop.permute.xlu0 %4428
  %4430 = vrot.lane.b32.xlu0 %v1659, 65
  %v4431 = vpop.permute.xlu0 %4430
  %4432 = vrot.lane.b32.xlu0 %v1661, 65
  %v4433 = vpop.permute.xlu0 %4432
  %4434 = vrot.lane.b32.xlu0 %v1663, 65
  %v4435 = vpop.permute.xlu0 %4434
  %4436 = vrot.lane.b32.xlu0 %v1665, 65
  %v4437 = vpop.permute.xlu0 %4436
  %vm4456 = vcmask 982856
  %4457 = vst.msk [vmem:[#allocation3] sm:$0xff] %vm4456, %v4403
  %4458 = vst.msk [vmem:[#allocation3 + $0x8] sm:$0xff] %vm4456, %v4405
  %4459 = vst.msk [vmem:[#allocation3 + $0x10] sm:$0xff] %vm4456, %v4407
  %4460 = vst.msk [vmem:[#allocation3 + $0x18] sm:$0xff] %vm4456, %v4409
  %4461 = vst.msk [vmem:[#allocation3 + $0x20] sm:$0xff] %vm4456, %v4411
  %4462 = vst.msk [vmem:[#allocation3 + $0x28] sm:$0xff] %vm4456, %v4413
  %4463 = vst.msk [vmem:[#allocation3 + $0x30] sm:$0xff] %vm4456, %v4415
  %4464 = vst.msk [vmem:[#allocation3 + $0x38] sm:$0xff] %vm4456, %v4417
  %4465 = vst.msk [vmem:[#allocation3 + $0x40] sm:$0xff] %vm4456, %v4419
  %4466 = vst.msk [vmem:[#allocation3 + $0x48] sm:$0xff] %vm4456, %v4421
  %4467 = vst.msk [vmem:[#allocation3 + $0x50] sm:$0xff] %vm4456, %v4423
  %4468 = vst.msk [vmem:[#allocation3 + $0x58] sm:$0xff] %vm4456, %v4425
  %4469 = vst.msk [vmem:[#allocation3 + $0x60] sm:$0xff] %vm4456, %v4427
  %4470 = vst.msk [vmem:[#allocation3 + $0x68] sm:$0xff] %vm4456, %v4429
  %4471 = vst.msk [vmem:[#allocation3 + $0x70] sm:$0xff] %vm4456, %v4431
  %4472 = vst.msk [vmem:[#allocation3 + $0x78] sm:$0xff] %vm4456, %v4433
  %4473 = vst.msk [vmem:[#allocation3 + $0x80] sm:$0xff] %vm4456, %v4435
  %vm4474 = vcmask 981832
  %4475 = vst.msk [vmem:[#allocation3 + $0x88] sm:$0x7f] %vm4474, %v4437
  %4476 = vrot.lane.b32.xlu0 %v1631, 63
  %v4477 = vpop.permute.xlu0 %4476
  %4478 = vrot.lane.b32.xlu0 %v1633, 63
  %v4479 = vpop.permute.xlu0 %4478
  %4480 = vrot.lane.b32.xlu0 %v1635, 63
  %v4481 = vpop.permute.xlu0 %4480
  %4482 = vrot.lane.b32.xlu0 %v1637, 63
  %v4483 = vpop.permute.xlu0 %4482
  %4484 = vrot.lane.b32.xlu0 %v1639, 63
  %v4485 = vpop.permute.xlu0 %4484
  %4486 = vrot.lane.b32.xlu0 %v1641, 63
  %v4487 = vpop.permute.xlu0 %4486
  %4488 = vrot.lane.b32.xlu0 %v1643, 63
  %v4489 = vpop.permute.xlu0 %4488
  %4490 = vrot.lane.b32.xlu0 %v1645, 63
  %v4491 = vpop.permute.xlu0 %4490
  %4492 = vrot.lane.b32.xlu0 %v1647, 63
  %v4493 = vpop.permute.xlu0 %4492
  %4494 = vrot.lane.b32.xlu0 %v1649, 63
  %v4495 = vpop.permute.xlu0 %4494
  %4496 = vrot.lane.b32.xlu0 %v1651, 63
  %v4497 = vpop.permute.xlu0 %4496
  %4498 = vrot.lane.b32.xlu0 %v1653, 63
  %v4499 = vpop.permute.xlu0 %4498
  %4500 = vrot.lane.b32.xlu0 %v1655, 63
  %v4501 = vpop.permute.xlu0 %4500
  %4502 = vrot.lane.b32.xlu0 %v1657, 63
  %v4503 = vpop.permute.xlu0 %4502
  %4504 = vrot.lane.b32.xlu0 %v1659, 63
  %v4505 = vpop.permute.xlu0 %4504
  %4506 = vrot.lane.b32.xlu0 %v1661, 63
  %v4507 = vpop.permute.xlu0 %4506
  %4508 = vrot.lane.b32.xlu0 %v1663, 63
  %v4509 = vpop.permute.xlu0 %4508
  %4510 = vrot.lane.b32.xlu0 %v1665, 63
  %v4511 = vpop.permute.xlu0 %4510
  %4530 = vst.msk [vmem:[#allocation3 + $0x8f] sm:$0xff] %vm4456, %v4477
  %4531 = vst.msk [vmem:[#allocation3 + $0x97] sm:$0xff] %vm4456, %v4479
  %4532 = vst.msk [vmem:[#allocation3 + $0x9f] sm:$0xff] %vm4456, %v4481
  %4533 = vst.msk [vmem:[#allocation3 + $0xa7] sm:$0xff] %vm4456, %v4483
  %4534 = vst.msk [vmem:[#allocation3 + $0xaf] sm:$0xff] %vm4456, %v4485
  %4535 = vst.msk [vmem:[#allocation3 + $0xb7] sm:$0xff] %vm4456, %v4487
  %4536 = vst.msk [vmem:[#allocation3 + $0xbf] sm:$0xff] %vm4456, %v4489
  %4537 = vst.msk [vmem:[#allocation3 + $0xc7] sm:$0xff] %vm4456, %v4491
  %4538 = vst.msk [vmem:[#allocation3 + $0xcf] sm:$0xff] %vm4456, %v4493
  %4539 = vst.msk [vmem:[#allocation3 + $0xd7] sm:$0xff] %vm4456, %v4495
  %4540 = vst.msk [vmem:[#allocation3 + $0xdf] sm:$0xff] %vm4456, %v4497
  %4541 = vst.msk [vmem:[#allocation3 + $0xe7] sm:$0xff] %vm4456, %v4499
  %4542 = vst.msk [vmem:[#allocation3 + $0xef] sm:$0xff] %vm4456, %v4501
  %4543 = vst.msk [vmem:[#allocation3 + $0xf7] sm:$0xff] %vm4456, %v4503
  %4544 = vst.msk [vmem:[#allocation3 + $0xff] sm:$0xff] %vm4456, %v4505
  %4545 = vst.msk [vmem:[#allocation3 + $0x107] sm:$0xff] %vm4456, %v4507
  %4546 = vst.msk [vmem:[#allocation3 + $0x10f] sm:$0xff] %vm4456, %v4509
  %4547 = vst.msk [vmem:[#allocation3 + $0x117] sm:$0x7f] %vm4474, %v4511
  %4548 = vrot.lane.b32.xlu0 %v1631, 61
  %v4549 = vpop.permute.xlu0 %4548
  %4550 = vrot.lane.b32.xlu0 %v1633, 61
  %v4551 = vpop.permute.xlu0 %4550
  %4552 = vrot.lane.b32.xlu0 %v1635, 61
  %v4553 = vpop.permute.xlu0 %4552
  %4554 = vrot.lane.b32.xlu0 %v1637, 61
  %v4555 = vpop.permute.xlu0 %4554
  %4556 = vrot.lane.b32.xlu0 %v1639, 61
  %v4557 = vpop.permute.xlu0 %4556
  %4558 = vrot.lane.b32.xlu0 %v1641, 61
  %v4559 = vpop.permute.xlu0 %4558
  %4560 = vrot.lane.b32.xlu0 %v1643, 61
  %v4561 = vpop.permute.xlu0 %4560
  %4562 = vrot.lane.b32.xlu0 %v1645, 61
  %v4563 = vpop.permute.xlu0 %4562
  %4564 = vrot.lane.b32.xlu0 %v1647, 61
  %v4565 = vpop.permute.xlu0 %4564
  %4566 = vrot.lane.b32.xlu0 %v1649, 61
  %v4567 = vpop.permute.xlu0 %4566
  %4568 = vrot.lane.b32.xlu0 %v1651, 61
  %v4569 = vpop.permute.xlu0 %4568
  %4570 = vrot.lane.b32.xlu0 %v1653, 61
  %v4571 = vpop.permute.xlu0 %4570
  %4572 = vrot.lane.b32.xlu0 %v1655, 61
  %v4573 = vpop.permute.xlu0 %4572
  %4574 = vrot.lane.b32.xlu0 %v1657, 61
  %v4575 = vpop.permute.xlu0 %4574
  %4576 = vrot.lane.b32.xlu0 %v1659, 61
  %v4577 = vpop.permute.xlu0 %4576
  %4578 = vrot.lane.b32.xlu0 %v1661, 61
  %v4579 = vpop.permute.xlu0 %4578
  %4580 = vrot.lane.b32.xlu0 %v1663, 61
  %v4581 = vpop.permute.xlu0 %4580
  %4582 = vrot.lane.b32.xlu0 %v1665, 61
  %v4583 = vpop.permute.xlu0 %4582
  %4602 = vst.msk [vmem:[#allocation3 + $0x11e] sm:$0xff] %vm4456, %v4549
  %4603 = vst.msk [vmem:[#allocation3 + $0x126] sm:$0xff] %vm4456, %v4551
  %4604 = vst.msk [vmem:[#allocation3 + $0x12e] sm:$0xff] %vm4456, %v4553
  %4605 = vst.msk [vmem:[#allocation3 + $0x136] sm:$0xff] %vm4456, %v4555
  %4606 = vst.msk [vmem:[#allocation3 + $0x13e] sm:$0xff] %vm4456, %v4557
  %4607 = vst.msk [vmem:[#allocation3 + $0x146] sm:$0xff] %vm4456, %v4559
  %4608 = vst.msk [vmem:[#allocation3 + $0x14e] sm:$0xff] %vm4456, %v4561
  %4609 = vst.msk [vmem:[#allocation3 + $0x156] sm:$0xff] %vm4456, %v4563
  %4610 = vst.msk [vmem:[#allocation3 + $0x15e] sm:$0xff] %vm4456, %v4565
  %4611 = vst.msk [vmem:[#allocation3 + $0x166] sm:$0xff] %vm4456, %v4567
  %4612 = vst.msk [vmem:[#allocation3 + $0x16e] sm:$0xff] %vm4456, %v4569
  %4613 = vst.msk [vmem:[#allocation3 + $0x176] sm:$0xff] %vm4456, %v4571
  %4614 = vst.msk [vmem:[#allocation3 + $0x17e] sm:$0xff] %vm4456, %v4573
  %4615 = vst.msk [vmem:[#allocation3 + $0x186] sm:$0xff] %vm4456, %v4575
  %4616 = vst.msk [vmem:[#allocation3 + $0x18e] sm:$0xff] %vm4456, %v4577
  %4617 = vst.msk [vmem:[#allocation3 + $0x196] sm:$0xff] %vm4456, %v4579
  %4618 = vst.msk [vmem:[#allocation3 + $0x19e] sm:$0xff] %vm4456, %v4581
  %4619 = vst.msk [vmem:[#allocation3 + $0x1a6] sm:$0x7f] %vm4474, %v4583
  %4620 = vrot.lane.b32.xlu0 %v1631, 59
  %v4621 = vpop.permute.xlu0 %4620
  %4622 = vrot.lane.b32.xlu0 %v1633, 59
  %v4623 = vpop.permute.xlu0 %4622
  %4624 = vrot.lane.b32.xlu0 %v1635, 59
  %v4625 = vpop.permute.xlu0 %4624
  %4626 = vrot.lane.b32.xlu0 %v1637, 59
  %v4627 = vpop.permute.xlu0 %4626
  %4628 = vrot.lane.b32.xlu0 %v1639, 59
  %v4629 = vpop.permute.xlu0 %4628
  %4630 = vrot.lane.b32.xlu0 %v1641, 59
  %v4631 = vpop.permute.xlu0 %4630
  %4632 = vrot.lane.b32.xlu0 %v1643, 59
  %v4633 = vpop.permute.xlu0 %4632
  %4634 = vrot.lane.b32.xlu0 %v1645, 59
  %v4635 = vpop.permute.xlu0 %4634
  %4636 = vrot.lane.b32.xlu0 %v1647, 59
  %v4637 = vpop.permute.xlu0 %4636
  %4638 = vrot.lane.b32.xlu0 %v1649, 59
  %v4639 = vpop.permute.xlu0 %4638
  %4640 = vrot.lane.b32.xlu0 %v1651, 59
  %v4641 = vpop.permute.xlu0 %4640
  %4642 = vrot.lane.b32.xlu0 %v1653, 59
  %v4643 = vpop.permute.xlu0 %4642
  %4644 = vrot.lane.b32.xlu0 %v1655, 59
  %v4645 = vpop.permute.xlu0 %4644
  %4646 = vrot.lane.b32.xlu0 %v1657, 59
  %v4647 = vpop.permute.xlu0 %4646
  %4648 = vrot.lane.b32.xlu0 %v1659, 59
  %v4649 = vpop.permute.xlu0 %4648
  %4650 = vrot.lane.b32.xlu0 %v1661, 59
  %v4651 = vpop.permute.xlu0 %4650
  %4652 = vrot.lane.b32.xlu0 %v1663, 59
  %v4653 = vpop.permute.xlu0 %4652
  %4654 = vrot.lane.b32.xlu0 %v1665, 59
  %v4655 = vpop.permute.xlu0 %4654
  %4674 = vst.msk [vmem:[#allocation3 + $0x1ad] sm:$0xff] %vm4456, %v4621
  %4675 = vst.msk [vmem:[#allocation3 + $0x1b5] sm:$0xff] %vm4456, %v4623
  %4676 = vst.msk [vmem:[#allocation3 + $0x1bd] sm:$0xff] %vm4456, %v4625
  %4677 = vst.msk [vmem:[#allocation3 + $0x1c5] sm:$0xff] %vm4456, %v4627
  %4678 = vst.msk [vmem:[#allocation3 + $0x1cd] sm:$0xff] %vm4456, %v4629
  %4679 = vst.msk [vmem:[#allocation3 + $0x1d5] sm:$0xff] %vm4456, %v4631
  %4680 = vst.msk [vmem:[#allocation3 + $0x1dd] sm:$0xff] %vm4456, %v4633
  %4681 = vst.msk [vmem:[#allocation3 + $0x1e5] sm:$0xff] %vm4456, %v4635
  %4682 = vst.msk [vmem:[#allocation3 + $0x1ed] sm:$0xff] %vm4456, %v4637
  %4683 = vst.msk [vmem:[#allocation3 + $0x1f5] sm:$0xff] %vm4456, %v4639
  %4684 = vst.msk [vmem:[#allocation3 + $0x1fd] sm:$0xff] %vm4456, %v4641
  %4685 = vst.msk [vmem:[#allocation3 + $0x205] sm:$0xff] %vm4456, %v4643
  %4686 = vst.msk [vmem:[#allocation3 + $0x20d] sm:$0xff] %vm4456, %v4645
  %4687 = vst.msk [vmem:[#allocation3 + $0x215] sm:$0xff] %vm4456, %v4647
  %4688 = vst.msk [vmem:[#allocation3 + $0x21d] sm:$0xff] %vm4456, %v4649
  %4689 = vst.msk [vmem:[#allocation3 + $0x225] sm:$0xff] %vm4456, %v4651
  %4690 = vst.msk [vmem:[#allocation3 + $0x22d] sm:$0xff] %vm4456, %v4653
  %4691 = vst.msk [vmem:[#allocation3 + $0x235] sm:$0x7f] %vm4474, %v4655
  %4692 = vrot.lane.b32.xlu0 %v1631, 57
  %v4693 = vpop.permute.xlu0 %4692
  %4694 = vrot.lane.b32.xlu0 %v1633, 57
  %v4695 = vpop.permute.xlu0 %4694
  %4696 = vrot.lane.b32.xlu0 %v1635, 57
  %v4697 = vpop.permute.xlu0 %4696
  %4698 = vrot.lane.b32.xlu0 %v1637, 57
  %v4699 = vpop.permute.xlu0 %4698
  %4700 = vrot.lane.b32.xlu0 %v1639, 57
  %v4701 = vpop.permute.xlu0 %4700
  %4702 = vrot.lane.b32.xlu0 %v1641, 57
  %v4703 = vpop.permute.xlu0 %4702
  %4704 = vrot.lane.b32.xlu0 %v1643, 57
  %v4705 = vpop.permute.xlu0 %4704
  %4706 = vrot.lane.b32.xlu0 %v1645, 57
  %v4707 = vpop.permute.xlu0 %4706
  %4708 = vrot.lane.b32.xlu0 %v1647, 57
  %v4709 = vpop.permute.xlu0 %4708
  %4710 = vrot.lane.b32.xlu0 %v1649, 57
  %v4711 = vpop.permute.xlu0 %4710
  %4712 = vrot.lane.b32.xlu0 %v1651, 57
  %v4713 = vpop.permute.xlu0 %4712
  %4714 = vrot.lane.b32.xlu0 %v1653, 57
  %v4715 = vpop.permute.xlu0 %4714
  %4716 = vrot.lane.b32.xlu0 %v1655, 57
  %v4717 = vpop.permute.xlu0 %4716
  %4718 = vrot.lane.b32.xlu0 %v1657, 57
  %v4719 = vpop.permute.xlu0 %4718
  %4720 = vrot.lane.b32.xlu0 %v1659, 57
  %v4721 = vpop.permute.xlu0 %4720
  %4722 = vrot.lane.b32.xlu0 %v1661, 57
  %v4723 = vpop.permute.xlu0 %4722
  %4724 = vrot.lane.b32.xlu0 %v1663, 57
  %v4725 = vpop.permute.xlu0 %4724
  %4726 = vrot.lane.b32.xlu0 %v1665, 57
  %v4727 = vpop.permute.xlu0 %4726
  %4746 = vst.msk [vmem:[#allocation3 + $0x23c] sm:$0xff] %vm4456, %v4693
  %4747 = vst.msk [vmem:[#allocation3 + $0x244] sm:$0xff] %vm4456, %v4695
  %4748 = vst.msk [vmem:[#allocation3 + $0x24c] sm:$0xff] %vm4456, %v4697
  %4749 = vst.msk [vmem:[#allocation3 + $0x254] sm:$0xff] %vm4456, %v4699
  %4750 = vst.msk [vmem:[#allocation3 + $0x25c] sm:$0xff] %vm4456, %v4701
  %4751 = vst.msk [vmem:[#allocation3 + $0x264] sm:$0xff] %vm4456, %v4703
  %4752 = vst.msk [vmem:[#allocation3 + $0x26c] sm:$0xff] %vm4456, %v4705
  %4753 = vst.msk [vmem:[#allocation3 + $0x274] sm:$0xff] %vm4456, %v4707
  %4754 = vst.msk [vmem:[#allocation3 + $0x27c] sm:$0xff] %vm4456, %v4709
  %4755 = vst.msk [vmem:[#allocation3 + $0x284] sm:$0xff] %vm4456, %v4711
  %4756 = vst.msk [vmem:[#allocation3 + $0x28c] sm:$0xff] %vm4456, %v4713
  %4757 = vst.msk [vmem:[#allocation3 + $0x294] sm:$0xff] %vm4456, %v4715
  %4758 = vst.msk [vmem:[#allocation3 + $0x29c] sm:$0xff] %vm4456, %v4717
  %4759 = vst.msk [vmem:[#allocation3 + $0x2a4] sm:$0xff] %vm4456, %v4719
  %4760 = vst.msk [vmem:[#allocation3 + $0x2ac] sm:$0xff] %vm4456, %v4721
  %4761 = vst.msk [vmem:[#allocation3 + $0x2b4] sm:$0xff] %vm4456, %v4723
  %4762 = vst.msk [vmem:[#allocation3 + $0x2bc] sm:$0xff] %vm4456, %v4725
  %4763 = vst.msk [vmem:[#allocation3 + $0x2c4] sm:$0x7f] %vm4474, %v4727
  %v4764 = vld [vmem:[%s3] sm:$0xff]
  %v4765 = vld [vmem:[%s3 + $0x8] sm:$0xff]
  %v4766 = vld [vmem:[%s3 + $0x10] sm:$0xff]
  %v4767 = vld [vmem:[%s3 + $0x18] sm:$0xff]
  %v4768 = vld [vmem:[%s3 + $0x20] sm:$0xff]
  %v4769 = vld [vmem:[%s3 + $0x28] sm:$0xff]
  %v4770 = vld [vmem:[%s3 + $0x30] sm:$0xff]
  %v4771 = vld [vmem:[%s3 + $0x38] sm:$0xff]
  %v4772 = vld [vmem:[%s3 + $0x40] sm:$0xff]
  %v4773 = vld [vmem:[%s3 + $0x48] sm:$0xff]
  %v4774 = vld [vmem:[%s3 + $0x50] sm:$0xff]
  %v4775 = vld [vmem:[%s3 + $0x58] sm:$0xff]
  %v4776 = vld [vmem:[%s3 + $0x60] sm:$0xff]
  %v4777 = vld [vmem:[%s3 + $0x68] sm:$0xff]
  %v4778 = vld [vmem:[%s3 + $0x70] sm:$0xff]
  %v4779 = vld [vmem:[%s3 + $0x78] sm:$0xff]
  %v4780 = vld [vmem:[%s3 + $0x80] sm:$0xff]
  %v4781 = vld [vmem:[%s3 + $0x88] sm:$0xff]
  %v4782 = vld [vmem:[%s3 + $0x90] sm:$0xff]
  %v4783 = vld [vmem:[%s3 + $0x98] sm:$0xff]
  %v4784 = vld [vmem:[%s3 + $0xa0] sm:$0xff]
  %v4785 = vld [vmem:[%s3 + $0xa8] sm:$0xff]
  %v4786 = vld [vmem:[%s3 + $0xb0] sm:$0xff]
  %v4787 = vld [vmem:[%s3 + $0xb8] sm:$0xff]
  %v4788 = vld [vmem:[%s3 + $0xc0] sm:$0xff]
  %v4789 = vld [vmem:[%s3 + $0xc8] sm:$0xff]
  %v4790 = vld [vmem:[%s3 + $0xd0] sm:$0xff]
  %v4791 = vld [vmem:[%s3 + $0xd8] sm:$0xff]
  %v4792 = vld [vmem:[%s3 + $0xe0] sm:$0xff]
  %v4793 = vld [vmem:[%s3 + $0xe8] sm:$0xff]
  %v4794 = vld [vmem:[%s3 + $0xf0] sm:$0xff]
  %v4795 = vld [vmem:[%s3 + $0xf8] sm:$0xff]
  %v4796 = vld [vmem:[%s3 + $0x100] sm:$0xff]
  %v4797 = vld [vmem:[%s3 + $0x108] sm:$0xff]
  %v4798 = vld [vmem:[%s3 + $0x110] sm:$0xff]
  %v4799 = vld [vmem:[%s3 + $0x118] sm:$0xff]
  %v4800 = vld [vmem:[%s3 + $0x120] sm:$0xff]
  %v4801 = vld [vmem:[%s3 + $0x128] sm:$0xff]
  %v4802 = vld [vmem:[%s3 + $0x130] sm:$0xff]
  %v4803 = vld [vmem:[%s3 + $0x138] sm:$0xff]
  %v4804 = vld [vmem:[%s3 + $0x140] sm:$0xff]
  %v4805 = vld [vmem:[%s3 + $0x148] sm:$0xff]
  %v4806 = vld [vmem:[%s3 + $0x150] sm:$0xff]
  %v4807 = vld [vmem:[%s3 + $0x158] sm:$0xff]
  %v4808 = vld [vmem:[%s3 + $0x160] sm:$0xff]
  %v4809 = vld [vmem:[%s3 + $0x168] sm:$0xff]
  %v4810 = vld [vmem:[%s3 + $0x170] sm:$0xff]
  %v4811 = vld [vmem:[%s3 + $0x178] sm:$0xff]
  %v4812 = vld [vmem:[%s3 + $0x180] sm:$0xff]
  %v4813 = vld [vmem:[%s3 + $0x188] sm:$0xff]
  %v4814 = vld [vmem:[%s3 + $0x190] sm:$0xff]
  %v4815 = vld [vmem:[%s3 + $0x198] sm:$0xff]
  %v4816 = vld [vmem:[%s3 + $0x1a0] sm:$0xff]
  %v4817 = vld [vmem:[%s3 + $0x1a8] sm:$0xff]
  %v4818 = vld [vmem:[%s3 + $0x1b0] sm:$0xff]
  %v4819 = vld [vmem:[%s3 + $0x1b8] sm:$0xff]
  %v4820 = vld [vmem:[%s3 + $0x1c0] sm:$0xff]
  %v4821 = vld [vmem:[%s3 + $0x1c8] sm:$0xff]
  %v4822 = vld [vmem:[%s3 + $0x1d0] sm:$0xff]
  %v4823 = vld [vmem:[%s3 + $0x1d8] sm:$0xff]
  %v4824 = vld [vmem:[%s3 + $0x1e0] sm:$0xff]
  %v4825 = vld [vmem:[%s3 + $0x1e8] sm:$0xff]
  %v4826 = vld [vmem:[%s3 + $0x1f0] sm:$0xff]
  %v4827 = vld [vmem:[%s3 + $0x1f8] sm:$0xff]
  %v4828 = vld [vmem:[%s3 + $0x200] sm:$0xff]
  %v4829 = vld [vmem:[%s3 + $0x208] sm:$0xff]
  %v4830 = vld [vmem:[%s3 + $0x210] sm:$0xff]
  %v4831 = vld [vmem:[%s3 + $0x218] sm:$0xff]
  %v4832 = vld [vmem:[%s3 + $0x220] sm:$0xff]
  %v4833 = vld [vmem:[%s3 + $0x228] sm:$0xff]
  %v4834 = vld [vmem:[%s3 + $0x230] sm:$0xff]
  %v4835 = vld [vmem:[%s3 + $0x238] sm:$0xff]
  %v4836 = vld [vmem:[%s3 + $0x240] sm:$0xff]
  %v4837 = vld [vmem:[%s3 + $0x248] sm:$0xff]
  %v4838 = vld [vmem:[%s3 + $0x250] sm:$0xff]
  %v4839 = vld [vmem:[%s3 + $0x258] sm:$0xff]
  %v4840 = vld [vmem:[%s3 + $0x260] sm:$0xff]
  %v4841 = vld [vmem:[%s3 + $0x268] sm:$0xff]
  %v4842 = vld [vmem:[%s3 + $0x270] sm:$0xff]
  %v4843 = vld [vmem:[%s3 + $0x278] sm:$0xff]
  %v4844 = vld [vmem:[%s3 + $0x280] sm:$0xff]
  %v4845 = vld [vmem:[%s3 + $0x288] sm:$0xff]
  %v4846 = vld [vmem:[%s3 + $0x290] sm:$0xff]
  %v4847 = vld [vmem:[%s3 + $0x298] sm:$0xff]
  %v4848 = vld [vmem:[%s3 + $0x2a0] sm:$0xff]
  %v4849 = vld [vmem:[%s3 + $0x2a8] sm:$0xff]
  %v4850 = vld [vmem:[%s3 + $0x2b0] sm:$0xff]
  %v4851 = vld [vmem:[%s3 + $0x2b8] sm:$0xff]
  %v4852 = vld [vmem:[%s3 + $0x2c0] sm:$0xff]
  %v4853 = vld [vmem:[%s3 + $0x2c8] sm:$0xff]
  %v4854 = vld [vmem:[%s3 + $0x2d0] sm:$0xff]
  %v4855 = vld [vmem:[%s3 + $0x2d8] sm:$0xff]
  %v4856 = vld [vmem:[%s3 + $0x2e0] sm:$0xff]
  %v4857 = vld [vmem:[%s3 + $0x2e8] sm:$0xff]
  %v4858 = vld [vmem:[%s3 + $0x2f0] sm:$0xff]
  %v4859 = vld [vmem:[%s3 + $0x2f8] sm:$0xff]
  %v4860 = vld [vmem:[#allocation3] sm:$0xff]
  %v4861 = vld [vmem:[#allocation3 + $0x8] sm:$0xff]
  %v4862 = vld [vmem:[#allocation3 + $0x10] sm:$0xff]
  %v4863 = vld [vmem:[#allocation3 + $0x18] sm:$0xff]
  %v4864 = vld [vmem:[#allocation3 + $0x20] sm:$0xff]
  %v4865 = vld [vmem:[#allocation3 + $0x28] sm:$0xff]
  %v4866 = vld [vmem:[#allocation3 + $0x30] sm:$0xff]
  %v4867 = vld [vmem:[#allocation3 + $0x38] sm:$0xff]
  %v4868 = vld [vmem:[#allocation3 + $0x40] sm:$0xff]
  %v4869 = vld [vmem:[#allocation3 + $0x48] sm:$0xff]
  %v4870 = vld [vmem:[#allocation3 + $0x50] sm:$0xff]
  %v4871 = vld [vmem:[#allocation3 + $0x58] sm:$0xff]
  %v4872 = vld [vmem:[#allocation3 + $0x60] sm:$0xff]
  %v4873 = vld [vmem:[#allocation3 + $0x68] sm:$0xff]
  %v4874 = vld [vmem:[#allocation3 + $0x70] sm:$0xff]
  %v4875 = vld [vmem:[#allocation3 + $0x78] sm:$0xff]
  %v4876 = vld [vmem:[#allocation3 + $0x80] sm:$0xff]
  %v4877 = vld [vmem:[#allocation3 + $0x88] sm:$0xff]
  %v4878 = vld [vmem:[#allocation3 + $0x90] sm:$0xff]
  %v4879 = vld [vmem:[#allocation3 + $0x98] sm:$0xff]
  %v4880 = vld [vmem:[#allocation3 + $0xa0] sm:$0xff]
  %v4881 = vld [vmem:[#allocation3 + $0xa8] sm:$0xff]
  %v4882 = vld [vmem:[#allocation3 + $0xb0] sm:$0xff]
  %v4883 = vld [vmem:[#allocation3 + $0xb8] sm:$0xff]
  %v4884 = vld [vmem:[#allocation3 + $0xc0] sm:$0xff]
  %v4885 = vld [vmem:[#allocation3 + $0xc8] sm:$0xff]
  %v4886 = vld [vmem:[#allocation3 + $0xd0] sm:$0xff]
  %v4887 = vld [vmem:[#allocation3 + $0xd8] sm:$0xff]
  %v4888 = vld [vmem:[#allocation3 + $0xe0] sm:$0xff]
  %v4889 = vld [vmem:[#allocation3 + $0xe8] sm:$0xff]
  %v4890 = vld [vmem:[#allocation3 + $0xf0] sm:$0xff]
  %v4891 = vld [vmem:[#allocation3 + $0xf8] sm:$0xff]
  %v4892 = vld [vmem:[#allocation3 + $0x100] sm:$0xff]
  %v4893 = vld [vmem:[#allocation3 + $0x108] sm:$0xff]
  %v4894 = vld [vmem:[#allocation3 + $0x110] sm:$0xff]
  %v4895 = vld [vmem:[#allocation3 + $0x118] sm:$0xff]
  %v4896 = vld [vmem:[#allocation3 + $0x120] sm:$0xff]
  %v4897 = vld [vmem:[#allocation3 + $0x128] sm:$0xff]
  %v4898 = vld [vmem:[#allocation3 + $0x130] sm:$0xff]
  %v4899 = vld [vmem:[#allocation3 + $0x138] sm:$0xff]
  %v4900 = vld [vmem:[#allocation3 + $0x140] sm:$0xff]
  %v4901 = vld [vmem:[#allocation3 + $0x148] sm:$0xff]
  %v4902 = vld [vmem:[#allocation3 + $0x150] sm:$0xff]
  %v4903 = vld [vmem:[#allocation3 + $0x158] sm:$0xff]
  %v4904 = vld [vmem:[#allocation3 + $0x160] sm:$0xff]
  %v4905 = vld [vmem:[#allocation3 + $0x168] sm:$0xff]
  %v4906 = vld [vmem:[#allocation3 + $0x170] sm:$0xff]
  %v4907 = vld [vmem:[#allocation3 + $0x178] sm:$0xff]
  %v4908 = vld [vmem:[#allocation3 + $0x180] sm:$0xff]
  %v4909 = vld [vmem:[#allocation3 + $0x188] sm:$0xff]
  %v4910 = vld [vmem:[#allocation3 + $0x190] sm:$0xff]
  %v4911 = vld [vmem:[#allocation3 + $0x198] sm:$0xff]
  %v4912 = vld [vmem:[#allocation3 + $0x1a0] sm:$0xff]
  %v4913 = vld [vmem:[#allocation3 + $0x1a8] sm:$0xff]
  %v4914 = vld [vmem:[#allocation3 + $0x1b0] sm:$0xff]
  %v4915 = vld [vmem:[#allocation3 + $0x1b8] sm:$0xff]
  %v4916 = vld [vmem:[#allocation3 + $0x1c0] sm:$0xff]
  %v4917 = vld [vmem:[#allocation3 + $0x1c8] sm:$0xff]
  %v4918 = vld [vmem:[#allocation3 + $0x1d0] sm:$0xff]
  %v4919 = vld [vmem:[#allocation3 + $0x1d8] sm:$0xff]
  %v4920 = vld [vmem:[#allocation3 + $0x1e0] sm:$0xff]
  %v4921 = vld [vmem:[#allocation3 + $0x1e8] sm:$0xff]
  %v4922 = vld [vmem:[#allocation3 + $0x1f0] sm:$0xff]
  %v4923 = vld [vmem:[#allocation3 + $0x1f8] sm:$0xff]
  %v4924 = vld [vmem:[#allocation3 + $0x200] sm:$0xff]
  %v4925 = vld [vmem:[#allocation3 + $0x208] sm:$0xff]
  %v4926 = vld [vmem:[#allocation3 + $0x210] sm:$0xff]
  %v4927 = vld [vmem:[#allocation3 + $0x218] sm:$0xff]
  %v4928 = vld [vmem:[#allocation3 + $0x220] sm:$0xff]
  %v4929 = vld [vmem:[#allocation3 + $0x228] sm:$0xff]
  %v4930 = vld [vmem:[#allocation3 + $0x230] sm:$0xff]
  %v4931 = vld [vmem:[#allocation3 + $0x238] sm:$0xff]
  %v4932 = vld [vmem:[#allocation3 + $0x240] sm:$0xff]
  %v4933 = vld [vmem:[#allocation3 + $0x248] sm:$0xff]
  %v4934 = vld [vmem:[#allocation3 + $0x250] sm:$0xff]
  %v4935 = vld [vmem:[#allocation3 + $0x258] sm:$0xff]
  %v4936 = vld [vmem:[#allocation3 + $0x260] sm:$0xff]
  %v4937 = vld [vmem:[#allocation3 + $0x268] sm:$0xff]
  %v4938 = vld [vmem:[#allocation3 + $0x270] sm:$0xff]
  %v4939 = vld [vmem:[#allocation3 + $0x278] sm:$0xff]
  %v4940 = vld [vmem:[#allocation3 + $0x280] sm:$0xff]
  %v4941 = vld [vmem:[#allocation3 + $0x288] sm:$0xff]
  %v4942 = vld [vmem:[#allocation3 + $0x290] sm:$0xff]
  %v4943 = vld [vmem:[#allocation3 + $0x298] sm:$0xff]
  %v4944 = vld [vmem:[#allocation3 + $0x2a0] sm:$0xff]
  %v4945 = vld [vmem:[#allocation3 + $0x2a8] sm:$0xff]
  %v4946 = vld [vmem:[#allocation3 + $0x2b0] sm:$0xff]
  %v4947 = vld [vmem:[#allocation3 + $0x2b8] sm:$0xff]
  %v4948 = vld [vmem:[#allocation3 + $0x2c0] sm:$0xff]
  %v4949 = vld [vmem:[#allocation3 + $0x2c8] sm:$0x7]
  %v4950 = vld [vmem:[%s4] sm:$0xff]
  %v4951 = vld [vmem:[%s4 + $0x8] sm:$0xff]
  %v4952 = vld [vmem:[%s4 + $0x10] sm:$0xff]
  %v4953 = vld [vmem:[%s4 + $0x18] sm:$0xff]
  %v4954 = vld [vmem:[%s4 + $0x20] sm:$0xff]
  %v4955 = vld [vmem:[%s4 + $0x28] sm:$0xff]
  %v4956 = vld [vmem:[%s4 + $0x30] sm:$0xff]
  %v4957 = vld [vmem:[%s4 + $0x38] sm:$0xff]
  %v4958 = vld [vmem:[%s4 + $0x40] sm:$0xff]
  %v4959 = vld [vmem:[%s4 + $0x48] sm:$0xff]
  %v4960 = vld [vmem:[%s4 + $0x50] sm:$0xff]
  %v4961 = vld [vmem:[%s4 + $0x58] sm:$0xff]
  %v4962 = vld [vmem:[%s4 + $0x60] sm:$0xff]
  %v4963 = vld [vmem:[%s4 + $0x68] sm:$0xff]
  %v4964 = vld [vmem:[%s4 + $0x70] sm:$0xff]
  %v4965 = vld [vmem:[%s4 + $0x78] sm:$0xff]
  %4967 = vset.pattern.permute.xlu0 0
  %4968 = vperm.xlu0 %4967, %v4950
  %v4969 = vpop.permute.xlu0 %4968
  %4972 = vset.pattern.permute.xlu0 0
  %4973 = vperm.xlu0 %4972, %v4951
  %v4974 = vpop.permute.xlu0 %4973
  %4977 = vset.pattern.permute.xlu0 0
  %4978 = vperm.xlu0 %4977, %v4952
  %v4979 = vpop.permute.xlu0 %4978
  %4982 = vset.pattern.permute.xlu0 0
  %4983 = vperm.xlu0 %4982, %v4953
  %v4984 = vpop.permute.xlu0 %4983
  %4987 = vset.pattern.permute.xlu0 0
  %4988 = vperm.xlu0 %4987, %v4954
  %v4989 = vpop.permute.xlu0 %4988
  %4992 = vset.pattern.permute.xlu0 0
  %4993 = vperm.xlu0 %4992, %v4955
  %v4994 = vpop.permute.xlu0 %4993
  %4997 = vset.pattern.permute.xlu0 0
  %4998 = vperm.xlu0 %4997, %v4956
  %v4999 = vpop.permute.xlu0 %4998
  %5002 = vset.pattern.permute.xlu0 0
  %5003 = vperm.xlu0 %5002, %v4957
  %v5004 = vpop.permute.xlu0 %5003
  %5007 = vset.pattern.permute.xlu0 0
  %5008 = vperm.xlu0 %5007, %v4958
  %v5009 = vpop.permute.xlu0 %5008
  %5012 = vset.pattern.permute.xlu0 0
  %5013 = vperm.xlu0 %5012, %v4959
  %v5014 = vpop.permute.xlu0 %5013
  %5017 = vset.pattern.permute.xlu0 0
  %5018 = vperm.xlu0 %5017, %v4960
  %v5019 = vpop.permute.xlu0 %5018
  %5022 = vset.pattern.permute.xlu0 0
  %5023 = vperm.xlu0 %5022, %v4961
  %v5024 = vpop.permute.xlu0 %5023
  %5027 = vset.pattern.permute.xlu0 0
  %5028 = vperm.xlu0 %5027, %v4962
  %v5029 = vpop.permute.xlu0 %5028
  %5032 = vset.pattern.permute.xlu0 0
  %5033 = vperm.xlu0 %5032, %v4963
  %v5034 = vpop.permute.xlu0 %5033
  %5037 = vset.pattern.permute.xlu0 0
  %5038 = vperm.xlu0 %5037, %v4964
  %v5039 = vpop.permute.xlu0 %5038
  %5042 = vset.pattern.permute.xlu0 0
  %5043 = vperm.xlu0 %5042, %v4965
  %v5044 = vpop.permute.xlu0 %5043
  %vm5046 = vcmask 613376
  %v5048 = vsel %vm5046, %v4769, 0
  %v5051 = vsel %vm5046, %v4775, 0
  %v5054 = vsel %vm5046, %v4781, 0
  %v5057 = vsel %vm5046, %v4787, 0
  %v5060 = vsel %vm5046, %v4793, 0
  %v5063 = vsel %vm5046, %v4799, 0
  %v5066 = vsel %vm5046, %v4805, 0
  %v5069 = vsel %vm5046, %v4811, 0
  %v5072 = vsel %vm5046, %v4817, 0
  %v5075 = vsel %vm5046, %v4823, 0
  %v5078 = vsel %vm5046, %v4829, 0
  %v5081 = vsel %vm5046, %v4835, 0
  %v5084 = vsel %vm5046, %v4841, 0
  %v5087 = vsel %vm5046, %v4847, 0
  %v5090 = vsel %vm5046, %v4853, 0
  %v5093 = vsel %vm5046, %v4859, 0
  %vm5095 = vcmask 1042432
  %v5097 = vsel %vm5095, %v4949, 0
  %5099 = vmatprep.subr.mxu0 0.0
  %5100 = vmatpush1.msra.mxu0 %v4860
  %5101 = vmatprep.subr.mxu0 0.0
  %5102 = vmatpush1.msra.mxu0 %v4861
  %5103 = vmatprep.subr.mxu0 0.0
  %5104 = vmatpush1.msra.mxu0 %v4862
  %5105 = vmatprep.subr.mxu0 0.0
  %5106 = vmatpush1.msra.mxu0 %v4863
  %5107 = vmatprep.subr.mxu0 0.0
  %5108 = vmatpush1.msra.mxu0 %v4864
  %5109 = vmatprep.subr.mxu0 0.0
  %5110 = vmatpush1.msra.mxu0 %v4865
  %5111 = vmatprep.subr.mxu0 0.0
  %5112 = vmatpush1.msra.mxu0 %v4866
  %5113 = vmatprep.subr.mxu0 0.0
  %5114 = vmatpush1.msra.mxu0 %v4867
  %5115 = vmatprep.subr.mxu0 0.0
  %5116 = vmatpush1.msra.mxu0 %v4868
  %5117 = vmatprep.subr.mxu0 0.0
  %5118 = vmatpush1.msra.mxu0 %v4869
  %5119 = vmatprep.subr.mxu0 0.0
  %5120 = vmatpush1.msra.mxu0 %v4870
  %5121 = vmatprep.subr.mxu0 0.0
  %5122 = vmatpush1.msra.mxu0 %v4871
  %5123 = vmatprep.subr.mxu0 0.0
  %5124 = vmatpush1.msra.mxu0 %v4872
  %5125 = vmatprep.subr.mxu0 0.0
  %5126 = vmatpush1.msra.mxu0 %v4873
  %5127 = vmatprep.subr.mxu0 0.0
  %5128 = vmatpush1.msra.mxu0 %v4874
  %5129 = vmatprep.subr.mxu0 0.0
  %5130 = vmatpush1.msra.mxu0 %v4875
  %5131 = vmatprep.subr.mxu0 0.0
  %5132 = vmatpush1.msra.mxu0 %v4876
  %5133 = vmatprep.subr.mxu0 0.0
  %5134 = vmatpush1.msra.mxu0 %v4877
  %5135 = vmatprep.subr.mxu0 0.0
  %5136 = vmatpush1.msra.mxu0 %v4878
  %5137 = vmatprep.subr.mxu0 0.0
  %5138 = vmatpush1.msra.mxu0 %v4879
  %5139 = vmatprep.subr.mxu0 0.0
  %5140 = vmatpush1.msra.mxu0 %v4880
  %5141 = vmatprep.subr.mxu0 0.0
  %5142 = vmatpush1.msra.mxu0 %v4881
  %5143 = vmatprep.subr.mxu0 0.0
  %5144 = vmatpush1.msra.mxu0 %v4882
  %5145 = vmatprep.subr.mxu0 0.0
  %5146 = vmatpush1.msra.mxu0 %v4883
  %5147 = vmatprep.subr.mxu0 0.0
  %5148 = vmatpush1.msra.mxu0 %v4884
  %5149 = vmatprep.subr.mxu0 0.0
  %5150 = vmatpush1.msra.mxu0 %v4885
  %5151 = vmatprep.subr.mxu0 0.0
  %5152 = vmatpush1.msra.mxu0 %v4886
  %5153 = vmatprep.subr.mxu0 0.0
  %5154 = vmatpush1.msra.mxu0 %v4887
  %5155 = vmatprep.subr.mxu0 0.0
  %5156 = vmatpush1.msra.mxu0 %v4888
  %5157 = vmatprep.subr.mxu0 0.0
  %5158 = vmatpush1.msra.mxu0 %v4889
  %5159 = vmatprep.subr.mxu0 0.0
  %5160 = vmatpush1.msra.mxu0 %v4890
  %5161 = vmatprep.subr.mxu0 0.0
  %5162 = vmatpush1.msra.mxu0 %v4891
  %5163 = vmatprep.mubr.f32.mxu0 %v4765
  %5164 = vmatmul.mubr.f32.gmra.mrb[0].mxu0 %v4764
  %v5165 = vpop.f32.mrb[0].mxu0
  %v5166 = vadd.f32 %v4969, %v5165
  %v5167 = vpop.f32.mrb[0].mxu0
  %5168 = vmatprep.mubr.f32.mxu0 %v4771
  %5169 = vmatmul.mubr.f32.gmra.mrb[0].mxu0 %v4770
  %v5170 = vpop.f32.mrb[0].mxu0
  %v5171 = vadd.f32 %v4974, %v5170
  %v5172 = vpop.f32.mrb[0].mxu0
  %5173 = vmatprep.mubr.f32.mxu0 %v4777
  %5174 = vmatmul.mubr.f32.gmra.mrb[0].mxu0 %v4776
  %v5175 = vpop.f32.mrb[0].mxu0
  %v5176 = vadd.f32 %v4979, %v5175
  %v5177 = vpop.f32.mrb[0].mxu0
  %5178 = vmatprep.mubr.f32.mxu0 %v4783
  %5179 = vmatmul.mubr.f32.gmra.mrb[0].mxu0 %v4782
  %v5180 = vpop.f32.mrb[0].mxu0
  %v5181 = vadd.f32 %v4984, %v5180
  %v5182 = vpop.f32.mrb[0].mxu0
  %5183 = vmatprep.mubr.f32.mxu0 %v4789
  %5184 = vmatmul.mubr.f32.gmra.mrb[0].mxu0 %v4788
  %v5185 = vpop.f32.mrb[0].mxu0
  %v5186 = vadd.f32 %v4989, %v5185
  %v5187 = vpop.f32.mrb[0].mxu0
  %5188 = vmatprep.mubr.f32.mxu0 %v4795
  %5189 = vmatmul.mubr.f32.gmra.mrb[0].mxu0 %v4794
  %v5190 = vpop.f32.mrb[0].mxu0
  %v5191 = vadd.f32 %v4994, %v5190
  %v5192 = vpop.f32.mrb[0].mxu0
  %5193 = vmatprep.mubr.f32.mxu0 %v4801
  %5194 = vmatmul.mubr.f32.gmra.mrb[0].mxu0 %v4800
  %v5195 = vpop.f32.mrb[0].mxu0
  %v5196 = vadd.f32 %v4999, %v5195
  %v5197 = vpop.f32.mrb[0].mxu0
  %5198 = vmatprep.mubr.f32.mxu0 %v4807
  %5199 = vmatmul.mubr.f32.gmra.mrb[0].mxu0 %v4806
  %v5200 = vpop.f32.mrb[0].mxu0
  %v5201 = vadd.f32 %v5004, %v5200
  %v5202 = vpop.f32.mrb[0].mxu0
  %5203 = vmatprep.mubr.f32.mxu0 %v4813
  %5204 = vmatmul.mubr.f32.gmra.mrb[0].mxu0 %v4812
  %v5205 = vpop.f32.mrb[0].mxu0
  %v5206 = vadd.f32 %v5009, %v5205
  %v5207 = vpop.f32.mrb[0].mxu0
  %5208 = vmatprep.mubr.f32.mxu0 %v4819
  %5209 = vmatmul.mubr.f32.gmra.mrb[0].mxu0 %v4818
  %v5210 = vpop.f32.mrb[0].mxu0
  %v5211 = vadd.f32 %v5014, %v5210
  %v5212 = vpop.f32.mrb[0].mxu0
  %5213 = vmatprep.mubr.f32.mxu0 %v4825
  %5214 = vmatmul.mubr.f32.gmra.mrb[0].mxu0 %v4824
  %v5215 = vpop.f32.mrb[0].mxu0
  %v5216 = vadd.f32 %v5019, %v5215
  %v5217 = vpop.f32.mrb[0].mxu0
  %5218 = vmatprep.mubr.f32.mxu0 %v4831
  %5219 = vmatmul.mubr.f32.gmra.mrb[0].mxu0 %v4830
  %v5220 = vpop.f32.mrb[0].mxu0
  %v5221 = vadd.f32 %v5024, %v5220
  %v5222 = vpop.f32.mrb[0].mxu0
  %5223 = vmatprep.mubr.f32.mxu0 %v4837
  %5224 = vmatmul.mubr.f32.gmra.mrb[0].mxu0 %v4836
  %v5225 = vpop.f32.mrb[0].mxu0
  %v5226 = vadd.f32 %v5029, %v5225
  %v5227 = vpop.f32.mrb[0].mxu0
  %5228 = vmatprep.mubr.f32.mxu0 %v4843
  %5229 = vmatmul.mubr.f32.gmra.mrb[0].mxu0 %v4842
  %v5230 = vpop.f32.mrb[0].mxu0
  %v5231 = vadd.f32 %v5034, %v5230
  %v5232 = vpop.f32.mrb[0].mxu0
  %5233 = vmatprep.mubr.f32.mxu0 %v4849
  %5234 = vmatmul.mubr.f32.gmra.mrb[0].mxu0 %v4848
  %v5235 = vpop.f32.mrb[0].mxu0
  %v5236 = vadd.f32 %v5039, %v5235
  %v5237 = vpop.f32.mrb[0].mxu0
  %5238 = vmatprep.mubr.f32.mxu0 %v4855
  %5239 = vmatmul.mubr.f32.gmra.mrb[0].mxu0 %v4854
  %v5240 = vpop.f32.mrb[0].mxu0
  %v5241 = vadd.f32 %v5044, %v5240
  %v5242 = vpop.f32.mrb[0].mxu0
  %5243 = vdwg.mxu0
  %5244 = vmatprep.subr.mxu0 0.0
  %5245 = vmatpush1.msra.mxu0 %v4892
  %5246 = vmatprep.subr.mxu0 0.0
  %5247 = vmatpush1.msra.mxu0 %v4893
  %5248 = vmatprep.subr.mxu0 0.0
  %5249 = vmatpush1.msra.mxu0 %v4894
  %5250 = vmatprep.subr.mxu0 0.0
  %5251 = vmatpush1.msra.mxu0 %v4895
  %5252 = vmatprep.subr.mxu0 0.0
  %5253 = vmatpush1.msra.mxu0 %v4896
  %5254 = vmatprep.subr.mxu0 0.0
  %5255 = vmatpush1.msra.mxu0 %v4897
  %5256 = vmatprep.subr.mxu0 0.0
  %5257 = vmatpush1.msra.mxu0 %v4898
  %5258 = vmatprep.subr.mxu0 0.0
  %5259 = vmatpush1.msra.mxu0 %v4899
  %5260 = vmatprep.subr.mxu0 0.0
  %5261 = vmatpush1.msra.mxu0 %v4900
  %5262 = vmatprep.subr.mxu0 0.0
  %5263 = vmatpush1.msra.mxu0 %v4901
  %5264 = vmatprep.subr.mxu0 0.0
  %5265 = vmatpush1.msra.mxu0 %v4902
  %5266 = vmatprep.subr.mxu0 0.0
  %5267 = vmatpush1.msra.mxu0 %v4903
  %5268 = vmatprep.subr.mxu0 0.0
  %5269 = vmatpush1.msra.mxu0 %v4904
  %5270 = vmatprep.subr.mxu0 0.0
  %5271 = vmatpush1.msra.mxu0 %v4905
  %5272 = vmatprep.subr.mxu0 0.0
  %5273 = vmatpush1.msra.mxu0 %v4906
  %5274 = vmatprep.subr.mxu0 0.0
  %5275 = vmatpush1.msra.mxu0 %v4907
  %5276 = vmatprep.subr.mxu0 0.0
  %5277 = vmatpush1.msra.mxu0 %v4908
  %5278 = vmatprep.subr.mxu0 0.0
  %5279 = vmatpush1.msra.mxu0 %v4909
  %5280 = vmatprep.subr.mxu0 0.0
  %5281 = vmatpush1.msra.mxu0 %v4910
  %5282 = vmatprep.subr.mxu0 0.0
  %5283 = vmatpush1.msra.mxu0 %v4911
  %5284 = vmatprep.subr.mxu0 0.0
  %5285 = vmatpush1.msra.mxu0 %v4912
  %5286 = vmatprep.subr.mxu0 0.0
  %5287 = vmatpush1.msra.mxu0 %v4913
  %5288 = vmatprep.subr.mxu0 0.0
  %5289 = vmatpush1.msra.mxu0 %v4914
  %5290 = vmatprep.subr.mxu0 0.0
  %5291 = vmatpush1.msra.mxu0 %v4915
  %5292 = vmatprep.subr.mxu0 0.0
  %5293 = vmatpush1.msra.mxu0 %v4916
  %5294 = vmatprep.subr.mxu0 0.0
  %5295 = vmatpush1.msra.mxu0 %v4917
  %5296 = vmatprep.subr.mxu0 0.0
  %5297 = vmatpush1.msra.mxu0 %v4918
  %5298 = vmatprep.subr.mxu0 0.0
  %5299 = vmatpush1.msra.mxu0 %v4919
  %5300 = vmatprep.subr.mxu0 0.0
  %5301 = vmatpush1.msra.mxu0 %v4920
  %5302 = vmatprep.subr.mxu0 0.0
  %5303 = vmatpush1.msra.mxu0 %v4921
  %5304 = vmatprep.subr.mxu0 0.0
  %5305 = vmatpush1.msra.mxu0 %v4922
  %5306 = vmatprep.subr.mxu0 0.0
  %5307 = vmatpush1.msra.mxu0 %v4923
  %5308 = vmatprep.mubr.f32.mxu0 %v4767
  %5309 = vmatmul.mubr.f32.gmra.mrb[0].mxu0 %v4766
  %v5310 = vpop.f32.mrb[0].mxu0
  %v5311 = vadd.f32 %v5166, %v5310
  %v5312 = vpop.f32.mrb[0].mxu0
  %5313 = vmatprep.mubr.f32.mxu0 %v4773
  %5314 = vmatmul.mubr.f32.gmra.mrb[0].mxu0 %v4772
  %v5315 = vpop.f32.mrb[0].mxu0
  %v5316 = vadd.f32 %v5171, %v5315
  %v5317 = vpop.f32.mrb[0].mxu0
  %5318 = vmatprep.mubr.f32.mxu0 %v4779
  %5319 = vmatmul.mubr.f32.gmra.mrb[0].mxu0 %v4778
  %v5320 = vpop.f32.mrb[0].mxu0
  %v5321 = vadd.f32 %v5176, %v5320
  %v5322 = vpop.f32.mrb[0].mxu0
  %5323 = vmatprep.mubr.f32.mxu0 %v4785
  %5324 = vmatmul.mubr.f32.gmra.mrb[0].mxu0 %v4784
  %v5325 = vpop.f32.mrb[0].mxu0
  %v5326 = vadd.f32 %v5181, %v5325
  %v5327 = vpop.f32.mrb[0].mxu0
  %5328 = vmatprep.mubr.f32.mxu0 %v4791
  %5329 = vmatmul.mubr.f32.gmra.mrb[0].mxu0 %v4790
  %v5330 = vpop.f32.mrb[0].mxu0
  %v5331 = vadd.f32 %v5186, %v5330
  %v5332 = vpop.f32.mrb[0].mxu0
  %5333 = vmatprep.mubr.f32.mxu0 %v4797
  %5334 = vmatmul.mubr.f32.gmra.mrb[0].mxu0 %v4796
  %v5335 = vpop.f32.mrb[0].mxu0
  %v5336 = vadd.f32 %v5191, %v5335
  %v5337 = vpop.f32.mrb[0].mxu0
  %5338 = vmatprep.mubr.f32.mxu0 %v4803
  %5339 = vmatmul.mubr.f32.gmra.mrb[0].mxu0 %v4802
  %v5340 = vpop.f32.mrb[0].mxu0
  %v5341 = vadd.f32 %v5196, %v5340
  %v5342 = vpop.f32.mrb[0].mxu0
  %5343 = vmatprep.mubr.f32.mxu0 %v4809
  %5344 = vmatmul.mubr.f32.gmra.mrb[0].mxu0 %v4808
  %v5345 = vpop.f32.mrb[0].mxu0
  %v5346 = vadd.f32 %v5201, %v5345
  %v5347 = vpop.f32.mrb[0].mxu0
  %5348 = vmatprep.mubr.f32.mxu0 %v4815
  %5349 = vmatmul.mubr.f32.gmra.mrb[0].mxu0 %v4814
  %v5350 = vpop.f32.mrb[0].mxu0
  %v5351 = vadd.f32 %v5206, %v5350
  %v5352 = vpop.f32.mrb[0].mxu0
  %5353 = vmatprep.mubr.f32.mxu0 %v4821
  %5354 = vmatmul.mubr.f32.gmra.mrb[0].mxu0 %v4820
  %v5355 = vpop.f32.mrb[0].mxu0
  %v5356 = vadd.f32 %v5211, %v5355
  %v5357 = vpop.f32.mrb[0].mxu0
  %5358 = vmatprep.mubr.f32.mxu0 %v4827
  %5359 = vmatmul.mubr.f32.gmra.mrb[0].mxu0 %v4826
  %v5360 = vpop.f32.mrb[0].mxu0
  %v5361 = vadd.f32 %v5216, %v5360
  %v5362 = vpop.f32.mrb[0].mxu0
  %5363 = vmatprep.mubr.f32.mxu0 %v4833
  %5364 = vmatmul.mubr.f32.gmra.mrb[0].mxu0 %v4832
  %v5365 = vpop.f32.mrb[0].mxu0
  %v5366 = vadd.f32 %v5221, %v5365
  %v5367 = vpop.f32.mrb[0].mxu0
  %5368 = vmatprep.mubr.f32.mxu0 %v4839
  %5369 = vmatmul.mubr.f32.gmra.mrb[0].mxu0 %v4838
  %v5370 = vpop.f32.mrb[0].mxu0
  %v5371 = vadd.f32 %v5226, %v5370
  %v5372 = vpop.f32.mrb[0].mxu0
  %5373 = vmatprep.mubr.f32.mxu0 %v4845
  %5374 = vmatmul.mubr.f32.gmra.mrb[0].mxu0 %v4844
  %v5375 = vpop.f32.mrb[0].mxu0
  %v5376 = vadd.f32 %v5231, %v5375
  %v5377 = vpop.f32.mrb[0].mxu0
  %5378 = vmatprep.mubr.f32.mxu0 %v4851
  %5379 = vmatmul.mubr.f32.gmra.mrb[0].mxu0 %v4850
  %v5380 = vpop.f32.mrb[0].mxu0
  %v5381 = vadd.f32 %v5236, %v5380
  %v5382 = vpop.f32.mrb[0].mxu0
  %5383 = vmatprep.mubr.f32.mxu0 %v4857
  %5384 = vmatmul.mubr.f32.gmra.mrb[0].mxu0 %v4856
  %v5385 = vpop.f32.mrb[0].mxu0
  %v5386 = vadd.f32 %v5241, %v5385
  %v5387 = vpop.f32.mrb[0].mxu0
  %5388 = vdwg.mxu0
  %5389 = vmatprep.subr.mxu0 0.0
  %5390 = vmatpush1.msra.mxu0 %v4924
  %5391 = vmatprep.subr.mxu0 0.0
  %5392 = vmatpush1.msra.mxu0 %v4925
  %5393 = vmatprep.subr.mxu0 0.0
  %5394 = vmatpush1.msra.mxu0 %v4926
  %5395 = vmatprep.subr.mxu0 0.0
  %5396 = vmatpush1.msra.mxu0 %v4927
  %5397 = vmatprep.subr.mxu0 0.0
  %5398 = vmatpush1.msra.mxu0 %v4928
  %5399 = vmatprep.subr.mxu0 0.0
  %5400 = vmatpush1.msra.mxu0 %v4929
  %5401 = vmatprep.subr.mxu0 0.0
  %5402 = vmatpush1.msra.mxu0 %v4930
  %5403 = vmatprep.subr.mxu0 0.0
  %5404 = vmatpush1.msra.mxu0 %v4931
  %5405 = vmatprep.subr.mxu0 0.0
  %5406 = vmatpush1.msra.mxu0 %v4932
  %5407 = vmatprep.subr.mxu0 0.0
  %5408 = vmatpush1.msra.mxu0 %v4933
  %5409 = vmatprep.subr.mxu0 0.0
  %5410 = vmatpush1.msra.mxu0 %v4934
  %5411 = vmatprep.subr.mxu0 0.0
  %5412 = vmatpush1.msra.mxu0 %v4935
  %5413 = vmatprep.subr.mxu0 0.0
  %5414 = vmatpush1.msra.mxu0 %v4936
  %5415 = vmatprep.subr.mxu0 0.0
  %5416 = vmatpush1.msra.mxu0 %v4937
  %5417 = vmatprep.subr.mxu0 0.0
  %5418 = vmatpush1.msra.mxu0 %v4938
  %5419 = vmatprep.subr.mxu0 0.0
  %5420 = vmatpush1.msra.mxu0 %v4939
  %5421 = vmatprep.subr.mxu0 0.0
  %5422 = vmatpush1.msra.mxu0 %v4940
  %5423 = vmatprep.subr.mxu0 0.0
  %5424 = vmatpush1.msra.mxu0 %v4941
  %5425 = vmatprep.subr.mxu0 0.0
  %5426 = vmatpush1.msra.mxu0 %v4942
  %5427 = vmatprep.subr.mxu0 0.0
  %5428 = vmatpush1.msra.mxu0 %v4943
  %5429 = vmatprep.subr.mxu0 0.0
  %5430 = vmatpush1.msra.mxu0 %v4944
  %5431 = vmatprep.subr.mxu0 0.0
  %5432 = vmatpush1.msra.mxu0 %v4945
  %5433 = vmatprep.subr.mxu0 0.0
  %5434 = vmatpush1.msra.mxu0 %v4946
  %5435 = vmatprep.subr.mxu0 0.0
  %5436 = vmatpush1.msra.mxu0 %v4947
  %5437 = vmatprep.subr.mxu0 0.0
  %5438 = vmatpush1.msra.mxu0 %v4948
  %5439 = vmatprep.subr.mxu0 0.0
  %5440 = vmatpush1.msra.mxu0 %v5097
  %5441 = vmatprep.subr.mxu0 0.0
  %5442 = vmatpush1.msra.mxu0 0.0
  %5443 = vmatprep.subr.mxu0 0.0
  %5444 = vmatpush1.msra.mxu0 0.0
  %5445 = vmatprep.subr.mxu0 0.0
  %5446 = vmatpush1.msra.mxu0 0.0
  %5447 = vmatprep.subr.mxu0 0.0
  %5448 = vmatpush1.msra.mxu0 0.0
  %5449 = vmatprep.subr.mxu0 0.0
  %5450 = vmatpush1.msra.mxu0 0.0
  %5451 = vmatprep.subr.mxu0 0.0
  %5452 = vmatpush1.msra.mxu0 0.0
  %5453 = vmatprep.mubr.f32.mxu0 %v5048
  %5454 = vmatmul.mubr.f32.gmra.mrb[0].mxu0 %v4768
  %v5455 = vpop.f32.mrb[0].mxu0
  %v5456 = vadd.f32 %v5311, %v5455
  %v5457 = vpop.f32.mrb[0].mxu0
  %5458 = vmatprep.mubr.f32.mxu0 %v5051
  %5459 = vmatmul.mubr.f32.gmra.mrb[0].mxu0 %v4774
  %v5460 = vpop.f32.mrb[0].mxu0
  %v5461 = vadd.f32 %v5316, %v5460
  %v5462 = vpop.f32.mrb[0].mxu0
  %5463 = vmatprep.mubr.f32.mxu0 %v5054
  %5464 = vmatmul.mubr.f32.gmra.mrb[0].mxu0 %v4780
  %v5465 = vpop.f32.mrb[0].mxu0
  %v5466 = vadd.f32 %v5321, %v5465
  %v5467 = vpop.f32.mrb[0].mxu0
  %5468 = vmatprep.mubr.f32.mxu0 %v5057
  %5469 = vmatmul.mubr.f32.gmra.mrb[0].mxu0 %v4786
  %v5470 = vpop.f32.mrb[0].mxu0
  %v5471 = vadd.f32 %v5326, %v5470
  %v5472 = vpop.f32.mrb[0].mxu0
  %5473 = vmatprep.mubr.f32.mxu0 %v5060
  %5474 = vmatmul.mubr.f32.gmra.mrb[0].mxu0 %v4792
  %v5475 = vpop.f32.mrb[0].mxu0
  %v5476 = vadd.f32 %v5331, %v5475
  %v5477 = vpop.f32.mrb[0].mxu0
  %5478 = vmatprep.mubr.f32.mxu0 %v5063
  %5479 = vmatmul.mubr.f32.gmra.mrb[0].mxu0 %v4798
  %v5480 = vpop.f32.mrb[0].mxu0
  %v5481 = vadd.f32 %v5336, %v5480
  %v5482 = vpop.f32.mrb[0].mxu0
  %5483 = vmatprep.mubr.f32.mxu0 %v5066
  %5484 = vmatmul.mubr.f32.gmra.mrb[0].mxu0 %v4804
  %v5485 = vpop.f32.mrb[0].mxu0
  %v5486 = vadd.f32 %v5341, %v5485
  %v5487 = vpop.f32.mrb[0].mxu0
  %5488 = vmatprep.mubr.f32.mxu0 %v5069
  %5489 = vmatmul.mubr.f32.gmra.mrb[0].mxu0 %v4810
  %v5490 = vpop.f32.mrb[0].mxu0
  %v5491 = vadd.f32 %v5346, %v5490
  %v5492 = vpop.f32.mrb[0].mxu0
  %5493 = vmatprep.mubr.f32.mxu0 %v5072
  %5494 = vmatmul.mubr.f32.gmra.mrb[0].mxu0 %v4816
  %v5495 = vpop.f32.mrb[0].mxu0
  %v5496 = vadd.f32 %v5351, %v5495
  %v5497 = vpop.f32.mrb[0].mxu0
  %5498 = vmatprep.mubr.f32.mxu0 %v5075
  %5499 = vmatmul.mubr.f32.gmra.mrb[0].mxu0 %v4822
  %v5500 = vpop.f32.mrb[0].mxu0
  %v5501 = vadd.f32 %v5356, %v5500
  %v5502 = vpop.f32.mrb[0].mxu0
  %5503 = vmatprep.mubr.f32.mxu0 %v5078
  %5504 = vmatmul.mubr.f32.gmra.mrb[0].mxu0 %v4828
  %v5505 = vpop.f32.mrb[0].mxu0
  %v5506 = vadd.f32 %v5361, %v5505
  %v5507 = vpop.f32.mrb[0].mxu0
  %5508 = vmatprep.mubr.f32.mxu0 %v5081
  %5509 = vmatmul.mubr.f32.gmra.mrb[0].mxu0 %v4834
  %v5510 = vpop.f32.mrb[0].mxu0
  %v5511 = vadd.f32 %v5366, %v5510
  %v5512 = vpop.f32.mrb[0].mxu0
  %5513 = vmatprep.mubr.f32.mxu0 %v5084
  %5514 = vmatmul.mubr.f32.gmra.mrb[0].mxu0 %v4840
  %v5515 = vpop.f32.mrb[0].mxu0
  %v5516 = vadd.f32 %v5371, %v5515
  %v5517 = vpop.f32.mrb[0].mxu0
  %5518 = vmatprep.mubr.f32.mxu0 %v5087
  %5519 = vmatmul.mubr.f32.gmra.mrb[0].mxu0 %v4846
  %v5520 = vpop.f32.mrb[0].mxu0
  %v5521 = vadd.f32 %v5376, %v5520
  %v5522 = vpop.f32.mrb[0].mxu0
  %5523 = vmatprep.mubr.f32.mxu0 %v5090
  %5524 = vmatmul.mubr.f32.gmra.mrb[0].mxu0 %v4852
  %v5525 = vpop.f32.mrb[0].mxu0
  %v5526 = vadd.f32 %v5381, %v5525
  %v5527 = vpop.f32.mrb[0].mxu0
  %5528 = vmatprep.mubr.f32.mxu0 %v5093
  %5529 = vmatmul.mubr.f32.gmra.mrb[0].mxu0 %v4858
  %v5530 = vpop.f32.mrb[0].mxu0
  %v5531 = vadd.f32 %v5386, %v5530
  %v5532 = vpop.f32.mrb[0].mxu0
  %5533 = vdwg.mxu0
  %v5534 = vmax.f32 %v5456, 0.0
  %v5535 = vmax.f32 %v5461, 0.0
  %v5536 = vmax.f32 %v5466, 0.0
  %v5537 = vmax.f32 %v5471, 0.0
  %v5538 = vmax.f32 %v5476, 0.0
  %v5539 = vmax.f32 %v5481, 0.0
  %v5540 = vmax.f32 %v5486, 0.0
  %v5541 = vmax.f32 %v5491, 0.0
  %v5542 = vmax.f32 %v5496, 0.0
  %v5543 = vmax.f32 %v5501, 0.0
  %v5544 = vmax.f32 %v5506, 0.0
  %v5545 = vmax.f32 %v5511, 0.0
  %v5546 = vmax.f32 %v5516, 0.0
  %v5547 = vmax.f32 %v5521, 0.0
  %v5548 = vmax.f32 %v5526, 0.0
  %v5549 = vmax.f32 %v5531, 0.0
  %v5566 = vrot.slane %v5534, 1
  %v5567 = vrot.slane %v5535, 1
  %v5568 = vsel %vm1523, %v5566, %v5567
  %v5569 = vrot.slane %v5536, 1
  %v5570 = vsel %vm1523, %v5567, %v5569
  %v5571 = vrot.slane %v5537, 1
  %v5572 = vsel %vm1523, %v5569, %v5571
  %v5573 = vrot.slane %v5538, 1
  %v5574 = vsel %vm1523, %v5571, %v5573
  %v5575 = vrot.slane %v5539, 1
  %v5576 = vsel %vm1523, %v5573, %v5575
  %v5577 = vrot.slane %v5540, 1
  %v5578 = vsel %vm1523, %v5575, %v5577
  %v5579 = vrot.slane %v5541, 1
  %v5580 = vsel %vm1523, %v5577, %v5579
  %v5581 = vrot.slane %v5542, 1
  %v5582 = vsel %vm1523, %v5579, %v5581
  %v5583 = vrot.slane %v5543, 1
  %v5584 = vsel %vm1523, %v5581, %v5583
  %v5585 = vrot.slane %v5544, 1
  %v5586 = vsel %vm1523, %v5583, %v5585
  %v5587 = vrot.slane %v5545, 1
  %v5588 = vsel %vm1523, %v5585, %v5587
  %v5589 = vrot.slane %v5546, 1
  %v5590 = vsel %vm1523, %v5587, %v5589
  %v5591 = vrot.slane %v5547, 1
  %v5592 = vsel %vm1523, %v5589, %v5591
  %v5593 = vrot.slane %v5548, 1
  %v5594 = vsel %vm1523, %v5591, %v5593
  %v5595 = vrot.slane %v5549, 1
  %v5596 = vsel %vm1523, %v5593, %v5595
  %v5613 = vmax.f32 %v5534, %v5568
  %v5614 = vmax.f32 %v5535, %v5570
  %v5615 = vmax.f32 %v5536, %v5572
  %v5616 = vmax.f32 %v5537, %v5574
  %v5617 = vmax.f32 %v5538, %v5576
  %v5618 = vmax.f32 %v5539, %v5578
  %v5619 = vmax.f32 %v5540, %v5580
  %v5620 = vmax.f32 %v5541, %v5582
  %v5621 = vmax.f32 %v5542, %v5584
  %v5622 = vmax.f32 %v5543, %v5586
  %v5623 = vmax.f32 %v5544, %v5588
  %v5624 = vmax.f32 %v5545, %v5590
  %v5625 = vmax.f32 %v5546, %v5592
  %v5626 = vmax.f32 %v5547, %v5594
  %v5627 = vmax.f32 %v5548, %v5596
  %v5628 = vmax.f32 %v5549, %v5595
  %5645 = vrot.lane.b32.xlu0 %v5613, 126
  %v5646 = vpop.permute.xlu0 %5645
  %5647 = vrot.lane.b32.xlu0 %v5614, 126
  %v5648 = vpop.permute.xlu0 %5647
  %5649 = vrot.lane.b32.xlu0 %v5615, 126
  %v5650 = vpop.permute.xlu0 %5649
  %5651 = vrot.lane.b32.xlu0 %v5616, 126
  %v5652 = vpop.permute.xlu0 %5651
  %5653 = vrot.lane.b32.xlu0 %v5617, 126
  %v5654 = vpop.permute.xlu0 %5653
  %5655 = vrot.lane.b32.xlu0 %v5618, 126
  %v5656 = vpop.permute.xlu0 %5655
  %5657 = vrot.lane.b32.xlu0 %v5619, 126
  %v5658 = vpop.permute.xlu0 %5657
  %5659 = vrot.lane.b32.xlu0 %v5620, 126
  %v5660 = vpop.permute.xlu0 %5659
  %5661 = vrot.lane.b32.xlu0 %v5621, 126
  %v5662 = vpop.permute.xlu0 %5661
  %5663 = vrot.lane.b32.xlu0 %v5622, 126
  %v5664 = vpop.permute.xlu0 %5663
  %5665 = vrot.lane.b32.xlu0 %v5623, 126
  %v5666 = vpop.permute.xlu0 %5665
  %5667 = vrot.lane.b32.xlu0 %v5624, 126
  %v5668 = vpop.permute.xlu0 %5667
  %5669 = vrot.lane.b32.xlu0 %v5625, 126
  %v5670 = vpop.permute.xlu0 %5669
  %5671 = vrot.lane.b32.xlu0 %v5626, 126
  %v5672 = vpop.permute.xlu0 %5671
  %5673 = vrot.lane.b32.xlu0 %v5627, 126
  %v5674 = vpop.permute.xlu0 %5673
  %5675 = vrot.lane.b32.xlu0 %v5628, 126
  %v5676 = vpop.permute.xlu0 %5675
  %v5693 = vmax.f32 %v5613, %v5646
  %v5694 = vmax.f32 %v5614, %v5648
  %v5695 = vmax.f32 %v5615, %v5650
  %v5696 = vmax.f32 %v5616, %v5652
  %v5697 = vmax.f32 %v5617, %v5654
  %v5698 = vmax.f32 %v5618, %v5656
  %v5699 = vmax.f32 %v5619, %v5658
  %v5700 = vmax.f32 %v5620, %v5660
  %v5701 = vmax.f32 %v5621, %v5662
  %v5702 = vmax.f32 %v5622, %v5664
  %v5703 = vmax.f32 %v5623, %v5666
  %v5704 = vmax.f32 %v5624, %v5668
  %v5705 = vmax.f32 %v5625, %v5670
  %v5706 = vmax.f32 %v5626, %v5672
  %v5707 = vmax.f32 %v5627, %v5674
  %v5708 = vmax.f32 %v5628, %v5676
  %v5709 = vld [vmem:[%s6] sm:$0xff]
  %v5710 = vld [vmem:[%s6 + $0x8] sm:$0xff]
  %v5711 = vld [vmem:[%s6 + $0x10] sm:$0xff]
  %v5712 = vld [vmem:[%s6 + $0x18] sm:$0xff]
  %v5713 = vld [vmem:[%s6 + $0x20] sm:$0xff]
  %v5714 = vld [vmem:[%s6 + $0x28] sm:$0xff]
  %v5715 = vld [vmem:[%s6 + $0x30] sm:$0xff]
  %v5716 = vld [vmem:[%s6 + $0x38] sm:$0xff]
  %v5717 = vld [vmem:[%s6 + $0x40] sm:$0xff]
  %v5718 = vld [vmem:[%s6 + $0x48] sm:$0xff]
  %v5719 = vld [vmem:[%s6 + $0x50] sm:$0xff]
  %v5720 = vld [vmem:[%s6 + $0x58] sm:$0xff]
  %v5721 = vld [vmem:[%s6 + $0x60] sm:$0xff]
  %v5722 = vld [vmem:[%s6 + $0x68] sm:$0xff]
  %v5723 = vld [vmem:[%s6 + $0x70] sm:$0x3f]
  %vm5724 = vcmask 965632
  %v5726 = vsel %vm5724, %v5693, 0
  %v5729 = vsel %vm5724, %v5694, 0
  %v5732 = vsel %vm5724, %v5695, 0
  %v5735 = vsel %vm5724, %v5696, 0
  %v5738 = vsel %vm5724, %v5697, 0
  %v5741 = vsel %vm5724, %v5698, 0
  %v5744 = vsel %vm5724, %v5699, 0
  %v5747 = vsel %vm5724, %v5700, 0
  %v5750 = vsel %vm5724, %v5701, 0
  %v5753 = vsel %vm5724, %v5702, 0
  %v5756 = vsel %vm5724, %v5703, 0
  %v5759 = vsel %vm5724, %v5704, 0
  %v5762 = vsel %vm5724, %v5705, 0
  %v5765 = vsel %vm5724, %v5706, 0
  %v5768 = vsel %vm5724, %v5707, 0
  %v5771 = vsel %vm5724, %v5708, 0
  %vm5773 = vcmask 1045504
  %v5775 = vsel %vm5773, %v5723, 0
  %5777 = vmatprep.subr.mxu0 0.0
  %5778 = vmatpush1.msra.mxu0 %v5709
  %5779 = vmatprep.subr.mxu0 0.0
  %5780 = vmatpush1.msra.mxu0 %v5710
  %5781 = vmatprep.subr.mxu0 0.0
  %5782 = vmatpush1.msra.mxu0 %v5711
  %5783 = vmatprep.subr.mxu0 0.0
  %5784 = vmatpush1.msra.mxu0 %v5712
  %5785 = vmatprep.subr.mxu0 0.0
  %5786 = vmatpush1.msra.mxu0 %v5713
  %5787 = vmatprep.subr.mxu0 0.0
  %5788 = vmatpush1.msra.mxu0 %v5714
  %5789 = vmatprep.subr.mxu0 0.0
  %5790 = vmatpush1.msra.mxu0 %v5715
  %5791 = vmatprep.subr.mxu0 0.0
  %5792 = vmatpush1.msra.mxu0 %v5716
  %5793 = vmatprep.subr.mxu0 0.0
  %5794 = vmatpush1.msra.mxu0 %v5717
  %5795 = vmatprep.subr.mxu0 0.0
  %5796 = vmatpush1.msra.mxu0 %v5718
  %5797 = vmatprep.subr.mxu0 0.0
  %5798 = vmatpush1.msra.mxu0 %v5719
  %5799 = vmatprep.subr.mxu0 0.0
  %5800 = vmatpush1.msra.mxu0 %v5720
  %5801 = vmatprep.subr.mxu0 0.0
  %5802 = vmatpush1.msra.mxu0 %v5721
  %5803 = vmatprep.subr.mxu0 0.0
  %5804 = vmatpush1.msra.mxu0 %v5722
  %5805 = vmatprep.subr.mxu0 0.0
  %5806 = vmatpush1.msra.mxu0 %v5775
  %5807 = vmatprep.subr.mxu0 0.0
  %5808 = vmatpush1.msra.mxu0 0.0
  %5809 = vmatprep.subr.mxu0 0.0
  %5810 = vmatpush1.msra.mxu0 0.0
  %5811 = vmatprep.subr.mxu0 0.0
  %5812 = vmatpush1.msra.mxu0 0.0
  %5813 = vmatprep.subr.mxu0 0.0
  %5814 = vmatpush1.msra.mxu0 0.0
  %5815 = vmatprep.subr.mxu0 0.0
  %5816 = vmatpush1.msra.mxu0 0.0
  %5817 = vmatprep.subr.mxu0 0.0
  %5818 = vmatpush1.msra.mxu0 0.0
  %5819 = vmatprep.subr.mxu0 0.0
  %5820 = vmatpush1.msra.mxu0 0.0
  %5821 = vmatprep.subr.mxu0 0.0
  %5822 = vmatpush1.msra.mxu0 0.0
  %5823 = vmatprep.subr.mxu0 0.0
  %5824 = vmatpush1.msra.mxu0 0.0
  %5825 = vmatprep.subr.mxu0 0.0
  %5826 = vmatpush1.msra.mxu0 0.0
  %5827 = vmatprep.subr.mxu0 0.0
  %5828 = vmatpush1.msra.mxu0 0.0
  %5829 = vmatprep.subr.mxu0 0.0
  %5830 = vmatpush1.msra.mxu0 0.0
  %5831 = vmatprep.subr.mxu0 0.0
  %5832 = vmatpush1.msra.mxu0 0.0
  %5833 = vmatprep.subr.mxu0 0.0
  %5834 = vmatpush1.msra.mxu0 0.0
  %5835 = vmatprep.subr.mxu0 0.0
  %5836 = vmatpush1.msra.mxu0 0.0
  %5837 = vmatprep.subr.mxu0 0.0
  %5838 = vmatpush1.msra.mxu0 0.0
  %5839 = vmatprep.subr.mxu0 0.0
  %5840 = vmatpush1.msra.mxu0 0.0
  %5841 = vmatprep.mubr.f32.mxu0 0.0
  %5842 = vmatmul.mubr.f32.gmra.mrb[0].mxu0 %v5726
  %v5843 = vpop.f32.mrb[0].mxu0
  %v5844 = vadd.f32 0.0, %v5843
  %v5845 = vpop.f32.mrb[0].mxu0
  %5846 = vmatprep.mubr.f32.mxu0 0.0
  %5847 = vmatmul.mubr.f32.gmra.mrb[0].mxu0 %v5729
  %v5848 = vpop.f32.mrb[0].mxu0
  %v5849 = vadd.f32 0.0, %v5848
  %v5850 = vpop.f32.mrb[0].mxu0
  %5851 = vmatprep.mubr.f32.mxu0 0.0
  %5852 = vmatmul.mubr.f32.gmra.mrb[0].mxu0 %v5732
  %v5853 = vpop.f32.mrb[0].mxu0
  %v5854 = vadd.f32 0.0, %v5853
  %v5855 = vpop.f32.mrb[0].mxu0
  %5856 = vmatprep.mubr.f32.mxu0 0.0
  %5857 = vmatmul.mubr.f32.gmra.mrb[0].mxu0 %v5735
  %v5858 = vpop.f32.mrb[0].mxu0
  %v5859 = vadd.f32 0.0, %v5858
  %v5860 = vpop.f32.mrb[0].mxu0
  %5861 = vmatprep.mubr.f32.mxu0 0.0
  %5862 = vmatmul.mubr.f32.gmra.mrb[0].mxu0 %v5738
  %v5863 = vpop.f32.mrb[0].mxu0
  %v5864 = vadd.f32 0.0, %v5863
  %v5865 = vpop.f32.mrb[0].mxu0
  %5866 = vmatprep.mubr.f32.mxu0 0.0
  %5867 = vmatmul.mubr.f32.gmra.mrb[0].mxu0 %v5741
  %v5868 = vpop.f32.mrb[0].mxu0
  %v5869 = vadd.f32 0.0, %v5868
  %v5870 = vpop.f32.mrb[0].mxu0
  %5871 = vmatprep.mubr.f32.mxu0 0.0
  %5872 = vmatmul.mubr.f32.gmra.mrb[0].mxu0 %v5744
  %v5873 = vpop.f32.mrb[0].mxu0
  %v5874 = vadd.f32 0.0, %v5873
  %v5875 = vpop.f32.mrb[0].mxu0
  %5876 = vmatprep.mubr.f32.mxu0 0.0
  %5877 = vmatmul.mubr.f32.gmra.mrb[0].mxu0 %v5747
  %v5878 = vpop.f32.mrb[0].mxu0
  %v5879 = vadd.f32 0.0, %v5878
  %v5880 = vpop.f32.mrb[0].mxu0
  %5881 = vmatprep.mubr.f32.mxu0 0.0
  %5882 = vmatmul.mubr.f32.gmra.mrb[0].mxu0 %v5750
  %v5883 = vpop.f32.mrb[0].mxu0
  %v5884 = vadd.f32 0.0, %v5883
  %v5885 = vpop.f32.mrb[0].mxu0
  %5886 = vmatprep.mubr.f32.mxu0 0.0
  %5887 = vmatmul.mubr.f32.gmra.mrb[0].mxu0 %v5753
  %v5888 = vpop.f32.mrb[0].mxu0
  %v5889 = vadd.f32 0.0, %v5888
  %v5890 = vpop.f32.mrb[0].mxu0
  %5891 = vmatprep.mubr.f32.mxu0 0.0
  %5892 = vmatmul.mubr.f32.gmra.mrb[0].mxu0 %v5756
  %v5893 = vpop.f32.mrb[0].mxu0
  %v5894 = vadd.f32 0.0, %v5893
  %v5895 = vpop.f32.mrb[0].mxu0
  %5896 = vmatprep.mubr.f32.mxu0 0.0
  %5897 = vmatmul.mubr.f32.gmra.mrb[0].mxu0 %v5759
  %v5898 = vpop.f32.mrb[0].mxu0
  %v5899 = vadd.f32 0.0, %v5898
  %v5900 = vpop.f32.mrb[0].mxu0
  %5901 = vmatprep.mubr.f32.mxu0 0.0
  %5902 = vmatmul.mubr.f32.gmra.mrb[0].mxu0 %v5762
  %v5903 = vpop.f32.mrb[0].mxu0
  %v5904 = vadd.f32 0.0, %v5903
  %v5905 = vpop.f32.mrb[0].mxu0
  %5906 = vmatprep.mubr.f32.mxu0 0.0
  %5907 = vmatmul.mubr.f32.gmra.mrb[0].mxu0 %v5765
  %v5908 = vpop.f32.mrb[0].mxu0
  %v5909 = vadd.f32 0.0, %v5908
  %v5910 = vpop.f32.mrb[0].mxu0
  %5911 = vmatprep.mubr.f32.mxu0 0.0
  %5912 = vmatmul.mubr.f32.gmra.mrb[0].mxu0 %v5768
  %v5913 = vpop.f32.mrb[0].mxu0
  %v5914 = vadd.f32 0.0, %v5913
  %v5915 = vpop.f32.mrb[0].mxu0
  %5916 = vmatprep.mubr.f32.mxu0 0.0
  %5917 = vmatmul.mubr.f32.gmra.mrb[0].mxu0 %v5771
  %v5918 = vpop.f32.mrb[0].mxu0
  %v5919 = vadd.f32 0.0, %v5918
  %v5920 = vpop.f32.mrb[0].mxu0
  %5921 = vdwg.mxu0
  %v5922 = vld [vmem:[%s5] sm:$0xff]
  %v5923 = vld [vmem:[%s5 + $0x8] sm:$0xff]
  %v5924 = vld [vmem:[%s5 + $0x10] sm:$0xff]
  %v5925 = vld [vmem:[%s5 + $0x18] sm:$0xff]
  %v5926 = vld [vmem:[%s5 + $0x20] sm:$0xff]
  %v5927 = vld [vmem:[%s5 + $0x28] sm:$0xff]
  %v5928 = vld [vmem:[%s5 + $0x30] sm:$0xff]
  %v5929 = vld [vmem:[%s5 + $0x38] sm:$0xff]
  %v5930 = vld [vmem:[%s5 + $0x40] sm:$0xff]
  %v5931 = vld [vmem:[%s5 + $0x48] sm:$0xff]
  %v5932 = vld [vmem:[%s5 + $0x50] sm:$0xff]
  %v5933 = vld [vmem:[%s5 + $0x58] sm:$0xff]
  %v5934 = vld [vmem:[%s5 + $0x60] sm:$0xff]
  %v5935 = vld [vmem:[%s5 + $0x68] sm:$0xff]
  %v5936 = vld [vmem:[%s5 + $0x70] sm:$0xff]
  %v5937 = vld [vmem:[%s5 + $0x78] sm:$0xff]
  %v5938 = vld [vmem:[%s5 + $0x80] sm:$0xff]
  %v5939 = vld [vmem:[%s5 + $0x88] sm:$0xff]
  %v5940 = vld [vmem:[%s5 + $0x90] sm:$0x7]
  %s5941 = scalar_lea.vmem %s6, 120
  %v5942 = vld [vmem:[%s5941] sm:$0xff]
  %v5943 = vld [vmem:[%s5941 + $0x8] sm:$0xff]
  %v5944 = vld [vmem:[%s5941 + $0x10] sm:$0xff]
  %v5945 = vld [vmem:[%s5941 + $0x18] sm:$0xff]
  %v5946 = vld [vmem:[%s5941 + $0x20] sm:$0xff]
  %v5947 = vld [vmem:[%s5941 + $0x28] sm:$0xff]
  %v5948 = vld [vmem:[%s5941 + $0x30] sm:$0xff]
  %v5949 = vld [vmem:[%s5941 + $0x38] sm:$0xff]
  %v5950 = vld [vmem:[%s5941 + $0x40] sm:$0xff]
  %v5951 = vld [vmem:[%s5941 + $0x48] sm:$0xff]
  %v5952 = vld [vmem:[%s5941 + $0x50] sm:$0xff]
  %v5953 = vld [vmem:[%s5941 + $0x58] sm:$0xff]
  %v5954 = vld [vmem:[%s5941 + $0x60] sm:$0xff]
  %v5955 = vld [vmem:[%s5941 + $0x68] sm:$0xff]
  %v5956 = vld [vmem:[%s5941 + $0x70] sm:$0x3f]
  %v5958 = vsel %vm5773, %v5956, 0
  %5960 = vmatprep.subr.mxu0 0.0
  %5961 = vmatpush1.msra.mxu0 %v5942
  %5962 = vmatprep.subr.mxu0 0.0
  %5963 = vmatpush1.msra.mxu0 %v5943
  %5964 = vmatprep.subr.mxu0 0.0
  %5965 = vmatpush1.msra.mxu0 %v5944
  %5966 = vmatprep.subr.mxu0 0.0
  %5967 = vmatpush1.msra.mxu0 %v5945
  %5968 = vmatprep.subr.mxu0 0.0
  %5969 = vmatpush1.msra.mxu0 %v5946
  %5970 = vmatprep.subr.mxu0 0.0
  %5971 = vmatpush1.msra.mxu0 %v5947
  %5972 = vmatprep.subr.mxu0 0.0
  %5973 = vmatpush1.msra.mxu0 %v5948
  %5974 = vmatprep.subr.mxu0 0.0
  %5975 = vmatpush1.msra.mxu0 %v5949
  %5976 = vmatprep.subr.mxu0 0.0
  %5977 = vmatpush1.msra.mxu0 %v5950
  %5978 = vmatprep.subr.mxu0 0.0
  %5979 = vmatpush1.msra.mxu0 %v5951
  %5980 = vmatprep.subr.mxu0 0.0
  %5981 = vmatpush1.msra.mxu0 %v5952
  %5982 = vmatprep.subr.mxu0 0.0
  %5983 = vmatpush1.msra.mxu0 %v5953
  %5984 = vmatprep.subr.mxu0 0.0
  %5985 = vmatpush1.msra.mxu0 %v5954
  %5986 = vmatprep.subr.mxu0 0.0
  %5987 = vmatpush1.msra.mxu0 %v5955
  %5988 = vmatprep.subr.mxu0 0.0
  %5989 = vmatpush1.msra.mxu0 %v5958
  %5990 = vmatprep.subr.mxu0 0.0
  %5991 = vmatpush1.msra.mxu0 0.0
  %5992 = vmatprep.subr.mxu0 0.0
  %5993 = vmatpush1.msra.mxu0 0.0
  %5994 = vmatprep.subr.mxu0 0.0
  %5995 = vmatpush1.msra.mxu0 0.0
  %5996 = vmatprep.subr.mxu0 0.0
  %5997 = vmatpush1.msra.mxu0 0.0
  %5998 = vmatprep.subr.mxu0 0.0
  %5999 = vmatpush1.msra.mxu0 0.0
  %6000 = vmatprep.subr.mxu0 0.0
  %6001 = vmatpush1.msra.mxu0 0.0
  %6002 = vmatprep.subr.mxu0 0.0
  %6003 = vmatpush1.msra.mxu0 0.0
  %6004 = vmatprep.subr.mxu0 0.0
  %6005 = vmatpush1.msra.mxu0 0.0
  %6006 = vmatprep.subr.mxu0 0.0
  %6007 = vmatpush1.msra.mxu0 0.0
  %6008 = vmatprep.subr.mxu0 0.0
  %6009 = vmatpush1.msra.mxu0 0.0
  %6010 = vmatprep.subr.mxu0 0.0
  %6011 = vmatpush1.msra.mxu0 0.0
  %6012 = vmatprep.subr.mxu0 0.0
  %6013 = vmatpush1.msra.mxu0 0.0
  %6014 = vmatprep.subr.mxu0 0.0
  %6015 = vmatpush1.msra.mxu0 0.0
  %6016 = vmatprep.subr.mxu0 0.0
  %6017 = vmatpush1.msra.mxu0 0.0
  %6018 = vmatprep.subr.mxu0 0.0
  %6019 = vmatpush1.msra.mxu0 0.0
  %6020 = vmatprep.subr.mxu0 0.0
  %6021 = vmatpush1.msra.mxu0 0.0
  %6022 = vmatprep.subr.mxu0 0.0
  %6023 = vmatpush1.msra.mxu0 0.0
  %6024 = vmatprep.mubr.f32.mxu0 0.0
  %6025 = vmatmul.mubr.f32.gmra.mrb[0].mxu0 %v5726
  %v6026 = vpop.f32.mrb[0].mxu0
  %v6027 = vadd.f32 0.0, %v6026
  %v6028 = vpop.f32.mrb[0].mxu0
  %6029 = vmatprep.mubr.f32.mxu0 0.0
  %6030 = vmatmul.mubr.f32.gmra.mrb[0].mxu0 %v5729
  %v6031 = vpop.f32.mrb[0].mxu0
  %v6032 = vadd.f32 0.0, %v6031
  %v6033 = vpop.f32.mrb[0].mxu0
  %6034 = vmatprep.mubr.f32.mxu0 0.0
  %6035 = vmatmul.mubr.f32.gmra.mrb[0].mxu0 %v5732
  %v6036 = vpop.f32.mrb[0].mxu0
  %v6037 = vadd.f32 0.0, %v6036
  %v6038 = vpop.f32.mrb[0].mxu0
  %6039 = vmatprep.mubr.f32.mxu0 0.0
  %6040 = vmatmul.mubr.f32.gmra.mrb[0].mxu0 %v5735
  %v6041 = vpop.f32.mrb[0].mxu0
  %v6042 = vadd.f32 0.0, %v6041
  %v6043 = vpop.f32.mrb[0].mxu0
  %6044 = vmatprep.mubr.f32.mxu0 0.0
  %6045 = vmatmul.mubr.f32.gmra.mrb[0].mxu0 %v5738
  %v6046 = vpop.f32.mrb[0].mxu0
  %v6047 = vadd.f32 0.0, %v6046
  %v6048 = vpop.f32.mrb[0].mxu0
  %6049 = vmatprep.mubr.f32.mxu0 0.0
  %6050 = vmatmul.mubr.f32.gmra.mrb[0].mxu0 %v5741
  %v6051 = vpop.f32.mrb[0].mxu0
  %v6052 = vadd.f32 0.0, %v6051
  %v6053 = vpop.f32.mrb[0].mxu0
  %6054 = vmatprep.mubr.f32.mxu0 0.0
  %6055 = vmatmul.mubr.f32.gmra.mrb[0].mxu0 %v5744
  %v6056 = vpop.f32.mrb[0].mxu0
  %v6057 = vadd.f32 0.0, %v6056
  %v6058 = vpop.f32.mrb[0].mxu0
  %6059 = vmatprep.mubr.f32.mxu0 0.0
  %6060 = vmatmul.mubr.f32.gmra.mrb[0].mxu0 %v5747
  %v6061 = vpop.f32.mrb[0].mxu0
  %v6062 = vadd.f32 0.0, %v6061
  %v6063 = vpop.f32.mrb[0].mxu0
  %6064 = vmatprep.mubr.f32.mxu0 0.0
  %6065 = vmatmul.mubr.f32.gmra.mrb[0].mxu0 %v5750
  %v6066 = vpop.f32.mrb[0].mxu0
  %v6067 = vadd.f32 0.0, %v6066
  %v6068 = vpop.f32.mrb[0].mxu0
  %6069 = vmatprep.mubr.f32.mxu0 0.0
  %6070 = vmatmul.mubr.f32.gmra.mrb[0].mxu0 %v5753
  %v6071 = vpop.f32.mrb[0].mxu0
  %v6072 = vadd.f32 0.0, %v6071
  %v6073 = vpop.f32.mrb[0].mxu0
  %6074 = vmatprep.mubr.f32.mxu0 0.0
  %6075 = vmatmul.mubr.f32.gmra.mrb[0].mxu0 %v5756
  %v6076 = vpop.f32.mrb[0].mxu0
  %v6077 = vadd.f32 0.0, %v6076
  %v6078 = vpop.f32.mrb[0].mxu0
  %6079 = vmatprep.mubr.f32.mxu0 0.0
  %6080 = vmatmul.mubr.f32.gmra.mrb[0].mxu0 %v5759
  %v6081 = vpop.f32.mrb[0].mxu0
  %v6082 = vadd.f32 0.0, %v6081
  %v6083 = vpop.f32.mrb[0].mxu0
  %6084 = vmatprep.mubr.f32.mxu0 0.0
  %6085 = vmatmul.mubr.f32.gmra.mrb[0].mxu0 %v5762
  %v6086 = vpop.f32.mrb[0].mxu0
  %v6087 = vadd.f32 0.0, %v6086
  %v6088 = vpop.f32.mrb[0].mxu0
  %6089 = vmatprep.mubr.f32.mxu0 0.0
  %6090 = vmatmul.mubr.f32.gmra.mrb[0].mxu0 %v5765
  %v6091 = vpop.f32.mrb[0].mxu0
  %v6092 = vadd.f32 0.0, %v6091
  %v6093 = vpop.f32.mrb[0].mxu0
  %6094 = vmatprep.mubr.f32.mxu0 0.0
  %6095 = vmatmul.mubr.f32.gmra.mrb[0].mxu0 %v5768
  %v6096 = vpop.f32.mrb[0].mxu0
  %v6097 = vadd.f32 0.0, %v6096
  %v6098 = vpop.f32.mrb[0].mxu0
  %6099 = vmatprep.mubr.f32.mxu0 0.0
  %6100 = vmatmul.mubr.f32.gmra.mrb[0].mxu0 %v5771
  %v6101 = vpop.f32.mrb[0].mxu0
  %v6102 = vadd.f32 0.0, %v6101
  %v6103 = vpop.f32.mrb[0].mxu0
  %6104 = vdwg.mxu0
  %s6105 = scalar_lea.vmem %s5, 152
  %v6106 = vld [vmem:[%s6105] sm:$0xff]
  %v6107 = vld [vmem:[%s6105 + $0x8] sm:$0xff]
  %v6108 = vld [vmem:[%s6105 + $0x10] sm:$0xff]
  %v6109 = vld [vmem:[%s6105 + $0x18] sm:$0xff]
  %v6110 = vld [vmem:[%s6105 + $0x20] sm:$0xff]
  %v6111 = vld [vmem:[%s6105 + $0x28] sm:$0xff]
  %v6112 = vld [vmem:[%s6105 + $0x30] sm:$0xff]
  %v6113 = vld [vmem:[%s6105 + $0x38] sm:$0xff]
  %v6114 = vld [vmem:[%s6105 + $0x40] sm:$0xff]
  %v6115 = vld [vmem:[%s6105 + $0x48] sm:$0xff]
  %v6116 = vld [vmem:[%s6105 + $0x50] sm:$0xff]
  %v6117 = vld [vmem:[%s6105 + $0x58] sm:$0xff]
  %v6118 = vld [vmem:[%s6105 + $0x60] sm:$0xff]
  %v6119 = vld [vmem:[%s6105 + $0x68] sm:$0xff]
  %v6120 = vld [vmem:[%s6105 + $0x70] sm:$0xff]
  %v6121 = vld [vmem:[%s6105 + $0x78] sm:$0xff]
  %v6122 = vld [vmem:[%s6105 + $0x80] sm:$0xff]
  %v6123 = vld [vmem:[%s6105 + $0x88] sm:$0xff]
  %v6124 = vld [vmem:[%s6105 + $0x90] sm:$0x7]
  %v6126 = vsel %vm1396, %v6106, 0
  %v6129 = vsel %vm1396, %v6107, 0
  %v6132 = vsel %vm1396, %v6108, 0
  %v6135 = vsel %vm1396, %v6109, 0
  %v6138 = vsel %vm1396, %v6110, 0
  %v6141 = vsel %vm1396, %v6111, 0
  %v6144 = vsel %vm1396, %v6112, 0
  %v6147 = vsel %vm1396, %v6113, 0
  %v6150 = vsel %vm1396, %v6114, 0
  %v6153 = vsel %vm1396, %v6115, 0
  %v6156 = vsel %vm1396, %v6116, 0
  %v6159 = vsel %vm1396, %v6117, 0
  %v6162 = vsel %vm1396, %v6118, 0
  %v6165 = vsel %vm1396, %v6119, 0
  %v6168 = vsel %vm1396, %v6120, 0
  %v6171 = vsel %vm1396, %v6121, 0
  %v6174 = vsel %vm1396, %v6122, 0
  %v6177 = vsel %vm1396, %v6123, 0
  %v6180 = vsel %vm1396, %v6124, 0
  %v6183 = vsel %vm1523, %v6102, 0
  %6185 = vmatprep.subr.mxu0 0.0
  %6186 = vmatpush1.msra.mxu0 %v6027
  %6187 = vmatprep.subr.mxu0 0.0
  %6188 = vmatpush1.msra.mxu0 %v6032
  %6189 = vmatprep.subr.mxu0 0.0
  %6190 = vmatpush1.msra.mxu0 %v6037
  %6191 = vmatprep.subr.mxu0 0.0
  %6192 = vmatpush1.msra.mxu0 %v6042
  %6193 = vmatprep.subr.mxu0 0.0
  %6194 = vmatpush1.msra.mxu0 %v6047
  %6195 = vmatprep.subr.mxu0 0.0
  %6196 = vmatpush1.msra.mxu0 %v6052
  %6197 = vmatprep.subr.mxu0 0.0
  %6198 = vmatpush1.msra.mxu0 %v6057
  %6199 = vmatprep.subr.mxu0 0.0
  %6200 = vmatpush1.msra.mxu0 %v6062
  %6201 = vmatprep.subr.mxu0 0.0
  %6202 = vmatpush1.msra.mxu0 %v6067
  %6203 = vmatprep.subr.mxu0 0.0
  %6204 = vmatpush1.msra.mxu0 %v6072
  %6205 = vmatprep.subr.mxu0 0.0
  %6206 = vmatpush1.msra.mxu0 %v6077
  %6207 = vmatprep.subr.mxu0 0.0
  %6208 = vmatpush1.msra.mxu0 %v6082
  %6209 = vmatprep.subr.mxu0 0.0
  %6210 = vmatpush1.msra.mxu0 %v6087
  %6211 = vmatprep.subr.mxu0 0.0
  %6212 = vmatpush1.msra.mxu0 %v6092
  %6213 = vmatprep.subr.mxu0 0.0
  %6214 = vmatpush1.msra.mxu0 %v6097
  %6215 = vmatprep.subr.mxu0 0.0
  %6216 = vmatpush1.msra.mxu0 %v6183
  %6217 = vmatprep.subr.mxu0 0.0
  %6218 = vmatpush1.msra.mxu0 0.0
  %6219 = vmatprep.subr.mxu0 0.0
  %6220 = vmatpush1.msra.mxu0 0.0
  %6221 = vmatprep.subr.mxu0 0.0
  %6222 = vmatpush1.msra.mxu0 0.0
  %6223 = vmatprep.subr.mxu0 0.0
  %6224 = vmatpush1.msra.mxu0 0.0
  %6225 = vmatprep.subr.mxu0 0.0
  %6226 = vmatpush1.msra.mxu0 0.0
  %6227 = vmatprep.subr.mxu0 0.0
  %6228 = vmatpush1.msra.mxu0 0.0
  %6229 = vmatprep.subr.mxu0 0.0
  %6230 = vmatpush1.msra.mxu0 0.0
  %6231 = vmatprep.subr.mxu0 0.0
  %6232 = vmatpush1.msra.mxu0 0.0
  %6233 = vmatprep.subr.mxu0 0.0
  %6234 = vmatpush1.msra.mxu0 0.0
  %6235 = vmatprep.subr.mxu0 0.0
  %6236 = vmatpush1.msra.mxu0 0.0
  %6237 = vmatprep.subr.mxu0 0.0
  %6238 = vmatpush1.msra.mxu0 0.0
  %6239 = vmatprep.subr.mxu0 0.0
  %6240 = vmatpush1.msra.mxu0 0.0
  %6241 = vmatprep.subr.mxu0 0.0
  %6242 = vmatpush1.msra.mxu0 0.0
  %6243 = vmatprep.subr.mxu0 0.0
  %6244 = vmatpush1.msra.mxu0 0.0
  %6245 = vmatprep.subr.mxu0 0.0
  %6246 = vmatpush1.msra.mxu0 0.0
  %6247 = vmatprep.subr.mxu0 0.0
  %6248 = vmatpush1.msra.mxu0 0.0
  %6249 = vmatprep.mubr.f32.mxu0 0.0
  %6250 = vmatmul.mubr.f32.gmra.mrb[0].mxu0 %v6126
  %v6251 = vpop.f32.mrb[0].mxu0
  %v6252 = vadd.f32 0.0, %v6251
  %v6253 = vpop.f32.mrb[0].mxu0
  %6254 = vmatprep.mubr.f32.mxu0 0.0
  %6255 = vmatmul.mubr.f32.gmra.mrb[0].mxu0 %v6129
  %v6256 = vpop.f32.mrb[0].mxu0
  %v6257 = vadd.f32 0.0, %v6256
  %v6258 = vpop.f32.mrb[0].mxu0
  %6259 = vmatprep.mubr.f32.mxu0 0.0
  %6260 = vmatmul.mubr.f32.gmra.mrb[0].mxu0 %v6132
  %v6261 = vpop.f32.mrb[0].mxu0
  %v6262 = vadd.f32 0.0, %v6261
  %v6263 = vpop.f32.mrb[0].mxu0
  %6264 = vmatprep.mubr.f32.mxu0 0.0
  %6265 = vmatmul.mubr.f32.gmra.mrb[0].mxu0 %v6135
  %v6266 = vpop.f32.mrb[0].mxu0
  %v6267 = vadd.f32 0.0, %v6266
  %v6268 = vpop.f32.mrb[0].mxu0
  %6269 = vmatprep.mubr.f32.mxu0 0.0
  %6270 = vmatmul.mubr.f32.gmra.mrb[0].mxu0 %v6138
  %v6271 = vpop.f32.mrb[0].mxu0
  %v6272 = vadd.f32 0.0, %v6271
  %v6273 = vpop.f32.mrb[0].mxu0
  %6274 = vmatprep.mubr.f32.mxu0 0.0
  %6275 = vmatmul.mubr.f32.gmra.mrb[0].mxu0 %v6141
  %v6276 = vpop.f32.mrb[0].mxu0
  %v6277 = vadd.f32 0.0, %v6276
  %v6278 = vpop.f32.mrb[0].mxu0
  %6279 = vmatprep.mubr.f32.mxu0 0.0
  %6280 = vmatmul.mubr.f32.gmra.mrb[0].mxu0 %v6144
  %v6281 = vpop.f32.mrb[0].mxu0
  %v6282 = vadd.f32 0.0, %v6281
  %v6283 = vpop.f32.mrb[0].mxu0
  %6284 = vmatprep.mubr.f32.mxu0 0.0
  %6285 = vmatmul.mubr.f32.gmra.mrb[0].mxu0 %v6147
  %v6286 = vpop.f32.mrb[0].mxu0
  %v6287 = vadd.f32 0.0, %v6286
  %v6288 = vpop.f32.mrb[0].mxu0
  %6289 = vmatprep.mubr.f32.mxu0 0.0
  %6290 = vmatmul.mubr.f32.gmra.mrb[0].mxu0 %v6150
  %v6291 = vpop.f32.mrb[0].mxu0
  %v6292 = vadd.f32 0.0, %v6291
  %v6293 = vpop.f32.mrb[0].mxu0
  %6294 = vmatprep.mubr.f32.mxu0 0.0
  %6295 = vmatmul.mubr.f32.gmra.mrb[0].mxu0 %v6153
  %v6296 = vpop.f32.mrb[0].mxu0
  %v6297 = vadd.f32 0.0, %v6296
  %v6298 = vpop.f32.mrb[0].mxu0
  %6299 = vmatprep.mubr.f32.mxu0 0.0
  %6300 = vmatmul.mubr.f32.gmra.mrb[0].mxu0 %v6156
  %v6301 = vpop.f32.mrb[0].mxu0
  %v6302 = vadd.f32 0.0, %v6301
  %v6303 = vpop.f32.mrb[0].mxu0
  %6304 = vmatprep.mubr.f32.mxu0 0.0
  %6305 = vmatmul.mubr.f32.gmra.mrb[0].mxu0 %v6159
  %v6306 = vpop.f32.mrb[0].mxu0
  %v6307 = vadd.f32 0.0, %v6306
  %v6308 = vpop.f32.mrb[0].mxu0
  %6309 = vmatprep.mubr.f32.mxu0 0.0
  %6310 = vmatmul.mubr.f32.gmra.mrb[0].mxu0 %v6162
  %v6311 = vpop.f32.mrb[0].mxu0
  %v6312 = vadd.f32 0.0, %v6311
  %v6313 = vpop.f32.mrb[0].mxu0
  %6314 = vmatprep.mubr.f32.mxu0 0.0
  %6315 = vmatmul.mubr.f32.gmra.mrb[0].mxu0 %v6165
  %v6316 = vpop.f32.mrb[0].mxu0
  %v6317 = vadd.f32 0.0, %v6316
  %v6318 = vpop.f32.mrb[0].mxu0
  %6319 = vmatprep.mubr.f32.mxu0 0.0
  %6320 = vmatmul.mubr.f32.gmra.mrb[0].mxu0 %v6168
  %v6321 = vpop.f32.mrb[0].mxu0
  %v6322 = vadd.f32 0.0, %v6321
  %v6323 = vpop.f32.mrb[0].mxu0
  %6324 = vmatprep.mubr.f32.mxu0 0.0
  %6325 = vmatmul.mubr.f32.gmra.mrb[0].mxu0 %v6171
  %v6326 = vpop.f32.mrb[0].mxu0
  %v6327 = vadd.f32 0.0, %v6326
  %v6328 = vpop.f32.mrb[0].mxu0
  %6329 = vmatprep.mubr.f32.mxu0 0.0
  %6330 = vmatmul.mubr.f32.gmra.mrb[0].mxu0 %v6174
  %v6331 = vpop.f32.mrb[0].mxu0
  %v6332 = vadd.f32 0.0, %v6331
  %v6333 = vpop.f32.mrb[0].mxu0
  %6334 = vmatprep.mubr.f32.mxu0 0.0
  %6335 = vmatmul.mubr.f32.gmra.mrb[0].mxu0 %v6177
  %v6336 = vpop.f32.mrb[0].mxu0
  %v6337 = vadd.f32 0.0, %v6336
  %v6338 = vpop.f32.mrb[0].mxu0
  %6339 = vmatprep.mubr.f32.mxu0 0.0
  %6340 = vmatmul.mubr.f32.gmra.mrb[0].mxu0 %v6180
  %v6341 = vpop.f32.mrb[0].mxu0
  %v6342 = vadd.f32 0.0, %v6341
  %v6343 = vpop.f32.mrb[0].mxu0
  %6344 = vdwg.mxu0
  %v6346 = vsel %vm1396, %v5922, 0
  %v6349 = vsel %vm1396, %v5923, 0
  %v6352 = vsel %vm1396, %v5924, 0
  %v6355 = vsel %vm1396, %v5925, 0
  %v6358 = vsel %vm1396, %v5926, 0
  %v6361 = vsel %vm1396, %v5927, 0
  %v6364 = vsel %vm1396, %v5928, 0
  %v6367 = vsel %vm1396, %v5929, 0
  %v6370 = vsel %vm1396, %v5930, 0
  %v6373 = vsel %vm1396, %v5931, 0
  %v6376 = vsel %vm1396, %v5932, 0
  %v6379 = vsel %vm1396, %v5933, 0
  %v6382 = vsel %vm1396, %v5934, 0
  %v6385 = vsel %vm1396, %v5935, 0
  %v6388 = vsel %vm1396, %v5936, 0
  %v6391 = vsel %vm1396, %v5937, 0
  %v6394 = vsel %vm1396, %v5938, 0
  %v6397 = vsel %vm1396, %v5939, 0
  %v6400 = vsel %vm1396, %v5940, 0
  %v6403 = vsel %vm1523, %v5919, 0
  %6405 = vmatprep.subr.mxu0 0.0
  %6406 = vmatpush1.msra.mxu0 %v5844
  %6407 = vmatprep.subr.mxu0 0.0
  %6408 = vmatpush1.msra.mxu0 %v5849
  %6409 = vmatprep.subr.mxu0 0.0
  %6410 = vmatpush1.msra.mxu0 %v5854
  %6411 = vmatprep.subr.mxu0 0.0
  %6412 = vmatpush1.msra.mxu0 %v5859
  %6413 = vmatprep.subr.mxu0 0.0
  %6414 = vmatpush1.msra.mxu0 %v5864
  %6415 = vmatprep.subr.mxu0 0.0
  %6416 = vmatpush1.msra.mxu0 %v5869
  %6417 = vmatprep.subr.mxu0 0.0
  %6418 = vmatpush1.msra.mxu0 %v5874
  %6419 = vmatprep.subr.mxu0 0.0
  %6420 = vmatpush1.msra.mxu0 %v5879
  %6421 = vmatprep.subr.mxu0 0.0
  %6422 = vmatpush1.msra.mxu0 %v5884
  %6423 = vmatprep.subr.mxu0 0.0
  %6424 = vmatpush1.msra.mxu0 %v5889
  %6425 = vmatprep.subr.mxu0 0.0
  %6426 = vmatpush1.msra.mxu0 %v5894
  %6427 = vmatprep.subr.mxu0 0.0
  %6428 = vmatpush1.msra.mxu0 %v5899
  %6429 = vmatprep.subr.mxu0 0.0
  %6430 = vmatpush1.msra.mxu0 %v5904
  %6431 = vmatprep.subr.mxu0 0.0
  %6432 = vmatpush1.msra.mxu0 %v5909
  %6433 = vmatprep.subr.mxu0 0.0
  %6434 = vmatpush1.msra.mxu0 %v5914
  %6435 = vmatprep.subr.mxu0 0.0
  %6436 = vmatpush1.msra.mxu0 %v6403
  %6437 = vmatprep.subr.mxu0 0.0
  %6438 = vmatpush1.msra.mxu0 0.0
  %6439 = vmatprep.subr.mxu0 0.0
  %6440 = vmatpush1.msra.mxu0 0.0
  %6441 = vmatprep.subr.mxu0 0.0
  %6442 = vmatpush1.msra.mxu0 0.0
  %6443 = vmatprep.subr.mxu0 0.0
  %6444 = vmatpush1.msra.mxu0 0.0
  %6445 = vmatprep.subr.mxu0 0.0
  %6446 = vmatpush1.msra.mxu0 0.0
  %6447 = vmatprep.subr.mxu0 0.0
  %6448 = vmatpush1.msra.mxu0 0.0
  %6449 = vmatprep.subr.mxu0 0.0
  %6450 = vmatpush1.msra.mxu0 0.0
  %6451 = vmatprep.subr.mxu0 0.0
  %6452 = vmatpush1.msra.mxu0 0.0
  %6453 = vmatprep.subr.mxu0 0.0
  %6454 = vmatpush1.msra.mxu0 0.0
  %6455 = vmatprep.subr.mxu0 0.0
  %6456 = vmatpush1.msra.mxu0 0.0
  %6457 = vmatprep.subr.mxu0 0.0
  %6458 = vmatpush1.msra.mxu0 0.0
  %6459 = vmatprep.subr.mxu0 0.0
  %6460 = vmatpush1.msra.mxu0 0.0
  %6461 = vmatprep.subr.mxu0 0.0
  %6462 = vmatpush1.msra.mxu0 0.0
  %6463 = vmatprep.subr.mxu0 0.0
  %6464 = vmatpush1.msra.mxu0 0.0
  %6465 = vmatprep.subr.mxu0 0.0
  %6466 = vmatpush1.msra.mxu0 0.0
  %6467 = vmatprep.subr.mxu0 0.0
  %6468 = vmatpush1.msra.mxu0 0.0
  %6469 = vmatprep.mubr.f32.mxu0 0.0
  %6470 = vmatmul.mubr.f32.gmra.mrb[0].mxu0 %v6346
  %v6471 = vpop.f32.mrb[0].mxu0
  %v6472 = vadd.f32 %v6252, %v6471
  %v6473 = vpop.f32.mrb[0].mxu0
  %6474 = vmatprep.mubr.f32.mxu0 0.0
  %6475 = vmatmul.mubr.f32.gmra.mrb[0].mxu0 %v6349
  %v6476 = vpop.f32.mrb[0].mxu0
  %v6477 = vadd.f32 %v6257, %v6476
  %v6478 = vpop.f32.mrb[0].mxu0
  %6479 = vmatprep.mubr.f32.mxu0 0.0
  %6480 = vmatmul.mubr.f32.gmra.mrb[0].mxu0 %v6352
  %v6481 = vpop.f32.mrb[0].mxu0
  %v6482 = vadd.f32 %v6262, %v6481
  %v6483 = vpop.f32.mrb[0].mxu0
  %6484 = vmatprep.mubr.f32.mxu0 0.0
  %6485 = vmatmul.mubr.f32.gmra.mrb[0].mxu0 %v6355
  %v6486 = vpop.f32.mrb[0].mxu0
  %v6487 = vadd.f32 %v6267, %v6486
  %v6488 = vpop.f32.mrb[0].mxu0
  %6489 = vmatprep.mubr.f32.mxu0 0.0
  %6490 = vmatmul.mubr.f32.gmra.mrb[0].mxu0 %v6358
  %v6491 = vpop.f32.mrb[0].mxu0
  %v6492 = vadd.f32 %v6272, %v6491
  %v6493 = vpop.f32.mrb[0].mxu0
  %6494 = vmatprep.mubr.f32.mxu0 0.0
  %6495 = vmatmul.mubr.f32.gmra.mrb[0].mxu0 %v6361
  %v6496 = vpop.f32.mrb[0].mxu0
  %v6497 = vadd.f32 %v6277, %v6496
  %v6498 = vpop.f32.mrb[0].mxu0
  %6499 = vmatprep.mubr.f32.mxu0 0.0
  %6500 = vmatmul.mubr.f32.gmra.mrb[0].mxu0 %v6364
  %v6501 = vpop.f32.mrb[0].mxu0
  %v6502 = vadd.f32 %v6282, %v6501
  %v6503 = vpop.f32.mrb[0].mxu0
  %6504 = vmatprep.mubr.f32.mxu0 0.0
  %6505 = vmatmul.mubr.f32.gmra.mrb[0].mxu0 %v6367
  %v6506 = vpop.f32.mrb[0].mxu0
  %v6507 = vadd.f32 %v6287, %v6506
  %v6508 = vpop.f32.mrb[0].mxu0
  %6509 = vmatprep.mubr.f32.mxu0 0.0
  %6510 = vmatmul.mubr.f32.gmra.mrb[0].mxu0 %v6370
  %v6511 = vpop.f32.mrb[0].mxu0
  %v6512 = vadd.f32 %v6292, %v6511
  %v6513 = vpop.f32.mrb[0].mxu0
  %6514 = vmatprep.mubr.f32.mxu0 0.0
  %6515 = vmatmul.mubr.f32.gmra.mrb[0].mxu0 %v6373
  %v6516 = vpop.f32.mrb[0].mxu0
  %v6517 = vadd.f32 %v6297, %v6516
  %v6518 = vpop.f32.mrb[0].mxu0
  %6519 = vmatprep.mubr.f32.mxu0 0.0
  %6520 = vmatmul.mubr.f32.gmra.mrb[0].mxu0 %v6376
  %v6521 = vpop.f32.mrb[0].mxu0
  %v6522 = vadd.f32 %v6302, %v6521
  %v6523 = vpop.f32.mrb[0].mxu0
  %6524 = vmatprep.mubr.f32.mxu0 0.0
  %6525 = vmatmul.mubr.f32.gmra.mrb[0].mxu0 %v6379
  %v6526 = vpop.f32.mrb[0].mxu0
  %v6527 = vadd.f32 %v6307, %v6526
  %v6528 = vpop.f32.mrb[0].mxu0
  %6529 = vmatprep.mubr.f32.mxu0 0.0
  %6530 = vmatmul.mubr.f32.gmra.mrb[0].mxu0 %v6382
  %v6531 = vpop.f32.mrb[0].mxu0
  %v6532 = vadd.f32 %v6312, %v6531
  %v6533 = vpop.f32.mrb[0].mxu0
  %6534 = vmatprep.mubr.f32.mxu0 0.0
  %6535 = vmatmul.mubr.f32.gmra.mrb[0].mxu0 %v6385
  %v6536 = vpop.f32.mrb[0].mxu0
  %v6537 = vadd.f32 %v6317, %v6536
  %v6538 = vpop.f32.mrb[0].mxu0
  %6539 = vmatprep.mubr.f32.mxu0 0.0
  %6540 = vmatmul.mubr.f32.gmra.mrb[0].mxu0 %v6388
  %v6541 = vpop.f32.mrb[0].mxu0
  %v6542 = vadd.f32 %v6322, %v6541
  %v6543 = vpop.f32.mrb[0].mxu0
  %6544 = vmatprep.mubr.f32.mxu0 0.0
  %6545 = vmatmul.mubr.f32.gmra.mrb[0].mxu0 %v6391
  %v6546 = vpop.f32.mrb[0].mxu0
  %v6547 = vadd.f32 %v6327, %v6546
  %v6548 = vpop.f32.mrb[0].mxu0
  %6549 = vmatprep.mubr.f32.mxu0 0.0
  %6550 = vmatmul.mubr.f32.gmra.mrb[0].mxu0 %v6394
  %v6551 = vpop.f32.mrb[0].mxu0
  %v6552 = vadd.f32 %v6332, %v6551
  %v6553 = vpop.f32.mrb[0].mxu0
  %6554 = vmatprep.mubr.f32.mxu0 0.0
  %6555 = vmatmul.mubr.f32.gmra.mrb[0].mxu0 %v6397
  %v6556 = vpop.f32.mrb[0].mxu0
  %v6557 = vadd.f32 %v6337, %v6556
  %v6558 = vpop.f32.mrb[0].mxu0
  %6559 = vmatprep.mubr.f32.mxu0 0.0
  %6560 = vmatmul.mubr.f32.gmra.mrb[0].mxu0 %v6400
  %v6561 = vpop.f32.mrb[0].mxu0
  %v6562 = vadd.f32 %v6342, %v6561
  %v6563 = vpop.f32.mrb[0].mxu0
  %6564 = vdwg.mxu0
  %s6565 = scalar_lea.vmem %s6, 240
  %v6566 = vld [vmem:[%s6565] sm:$0xff]
  %v6567 = vld [vmem:[%s6565 + $0x8] sm:$0xff]
  %v6568 = vld [vmem:[%s6565 + $0x10] sm:$0xff]
  %v6569 = vld [vmem:[%s6565 + $0x18] sm:$0xff]
  %v6570 = vld [vmem:[%s6565 + $0x20] sm:$0xff]
  %v6571 = vld [vmem:[%s6565 + $0x28] sm:$0xff]
  %v6572 = vld [vmem:[%s6565 + $0x30] sm:$0xff]
  %v6573 = vld [vmem:[%s6565 + $0x38] sm:$0xff]
  %v6574 = vld [vmem:[%s6565 + $0x40] sm:$0xff]
  %v6575 = vld [vmem:[%s6565 + $0x48] sm:$0xff]
  %v6576 = vld [vmem:[%s6565 + $0x50] sm:$0xff]
  %v6577 = vld [vmem:[%s6565 + $0x58] sm:$0xff]
  %v6578 = vld [vmem:[%s6565 + $0x60] sm:$0xff]
  %v6579 = vld [vmem:[%s6565 + $0x68] sm:$0xff]
  %v6580 = vld [vmem:[%s6565 + $0x70] sm:$0x3f]
  %v6582 = vsel %vm5773, %v6580, 0
  %6584 = vmatprep.subr.mxu0 0.0
  %6585 = vmatpush1.msra.mxu0 %v6566
  %6586 = vmatprep.subr.mxu0 0.0
  %6587 = vmatpush1.msra.mxu0 %v6567
  %6588 = vmatprep.subr.mxu0 0.0
  %6589 = vmatpush1.msra.mxu0 %v6568
  %6590 = vmatprep.subr.mxu0 0.0
  %6591 = vmatpush1.msra.mxu0 %v6569
  %6592 = vmatprep.subr.mxu0 0.0
  %6593 = vmatpush1.msra.mxu0 %v6570
  %6594 = vmatprep.subr.mxu0 0.0
  %6595 = vmatpush1.msra.mxu0 %v6571
  %6596 = vmatprep.subr.mxu0 0.0
  %6597 = vmatpush1.msra.mxu0 %v6572
  %6598 = vmatprep.subr.mxu0 0.0
  %6599 = vmatpush1.msra.mxu0 %v6573
  %6600 = vmatprep.subr.mxu0 0.0
  %6601 = vmatpush1.msra.mxu0 %v6574
  %6602 = vmatprep.subr.mxu0 0.0
  %6603 = vmatpush1.msra.mxu0 %v6575
  %6604 = vmatprep.subr.mxu0 0.0
  %6605 = vmatpush1.msra.mxu0 %v6576
  %6606 = vmatprep.subr.mxu0 0.0
  %6607 = vmatpush1.msra.mxu0 %v6577
  %6608 = vmatprep.subr.mxu0 0.0
  %6609 = vmatpush1.msra.mxu0 %v6578
  %6610 = vmatprep.subr.mxu0 0.0
  %6611 = vmatpush1.msra.mxu0 %v6579
  %6612 = vmatprep.subr.mxu0 0.0
  %6613 = vmatpush1.msra.mxu0 %v6582
  %6614 = vmatprep.subr.mxu0 0.0
  %6615 = vmatpush1.msra.mxu0 0.0
  %6616 = vmatprep.subr.mxu0 0.0
  %6617 = vmatpush1.msra.mxu0 0.0
  %6618 = vmatprep.subr.mxu0 0.0
  %6619 = vmatpush1.msra.mxu0 0.0
  %6620 = vmatprep.subr.mxu0 0.0
  %6621 = vmatpush1.msra.mxu0 0.0
  %6622 = vmatprep.subr.mxu0 0.0
  %6623 = vmatpush1.msra.mxu0 0.0
  %6624 = vmatprep.subr.mxu0 0.0
  %6625 = vmatpush1.msra.mxu0 0.0
  %6626 = vmatprep.subr.mxu0 0.0
  %6627 = vmatpush1.msra.mxu0 0.0
  %6628 = vmatprep.subr.mxu0 0.0
  %6629 = vmatpush1.msra.mxu0 0.0
  %6630 = vmatprep.subr.mxu0 0.0
  %6631 = vmatpush1.msra.mxu0 0.0
  %6632 = vmatprep.subr.mxu0 0.0
  %6633 = vmatpush1.msra.mxu0 0.0
  %6634 = vmatprep.subr.mxu0 0.0
  %6635 = vmatpush1.msra.mxu0 0.0
  %6636 = vmatprep.subr.mxu0 0.0
  %6637 = vmatpush1.msra.mxu0 0.0
  %6638 = vmatprep.subr.mxu0 0.0
  %6639 = vmatpush1.msra.mxu0 0.0
  %6640 = vmatprep.subr.mxu0 0.0
  %6641 = vmatpush1.msra.mxu0 0.0
  %6642 = vmatprep.subr.mxu0 0.0
  %6643 = vmatpush1.msra.mxu0 0.0
  %6644 = vmatprep.subr.mxu0 0.0
  %6645 = vmatpush1.msra.mxu0 0.0
  %6646 = vmatprep.subr.mxu0 0.0
  %6647 = vmatpush1.msra.mxu0 0.0
  %6648 = vmatprep.mubr.f32.mxu0 0.0
  %6649 = vmatmul.mubr.f32.gmra.mrb[0].mxu0 %v5726
  %v6650 = vpop.f32.mrb[0].mxu0
  %v6651 = vadd.f32 0.0, %v6650
  %v6652 = vpop.f32.mrb[0].mxu0
  %6653 = vmatprep.mubr.f32.mxu0 0.0
  %6654 = vmatmul.mubr.f32.gmra.mrb[0].mxu0 %v5729
  %v6655 = vpop.f32.mrb[0].mxu0
  %v6656 = vadd.f32 0.0, %v6655
  %v6657 = vpop.f32.mrb[0].mxu0
  %6658 = vmatprep.mubr.f32.mxu0 0.0
  %6659 = vmatmul.mubr.f32.gmra.mrb[0].mxu0 %v5732
  %v6660 = vpop.f32.mrb[0].mxu0
  %v6661 = vadd.f32 0.0, %v6660
  %v6662 = vpop.f32.mrb[0].mxu0
  %6663 = vmatprep.mubr.f32.mxu0 0.0
  %6664 = vmatmul.mubr.f32.gmra.mrb[0].mxu0 %v5735
  %v6665 = vpop.f32.mrb[0].mxu0
  %v6666 = vadd.f32 0.0, %v6665
  %v6667 = vpop.f32.mrb[0].mxu0
  %6668 = vmatprep.mubr.f32.mxu0 0.0
  %6669 = vmatmul.mubr.f32.gmra.mrb[0].mxu0 %v5738
  %v6670 = vpop.f32.mrb[0].mxu0
  %v6671 = vadd.f32 0.0, %v6670
  %v6672 = vpop.f32.mrb[0].mxu0
  %6673 = vmatprep.mubr.f32.mxu0 0.0
  %6674 = vmatmul.mubr.f32.gmra.mrb[0].mxu0 %v5741
  %v6675 = vpop.f32.mrb[0].mxu0
  %v6676 = vadd.f32 0.0, %v6675
  %v6677 = vpop.f32.mrb[0].mxu0
  %6678 = vmatprep.mubr.f32.mxu0 0.0
  %6679 = vmatmul.mubr.f32.gmra.mrb[0].mxu0 %v5744
  %v6680 = vpop.f32.mrb[0].mxu0
  %v6681 = vadd.f32 0.0, %v6680
  %v6682 = vpop.f32.mrb[0].mxu0
  %6683 = vmatprep.mubr.f32.mxu0 0.0
  %6684 = vmatmul.mubr.f32.gmra.mrb[0].mxu0 %v5747
  %v6685 = vpop.f32.mrb[0].mxu0
  %v6686 = vadd.f32 0.0, %v6685
  %v6687 = vpop.f32.mrb[0].mxu0
  %6688 = vmatprep.mubr.f32.mxu0 0.0
  %6689 = vmatmul.mubr.f32.gmra.mrb[0].mxu0 %v5750
  %v6690 = vpop.f32.mrb[0].mxu0
  %v6691 = vadd.f32 0.0, %v6690
  %v6692 = vpop.f32.mrb[0].mxu0
  %6693 = vmatprep.mubr.f32.mxu0 0.0
  %6694 = vmatmul.mubr.f32.gmra.mrb[0].mxu0 %v5753
  %v6695 = vpop.f32.mrb[0].mxu0
  %v6696 = vadd.f32 0.0, %v6695
  %v6697 = vpop.f32.mrb[0].mxu0
  %6698 = vmatprep.mubr.f32.mxu0 0.0
  %6699 = vmatmul.mubr.f32.gmra.mrb[0].mxu0 %v5756
  %v6700 = vpop.f32.mrb[0].mxu0
  %v6701 = vadd.f32 0.0, %v6700
  %v6702 = vpop.f32.mrb[0].mxu0
  %6703 = vmatprep.mubr.f32.mxu0 0.0
  %6704 = vmatmul.mubr.f32.gmra.mrb[0].mxu0 %v5759
  %v6705 = vpop.f32.mrb[0].mxu0
  %v6706 = vadd.f32 0.0, %v6705
  %v6707 = vpop.f32.mrb[0].mxu0
  %6708 = vmatprep.mubr.f32.mxu0 0.0
  %6709 = vmatmul.mubr.f32.gmra.mrb[0].mxu0 %v5762
  %v6710 = vpop.f32.mrb[0].mxu0
  %v6711 = vadd.f32 0.0, %v6710
  %v6712 = vpop.f32.mrb[0].mxu0
  %6713 = vmatprep.mubr.f32.mxu0 0.0
  %6714 = vmatmul.mubr.f32.gmra.mrb[0].mxu0 %v5765
  %v6715 = vpop.f32.mrb[0].mxu0
  %v6716 = vadd.f32 0.0, %v6715
  %v6717 = vpop.f32.mrb[0].mxu0
  %6718 = vmatprep.mubr.f32.mxu0 0.0
  %6719 = vmatmul.mubr.f32.gmra.mrb[0].mxu0 %v5768
  %v6720 = vpop.f32.mrb[0].mxu0
  %v6721 = vadd.f32 0.0, %v6720
  %v6722 = vpop.f32.mrb[0].mxu0
  %6723 = vmatprep.mubr.f32.mxu0 0.0
  %6724 = vmatmul.mubr.f32.gmra.mrb[0].mxu0 %v5771
  %v6725 = vpop.f32.mrb[0].mxu0
  %v6726 = vadd.f32 0.0, %v6725
  %v6727 = vpop.f32.mrb[0].mxu0
  %6728 = vdwg.mxu0
  %s6729 = scalar_lea.vmem %s5, 304
  %v6730 = vld [vmem:[%s6729] sm:$0xff]
  %v6731 = vld [vmem:[%s6729 + $0x8] sm:$0xff]
  %v6732 = vld [vmem:[%s6729 + $0x10] sm:$0xff]
  %v6733 = vld [vmem:[%s6729 + $0x18] sm:$0xff]
  %v6734 = vld [vmem:[%s6729 + $0x20] sm:$0xff]
  %v6735 = vld [vmem:[%s6729 + $0x28] sm:$0xff]
  %v6736 = vld [vmem:[%s6729 + $0x30] sm:$0xff]
  %v6737 = vld [vmem:[%s6729 + $0x38] sm:$0xff]
  %v6738 = vld [vmem:[%s6729 + $0x40] sm:$0xff]
  %v6739 = vld [vmem:[%s6729 + $0x48] sm:$0xff]
  %v6740 = vld [vmem:[%s6729 + $0x50] sm:$0xff]
  %v6741 = vld [vmem:[%s6729 + $0x58] sm:$0xff]
  %v6742 = vld [vmem:[%s6729 + $0x60] sm:$0xff]
  %v6743 = vld [vmem:[%s6729 + $0x68] sm:$0xff]
  %v6744 = vld [vmem:[%s6729 + $0x70] sm:$0xff]
  %v6745 = vld [vmem:[%s6729 + $0x78] sm:$0xff]
  %v6746 = vld [vmem:[%s6729 + $0x80] sm:$0xff]
  %v6747 = vld [vmem:[%s6729 + $0x88] sm:$0xff]
  %v6748 = vld [vmem:[%s6729 + $0x90] sm:$0x7]
  %v6750 = vsel %vm1396, %v6730, 0
  %v6753 = vsel %vm1396, %v6731, 0
  %v6756 = vsel %vm1396, %v6732, 0
  %v6759 = vsel %vm1396, %v6733, 0
  %v6762 = vsel %vm1396, %v6734, 0
  %v6765 = vsel %vm1396, %v6735, 0
  %v6768 = vsel %vm1396, %v6736, 0
  %v6771 = vsel %vm1396, %v6737, 0
  %v6774 = vsel %vm1396, %v6738, 0
  %v6777 = vsel %vm1396, %v6739, 0
  %v6780 = vsel %vm1396, %v6740, 0
  %v6783 = vsel %vm1396, %v6741, 0
  %v6786 = vsel %vm1396, %v6742, 0
  %v6789 = vsel %vm1396, %v6743, 0
  %v6792 = vsel %vm1396, %v6744, 0
  %v6795 = vsel %vm1396, %v6745, 0
  %v6798 = vsel %vm1396, %v6746, 0
  %v6801 = vsel %vm1396, %v6747, 0
  %v6804 = vsel %vm1396, %v6748, 0
  %v6807 = vsel %vm1523, %v6726, 0
  %6809 = vmatprep.subr.mxu0 0.0
  %6810 = vmatpush1.msra.mxu0 %v6651
  %6811 = vmatprep.subr.mxu0 0.0
  %6812 = vmatpush1.msra.mxu0 %v6656
  %6813 = vmatprep.subr.mxu0 0.0
  %6814 = vmatpush1.msra.mxu0 %v6661
  %6815 = vmatprep.subr.mxu0 0.0
  %6816 = vmatpush1.msra.mxu0 %v6666
  %6817 = vmatprep.subr.mxu0 0.0
  %6818 = vmatpush1.msra.mxu0 %v6671
  %6819 = vmatprep.subr.mxu0 0.0
  %6820 = vmatpush1.msra.mxu0 %v6676
  %6821 = vmatprep.subr.mxu0 0.0
  %6822 = vmatpush1.msra.mxu0 %v6681
  %6823 = vmatprep.subr.mxu0 0.0
  %6824 = vmatpush1.msra.mxu0 %v6686
  %6825 = vmatprep.subr.mxu0 0.0
  %6826 = vmatpush1.msra.mxu0 %v6691
  %6827 = vmatprep.subr.mxu0 0.0
  %6828 = vmatpush1.msra.mxu0 %v6696
  %6829 = vmatprep.subr.mxu0 0.0
  %6830 = vmatpush1.msra.mxu0 %v6701
  %6831 = vmatprep.subr.mxu0 0.0
  %6832 = vmatpush1.msra.mxu0 %v6706
  %6833 = vmatprep.subr.mxu0 0.0
  %6834 = vmatpush1.msra.mxu0 %v6711
  %6835 = vmatprep.subr.mxu0 0.0
  %6836 = vmatpush1.msra.mxu0 %v6716
  %6837 = vmatprep.subr.mxu0 0.0
  %6838 = vmatpush1.msra.mxu0 %v6721
  %6839 = vmatprep.subr.mxu0 0.0
  %6840 = vmatpush1.msra.mxu0 %v6807
  %6841 = vmatprep.subr.mxu0 0.0
  %6842 = vmatpush1.msra.mxu0 0.0
  %6843 = vmatprep.subr.mxu0 0.0
  %6844 = vmatpush1.msra.mxu0 0.0
  %6845 = vmatprep.subr.mxu0 0.0
  %6846 = vmatpush1.msra.mxu0 0.0
  %6847 = vmatprep.subr.mxu0 0.0
  %6848 = vmatpush1.msra.mxu0 0.0
  %6849 = vmatprep.subr.mxu0 0.0
  %6850 = vmatpush1.msra.mxu0 0.0
  %6851 = vmatprep.subr.mxu0 0.0
  %6852 = vmatpush1.msra.mxu0 0.0
  %6853 = vmatprep.subr.mxu0 0.0
  %6854 = vmatpush1.msra.mxu0 0.0
  %6855 = vmatprep.subr.mxu0 0.0
  %6856 = vmatpush1.msra.mxu0 0.0
  %6857 = vmatprep.subr.mxu0 0.0
  %6858 = vmatpush1.msra.mxu0 0.0
  %6859 = vmatprep.subr.mxu0 0.0
  %6860 = vmatpush1.msra.mxu0 0.0
  %6861 = vmatprep.subr.mxu0 0.0
  %6862 = vmatpush1.msra.mxu0 0.0
  %6863 = vmatprep.subr.mxu0 0.0
  %6864 = vmatpush1.msra.mxu0 0.0
  %6865 = vmatprep.subr.mxu0 0.0
  %6866 = vmatpush1.msra.mxu0 0.0
  %6867 = vmatprep.subr.mxu0 0.0
  %6868 = vmatpush1.msra.mxu0 0.0
  %6869 = vmatprep.subr.mxu0 0.0
  %6870 = vmatpush1.msra.mxu0 0.0
  %6871 = vmatprep.subr.mxu0 0.0
  %6872 = vmatpush1.msra.mxu0 0.0
  %6873 = vmatprep.mubr.f32.mxu0 0.0
  %6874 = vmatmul.mubr.f32.gmra.mrb[0].mxu0 %v6750
  %v6875 = vpop.f32.mrb[0].mxu0
  %v6876 = vadd.f32 0.0, %v6875
  %v6877 = vpop.f32.mrb[0].mxu0
  %6878 = vmatprep.mubr.f32.mxu0 0.0
  %6879 = vmatmul.mubr.f32.gmra.mrb[0].mxu0 %v6753
  %v6880 = vpop.f32.mrb[0].mxu0
  %v6881 = vadd.f32 0.0, %v6880
  %v6882 = vpop.f32.mrb[0].mxu0
  %6883 = vmatprep.mubr.f32.mxu0 0.0
  %6884 = vmatmul.mubr.f32.gmra.mrb[0].mxu0 %v6756
  %v6885 = vpop.f32.mrb[0].mxu0
  %v6886 = vadd.f32 0.0, %v6885
  %v6887 = vpop.f32.mrb[0].mxu0
  %6888 = vmatprep.mubr.f32.mxu0 0.0
  %6889 = vmatmul.mubr.f32.gmra.mrb[0].mxu0 %v6759
  %v6890 = vpop.f32.mrb[0].mxu0
  %v6891 = vadd.f32 0.0, %v6890
  %v6892 = vpop.f32.mrb[0].mxu0
  %6893 = vmatprep.mubr.f32.mxu0 0.0
  %6894 = vmatmul.mubr.f32.gmra.mrb[0].mxu0 %v6762
  %v6895 = vpop.f32.mrb[0].mxu0
  %v6896 = vadd.f32 0.0, %v6895
  %v6897 = vpop.f32.mrb[0].mxu0
  %6898 = vmatprep.mubr.f32.mxu0 0.0
  %6899 = vmatmul.mubr.f32.gmra.mrb[0].mxu0 %v6765
  %v6900 = vpop.f32.mrb[0].mxu0
  %v6901 = vadd.f32 0.0, %v6900
  %v6902 = vpop.f32.mrb[0].mxu0
  %6903 = vmatprep.mubr.f32.mxu0 0.0
  %6904 = vmatmul.mubr.f32.gmra.mrb[0].mxu0 %v6768
  %v6905 = vpop.f32.mrb[0].mxu0
  %v6906 = vadd.f32 0.0, %v6905
  %v6907 = vpop.f32.mrb[0].mxu0
  %6908 = vmatprep.mubr.f32.mxu0 0.0
  %6909 = vmatmul.mubr.f32.gmra.mrb[0].mxu0 %v6771
  %v6910 = vpop.f32.mrb[0].mxu0
  %v6911 = vadd.f32 0.0, %v6910
  %v6912 = vpop.f32.mrb[0].mxu0
  %6913 = vmatprep.mubr.f32.mxu0 0.0
  %6914 = vmatmul.mubr.f32.gmra.mrb[0].mxu0 %v6774
  %v6915 = vpop.f32.mrb[0].mxu0
  %v6916 = vadd.f32 0.0, %v6915
  %v6917 = vpop.f32.mrb[0].mxu0
  %6918 = vmatprep.mubr.f32.mxu0 0.0
  %6919 = vmatmul.mubr.f32.gmra.mrb[0].mxu0 %v6777
  %v6920 = vpop.f32.mrb[0].mxu0
  %v6921 = vadd.f32 0.0, %v6920
  %v6922 = vpop.f32.mrb[0].mxu0
  %6923 = vmatprep.mubr.f32.mxu0 0.0
  %6924 = vmatmul.mubr.f32.gmra.mrb[0].mxu0 %v6780
  %v6925 = vpop.f32.mrb[0].mxu0
  %v6926 = vadd.f32 0.0, %v6925
  %v6927 = vpop.f32.mrb[0].mxu0
  %6928 = vmatprep.mubr.f32.mxu0 0.0
  %6929 = vmatmul.mubr.f32.gmra.mrb[0].mxu0 %v6783
  %v6930 = vpop.f32.mrb[0].mxu0
  %v6931 = vadd.f32 0.0, %v6930
  %v6932 = vpop.f32.mrb[0].mxu0
  %6933 = vmatprep.mubr.f32.mxu0 0.0
  %6934 = vmatmul.mubr.f32.gmra.mrb[0].mxu0 %v6786
  %v6935 = vpop.f32.mrb[0].mxu0
  %v6936 = vadd.f32 0.0, %v6935
  %v6937 = vpop.f32.mrb[0].mxu0
  %6938 = vmatprep.mubr.f32.mxu0 0.0
  %6939 = vmatmul.mubr.f32.gmra.mrb[0].mxu0 %v6789
  %v6940 = vpop.f32.mrb[0].mxu0
  %v6941 = vadd.f32 0.0, %v6940
  %v6942 = vpop.f32.mrb[0].mxu0
  %6943 = vmatprep.mubr.f32.mxu0 0.0
  %6944 = vmatmul.mubr.f32.gmra.mrb[0].mxu0 %v6792
  %v6945 = vpop.f32.mrb[0].mxu0
  %v6946 = vadd.f32 0.0, %v6945
  %v6947 = vpop.f32.mrb[0].mxu0
  %6948 = vmatprep.mubr.f32.mxu0 0.0
  %6949 = vmatmul.mubr.f32.gmra.mrb[0].mxu0 %v6795
  %v6950 = vpop.f32.mrb[0].mxu0
  %v6951 = vadd.f32 0.0, %v6950
  %v6952 = vpop.f32.mrb[0].mxu0
  %6953 = vmatprep.mubr.f32.mxu0 0.0
  %6954 = vmatmul.mubr.f32.gmra.mrb[0].mxu0 %v6798
  %v6955 = vpop.f32.mrb[0].mxu0
  %v6956 = vadd.f32 0.0, %v6955
  %v6957 = vpop.f32.mrb[0].mxu0
  %6958 = vmatprep.mubr.f32.mxu0 0.0
  %6959 = vmatmul.mubr.f32.gmra.mrb[0].mxu0 %v6801
  %v6960 = vpop.f32.mrb[0].mxu0
  %v6961 = vadd.f32 0.0, %v6960
  %v6962 = vpop.f32.mrb[0].mxu0
  %6963 = vmatprep.mubr.f32.mxu0 0.0
  %6964 = vmatmul.mubr.f32.gmra.mrb[0].mxu0 %v6804
  %v6965 = vpop.f32.mrb[0].mxu0
  %v6966 = vadd.f32 0.0, %v6965
  %v6967 = vpop.f32.mrb[0].mxu0
  %6968 = vdwg.mxu0
  %v6969 = vadd.f32 %v6472, %v6876
  %v6970 = vadd.f32 %v6477, %v6881
  %v6971 = vadd.f32 %v6482, %v6886
  %v6972 = vadd.f32 %v6487, %v6891
  %v6973 = vadd.f32 %v6492, %v6896
  %v6974 = vadd.f32 %v6497, %v6901
  %v6975 = vadd.f32 %v6502, %v6906
  %v6976 = vadd.f32 %v6507, %v6911
  %v6977 = vadd.f32 %v6512, %v6916
  %v6978 = vadd.f32 %v6517, %v6921
  %v6979 = vadd.f32 %v6522, %v6926
  %v6980 = vadd.f32 %v6527, %v6931
  %v6981 = vadd.f32 %v6532, %v6936
  %v6982 = vadd.f32 %v6537, %v6941
  %v6983 = vadd.f32 %v6542, %v6946
  %v6984 = vadd.f32 %v6547, %v6951
  %v6985 = vadd.f32 %v6552, %v6956
  %v6986 = vadd.f32 %v6557, %v6961
  %v6987 = vadd.f32 %v6562, %v6966
  %s6988 = scalar_lea.vmem %s6, 360
  %v6989 = vld [vmem:[%s6988] sm:$0xff]
  %v6990 = vld [vmem:[%s6988 + $0x8] sm:$0xff]
  %v6991 = vld [vmem:[%s6988 + $0x10] sm:$0xff]
  %v6992 = vld [vmem:[%s6988 + $0x18] sm:$0xff]
  %v6993 = vld [vmem:[%s6988 + $0x20] sm:$0xff]
  %v6994 = vld [vmem:[%s6988 + $0x28] sm:$0xff]
  %v6995 = vld [vmem:[%s6988 + $0x30] sm:$0xff]
  %v6996 = vld [vmem:[%s6988 + $0x38] sm:$0xff]
  %v6997 = vld [vmem:[%s6988 + $0x40] sm:$0xff]
  %v6998 = vld [vmem:[%s6988 + $0x48] sm:$0xff]
  %v6999 = vld [vmem:[%s6988 + $0x50] sm:$0xff]
  %v7000 = vld [vmem:[%s6988 + $0x58] sm:$0xff]
  %v7001 = vld [vmem:[%s6988 + $0x60] sm:$0xff]
  %v7002 = vld [vmem:[%s6988 + $0x68] sm:$0xff]
  %v7003 = vld [vmem:[%s6988 + $0x70] sm:$0x3f]
  %v7005 = vsel %vm5773, %v7003, 0
  %7007 = vmatprep.subr.mxu0 0.0
  %7008 = vmatpush1.msra.mxu0 %v6989
  %7009 = vmatprep.subr.mxu0 0.0
  %7010 = vmatpush1.msra.mxu0 %v6990
  %7011 = vmatprep.subr.mxu0 0.0
  %7012 = vmatpush1.msra.mxu0 %v6991
  %7013 = vmatprep.subr.mxu0 0.0
  %7014 = vmatpush1.msra.mxu0 %v6992
  %7015 = vmatprep.subr.mxu0 0.0
  %7016 = vmatpush1.msra.mxu0 %v6993
  %7017 = vmatprep.subr.mxu0 0.0
  %7018 = vmatpush1.msra.mxu0 %v6994
  %7019 = vmatprep.subr.mxu0 0.0
  %7020 = vmatpush1.msra.mxu0 %v6995
  %7021 = vmatprep.subr.mxu0 0.0
  %7022 = vmatpush1.msra.mxu0 %v6996
  %7023 = vmatprep.subr.mxu0 0.0
  %7024 = vmatpush1.msra.mxu0 %v6997
  %7025 = vmatprep.subr.mxu0 0.0
  %7026 = vmatpush1.msra.mxu0 %v6998
  %7027 = vmatprep.subr.mxu0 0.0
  %7028 = vmatpush1.msra.mxu0 %v6999
  %7029 = vmatprep.subr.mxu0 0.0
  %7030 = vmatpush1.msra.mxu0 %v7000
  %7031 = vmatprep.subr.mxu0 0.0
  %7032 = vmatpush1.msra.mxu0 %v7001
  %7033 = vmatprep.subr.mxu0 0.0
  %7034 = vmatpush1.msra.mxu0 %v7002
  %7035 = vmatprep.subr.mxu0 0.0
  %7036 = vmatpush1.msra.mxu0 %v7005
  %7037 = vmatprep.subr.mxu0 0.0
  %7038 = vmatpush1.msra.mxu0 0.0
  %7039 = vmatprep.subr.mxu0 0.0
  %7040 = vmatpush1.msra.mxu0 0.0
  %7041 = vmatprep.subr.mxu0 0.0
  %7042 = vmatpush1.msra.mxu0 0.0
  %7043 = vmatprep.subr.mxu0 0.0
  %7044 = vmatpush1.msra.mxu0 0.0
  %7045 = vmatprep.subr.mxu0 0.0
  %7046 = vmatpush1.msra.mxu0 0.0
  %7047 = vmatprep.subr.mxu0 0.0
  %7048 = vmatpush1.msra.mxu0 0.0
  %7049 = vmatprep.subr.mxu0 0.0
  %7050 = vmatpush1.msra.mxu0 0.0
  %7051 = vmatprep.subr.mxu0 0.0
  %7052 = vmatpush1.msra.mxu0 0.0
  %7053 = vmatprep.subr.mxu0 0.0
  %7054 = vmatpush1.msra.mxu0 0.0
  %7055 = vmatprep.subr.mxu0 0.0
  %7056 = vmatpush1.msra.mxu0 0.0
  %7057 = vmatprep.subr.mxu0 0.0
  %7058 = vmatpush1.msra.mxu0 0.0
  %7059 = vmatprep.subr.mxu0 0.0
  %7060 = vmatpush1.msra.mxu0 0.0
  %7061 = vmatprep.subr.mxu0 0.0
  %7062 = vmatpush1.msra.mxu0 0.0
  %7063 = vmatprep.subr.mxu0 0.0
  %7064 = vmatpush1.msra.mxu0 0.0
  %7065 = vmatprep.subr.mxu0 0.0
  %7066 = vmatpush1.msra.mxu0 0.0
  %7067 = vmatprep.subr.mxu0 0.0
  %7068 = vmatpush1.msra.mxu0 0.0
  %7069 = vmatprep.subr.mxu0 0.0
  %7070 = vmatpush1.msra.mxu0 0.0
  %7071 = vmatprep.mubr.f32.mxu0 0.0
  %7072 = vmatmul.mubr.f32.gmra.mrb[0].mxu0 %v5726
  %v7073 = vpop.f32.mrb[0].mxu0
  %v7074 = vadd.f32 0.0, %v7073
  %v7075 = vpop.f32.mrb[0].mxu0
  %7076 = vmatprep.mubr.f32.mxu0 0.0
  %7077 = vmatmul.mubr.f32.gmra.mrb[0].mxu0 %v5729
  %v7078 = vpop.f32.mrb[0].mxu0
  %v7079 = vadd.f32 0.0, %v7078
  %v7080 = vpop.f32.mrb[0].mxu0
  %7081 = vmatprep.mubr.f32.mxu0 0.0
  %7082 = vmatmul.mubr.f32.gmra.mrb[0].mxu0 %v5732
  %v7083 = vpop.f32.mrb[0].mxu0
  %v7084 = vadd.f32 0.0, %v7083
  %v7085 = vpop.f32.mrb[0].mxu0
  %7086 = vmatprep.mubr.f32.mxu0 0.0
  %7087 = vmatmul.mubr.f32.gmra.mrb[0].mxu0 %v5735
  %v7088 = vpop.f32.mrb[0].mxu0
  %v7089 = vadd.f32 0.0, %v7088
  %v7090 = vpop.f32.mrb[0].mxu0
  %7091 = vmatprep.mubr.f32.mxu0 0.0
  %7092 = vmatmul.mubr.f32.gmra.mrb[0].mxu0 %v5738
  %v7093 = vpop.f32.mrb[0].mxu0
  %v7094 = vadd.f32 0.0, %v7093
  %v7095 = vpop.f32.mrb[0].mxu0
  %7096 = vmatprep.mubr.f32.mxu0 0.0
  %7097 = vmatmul.mubr.f32.gmra.mrb[0].mxu0 %v5741
  %v7098 = vpop.f32.mrb[0].mxu0
  %v7099 = vadd.f32 0.0, %v7098
  %v7100 = vpop.f32.mrb[0].mxu0
  %7101 = vmatprep.mubr.f32.mxu0 0.0
  %7102 = vmatmul.mubr.f32.gmra.mrb[0].mxu0 %v5744
  %v7103 = vpop.f32.mrb[0].mxu0
  %v7104 = vadd.f32 0.0, %v7103
  %v7105 = vpop.f32.mrb[0].mxu0
  %7106 = vmatprep.mubr.f32.mxu0 0.0
  %7107 = vmatmul.mubr.f32.gmra.mrb[0].mxu0 %v5747
  %v7108 = vpop.f32.mrb[0].mxu0
  %v7109 = vadd.f32 0.0, %v7108
  %v7110 = vpop.f32.mrb[0].mxu0
  %7111 = vmatprep.mubr.f32.mxu0 0.0
  %7112 = vmatmul.mubr.f32.gmra.mrb[0].mxu0 %v5750
  %v7113 = vpop.f32.mrb[0].mxu0
  %v7114 = vadd.f32 0.0, %v7113
  %v7115 = vpop.f32.mrb[0].mxu0
  %7116 = vmatprep.mubr.f32.mxu0 0.0
  %7117 = vmatmul.mubr.f32.gmra.mrb[0].mxu0 %v5753
  %v7118 = vpop.f32.mrb[0].mxu0
  %v7119 = vadd.f32 0.0, %v7118
  %v7120 = vpop.f32.mrb[0].mxu0
  %7121 = vmatprep.mubr.f32.mxu0 0.0
  %7122 = vmatmul.mubr.f32.gmra.mrb[0].mxu0 %v5756
  %v7123 = vpop.f32.mrb[0].mxu0
  %v7124 = vadd.f32 0.0, %v7123
  %v7125 = vpop.f32.mrb[0].mxu0
  %7126 = vmatprep.mubr.f32.mxu0 0.0
  %7127 = vmatmul.mubr.f32.gmra.mrb[0].mxu0 %v5759
  %v7128 = vpop.f32.mrb[0].mxu0
  %v7129 = vadd.f32 0.0, %v7128
  %v7130 = vpop.f32.mrb[0].mxu0
  %7131 = vmatprep.mubr.f32.mxu0 0.0
  %7132 = vmatmul.mubr.f32.gmra.mrb[0].mxu0 %v5762
  %v7133 = vpop.f32.mrb[0].mxu0
  %v7134 = vadd.f32 0.0, %v7133
  %v7135 = vpop.f32.mrb[0].mxu0
  %7136 = vmatprep.mubr.f32.mxu0 0.0
  %7137 = vmatmul.mubr.f32.gmra.mrb[0].mxu0 %v5765
  %v7138 = vpop.f32.mrb[0].mxu0
  %v7139 = vadd.f32 0.0, %v7138
  %v7140 = vpop.f32.mrb[0].mxu0
  %7141 = vmatprep.mubr.f32.mxu0 0.0
  %7142 = vmatmul.mubr.f32.gmra.mrb[0].mxu0 %v5768
  %v7143 = vpop.f32.mrb[0].mxu0
  %v7144 = vadd.f32 0.0, %v7143
  %v7145 = vpop.f32.mrb[0].mxu0
  %7146 = vmatprep.mubr.f32.mxu0 0.0
  %7147 = vmatmul.mubr.f32.gmra.mrb[0].mxu0 %v5771
  %v7148 = vpop.f32.mrb[0].mxu0
  %v7149 = vadd.f32 0.0, %v7148
  %v7150 = vpop.f32.mrb[0].mxu0
  %7151 = vdwg.mxu0
  %s7152 = scalar_lea.vmem %s5, 456
  %v7153 = vld [vmem:[%s7152] sm:$0xff]
  %v7154 = vld [vmem:[%s7152 + $0x8] sm:$0xff]
  %v7155 = vld [vmem:[%s7152 + $0x10] sm:$0xff]
  %v7156 = vld [vmem:[%s7152 + $0x18] sm:$0xff]
  %v7157 = vld [vmem:[%s7152 + $0x20] sm:$0xff]
  %v7158 = vld [vmem:[%s7152 + $0x28] sm:$0xff]
  %v7159 = vld [vmem:[%s7152 + $0x30] sm:$0xff]
  %v7160 = vld [vmem:[%s7152 + $0x38] sm:$0xff]
  %v7161 = vld [vmem:[%s7152 + $0x40] sm:$0xff]
  %v7162 = vld [vmem:[%s7152 + $0x48] sm:$0xff]
  %v7163 = vld [vmem:[%s7152 + $0x50] sm:$0xff]
  %v7164 = vld [vmem:[%s7152 + $0x58] sm:$0xff]
  %v7165 = vld [vmem:[%s7152 + $0x60] sm:$0xff]
  %v7166 = vld [vmem:[%s7152 + $0x68] sm:$0xff]
  %v7167 = vld [vmem:[%s7152 + $0x70] sm:$0xff]
  %v7168 = vld [vmem:[%s7152 + $0x78] sm:$0xff]
  %v7169 = vld [vmem:[%s7152 + $0x80] sm:$0xff]
  %v7170 = vld [vmem:[%s7152 + $0x88] sm:$0xff]
  %v7171 = vld [vmem:[%s7152 + $0x90] sm:$0x7]
  %v7173 = vsel %vm1396, %v7153, 0
  %v7176 = vsel %vm1396, %v7154, 0
  %v7179 = vsel %vm1396, %v7155, 0
  %v7182 = vsel %vm1396, %v7156, 0
  %v7185 = vsel %vm1396, %v7157, 0
  %v7188 = vsel %vm1396, %v7158, 0
  %v7191 = vsel %vm1396, %v7159, 0
  %v7194 = vsel %vm1396, %v7160, 0
  %v7197 = vsel %vm1396, %v7161, 0
  %v7200 = vsel %vm1396, %v7162, 0
  %v7203 = vsel %vm1396, %v7163, 0
  %v7206 = vsel %vm1396, %v7164, 0
  %v7209 = vsel %vm1396, %v7165, 0
  %v7212 = vsel %vm1396, %v7166, 0
  %v7215 = vsel %vm1396, %v7167, 0
  %v7218 = vsel %vm1396, %v7168, 0
  %v7221 = vsel %vm1396, %v7169, 0
  %v7224 = vsel %vm1396, %v7170, 0
  %v7227 = vsel %vm1396, %v7171, 0
  %v7230 = vsel %vm1523, %v7149, 0
  %7232 = vmatprep.subr.mxu0 0.0
  %7233 = vmatpush1.msra.mxu0 %v7074
  %7234 = vmatprep.subr.mxu0 0.0
  %7235 = vmatpush1.msra.mxu0 %v7079
  %7236 = vmatprep.subr.mxu0 0.0
  %7237 = vmatpush1.msra.mxu0 %v7084
  %7238 = vmatprep.subr.mxu0 0.0
  %7239 = vmatpush1.msra.mxu0 %v7089
  %7240 = vmatprep.subr.mxu0 0.0
  %7241 = vmatpush1.msra.mxu0 %v7094
  %7242 = vmatprep.subr.mxu0 0.0
  %7243 = vmatpush1.msra.mxu0 %v7099
  %7244 = vmatprep.subr.mxu0 0.0
  %7245 = vmatpush1.msra.mxu0 %v7104
  %7246 = vmatprep.subr.mxu0 0.0
  %7247 = vmatpush1.msra.mxu0 %v7109
  %7248 = vmatprep.subr.mxu0 0.0
  %7249 = vmatpush1.msra.mxu0 %v7114
  %7250 = vmatprep.subr.mxu0 0.0
  %7251 = vmatpush1.msra.mxu0 %v7119
  %7252 = vmatprep.subr.mxu0 0.0
  %7253 = vmatpush1.msra.mxu0 %v7124
  %7254 = vmatprep.subr.mxu0 0.0
  %7255 = vmatpush1.msra.mxu0 %v7129
  %7256 = vmatprep.subr.mxu0 0.0
  %7257 = vmatpush1.msra.mxu0 %v7134
  %7258 = vmatprep.subr.mxu0 0.0
  %7259 = vmatpush1.msra.mxu0 %v7139
  %7260 = vmatprep.subr.mxu0 0.0
  %7261 = vmatpush1.msra.mxu0 %v7144
  %7262 = vmatprep.subr.mxu0 0.0
  %7263 = vmatpush1.msra.mxu0 %v7230
  %7264 = vmatprep.subr.mxu0 0.0
  %7265 = vmatpush1.msra.mxu0 0.0
  %7266 = vmatprep.subr.mxu0 0.0
  %7267 = vmatpush1.msra.mxu0 0.0
  %7268 = vmatprep.subr.mxu0 0.0
  %7269 = vmatpush1.msra.mxu0 0.0
  %7270 = vmatprep.subr.mxu0 0.0
  %7271 = vmatpush1.msra.mxu0 0.0
  %7272 = vmatprep.subr.mxu0 0.0
  %7273 = vmatpush1.msra.mxu0 0.0
  %7274 = vmatprep.subr.mxu0 0.0
  %7275 = vmatpush1.msra.mxu0 0.0
  %7276 = vmatprep.subr.mxu0 0.0
  %7277 = vmatpush1.msra.mxu0 0.0
  %7278 = vmatprep.subr.mxu0 0.0
  %7279 = vmatpush1.msra.mxu0 0.0
  %7280 = vmatprep.subr.mxu0 0.0
  %7281 = vmatpush1.msra.mxu0 0.0
  %7282 = vmatprep.subr.mxu0 0.0
  %7283 = vmatpush1.msra.mxu0 0.0
  %7284 = vmatprep.subr.mxu0 0.0
  %7285 = vmatpush1.msra.mxu0 0.0
  %7286 = vmatprep.subr.mxu0 0.0
  %7287 = vmatpush1.msra.mxu0 0.0
  %7288 = vmatprep.subr.mxu0 0.0
  %7289 = vmatpush1.msra.mxu0 0.0
  %7290 = vmatprep.subr.mxu0 0.0
  %7291 = vmatpush1.msra.mxu0 0.0
  %7292 = vmatprep.subr.mxu0 0.0
  %7293 = vmatpush1.msra.mxu0 0.0
  %7294 = vmatprep.subr.mxu0 0.0
  %7295 = vmatpush1.msra.mxu0 0.0
  %7296 = vmatprep.mubr.f32.mxu0 0.0
  %7297 = vmatmul.mubr.f32.gmra.mrb[0].mxu0 %v7173
  %v7298 = vpop.f32.mrb[0].mxu0
  %v7299 = vadd.f32 0.0, %v7298
  %v7300 = vpop.f32.mrb[0].mxu0
  %7301 = vmatprep.mubr.f32.mxu0 0.0
  %7302 = vmatmul.mubr.f32.gmra.mrb[0].mxu0 %v7176
  %v7303 = vpop.f32.mrb[0].mxu0
  %v7304 = vadd.f32 0.0, %v7303
  %v7305 = vpop.f32.mrb[0].mxu0
  %7306 = vmatprep.mubr.f32.mxu0 0.0
  %7307 = vmatmul.mubr.f32.gmra.mrb[0].mxu0 %v7179
  %v7308 = vpop.f32.mrb[0].mxu0
  %v7309 = vadd.f32 0.0, %v7308
  %v7310 = vpop.f32.mrb[0].mxu0
  %7311 = vmatprep.mubr.f32.mxu0 0.0
  %7312 = vmatmul.mubr.f32.gmra.mrb[0].mxu0 %v7182
  %v7313 = vpop.f32.mrb[0].mxu0
  %v7314 = vadd.f32 0.0, %v7313
  %v7315 = vpop.f32.mrb[0].mxu0
  %7316 = vmatprep.mubr.f32.mxu0 0.0
  %7317 = vmatmul.mubr.f32.gmra.mrb[0].mxu0 %v7185
  %v7318 = vpop.f32.mrb[0].mxu0
  %v7319 = vadd.f32 0.0, %v7318
  %v7320 = vpop.f32.mrb[0].mxu0
  %7321 = vmatprep.mubr.f32.mxu0 0.0
  %7322 = vmatmul.mubr.f32.gmra.mrb[0].mxu0 %v7188
  %v7323 = vpop.f32.mrb[0].mxu0
  %v7324 = vadd.f32 0.0, %v7323
  %v7325 = vpop.f32.mrb[0].mxu0
  %7326 = vmatprep.mubr.f32.mxu0 0.0
  %7327 = vmatmul.mubr.f32.gmra.mrb[0].mxu0 %v7191
  %v7328 = vpop.f32.mrb[0].mxu0
  %v7329 = vadd.f32 0.0, %v7328
  %v7330 = vpop.f32.mrb[0].mxu0
  %7331 = vmatprep.mubr.f32.mxu0 0.0
  %7332 = vmatmul.mubr.f32.gmra.mrb[0].mxu0 %v7194
  %v7333 = vpop.f32.mrb[0].mxu0
  %v7334 = vadd.f32 0.0, %v7333
  %v7335 = vpop.f32.mrb[0].mxu0
  %7336 = vmatprep.mubr.f32.mxu0 0.0
  %7337 = vmatmul.mubr.f32.gmra.mrb[0].mxu0 %v7197
  %v7338 = vpop.f32.mrb[0].mxu0
  %v7339 = vadd.f32 0.0, %v7338
  %v7340 = vpop.f32.mrb[0].mxu0
  %7341 = vmatprep.mubr.f32.mxu0 0.0
  %7342 = vmatmul.mubr.f32.gmra.mrb[0].mxu0 %v7200
  %v7343 = vpop.f32.mrb[0].mxu0
  %v7344 = vadd.f32 0.0, %v7343
  %v7345 = vpop.f32.mrb[0].mxu0
  %7346 = vmatprep.mubr.f32.mxu0 0.0
  %7347 = vmatmul.mubr.f32.gmra.mrb[0].mxu0 %v7203
  %v7348 = vpop.f32.mrb[0].mxu0
  %v7349 = vadd.f32 0.0, %v7348
  %v7350 = vpop.f32.mrb[0].mxu0
  %7351 = vmatprep.mubr.f32.mxu0 0.0
  %7352 = vmatmul.mubr.f32.gmra.mrb[0].mxu0 %v7206
  %v7353 = vpop.f32.mrb[0].mxu0
  %v7354 = vadd.f32 0.0, %v7353
  %v7355 = vpop.f32.mrb[0].mxu0
  %7356 = vmatprep.mubr.f32.mxu0 0.0
  %7357 = vmatmul.mubr.f32.gmra.mrb[0].mxu0 %v7209
  %v7358 = vpop.f32.mrb[0].mxu0
  %v7359 = vadd.f32 0.0, %v7358
  %v7360 = vpop.f32.mrb[0].mxu0
  %7361 = vmatprep.mubr.f32.mxu0 0.0
  %7362 = vmatmul.mubr.f32.gmra.mrb[0].mxu0 %v7212
  %v7363 = vpop.f32.mrb[0].mxu0
  %v7364 = vadd.f32 0.0, %v7363
  %v7365 = vpop.f32.mrb[0].mxu0
  %7366 = vmatprep.mubr.f32.mxu0 0.0
  %7367 = vmatmul.mubr.f32.gmra.mrb[0].mxu0 %v7215
  %v7368 = vpop.f32.mrb[0].mxu0
  %v7369 = vadd.f32 0.0, %v7368
  %v7370 = vpop.f32.mrb[0].mxu0
  %7371 = vmatprep.mubr.f32.mxu0 0.0
  %7372 = vmatmul.mubr.f32.gmra.mrb[0].mxu0 %v7218
  %v7373 = vpop.f32.mrb[0].mxu0
  %v7374 = vadd.f32 0.0, %v7373
  %v7375 = vpop.f32.mrb[0].mxu0
  %7376 = vmatprep.mubr.f32.mxu0 0.0
  %7377 = vmatmul.mubr.f32.gmra.mrb[0].mxu0 %v7221
  %v7378 = vpop.f32.mrb[0].mxu0
  %v7379 = vadd.f32 0.0, %v7378
  %v7380 = vpop.f32.mrb[0].mxu0
  %7381 = vmatprep.mubr.f32.mxu0 0.0
  %7382 = vmatmul.mubr.f32.gmra.mrb[0].mxu0 %v7224
  %v7383 = vpop.f32.mrb[0].mxu0
  %v7384 = vadd.f32 0.0, %v7383
  %v7385 = vpop.f32.mrb[0].mxu0
  %7386 = vmatprep.mubr.f32.mxu0 0.0
  %7387 = vmatmul.mubr.f32.gmra.mrb[0].mxu0 %v7227
  %v7388 = vpop.f32.mrb[0].mxu0
  %v7389 = vadd.f32 0.0, %v7388
  %v7390 = vpop.f32.mrb[0].mxu0
  %7391 = vdwg.mxu0
  %v7392 = vadd.f32 %v6969, %v7299
  %v7393 = vadd.f32 %v6970, %v7304
  %v7394 = vadd.f32 %v6971, %v7309
  %v7395 = vadd.f32 %v6972, %v7314
  %v7396 = vadd.f32 %v6973, %v7319
  %v7397 = vadd.f32 %v6974, %v7324
  %v7398 = vadd.f32 %v6975, %v7329
  %v7399 = vadd.f32 %v6976, %v7334
  %v7400 = vadd.f32 %v6977, %v7339
  %v7401 = vadd.f32 %v6978, %v7344
  %v7402 = vadd.f32 %v6979, %v7349
  %v7403 = vadd.f32 %v6980, %v7354
  %v7404 = vadd.f32 %v6981, %v7359
  %v7405 = vadd.f32 %v6982, %v7364
  %v7406 = vadd.f32 %v6983, %v7369
  %v7407 = vadd.f32 %v6984, %v7374
  %v7408 = vadd.f32 %v6985, %v7379
  %v7409 = vadd.f32 %v6986, %v7384
  %v7410 = vadd.f32 %v6987, %v7389
  %v7411 = vld [vmem:[%s7] sm:$0xff]
  %v7412 = vld [vmem:[%s7 + $0x8] sm:$0xff]
  %v7413 = vld [vmem:[%s7 + $0x10] sm:$0xff]
  %v7414 = vld [vmem:[%s7 + $0x18] sm:$0xff]
  %v7415 = vld [vmem:[%s7 + $0x20] sm:$0xff]
  %v7416 = vld [vmem:[%s7 + $0x28] sm:$0xff]
  %v7417 = vld [vmem:[%s7 + $0x30] sm:$0xff]
  %v7418 = vld [vmem:[%s7 + $0x38] sm:$0xff]
  %v7419 = vld [vmem:[%s7 + $0x40] sm:$0xff]
  %v7420 = vld [vmem:[%s7 + $0x48] sm:$0xff]
  %v7421 = vld [vmem:[%s7 + $0x50] sm:$0xff]
  %v7422 = vld [vmem:[%s7 + $0x58] sm:$0xff]
  %v7423 = vld [vmem:[%s7 + $0x60] sm:$0xff]
  %v7424 = vld [vmem:[%s7 + $0x68] sm:$0xff]
  %v7425 = vld [vmem:[%s7 + $0x70] sm:$0xff]
  %v7426 = vld [vmem:[%s7 + $0x78] sm:$0xff]
  %v7427 = vld [vmem:[%s7 + $0x80] sm:$0xff]
  %v7428 = vld [vmem:[%s7 + $0x88] sm:$0xff]
  %v7429 = vld [vmem:[%s7 + $0x90] sm:$0x7]
  %7431 = vset.pattern.permute.xlu0 0
  %7432 = vperm.xlu0 %7431, %v7411
  %v7433 = vpop.permute.xlu0 %7432
  %7436 = vset.pattern.permute.xlu0 0
  %7437 = vperm.xlu0 %7436, %v7412
  %v7438 = vpop.permute.xlu0 %7437
  %7441 = vset.pattern.permute.xlu0 0
  %7442 = vperm.xlu0 %7441, %v7413
  %v7443 = vpop.permute.xlu0 %7442
  %7446 = vset.pattern.permute.xlu0 0
  %7447 = vperm.xlu0 %7446, %v7414
  %v7448 = vpop.permute.xlu0 %7447
  %7451 = vset.pattern.permute.xlu0 0
  %7452 = vperm.xlu0 %7451, %v7415
  %v7453 = vpop.permute.xlu0 %7452
  %7456 = vset.pattern.permute.xlu0 0
  %7457 = vperm.xlu0 %7456, %v7416
  %v7458 = vpop.permute.xlu0 %7457
  %7461 = vset.pattern.permute.xlu0 0
  %7462 = vperm.xlu0 %7461, %v7417
  %v7463 = vpop.permute.xlu0 %7462
  %7466 = vset.pattern.permute.xlu0 0
  %7467 = vperm.xlu0 %7466, %v7418
  %v7468 = vpop.permute.xlu0 %7467
  %7471 = vset.pattern.permute.xlu0 0
  %7472 = vperm.xlu0 %7471, %v7419
  %v7473 = vpop.permute.xlu0 %7472
  %7476 = vset.pattern.permute.xlu0 0
  %7477 = vperm.xlu0 %7476, %v7420
  %v7478 = vpop.permute.xlu0 %7477
  %7481 = vset.pattern.permute.xlu0 0
  %7482 = vperm.xlu0 %7481, %v7421
  %v7483 = vpop.permute.xlu0 %7482
  %7486 = vset.pattern.permute.xlu0 0
  %7487 = vperm.xlu0 %7486, %v7422
  %v7488 = vpop.permute.xlu0 %7487
  %7491 = vset.pattern.permute.xlu0 0
  %7492 = vperm.xlu0 %7491, %v7423
  %v7493 = vpop.permute.xlu0 %7492
  %7496 = vset.pattern.permute.xlu0 0
  %7497 = vperm.xlu0 %7496, %v7424
  %v7498 = vpop.permute.xlu0 %7497
  %7501 = vset.pattern.permute.xlu0 0
  %7502 = vperm.xlu0 %7501, %v7425
  %v7503 = vpop.permute.xlu0 %7502
  %7506 = vset.pattern.permute.xlu0 0
  %7507 = vperm.xlu0 %7506, %v7426
  %v7508 = vpop.permute.xlu0 %7507
  %7511 = vset.pattern.permute.xlu0 0
  %7512 = vperm.xlu0 %7511, %v7427
  %v7513 = vpop.permute.xlu0 %7512
  %7516 = vset.pattern.permute.xlu0 0
  %7517 = vperm.xlu0 %7516, %v7428
  %v7518 = vpop.permute.xlu0 %7517
  %7521 = vset.pattern.permute.xlu0 0
  %7522 = vperm.xlu0 %7521, %v7429
  %v7523 = vpop.permute.xlu0 %7522
  %v7525 = vadd.f32 %v7392, %v7433
  %v7526 = vadd.f32 %v7393, %v7438
  %v7527 = vadd.f32 %v7394, %v7443
  %v7528 = vadd.f32 %v7395, %v7448
  %v7529 = vadd.f32 %v7396, %v7453
  %v7530 = vadd.f32 %v7397, %v7458
  %v7531 = vadd.f32 %v7398, %v7463
  %v7532 = vadd.f32 %v7399, %v7468
  %v7533 = vadd.f32 %v7400, %v7473
  %v7534 = vadd.f32 %v7401, %v7478
  %v7535 = vadd.f32 %v7402, %v7483
  %v7536 = vadd.f32 %v7403, %v7488
  %v7537 = vadd.f32 %v7404, %v7493
  %v7538 = vadd.f32 %v7405, %v7498
  %v7539 = vadd.f32 %v7406, %v7503
  %v7540 = vadd.f32 %v7407, %v7508
  %v7541 = vadd.f32 %v7408, %v7513
  %v7542 = vadd.f32 %v7409, %v7518
  %v7543 = vadd.f32 %v7410, %v7523
  %v7544 = vmax.f32 %v7525, 0.0
  %v7545 = vmax.f32 %v7526, 0.0
  %v7546 = vmax.f32 %v7527, 0.0
  %v7547 = vmax.f32 %v7528, 0.0
  %v7548 = vmax.f32 %v7529, 0.0
  %v7549 = vmax.f32 %v7530, 0.0
  %v7550 = vmax.f32 %v7531, 0.0
  %v7551 = vmax.f32 %v7532, 0.0
  %v7552 = vmax.f32 %v7533, 0.0
  %v7553 = vmax.f32 %v7534, 0.0
  %v7554 = vmax.f32 %v7535, 0.0
  %v7555 = vmax.f32 %v7536, 0.0
  %v7556 = vmax.f32 %v7537, 0.0
  %v7557 = vmax.f32 %v7538, 0.0
  %v7558 = vmax.f32 %v7539, 0.0
  %v7559 = vmax.f32 %v7540, 0.0
  %v7560 = vmax.f32 %v7541, 0.0
  %v7561 = vmax.f32 %v7542, 0.0
  %v7562 = vmax.f32 %v7543, 0.0
  %v7563 = vld [vmem:[%s8] sm:$0xff]
  %v7564 = vld [vmem:[%s8 + $0x8] sm:$0xff]
  %v7565 = vld [vmem:[%s8 + $0x10] sm:$0x3]
  %v7566 = vld [vmem:[%s8 + $0x18] sm:$0x3]
  %v7567 = vld [vmem:[%s9] sm:$0xff]
  %v7568 = vld [vmem:[%s9 + $0x8] sm:$0x3]
  %7570 = vset.pattern.permute.xlu0 0
  %7571 = vperm.xlu0 %7570, %v7567
  %v7572 = vpop.permute.xlu0 %7571
  %7575 = vset.pattern.permute.xlu0 0
  %7576 = vperm.xlu0 %7575, %v7568
  %v7577 = vpop.permute.xlu0 %7576
  %vm7579 = vcmask 154624
  %v7581 = vsel %vm7579, %v7564, 0
  %v7584 = vsel %vm7579, %v7566, 0
  %v7587 = vsel %vm5095, %v7562, 0
  %7589 = vmatprep.subr.mxu0 0.0
  %7590 = vmatpush1.msra.mxu0 %v7544
  %7591 = vmatprep.subr.mxu0 0.0
  %7592 = vmatpush1.msra.mxu0 %v7545
  %7593 = vmatprep.subr.mxu0 0.0
  %7594 = vmatpush1.msra.mxu0 %v7546
  %7595 = vmatprep.subr.mxu0 0.0
  %7596 = vmatpush1.msra.mxu0 %v7547
  %7597 = vmatprep.subr.mxu0 0.0
  %7598 = vmatpush1.msra.mxu0 %v7548
  %7599 = vmatprep.subr.mxu0 0.0
  %7600 = vmatpush1.msra.mxu0 %v7549
  %7601 = vmatprep.subr.mxu0 0.0
  %7602 = vmatpush1.msra.mxu0 %v7550
  %7603 = vmatprep.subr.mxu0 0.0
  %7604 = vmatpush1.msra.mxu0 %v7551
  %7605 = vmatprep.subr.mxu0 0.0
  %7606 = vmatpush1.msra.mxu0 %v7552
  %7607 = vmatprep.subr.mxu0 0.0
  %7608 = vmatpush1.msra.mxu0 %v7553
  %7609 = vmatprep.subr.mxu0 0.0
  %7610 = vmatpush1.msra.mxu0 %v7554
  %7611 = vmatprep.subr.mxu0 0.0
  %7612 = vmatpush1.msra.mxu0 %v7555
  %7613 = vmatprep.subr.mxu0 0.0
  %7614 = vmatpush1.msra.mxu0 %v7556
  %7615 = vmatprep.subr.mxu0 0.0
  %7616 = vmatpush1.msra.mxu0 %v7557
  %7617 = vmatprep.subr.mxu0 0.0
  %7618 = vmatpush1.msra.mxu0 %v7558
  %7619 = vmatprep.subr.mxu0 0.0
  %7620 = vmatpush1.msra.mxu0 %v7559
  %7621 = vmatprep.subr.mxu0 0.0
  %7622 = vmatpush1.msra.mxu0 %v7560
  %7623 = vmatprep.subr.mxu0 0.0
  %7624 = vmatpush1.msra.mxu0 %v7561
  %7625 = vmatprep.subr.mxu0 0.0
  %7626 = vmatpush1.msra.mxu0 %v7587
  %7627 = vmatprep.subr.mxu0 0.0
  %7628 = vmatpush1.msra.mxu0 0.0
  %7629 = vmatprep.subr.mxu0 0.0
  %7630 = vmatpush1.msra.mxu0 0.0
  %7631 = vmatprep.subr.mxu0 0.0
  %7632 = vmatpush1.msra.mxu0 0.0
  %7633 = vmatprep.subr.mxu0 0.0
  %7634 = vmatpush1.msra.mxu0 0.0
  %7635 = vmatprep.subr.mxu0 0.0
  %7636 = vmatpush1.msra.mxu0 0.0
  %7637 = vmatprep.subr.mxu0 0.0
  %7638 = vmatpush1.msra.mxu0 0.0
  %7639 = vmatprep.subr.mxu0 0.0
  %7640 = vmatpush1.msra.mxu0 0.0
  %7641 = vmatprep.subr.mxu0 0.0
  %7642 = vmatpush1.msra.mxu0 0.0
  %7643 = vmatprep.subr.mxu0 0.0
  %7644 = vmatpush1.msra.mxu0 0.0
  %7645 = vmatprep.subr.mxu0 0.0
  %7646 = vmatpush1.msra.mxu0 0.0
  %7647 = vmatprep.subr.mxu0 0.0
  %7648 = vmatpush1.msra.mxu0 0.0
  %7649 = vmatprep.subr.mxu0 0.0
  %7650 = vmatpush1.msra.mxu0 0.0
  %7651 = vmatprep.subr.mxu0 0.0
  %7652 = vmatpush1.msra.mxu0 0.0
  %7653 = vmatprep.mubr.f32.mxu0 %v7581
  %7654 = vmatmul.mubr.f32.gmra.mrb[0].mxu0 %v7563
  %v7655 = vpop.f32.mrb[0].mxu0
  %v7656 = vadd.f32 %v7572, %v7655
  %v7657 = vpop.f32.mrb[0].mxu0
  %7658 = vmatprep.mubr.f32.mxu0 %v7584
  %7659 = vmatmul.mubr.f32.gmra.mrb[0].mxu0 %v7565
  %v7660 = vpop.f32.mrb[0].mxu0
  %v7661 = vadd.f32 %v7577, %v7660
  %v7662 = vpop.f32.mrb[0].mxu0
  %7663 = vdwg.mxu0
  %vm7664 = vcmask 64512
  %7665 = vst.msk [vmem:[%s10] sm:$0xff] %vm7664, %v7656
  %vm7666 = vcmask 58368
  %7667 = vst.msk [vmem:[%s10 + $0x8] sm:$0x3] %vm7666, %v7661
  // Predicated region
  $region42: #{convnet_forward.1} parent=0 // pred_check
    _
  $region43: #{convnet_forward.1} parent=0 // pred_check_branch
    %7669 = sbr.rel (0) target = $region45
  $region44: #{convnet_forward.1} parent=0 // pred_region
    _
  $region45: #{convnet_forward.1} parent=0 // pred_fallthru
    _
  // Predicated region
  $region46: #{convnet_forward.1} parent=0 // pred_check
    _
  $region47: #{convnet_forward.1} parent=0 // pred_check_branch
    %7671 = sbr.rel (0) target = $region49
  $region48: #{convnet_forward.1} parent=0 // pred_region
    _
  $region49: #{convnet_forward.1} parent=0 // pred_fallthru
    _

</llo_original>
